<compile_context>
chip_gen: v7x
topology: tpu7x:2x2x1
jax: 0.10.0
libtpu: 0.0.40
codegen_flags: <defaults>
</compile_context>

<pallas_src>
import functools
import math

import jax
import jax.numpy as jnp
from jax.experimental import pallas as pl
from jax.experimental.pallas import tpu as pltpu

_EPS = 1e-5


def _cdiv(a, b):
    return -(-a // b)


def _round_up(a, b):
    return _cdiv(a, b) * b


# ----------------------------- kernels ------------------------------------ #

def _ln_kernel_dense(x_ref, w_ref, b_ref, o_ref, *, eps):
    """Plain path: each kernel row is one logical LayerNorm row (C lanes)."""
    x = x_ref[...].astype(jnp.float32)                      # (TR, C)
    mu = jnp.mean(x, axis=-1, keepdims=True)
    xc = x - mu
    var = jnp.mean(xc * xc, axis=-1, keepdims=True)         # unbiased=False
    inv = jax.lax.rsqrt(var + eps)
    w = w_ref[...].astype(jnp.float32)
    b = b_ref[...].astype(jnp.float32)
    o_ref[...] = (xc * (inv * w) + b).astype(o_ref.dtype)


def _ln_kernel_grouped(x_ref, w_ref, b_ref, seg_ref, segt_ref, o_ref, *, c, eps):
    """Lane-dense path: each kernel row packs g logical rows (W = g*C lanes).

    Per-logical-row statistics are segmented reductions on the otherwise-idle
    MXU using a constant 0/1 (W, g) segment matrix.  One-pass form:
      mu = E[x], var = E[x^2] - mu^2, then a fused scale/shift
      out = x * (inv*w) + (b - mu*inv*w)
    so only three (TR, W) f32 intermediates are materialized.
    """
    hi = jax.lax.Precision.HIGHEST                          # no bf16 truncation
    x = x_ref[...].astype(jnp.float32)                      # (TR, W)
    seg = seg_ref[...]                                      # (W, g) 0/1 f32
    segt = segt_ref[...]                                    # (g, W) 0/1 f32
    inv_c = jnp.float32(1.0 / c)

    s1 = jnp.dot(x, seg, preferred_element_type=jnp.float32,
                 precision=hi)                              # (TR, g)  sum(x)
    s2 = jnp.dot(x * x, seg, preferred_element_type=jnp.float32,
                 precision=hi)                              # (TR, g)  sum(x^2)
    mu_g = s1 * inv_c
    var_g = jnp.maximum(s2 * inv_c - mu_g * mu_g, 0.0)
    inv_g = jax.lax.rsqrt(var_g + eps)                      # (TR, g)

    # Broadcast per-group scale / shift back to lane width with the 0/1
    # transposed segment matrix (HIGHEST so inv_g is not truncated).
    inv = jnp.dot(inv_g, segt, preferred_element_type=jnp.float32,
                  precision=hi)                             # (TR, W)
    mu_inv = jnp.dot(mu_g * inv_g, segt, preferred_element_type=jnp.float32,
                     precision=hi)                          # (TR, W)

    w = w_ref[...].astype(jnp.float32)
    b = b_ref[...].astype(jnp.float32)
    o_ref[...] = ((x * inv - mu_inv) * w + b).astype(o_ref.dtype)


# ----------------------------- tiling heuristics --------------------------- #

def _group_factor(c, max_width=4096):
    """Rows grouped per kernel row so the last dim is a lane-dense multiple of 128."""
    if c % 128 == 0:
        return 1
    g = 128 // math.gcd(c, 128)          # smallest g with (g*c) % 128 == 0
    if g * c > max_width:                # grouping would blow up the row width
        return 1
    while g * c < 512 and 2 * g * c <= max_width:   # widen for dense stores
        g *= 2
    return g


def _choose_tile_rows(rg, row_bytes, *, sublane=8, target_bytes=2 << 20,
                      min_block_bytes=1 << 20, min_grid=4):
    """Largest ~target_bytes row tile; split for multi-TC parallelism only if
    each split block stays above the ~1 MiB DMA-efficiency floor."""
    tr = max(sublane, (target_bytes // max(row_bytes, 1)) // sublane * sublane)
    tr = min(tr, _round_up(rg, sublane))
    if _cdiv(rg, tr) < min_grid:
        tr_split = _round_up(_cdiv(rg, min_grid), sublane)
        if tr_split * row_bytes >= min_block_bytes:
            tr = tr_split
    return max(sublane, (tr // sublane) * sublane)


def _vmem_limit_bytes():
    try:
        cap = int(pltpu.get_tpu_info().vmem_capacity_bytes)
        return int(min(cap * 5 // 8, 96 * 1024 * 1024))   # 40 MiB on v7x, 80 on v5e/v6e
    except Exception:
        return 40 * 1024 * 1024                           # safe on 64 MiB parts


# ----------------------------- wrapper ------------------------------------- #

@jax.jit
def withbias_layernorm(x, weight, bias):
    """LayerNorm over the last dim of `x` with affine weight/bias of shape (C,)."""
    orig_shape = x.shape
    c = orig_shape[-1]
    r = 1
    for d in orig_shape[:-1]:
        r *= d
    itemsize = jnp.dtype(x.dtype).itemsize
    sublane = {4: 8, 2: 16, 1: 32}.get(itemsize, 8)   # native sublane packing

    g = _group_factor(c)
    w_lanes = g * c                                   # kernel-row width (lane dim)

    x2 = x.reshape(r, c)
    if g > 1 and r % g != 0:
        # Only pad up to a multiple of g (<= g-1 rows) so the lane-dense
        # reshape is valid; no tile-multiple padding (Pallas masks ragged
        # final blocks, rows are independent).
        r_pad = _round_up(r, g)
        x2 = jnp.pad(x2, ((0, r_pad - r), (0, 0)))
    else:
        r_pad = r
    rg = r_pad // g                                   # grouped row count
    xg = x2.reshape(rg, w_lanes)                      # contiguous (free) reshape

    tr = _choose_tile_rows(rg, w_lanes * itemsize, sublane=sublane)
    grid = _cdiv(rg, tr)

    w2 = jnp.tile(weight.reshape(-1), g).reshape(1, w_lanes)
    b2 = jnp.tile(bias.reshape(-1), g).reshape(1, w_lanes)

    cost = pl.CostEstimate(
        flops=12 * r * c,
        transcendentals=r,
        bytes_accessed=2 * r * c * itemsize,
    )
    cparams = pltpu.CompilerParams(
        dimension_semantics=("parallel",),
        vmem_limit_bytes=_vmem_limit_bytes(),
    )

    if g == 1:
        kernel = functools.partial(_ln_kernel_dense, eps=_EPS)
        in_specs = [
            pl.BlockSpec((tr, w_lanes), lambda i: (i, 0)),
            pl.BlockSpec((1, w_lanes), lambda i: (0, 0)),
            pl.BlockSpec((1, w_lanes), lambda i: (0, 0)),
        ]
        args = (xg, w2, b2)
    else:
        lane = jnp.arange(w_lanes, dtype=jnp.int32)
        grp = jnp.arange(g, dtype=jnp.int32)
        seg = (lane[:, None] // c == grp[None, :]).astype(jnp.float32)   # (W, g)
        segt = (grp[:, None] == lane[None, :] // c).astype(jnp.float32)  # (g, W)
        kernel = functools.partial(_ln_kernel_grouped, c=float(c), eps=_EPS)
        in_specs = [
            pl.BlockSpec((tr, w_lanes), lambda i: (i, 0)),
            pl.BlockSpec((1, w_lanes), lambda i: (0, 0)),
            pl.BlockSpec((1, w_lanes), lambda i: (0, 0)),
            pl.BlockSpec((w_lanes, g), lambda i: (0, 0)),
            pl.BlockSpec((g, w_lanes), lambda i: (0, 0)),
        ]
        args = (xg, w2, b2, seg, segt)

    out = pl.pallas_call(
        kernel,
        out_shape=jax.ShapeDtypeStruct((rg, w_lanes), x.dtype),
        grid_spec=pltpu.PrefetchScalarGridSpec(
            num_scalar_prefetch=0,
            grid=(grid,),
            in_specs=in_specs,
            out_specs=pl.BlockSpec((tr, w_lanes), lambda i: (i, 0)),
        ),
        compiler_params=cparams,
        cost_estimate=cost,
    )(*args)

    out = out.reshape(r_pad, c)
    if r_pad != r:
        out = out[:r]
    return out.reshape(orig_shape)


# ----------------------------- reference & test ---------------------------- #

def _reference(x, weight, bias):
    x32 = x.astype(jnp.float32)
    mu = jnp.mean(x32, axis=-1, keepdims=True)
    var = jnp.mean((x32 - mu) ** 2, axis=-1, keepdims=True)
    return ((x32 - mu) / jnp.sqrt(var + 1e-5) * weight + bias).astype(x.dtype)


if __name__ == "__main__":
    key = jax.random.PRNGKey(0)
    keys = jax.random.split(key, 9)

    # Case 1: Restormer-like small channel count -> grouped lane-dense path,
    # row count not a multiple of g (exercises the small pad + ragged block).
    B, L, C = 2, 255, 32
    x = jax.random.normal(keys[0], (B, L, C), dtype=jnp.float32)
    w = jnp.ones((C,), jnp.float32) + 0.1 * jax.random.normal(keys[1], (C,), jnp.float32)
    b = 0.1 * jax.random.normal(keys[2], (C,), jnp.float32)
    out = jax.block_until_ready(withbias_layernorm(x, w, b))
    ref = _reference(x, w, b)
    assert out.shape == x.shape and out.dtype == x.dtype
    assert jnp.allclose(out, ref, atol=2e-5, rtol=1e-5), "mismatch (grouped path)"

    # Case 2: channel count already a multiple of 128 -> dense path, ragged rows,
    # no padding at all (Pallas masks the ragged block).
    C2 = 128
    x2 = jax.random.normal(keys[3], (2, 7, 19, C2), dtype=jnp.float32)
    w2 = jnp.ones((C2,), jnp.float32) + 0.1 * jax.random.normal(keys[4], (C2,), jnp.float32)
    b2 = 0.1 * jax.random.normal(keys[5], (C2,), jnp.float32)
    out2 = jax.block_until_ready(withbias_layernorm(x2, w2, b2))
    ref2 = _reference(x2, w2, b2)
    assert out2.shape == x2.shape and out2.dtype == x2.dtype
    assert jnp.allclose(out2, ref2, atol=2e-5, rtol=1e-5), "mismatch (dense path)"

    # Case 3: dense path with grid > 1 and a ragged final row block.
    C3, R3 = 256, 3000
    x3 = jax.random.normal(keys[6], (R3, C3), dtype=jnp.float32)
    w3 = jnp.ones((C3,), jnp.float32) + 0.1 * jax.random.normal(keys[7], (C3,), jnp.float32)
    b3 = 0.1 * jax.random.normal(keys[8], (C3,), jnp.float32)
    out3 = jax.block_until_ready(withbias_layernorm(x3, w3, b3))
    ref3 = _reference(x3, w3, b3)
    assert out3.shape == x3.shape and out3.dtype == x3.dtype
    assert jnp.allclose(out3, ref3, atol=2e-5, rtol=1e-5), "mismatch (multi-block path)"

    print("KERNEL_OK")
</pallas_src>

<mosaic_0001>
module attributes {stable_mosaic.version = 11 : i64} {
  func.func @_ln_kernel_grouped(%arg0: i32, %arg1: memref<32x512xf32, #tpu.memory_space<vmem>>, %arg2: memref<1x512xf32, #tpu.memory_space<vmem>>, %arg3: memref<1x512xf32, #tpu.memory_space<vmem>>, %arg4: memref<512x16xf32, #tpu.memory_space<vmem>>, %arg5: memref<16x512xf32, #tpu.memory_space<vmem>>, %arg6: memref<32x512xf32, #tpu.memory_space<vmem>>) attributes {dimension_semantics = [#tpu.dimension_semantics<parallel>], iteration_bounds = array<i64: 1>, scalar_prefetch = 0 : i64, scratch_operands = 0 : i64, tpu.core_type = #tpu.core_type<tc>, window_params = [{transform_indices = @transform_0, window_bounds = array<i64: 32, 512>}, {pipeline_mode = #tpu.pipeline_mode<synchronous>, transform_indices = @transform_1, window_bounds = array<i64: 1, 512>}, {pipeline_mode = #tpu.pipeline_mode<synchronous>, transform_indices = @transform_2, window_bounds = array<i64: 1, 512>}, {pipeline_mode = #tpu.pipeline_mode<synchronous>, transform_indices = @transform_3, window_bounds = array<i64: 512, 16>}, {pipeline_mode = #tpu.pipeline_mode<synchronous>, transform_indices = @transform_4, window_bounds = array<i64: 16, 512>}, {transform_indices = @transform_5, window_bounds = array<i64: 32, 512>}]} {
    %c0 = arith.constant 0 : index
    %c0_0 = arith.constant 0 : index
    %0 = vector.load %arg1[%c0, %c0_0] : memref<32x512xf32, #tpu.memory_space<vmem>>, vector<32x512xf32>
    %c0_1 = arith.constant 0 : index
    %c0_2 = arith.constant 0 : index
    %1 = vector.load %arg4[%c0_1, %c0_2] : memref<512x16xf32, #tpu.memory_space<vmem>>, vector<512x16xf32>
    %c0_3 = arith.constant 0 : index
    %c0_4 = arith.constant 0 : index
    %2 = vector.load %arg5[%c0_3, %c0_4] : memref<16x512xf32, #tpu.memory_space<vmem>>, vector<16x512xf32>
    %cst = arith.constant dense<0.000000e+00> : vector<32x16xf32>
    %3 = tpu.matmul %0, %1, %cst {dimension_numbers = #tpu.dot_dimension_numbers<[1], [0], [0], [1], [0, 0, 1, 1], [], []>, precision = #tpu.contract_precision<fp32>} : vector<32x512xf32>, vector<512x16xf32>, vector<32x16xf32> -> vector<32x16xf32>
    %4 = arith.mulf %0, %0 : vector<32x512xf32>
    %cst_5 = arith.constant dense<0.000000e+00> : vector<32x16xf32>
    %5 = tpu.matmul %4, %1, %cst_5 {dimension_numbers = #tpu.dot_dimension_numbers<[1], [0], [0], [1], [0, 0, 1, 1], [], []>, precision = #tpu.contract_precision<fp32>} : vector<32x512xf32>, vector<512x16xf32>, vector<32x16xf32> -> vector<32x16xf32>
    %cst_6 = arith.constant 3.125000e-02 : f32
    %6 = vector.broadcast %cst_6 : f32 to vector<32x16xf32>
    %7 = arith.mulf %3, %6 : vector<32x16xf32>
    %cst_7 = arith.constant 3.125000e-02 : f32
    %8 = vector.broadcast %cst_7 : f32 to vector<32x16xf32>
    %9 = arith.mulf %5, %8 : vector<32x16xf32>
    %10 = arith.mulf %7, %7 : vector<32x16xf32>
    %11 = arith.subf %9, %10 : vector<32x16xf32>
    %cst_8 = arith.constant 0.000000e+00 : f32
    %12 = vector.broadcast %cst_8 : f32 to vector<32x16xf32>
    %13 = arith.maximumf %11, %12 : vector<32x16xf32>
    %cst_9 = arith.constant 9.99999974E-6 : f32
    %14 = vector.broadcast %cst_9 : f32 to vector<32x16xf32>
    %15 = arith.addf %13, %14 : vector<32x16xf32>
    %16 = math.rsqrt %15 : vector<32x16xf32>
    %cst_10 = arith.constant dense<0.000000e+00> : vector<32x512xf32>
    %17 = tpu.matmul %16, %2, %cst_10 {dimension_numbers = #tpu.dot_dimension_numbers<[1], [0], [0], [1], [0, 0, 1, 1], [], []>, precision = #tpu.contract_precision<fp32>} : vector<32x16xf32>, vector<16x512xf32>, vector<32x512xf32> -> vector<32x512xf32>
    %18 = arith.mulf %7, %16 : vector<32x16xf32>
    %cst_11 = arith.constant dense<0.000000e+00> : vector<32x512xf32>
    %19 = tpu.matmul %18, %2, %cst_11 {dimension_numbers = #tpu.dot_dimension_numbers<[1], [0], [0], [1], [0, 0, 1, 1], [], []>, precision = #tpu.contract_precision<fp32>} : vector<32x16xf32>, vector<16x512xf32>, vector<32x512xf32> -> vector<32x512xf32>
    %c0_12 = arith.constant 0 : index
    %c0_13 = arith.constant 0 : index
    %20 = vector.load %arg2[%c0_12, %c0_13] : memref<1x512xf32, #tpu.memory_space<vmem>>, vector<1x512xf32>
    %c0_14 = arith.constant 0 : index
    %c0_15 = arith.constant 0 : index
    %21 = vector.load %arg3[%c0_14, %c0_15] : memref<1x512xf32, #tpu.memory_space<vmem>>, vector<1x512xf32>
    %22 = arith.mulf %0, %17 : vector<32x512xf32>
    %23 = arith.subf %22, %19 : vector<32x512xf32>
    %24 = vector.broadcast %20 : vector<1x512xf32> to vector<32x512xf32>
    %25 = arith.mulf %23, %24 : vector<32x512xf32>
    %26 = vector.broadcast %21 : vector<1x512xf32> to vector<32x512xf32>
    %27 = arith.addf %25, %26 : vector<32x512xf32>
    %c0_16 = arith.constant 0 : index
    %c0_17 = arith.constant 0 : index
    %28 = vector.load %arg6[%c0_16, %c0_17] : memref<32x512xf32, #tpu.memory_space<vmem>>, vector<32x512xf32>
    tpu.vector_store %arg6[%c0_16, %c0_17], %27 {strides = array<i32>} : memref<32x512xf32, #tpu.memory_space<vmem>>, vector<32x512xf32>,
    return
  }
  func.func @transform_0(%arg0: i32) -> (i32, i32) {
    %c0_i32 = arith.constant 0 : i32
    %c0_i32_0 = arith.constant 0 : i32
    return %arg0, %c0_i32 : i32, i32
  }
  func.func @transform_1(%arg0: i32) -> (i32, i32) {
    %c0_i32 = arith.constant 0 : i32
    %c0_i32_0 = arith.constant 0 : i32
    %c0_i32_1 = arith.constant 0 : i32
    return %c0_i32, %c0_i32_0 : i32, i32
  }
  func.func @transform_2(%arg0: i32) -> (i32, i32) {
    %c0_i32 = arith.constant 0 : i32
    %c0_i32_0 = arith.constant 0 : i32
    %c0_i32_1 = arith.constant 0 : i32
    return %c0_i32, %c0_i32_0 : i32, i32
  }
  func.func @transform_3(%arg0: i32) -> (i32, i32) {
    %c0_i32 = arith.constant 0 : i32
    %c0_i32_0 = arith.constant 0 : i32
    %c0_i32_1 = arith.constant 0 : i32
    return %c0_i32, %c0_i32_0 : i32, i32
  }
  func.func @transform_4(%arg0: i32) -> (i32, i32) {
    %c0_i32 = arith.constant 0 : i32
    %c0_i32_0 = arith.constant 0 : i32
    %c0_i32_1 = arith.constant 0 : i32
    return %c0_i32, %c0_i32_0 : i32, i32
  }
  func.func @transform_5(%arg0: i32) -> (i32, i32) {
    %c0_i32 = arith.constant 0 : i32
    %c0_i32_0 = arith.constant 0 : i32
    return %arg0, %c0_i32 : i32, i32
  }
}

</mosaic_0001>

<llo_original>
// kernel: tile.13
$region0: #{tile.13}
  #allocation0 [shape = 's32[1]{0}', space=sflag, size = 0x4, scoped, tag = 'scoped memory for tile.13']
  %s0 = inlined_call_operand.vmem [shape: f32[32], index: 0, kind: input, shape index: {}]
  %s1 = inlined_call_operand.vmem [shape: f32[16,32], index: 1, kind: output, shape index: {}]
  // Predicated region
  $region2: #{tile.13} parent=0 // pred_check
    _
  $region3: #{tile.13} parent=0 // pred_check_branch
    %3 = sbr.rel (0) target = $region5
  $region4: #{tile.13} parent=0 // pred_region
    _
  $region5: #{tile.13} parent=0 // pred_fallthru
    _
  %v4 = vld [vmem:[%s0] ss:$0 sm:$0xff]
  %5 = vst [vmem:[%s1] sm:$0xff] %v4
  %s6 = scalar_lea.vmem %s1, 8
  %7 = vst [vmem:[%s6] sm:$0xff] %v4

// kernel: tile.14
$region0: #{tile.14}
  %s0 = inlined_call_operand.vmem [shape: f32[16,32], index: 0, kind: input, shape index: {}]
  %s1 = inlined_call_operand.vmem [shape: f32[1,512], index: 1, kind: output, shape index: {}]
  $region1: #{tile.14} parent=0
    #allocation0 [shape = 'u8[16384]{0}', space=vmem, size = 0x4000, scoped, tag = 'scoped mem for output reshape']
    %v2 = vld [vmem:[%s0] ss:$4 sm:$0xf]
    %vm3 = vcmask 261120
    %4 = vst.msk [vmem:[#allocation0] ss:$8 sm:$0xf] %vm3, %v2
    %s5 = scalar_lea.vmem %s0, 3
    %v6 = vld [vmem:[%s5] ss:$4 sm:$0xf]
    %7 = vrot.lane.b32.xlu0 %v6, 96
    %v8 = vpop.permute.xlu0 %7
    %vm9 = vcmask 1048320
    %10 = vst.msk [vmem:[#allocation0] ss:$8 sm:$0xf] %vm9, %v8
    %s11 = scalar_lea.vmem %s0, 2
    %v12 = vld [vmem:[%s11] ss:$4 sm:$0xf]
    %13 = vrot.lane.b32.xlu0 %v12, 64
    %v14 = vpop.permute.xlu0 %13
    %vm15 = vcmask 785920
    %16 = vst.msk [vmem:[#allocation0] ss:$8 sm:$0xf] %vm15, %v14
    %s17 = scalar_lea.vmem %s0, 1
    %v18 = vld [vmem:[%s17] ss:$4 sm:$0xf]
    %19 = vrot.lane.b32.xlu0 %v18, 32
    %v20 = vpop.permute.xlu0 %19
    %vm21 = vcmask 523520
    %22 = vst.msk [vmem:[#allocation0] ss:$8 sm:$0xf] %vm21, %v20
    %s24 = sshllo.u32 0, 1
    %v26 = vld [vmem:[#allocation0] sm:%s24]
    %s27 = sshllo.u32 0, 1
    %28 = vst [vmem:[%s1] sm:%s27] %v26
    %s29 = scalar_lea.vmem [#allocation0], 8
    %v30 = vld [vmem:[%s29] sm:%s24]
    %s31 = sshllo.u32 0, 1
    %s32 = scalar_lea.vmem %s1, 1
    %33 = vst [vmem:[%s32] sm:%s31] %v30
    %s34 = scalar_lea.vmem [#allocation0], 16
    %v35 = vld [vmem:[%s34] sm:%s24]
    %s36 = sshllo.u32 0, 1
    %s37 = smul.addr 1, 2
    %s38 = scalar_lea.vmem %s1, %s37
    %39 = vst [vmem:[%s38] sm:%s36] %v35
    %s40 = scalar_lea.vmem [#allocation0], 24
    %v41 = vld [vmem:[%s40] sm:%s24]
    %s42 = sshllo.u32 0, 1
    %s43 = smul.addr 1, 3
    %s44 = scalar_lea.vmem %s1, %s43
    %45 = vst [vmem:[%s44] sm:%s42] %v41

// kernel: withbias_layernorm.1
$region0: #{withbias_layernorm.1}
  #allocation0 [shape = 'u32[]', space=smem, size = 0x4, offset = 0x4, fixed_abs, tag = 'smem constant byte address 0x4 - core index']
  #allocation1 [shape = 'u32[144,128]{1,0:T(1,128)}', space=vmem, size = 0x12000, scoped, tag = 'internal scratch']
  %s0 = inlined_call_operand.vmem [shape: f32[32,512], index: 0, kind: input, shape index: {}]
  %s1 = inlined_call_operand.vmem [shape: f32[1,512], index: 1, kind: input, shape index: {}]
  %s2 = inlined_call_operand.vmem [shape: f32[1,512], index: 2, kind: input, shape index: {}]
  %s3 = inlined_call_operand.vmem [shape: f32[512,16], index: 3, kind: input, shape index: {}]
  %s4 = inlined_call_operand.vmem [shape: f32[16,512], index: 4, kind: input, shape index: {}]
  %s5 = inlined_call_operand.vmem [shape: f32[32,512], index: 5, kind: output, shape index: {}]
  %s6 = sld [smem:[#allocation0]]
  $region30: #{withbias_layernorm.1} parent=0
    _
  %s8 = ssub.s32 1, %s6
  %s9 = scalar_select 0, %s8, %s6
  // Predicated region
  $region2: #{withbias_layernorm.1} parent=0 // pred_check
    _
  $region3: #{withbias_layernorm.1} parent=0 // pred_check_branch
    %11 = sbr.rel (0) target = $region5
  $region4: #{withbias_layernorm.1} parent=0 // pred_region
    _
  $region5: #{withbias_layernorm.1} parent=0 // pred_fallthru
    _
  // Predicated region
  $region6: #{withbias_layernorm.1} parent=0 // pred_check
    _
  $region7: #{withbias_layernorm.1} parent=0 // pred_check_branch
    %13 = sbr.rel (0) target = $region9
  $region8: #{withbias_layernorm.1} parent=0 // pred_region
    _
  $region9: #{withbias_layernorm.1} parent=0 // pred_fallthru
    _
  // Predicated region
  $region10: #{withbias_layernorm.1} parent=0 // pred_check
    _
  $region11: #{withbias_layernorm.1} parent=0 // pred_check_branch
    %15 = sbr.rel (0) target = $region13
  $region12: #{withbias_layernorm.1} parent=0 // pred_region
    _
  $region13: #{withbias_layernorm.1} parent=0 // pred_fallthru
    _
  // Predicated region
  $region14: #{withbias_layernorm.1} parent=0 // pred_check
    _
  $region15: #{withbias_layernorm.1} parent=0 // pred_check_branch
    %17 = sbr.rel (0) target = $region17
  $region16: #{withbias_layernorm.1} parent=0 // pred_region
    _
  $region17: #{withbias_layernorm.1} parent=0 // pred_fallthru
    _
  // Predicated region
  $region18: #{withbias_layernorm.1} parent=0 // pred_check
    _
  $region19: #{withbias_layernorm.1} parent=0 // pred_check_branch
    %19 = sbr.rel (0) target = $region21
  $region20: #{withbias_layernorm.1} parent=0 // pred_region
    _
  $region21: #{withbias_layernorm.1} parent=0 // pred_fallthru
    _
  %v20 = vld [vmem:[%s0] sm:$0xff]
  %v21 = vld [vmem:[%s0 + $0x8] sm:$0xff]
  %v22 = vld [vmem:[%s0 + $0x10] sm:$0xff]
  %v23 = vld [vmem:[%s0 + $0x18] sm:$0xff]
  %v24 = vld [vmem:[%s0 + $0x20] sm:$0xff]
  %v25 = vld [vmem:[%s0 + $0x28] sm:$0xff]
  %v26 = vld [vmem:[%s0 + $0x30] sm:$0xff]
  %v27 = vld [vmem:[%s0 + $0x38] sm:$0xff]
  %v28 = vld [vmem:[%s0 + $0x40] sm:$0xff]
  %v29 = vld [vmem:[%s0 + $0x48] sm:$0xff]
  %v30 = vld [vmem:[%s0 + $0x50] sm:$0xff]
  %v31 = vld [vmem:[%s0 + $0x58] sm:$0xff]
  %v32 = vld [vmem:[%s0 + $0x60] sm:$0xff]
  %v33 = vld [vmem:[%s0 + $0x68] sm:$0xff]
  %v34 = vld [vmem:[%s0 + $0x70] sm:$0xff]
  %v35 = vld [vmem:[%s0 + $0x78] sm:$0xff]
  %v36 = vld [vmem:[%s3] sm:$0xff]
  %v37 = vld [vmem:[%s3 + $0x8] sm:$0xff]
  %v38 = vld [vmem:[%s3 + $0x10] sm:$0xff]
  %v39 = vld [vmem:[%s3 + $0x18] sm:$0xff]
  %v40 = vld [vmem:[%s3 + $0x20] sm:$0xff]
  %v41 = vld [vmem:[%s3 + $0x28] sm:$0xff]
  %v42 = vld [vmem:[%s3 + $0x30] sm:$0xff]
  %v43 = vld [vmem:[%s3 + $0x38] sm:$0xff]
  %v44 = vld [vmem:[%s3 + $0x40] sm:$0xff]
  %v45 = vld [vmem:[%s3 + $0x48] sm:$0xff]
  %v46 = vld [vmem:[%s3 + $0x50] sm:$0xff]
  %v47 = vld [vmem:[%s3 + $0x58] sm:$0xff]
  %v48 = vld [vmem:[%s3 + $0x60] sm:$0xff]
  %v49 = vld [vmem:[%s3 + $0x68] sm:$0xff]
  %v50 = vld [vmem:[%s3 + $0x70] sm:$0xff]
  %v51 = vld [vmem:[%s3 + $0x78] sm:$0xff]
  %v52 = vld [vmem:[%s3 + $0x80] sm:$0xff]
  %v53 = vld [vmem:[%s3 + $0x88] sm:$0xff]
  %v54 = vld [vmem:[%s3 + $0x90] sm:$0xff]
  %v55 = vld [vmem:[%s3 + $0x98] sm:$0xff]
  %v56 = vld [vmem:[%s3 + $0xa0] sm:$0xff]
  %v57 = vld [vmem:[%s3 + $0xa8] sm:$0xff]
  %v58 = vld [vmem:[%s3 + $0xb0] sm:$0xff]
  %v59 = vld [vmem:[%s3 + $0xb8] sm:$0xff]
  %v60 = vld [vmem:[%s3 + $0xc0] sm:$0xff]
  %v61 = vld [vmem:[%s3 + $0xc8] sm:$0xff]
  %v62 = vld [vmem:[%s3 + $0xd0] sm:$0xff]
  %v63 = vld [vmem:[%s3 + $0xd8] sm:$0xff]
  %v64 = vld [vmem:[%s3 + $0xe0] sm:$0xff]
  %v65 = vld [vmem:[%s3 + $0xe8] sm:$0xff]
  %v66 = vld [vmem:[%s3 + $0xf0] sm:$0xff]
  %v67 = vld [vmem:[%s3 + $0xf8] sm:$0xff]
  %v68 = vld [vmem:[%s3 + $0x100] sm:$0xff]
  %v69 = vld [vmem:[%s3 + $0x108] sm:$0xff]
  %v70 = vld [vmem:[%s3 + $0x110] sm:$0xff]
  %v71 = vld [vmem:[%s3 + $0x118] sm:$0xff]
  %v72 = vld [vmem:[%s3 + $0x120] sm:$0xff]
  %v73 = vld [vmem:[%s3 + $0x128] sm:$0xff]
  %v74 = vld [vmem:[%s3 + $0x130] sm:$0xff]
  %v75 = vld [vmem:[%s3 + $0x138] sm:$0xff]
  %v76 = vld [vmem:[%s3 + $0x140] sm:$0xff]
  %v77 = vld [vmem:[%s3 + $0x148] sm:$0xff]
  %v78 = vld [vmem:[%s3 + $0x150] sm:$0xff]
  %v79 = vld [vmem:[%s3 + $0x158] sm:$0xff]
  %v80 = vld [vmem:[%s3 + $0x160] sm:$0xff]
  %v81 = vld [vmem:[%s3 + $0x168] sm:$0xff]
  %v82 = vld [vmem:[%s3 + $0x170] sm:$0xff]
  %v83 = vld [vmem:[%s3 + $0x178] sm:$0xff]
  %v84 = vld [vmem:[%s3 + $0x180] sm:$0xff]
  %v85 = vld [vmem:[%s3 + $0x188] sm:$0xff]
  %v86 = vld [vmem:[%s3 + $0x190] sm:$0xff]
  %v87 = vld [vmem:[%s3 + $0x198] sm:$0xff]
  %v88 = vld [vmem:[%s3 + $0x1a0] sm:$0xff]
  %v89 = vld [vmem:[%s3 + $0x1a8] sm:$0xff]
  %v90 = vld [vmem:[%s3 + $0x1b0] sm:$0xff]
  %v91 = vld [vmem:[%s3 + $0x1b8] sm:$0xff]
  %v92 = vld [vmem:[%s3 + $0x1c0] sm:$0xff]
  %v93 = vld [vmem:[%s3 + $0x1c8] sm:$0xff]
  %v94 = vld [vmem:[%s3 + $0x1d0] sm:$0xff]
  %v95 = vld [vmem:[%s3 + $0x1d8] sm:$0xff]
  %v96 = vld [vmem:[%s3 + $0x1e0] sm:$0xff]
  %v97 = vld [vmem:[%s3 + $0x1e8] sm:$0xff]
  %v98 = vld [vmem:[%s3 + $0x1f0] sm:$0xff]
  %v99 = vld [vmem:[%s3 + $0x1f8] sm:$0xff]
  %v100 = vld [vmem:[%s4] sm:$0xff]
  %v101 = vld [vmem:[%s4 + $0x8] sm:$0xff]
  %v102 = vld [vmem:[%s4 + $0x10] sm:$0xff]
  %v103 = vld [vmem:[%s4 + $0x18] sm:$0xff]
  %v104 = vld [vmem:[%s4 + $0x20] sm:$0xff]
  %v105 = vld [vmem:[%s4 + $0x28] sm:$0xff]
  %v106 = vld [vmem:[%s4 + $0x30] sm:$0xff]
  %v107 = vld [vmem:[%s4 + $0x38] sm:$0xff]
  %108 = vmatprep.subr.mxu0 0.0
  %v109 = vand.u32 %v36, 4294901760
  %110 = vmatpush1.msra.mxu0 %v109
  %111 = vmatprep.subr.mxu0 0.0
  %v112 = vand.u32 %v37, 4294901760
  %113 = vmatpush1.msra.mxu0 %v112
  %114 = vmatprep.subr.mxu0 0.0
  %v115 = vand.u32 %v38, 4294901760
  %116 = vmatpush1.msra.mxu0 %v115
  %117 = vmatprep.subr.mxu0 0.0
  %v118 = vand.u32 %v39, 4294901760
  %119 = vmatpush1.msra.mxu0 %v118
  %120 = vmatprep.subr.mxu0 0.0
  %v121 = vand.u32 %v40, 4294901760
  %122 = vmatpush1.msra.mxu0 %v121
  %123 = vmatprep.subr.mxu0 0.0
  %v124 = vand.u32 %v41, 4294901760
  %125 = vmatpush1.msra.mxu0 %v124
  %126 = vmatprep.subr.mxu0 0.0
  %v127 = vand.u32 %v42, 4294901760
  %128 = vmatpush1.msra.mxu0 %v127
  %129 = vmatprep.subr.mxu0 0.0
  %v130 = vand.u32 %v43, 4294901760
  %131 = vmatpush1.msra.mxu0 %v130
  %132 = vmatprep.subr.mxu0 0.0
  %v133 = vand.u32 %v44, 4294901760
  %134 = vmatpush1.msra.mxu0 %v133
  %135 = vmatprep.subr.mxu0 0.0
  %v136 = vand.u32 %v45, 4294901760
  %137 = vmatpush1.msra.mxu0 %v136
  %138 = vmatprep.subr.mxu0 0.0
  %v139 = vand.u32 %v46, 4294901760
  %140 = vmatpush1.msra.mxu0 %v139
  %141 = vmatprep.subr.mxu0 0.0
  %v142 = vand.u32 %v47, 4294901760
  %143 = vmatpush1.msra.mxu0 %v142
  %144 = vmatprep.subr.mxu0 0.0
  %v145 = vand.u32 %v48, 4294901760
  %146 = vmatpush1.msra.mxu0 %v145
  %147 = vmatprep.subr.mxu0 0.0
  %v148 = vand.u32 %v49, 4294901760
  %149 = vmatpush1.msra.mxu0 %v148
  %150 = vmatprep.subr.mxu0 0.0
  %v151 = vand.u32 %v50, 4294901760
  %152 = vmatpush1.msra.mxu0 %v151
  %153 = vmatprep.subr.mxu0 0.0
  %v154 = vand.u32 %v51, 4294901760
  %155 = vmatpush1.msra.mxu0 %v154
  %156 = vmatprep.subr.mxu0 0.0
  %v157 = vand.u32 %v52, 4294901760
  %158 = vmatpush1.msra.mxu0 %v157
  %159 = vmatprep.subr.mxu0 0.0
  %v160 = vand.u32 %v53, 4294901760
  %161 = vmatpush1.msra.mxu0 %v160
  %162 = vmatprep.subr.mxu0 0.0
  %v163 = vand.u32 %v54, 4294901760
  %164 = vmatpush1.msra.mxu0 %v163
  %165 = vmatprep.subr.mxu0 0.0
  %v166 = vand.u32 %v55, 4294901760
  %167 = vmatpush1.msra.mxu0 %v166
  %168 = vmatprep.subr.mxu0 0.0
  %v169 = vand.u32 %v56, 4294901760
  %170 = vmatpush1.msra.mxu0 %v169
  %171 = vmatprep.subr.mxu0 0.0
  %v172 = vand.u32 %v57, 4294901760
  %173 = vmatpush1.msra.mxu0 %v172
  %174 = vmatprep.subr.mxu0 0.0
  %v175 = vand.u32 %v58, 4294901760
  %176 = vmatpush1.msra.mxu0 %v175
  %177 = vmatprep.subr.mxu0 0.0
  %v178 = vand.u32 %v59, 4294901760
  %179 = vmatpush1.msra.mxu0 %v178
  %180 = vmatprep.subr.mxu0 0.0
  %v181 = vand.u32 %v60, 4294901760
  %182 = vmatpush1.msra.mxu0 %v181
  %183 = vmatprep.subr.mxu0 0.0
  %v184 = vand.u32 %v61, 4294901760
  %185 = vmatpush1.msra.mxu0 %v184
  %186 = vmatprep.subr.mxu0 0.0
  %v187 = vand.u32 %v62, 4294901760
  %188 = vmatpush1.msra.mxu0 %v187
  %189 = vmatprep.subr.mxu0 0.0
  %v190 = vand.u32 %v63, 4294901760
  %191 = vmatpush1.msra.mxu0 %v190
  %192 = vmatprep.subr.mxu0 0.0
  %v193 = vand.u32 %v64, 4294901760
  %194 = vmatpush1.msra.mxu0 %v193
  %195 = vmatprep.subr.mxu0 0.0
  %v196 = vand.u32 %v65, 4294901760
  %197 = vmatpush1.msra.mxu0 %v196
  %198 = vmatprep.subr.mxu0 0.0
  %v199 = vand.u32 %v66, 4294901760
  %200 = vmatpush1.msra.mxu0 %v199
  %201 = vmatprep.subr.mxu0 0.0
  %v202 = vand.u32 %v67, 4294901760
  %203 = vmatpush1.msra.mxu0 %v202
  %v204 = vand.u32 %v21, 4294901760
  %v205 = vsub.f32 %v21, %v204
  %v206 = vand.u32 %v205, 4294901760
  %v207 = vsub.f32 %v205, %v206
  %v208 = vand.u32 %v207, 4294901760
  %209 = vmatprep.mubr.f32.mxu0 %v208
  %v210 = vand.u32 %v20, 4294901760
  %v211 = vsub.f32 %v20, %v210
  %v212 = vand.u32 %v211, 4294901760
  %v213 = vsub.f32 %v211, %v212
  %v214 = vand.u32 %v213, 4294901760
  %215 = vmatmul.mubr.f32.gmra.mrb[0].mxu0 %v214
  %v216 = vpop.f32.mrb[0].mxu0
  %v217 = vadd.f32 0.0, %v216
  %v218 = vpop.f32.mrb[0].mxu0
  %v219 = vand.u32 %v25, 4294901760
  %v220 = vsub.f32 %v25, %v219
  %v221 = vand.u32 %v220, 4294901760
  %v222 = vsub.f32 %v220, %v221
  %v223 = vand.u32 %v222, 4294901760
  %224 = vmatprep.mubr.f32.mxu0 %v223
  %v225 = vand.u32 %v24, 4294901760
  %v226 = vsub.f32 %v24, %v225
  %v227 = vand.u32 %v226, 4294901760
  %v228 = vsub.f32 %v226, %v227
  %v229 = vand.u32 %v228, 4294901760
  %230 = vmatmul.mubr.f32.gmra.mrb[0].mxu0 %v229
  %v231 = vpop.f32.mrb[0].mxu0
  %v232 = vadd.f32 0.0, %v231
  %v233 = vpop.f32.mrb[0].mxu0
  %v234 = vand.u32 %v29, 4294901760
  %v235 = vsub.f32 %v29, %v234
  %v236 = vand.u32 %v235, 4294901760
  %v237 = vsub.f32 %v235, %v236
  %v238 = vand.u32 %v237, 4294901760
  %239 = vmatprep.mubr.f32.mxu0 %v238
  %v240 = vand.u32 %v28, 4294901760
  %v241 = vsub.f32 %v28, %v240
  %v242 = vand.u32 %v241, 4294901760
  %v243 = vsub.f32 %v241, %v242
  %v244 = vand.u32 %v243, 4294901760
  %245 = vmatmul.mubr.f32.gmra.mrb[0].mxu0 %v244
  %v246 = vpop.f32.mrb[0].mxu0
  %v247 = vadd.f32 0.0, %v246
  %v248 = vpop.f32.mrb[0].mxu0
  %v249 = vand.u32 %v33, 4294901760
  %v250 = vsub.f32 %v33, %v249
  %v251 = vand.u32 %v250, 4294901760
  %v252 = vsub.f32 %v250, %v251
  %v253 = vand.u32 %v252, 4294901760
  %254 = vmatprep.mubr.f32.mxu0 %v253
  %v255 = vand.u32 %v32, 4294901760
  %v256 = vsub.f32 %v32, %v255
  %v257 = vand.u32 %v256, 4294901760
  %v258 = vsub.f32 %v256, %v257
  %v259 = vand.u32 %v258, 4294901760
  %260 = vmatmul.mubr.f32.gmra.mrb[0].mxu0 %v259
  %v261 = vpop.f32.mrb[0].mxu0
  %v262 = vadd.f32 0.0, %v261
  %v263 = vpop.f32.mrb[0].mxu0
  %264 = vdwg.mxu0
  %265 = vmatprep.subr.mxu0 0.0
  %v266 = vand.u32 %v36, 4294901760
  %v267 = vsub.f32 %v36, %v266
  %v268 = vand.u32 %v267, 4294901760
  %v269 = vsub.f32 %v267, %v268
  %v270 = vand.u32 %v269, 4294901760
  %271 = vmatpush1.msra.mxu0 %v270
  %272 = vmatprep.subr.mxu0 0.0
  %v273 = vand.u32 %v37, 4294901760
  %v274 = vsub.f32 %v37, %v273
  %v275 = vand.u32 %v274, 4294901760
  %v276 = vsub.f32 %v274, %v275
  %v277 = vand.u32 %v276, 4294901760
  %278 = vmatpush1.msra.mxu0 %v277
  %279 = vmatprep.subr.mxu0 0.0
  %v280 = vand.u32 %v38, 4294901760
  %v281 = vsub.f32 %v38, %v280
  %v282 = vand.u32 %v281, 4294901760
  %v283 = vsub.f32 %v281, %v282
  %v284 = vand.u32 %v283, 4294901760
  %285 = vmatpush1.msra.mxu0 %v284
  %286 = vmatprep.subr.mxu0 0.0
  %v287 = vand.u32 %v39, 4294901760
  %v288 = vsub.f32 %v39, %v287
  %v289 = vand.u32 %v288, 4294901760
  %v290 = vsub.f32 %v288, %v289
  %v291 = vand.u32 %v290, 4294901760
  %292 = vmatpush1.msra.mxu0 %v291
  %293 = vmatprep.subr.mxu0 0.0
  %v294 = vand.u32 %v40, 4294901760
  %v295 = vsub.f32 %v40, %v294
  %v296 = vand.u32 %v295, 4294901760
  %v297 = vsub.f32 %v295, %v296
  %v298 = vand.u32 %v297, 4294901760
  %299 = vmatpush1.msra.mxu0 %v298
  %300 = vmatprep.subr.mxu0 0.0
  %v301 = vand.u32 %v41, 4294901760
  %v302 = vsub.f32 %v41, %v301
  %v303 = vand.u32 %v302, 4294901760
  %v304 = vsub.f32 %v302, %v303
  %v305 = vand.u32 %v304, 4294901760
  %306 = vmatpush1.msra.mxu0 %v305
  %307 = vmatprep.subr.mxu0 0.0
  %v308 = vand.u32 %v42, 4294901760
  %v309 = vsub.f32 %v42, %v308
  %v310 = vand.u32 %v309, 4294901760
  %v311 = vsub.f32 %v309, %v310
  %v312 = vand.u32 %v311, 4294901760
  %313 = vmatpush1.msra.mxu0 %v312
  %314 = vmatprep.subr.mxu0 0.0
  %v315 = vand.u32 %v43, 4294901760
  %v316 = vsub.f32 %v43, %v315
  %v317 = vand.u32 %v316, 4294901760
  %v318 = vsub.f32 %v316, %v317
  %v319 = vand.u32 %v318, 4294901760
  %320 = vmatpush1.msra.mxu0 %v319
  %321 = vmatprep.subr.mxu0 0.0
  %v322 = vand.u32 %v44, 4294901760
  %v323 = vsub.f32 %v44, %v322
  %v324 = vand.u32 %v323, 4294901760
  %v325 = vsub.f32 %v323, %v324
  %v326 = vand.u32 %v325, 4294901760
  %327 = vmatpush1.msra.mxu0 %v326
  %328 = vmatprep.subr.mxu0 0.0
  %v329 = vand.u32 %v45, 4294901760
  %v330 = vsub.f32 %v45, %v329
  %v331 = vand.u32 %v330, 4294901760
  %v332 = vsub.f32 %v330, %v331
  %v333 = vand.u32 %v332, 4294901760
  %334 = vmatpush1.msra.mxu0 %v333
  %335 = vmatprep.subr.mxu0 0.0
  %v336 = vand.u32 %v46, 4294901760
  %v337 = vsub.f32 %v46, %v336
  %v338 = vand.u32 %v337, 4294901760
  %v339 = vsub.f32 %v337, %v338
  %v340 = vand.u32 %v339, 4294901760
  %341 = vmatpush1.msra.mxu0 %v340
  %342 = vmatprep.subr.mxu0 0.0
  %v343 = vand.u32 %v47, 4294901760
  %v344 = vsub.f32 %v47, %v343
  %v345 = vand.u32 %v344, 4294901760
  %v346 = vsub.f32 %v344, %v345
  %v347 = vand.u32 %v346, 4294901760
  %348 = vmatpush1.msra.mxu0 %v347
  %349 = vmatprep.subr.mxu0 0.0
  %v350 = vand.u32 %v48, 4294901760
  %v351 = vsub.f32 %v48, %v350
  %v352 = vand.u32 %v351, 4294901760
  %v353 = vsub.f32 %v351, %v352
  %v354 = vand.u32 %v353, 4294901760
  %355 = vmatpush1.msra.mxu0 %v354
  %356 = vmatprep.subr.mxu0 0.0
  %v357 = vand.u32 %v49, 4294901760
  %v358 = vsub.f32 %v49, %v357
  %v359 = vand.u32 %v358, 4294901760
  %v360 = vsub.f32 %v358, %v359
  %v361 = vand.u32 %v360, 4294901760
  %362 = vmatpush1.msra.mxu0 %v361
  %363 = vmatprep.subr.mxu0 0.0
  %v364 = vand.u32 %v50, 4294901760
  %v365 = vsub.f32 %v50, %v364
  %v366 = vand.u32 %v365, 4294901760
  %v367 = vsub.f32 %v365, %v366
  %v368 = vand.u32 %v367, 4294901760
  %369 = vmatpush1.msra.mxu0 %v368
  %370 = vmatprep.subr.mxu0 0.0
  %v371 = vand.u32 %v51, 4294901760
  %v372 = vsub.f32 %v51, %v371
  %v373 = vand.u32 %v372, 4294901760
  %v374 = vsub.f32 %v372, %v373
  %v375 = vand.u32 %v374, 4294901760
  %376 = vmatpush1.msra.mxu0 %v375
  %377 = vmatprep.subr.mxu0 0.0
  %v378 = vand.u32 %v52, 4294901760
  %v379 = vsub.f32 %v52, %v378
  %v380 = vand.u32 %v379, 4294901760
  %v381 = vsub.f32 %v379, %v380
  %v382 = vand.u32 %v381, 4294901760
  %383 = vmatpush1.msra.mxu0 %v382
  %384 = vmatprep.subr.mxu0 0.0
  %v385 = vand.u32 %v53, 4294901760
  %v386 = vsub.f32 %v53, %v385
  %v387 = vand.u32 %v386, 4294901760
  %v388 = vsub.f32 %v386, %v387
  %v389 = vand.u32 %v388, 4294901760
  %390 = vmatpush1.msra.mxu0 %v389
  %391 = vmatprep.subr.mxu0 0.0
  %v392 = vand.u32 %v54, 4294901760
  %v393 = vsub.f32 %v54, %v392
  %v394 = vand.u32 %v393, 4294901760
  %v395 = vsub.f32 %v393, %v394
  %v396 = vand.u32 %v395, 4294901760
  %397 = vmatpush1.msra.mxu0 %v396
  %398 = vmatprep.subr.mxu0 0.0
  %v399 = vand.u32 %v55, 4294901760
  %v400 = vsub.f32 %v55, %v399
  %v401 = vand.u32 %v400, 4294901760
  %v402 = vsub.f32 %v400, %v401
  %v403 = vand.u32 %v402, 4294901760
  %404 = vmatpush1.msra.mxu0 %v403
  %405 = vmatprep.subr.mxu0 0.0
  %v406 = vand.u32 %v56, 4294901760
  %v407 = vsub.f32 %v56, %v406
  %v408 = vand.u32 %v407, 4294901760
  %v409 = vsub.f32 %v407, %v408
  %v410 = vand.u32 %v409, 4294901760
  %411 = vmatpush1.msra.mxu0 %v410
  %412 = vmatprep.subr.mxu0 0.0
  %v413 = vand.u32 %v57, 4294901760
  %v414 = vsub.f32 %v57, %v413
  %v415 = vand.u32 %v414, 4294901760
  %v416 = vsub.f32 %v414, %v415
  %v417 = vand.u32 %v416, 4294901760
  %418 = vmatpush1.msra.mxu0 %v417
  %419 = vmatprep.subr.mxu0 0.0
  %v420 = vand.u32 %v58, 4294901760
  %v421 = vsub.f32 %v58, %v420
  %v422 = vand.u32 %v421, 4294901760
  %v423 = vsub.f32 %v421, %v422
  %v424 = vand.u32 %v423, 4294901760
  %425 = vmatpush1.msra.mxu0 %v424
  %426 = vmatprep.subr.mxu0 0.0
  %v427 = vand.u32 %v59, 4294901760
  %v428 = vsub.f32 %v59, %v427
  %v429 = vand.u32 %v428, 4294901760
  %v430 = vsub.f32 %v428, %v429
  %v431 = vand.u32 %v430, 4294901760
  %432 = vmatpush1.msra.mxu0 %v431
  %433 = vmatprep.subr.mxu0 0.0
  %v434 = vand.u32 %v60, 4294901760
  %v435 = vsub.f32 %v60, %v434
  %v436 = vand.u32 %v435, 4294901760
  %v437 = vsub.f32 %v435, %v436
  %v438 = vand.u32 %v437, 4294901760
  %439 = vmatpush1.msra.mxu0 %v438
  %440 = vmatprep.subr.mxu0 0.0
  %v441 = vand.u32 %v61, 4294901760
  %v442 = vsub.f32 %v61, %v441
  %v443 = vand.u32 %v442, 4294901760
  %v444 = vsub.f32 %v442, %v443
  %v445 = vand.u32 %v444, 4294901760
  %446 = vmatpush1.msra.mxu0 %v445
  %447 = vmatprep.subr.mxu0 0.0
  %v448 = vand.u32 %v62, 4294901760
  %v449 = vsub.f32 %v62, %v448
  %v450 = vand.u32 %v449, 4294901760
  %v451 = vsub.f32 %v449, %v450
  %v452 = vand.u32 %v451, 4294901760
  %453 = vmatpush1.msra.mxu0 %v452
  %454 = vmatprep.subr.mxu0 0.0
  %v455 = vand.u32 %v63, 4294901760
  %v456 = vsub.f32 %v63, %v455
  %v457 = vand.u32 %v456, 4294901760
  %v458 = vsub.f32 %v456, %v457
  %v459 = vand.u32 %v458, 4294901760
  %460 = vmatpush1.msra.mxu0 %v459
  %461 = vmatprep.subr.mxu0 0.0
  %v462 = vand.u32 %v64, 4294901760
  %v463 = vsub.f32 %v64, %v462
  %v464 = vand.u32 %v463, 4294901760
  %v465 = vsub.f32 %v463, %v464
  %v466 = vand.u32 %v465, 4294901760
  %467 = vmatpush1.msra.mxu0 %v466
  %468 = vmatprep.subr.mxu0 0.0
  %v469 = vand.u32 %v65, 4294901760
  %v470 = vsub.f32 %v65, %v469
  %v471 = vand.u32 %v470, 4294901760
  %v472 = vsub.f32 %v470, %v471
  %v473 = vand.u32 %v472, 4294901760
  %474 = vmatpush1.msra.mxu0 %v473
  %475 = vmatprep.subr.mxu0 0.0
  %v476 = vand.u32 %v66, 4294901760
  %v477 = vsub.f32 %v66, %v476
  %v478 = vand.u32 %v477, 4294901760
  %v479 = vsub.f32 %v477, %v478
  %v480 = vand.u32 %v479, 4294901760
  %481 = vmatpush1.msra.mxu0 %v480
  %482 = vmatprep.subr.mxu0 0.0
  %v483 = vand.u32 %v67, 4294901760
  %v484 = vsub.f32 %v67, %v483
  %v485 = vand.u32 %v484, 4294901760
  %v486 = vsub.f32 %v484, %v485
  %v487 = vand.u32 %v486, 4294901760
  %488 = vmatpush1.msra.mxu0 %v487
  %v489 = vand.u32 %v21, 4294901760
  %490 = vmatprep.mubr.f32.mxu0 %v489
  %v491 = vand.u32 %v20, 4294901760
  %492 = vmatmul.mubr.f32.gmra.mrb[0].mxu0 %v491
  %v493 = vpop.f32.mrb[0].mxu0
  %v494 = vadd.f32 %v217, %v493
  %v495 = vpop.f32.mrb[0].mxu0
  %v496 = vand.u32 %v25, 4294901760
  %497 = vmatprep.mubr.f32.mxu0 %v496
  %v498 = vand.u32 %v24, 4294901760
  %499 = vmatmul.mubr.f32.gmra.mrb[0].mxu0 %v498
  %v500 = vpop.f32.mrb[0].mxu0
  %v501 = vadd.f32 %v232, %v500
  %v502 = vpop.f32.mrb[0].mxu0
  %v503 = vand.u32 %v29, 4294901760
  %504 = vmatprep.mubr.f32.mxu0 %v503
  %v505 = vand.u32 %v28, 4294901760
  %506 = vmatmul.mubr.f32.gmra.mrb[0].mxu0 %v505
  %v507 = vpop.f32.mrb[0].mxu0
  %v508 = vadd.f32 %v247, %v507
  %v509 = vpop.f32.mrb[0].mxu0
  %v510 = vand.u32 %v33, 4294901760
  %511 = vmatprep.mubr.f32.mxu0 %v510
  %v512 = vand.u32 %v32, 4294901760
  %513 = vmatmul.mubr.f32.gmra.mrb[0].mxu0 %v512
  %v514 = vpop.f32.mrb[0].mxu0
  %v515 = vadd.f32 %v262, %v514
  %v516 = vpop.f32.mrb[0].mxu0
  %517 = vdwg.mxu0
  %518 = vmatprep.subr.mxu0 0.0
  %v519 = vand.u32 %v36, 4294901760
  %v520 = vsub.f32 %v36, %v519
  %521 = vmatpush1.msra.mxu0 %v520
  %522 = vmatprep.subr.mxu0 0.0
  %v523 = vand.u32 %v37, 4294901760
  %v524 = vsub.f32 %v37, %v523
  %525 = vmatpush1.msra.mxu0 %v524
  %526 = vmatprep.subr.mxu0 0.0
  %v527 = vand.u32 %v38, 4294901760
  %v528 = vsub.f32 %v38, %v527
  %529 = vmatpush1.msra.mxu0 %v528
  %530 = vmatprep.subr.mxu0 0.0
  %v531 = vand.u32 %v39, 4294901760
  %v532 = vsub.f32 %v39, %v531
  %533 = vmatpush1.msra.mxu0 %v532
  %534 = vmatprep.subr.mxu0 0.0
  %v535 = vand.u32 %v40, 4294901760
  %v536 = vsub.f32 %v40, %v535
  %537 = vmatpush1.msra.mxu0 %v536
  %538 = vmatprep.subr.mxu0 0.0
  %v539 = vand.u32 %v41, 4294901760
  %v540 = vsub.f32 %v41, %v539
  %541 = vmatpush1.msra.mxu0 %v540
  %542 = vmatprep.subr.mxu0 0.0
  %v543 = vand.u32 %v42, 4294901760
  %v544 = vsub.f32 %v42, %v543
  %545 = vmatpush1.msra.mxu0 %v544
  %546 = vmatprep.subr.mxu0 0.0
  %v547 = vand.u32 %v43, 4294901760
  %v548 = vsub.f32 %v43, %v547
  %549 = vmatpush1.msra.mxu0 %v548
  %550 = vmatprep.subr.mxu0 0.0
  %v551 = vand.u32 %v44, 4294901760
  %v552 = vsub.f32 %v44, %v551
  %553 = vmatpush1.msra.mxu0 %v552
  %554 = vmatprep.subr.mxu0 0.0
  %v555 = vand.u32 %v45, 4294901760
  %v556 = vsub.f32 %v45, %v555
  %557 = vmatpush1.msra.mxu0 %v556
  %558 = vmatprep.subr.mxu0 0.0
  %v559 = vand.u32 %v46, 4294901760
  %v560 = vsub.f32 %v46, %v559
  %561 = vmatpush1.msra.mxu0 %v560
  %562 = vmatprep.subr.mxu0 0.0
  %v563 = vand.u32 %v47, 4294901760
  %v564 = vsub.f32 %v47, %v563
  %565 = vmatpush1.msra.mxu0 %v564
  %566 = vmatprep.subr.mxu0 0.0
  %v567 = vand.u32 %v48, 4294901760
  %v568 = vsub.f32 %v48, %v567
  %569 = vmatpush1.msra.mxu0 %v568
  %570 = vmatprep.subr.mxu0 0.0
  %v571 = vand.u32 %v49, 4294901760
  %v572 = vsub.f32 %v49, %v571
  %573 = vmatpush1.msra.mxu0 %v572
  %574 = vmatprep.subr.mxu0 0.0
  %v575 = vand.u32 %v50, 4294901760
  %v576 = vsub.f32 %v50, %v575
  %577 = vmatpush1.msra.mxu0 %v576
  %578 = vmatprep.subr.mxu0 0.0
  %v579 = vand.u32 %v51, 4294901760
  %v580 = vsub.f32 %v51, %v579
  %581 = vmatpush1.msra.mxu0 %v580
  %582 = vmatprep.subr.mxu0 0.0
  %v583 = vand.u32 %v52, 4294901760
  %v584 = vsub.f32 %v52, %v583
  %585 = vmatpush1.msra.mxu0 %v584
  %586 = vmatprep.subr.mxu0 0.0
  %v587 = vand.u32 %v53, 4294901760
  %v588 = vsub.f32 %v53, %v587
  %589 = vmatpush1.msra.mxu0 %v588
  %590 = vmatprep.subr.mxu0 0.0
  %v591 = vand.u32 %v54, 4294901760
  %v592 = vsub.f32 %v54, %v591
  %593 = vmatpush1.msra.mxu0 %v592
  %594 = vmatprep.subr.mxu0 0.0
  %v595 = vand.u32 %v55, 4294901760
  %v596 = vsub.f32 %v55, %v595
  %597 = vmatpush1.msra.mxu0 %v596
  %598 = vmatprep.subr.mxu0 0.0
  %v599 = vand.u32 %v56, 4294901760
  %v600 = vsub.f32 %v56, %v599
  %601 = vmatpush1.msra.mxu0 %v600
  %602 = vmatprep.subr.mxu0 0.0
  %v603 = vand.u32 %v57, 4294901760
  %v604 = vsub.f32 %v57, %v603
  %605 = vmatpush1.msra.mxu0 %v604
  %606 = vmatprep.subr.mxu0 0.0
  %v607 = vand.u32 %v58, 4294901760
  %v608 = vsub.f32 %v58, %v607
  %609 = vmatpush1.msra.mxu0 %v608
  %610 = vmatprep.subr.mxu0 0.0
  %v611 = vand.u32 %v59, 4294901760
  %v612 = vsub.f32 %v59, %v611
  %613 = vmatpush1.msra.mxu0 %v612
  %614 = vmatprep.subr.mxu0 0.0
  %v615 = vand.u32 %v60, 4294901760
  %v616 = vsub.f32 %v60, %v615
  %617 = vmatpush1.msra.mxu0 %v616
  %618 = vmatprep.subr.mxu0 0.0
  %v619 = vand.u32 %v61, 4294901760
  %v620 = vsub.f32 %v61, %v619
  %621 = vmatpush1.msra.mxu0 %v620
  %622 = vmatprep.subr.mxu0 0.0
  %v623 = vand.u32 %v62, 4294901760
  %v624 = vsub.f32 %v62, %v623
  %625 = vmatpush1.msra.mxu0 %v624
  %626 = vmatprep.subr.mxu0 0.0
  %v627 = vand.u32 %v63, 4294901760
  %v628 = vsub.f32 %v63, %v627
  %629 = vmatpush1.msra.mxu0 %v628
  %630 = vmatprep.subr.mxu0 0.0
  %v631 = vand.u32 %v64, 4294901760
  %v632 = vsub.f32 %v64, %v631
  %633 = vmatpush1.msra.mxu0 %v632
  %634 = vmatprep.subr.mxu0 0.0
  %v635 = vand.u32 %v65, 4294901760
  %v636 = vsub.f32 %v65, %v635
  %637 = vmatpush1.msra.mxu0 %v636
  %638 = vmatprep.subr.mxu0 0.0
  %v639 = vand.u32 %v66, 4294901760
  %v640 = vsub.f32 %v66, %v639
  %641 = vmatpush1.msra.mxu0 %v640
  %642 = vmatprep.subr.mxu0 0.0
  %v643 = vand.u32 %v67, 4294901760
  %v644 = vsub.f32 %v67, %v643
  %645 = vmatpush1.msra.mxu0 %v644
  %v646 = vand.u32 %v21, 4294901760
  %v647 = vsub.f32 %v21, %v646
  %648 = vmatprep.mubr.f32.mxu0 %v647
  %v649 = vand.u32 %v20, 4294901760
  %v650 = vsub.f32 %v20, %v649
  %651 = vmatmul.mubr.f32.gmra.mrb[0].mxu0 %v650
  %v652 = vpop.f32.mrb[0].mxu0
  %v653 = vadd.f32 %v494, %v652
  %v654 = vpop.f32.mrb[0].mxu0
  %v655 = vand.u32 %v25, 4294901760
  %v656 = vsub.f32 %v25, %v655
  %657 = vmatprep.mubr.f32.mxu0 %v656
  %v658 = vand.u32 %v24, 4294901760
  %v659 = vsub.f32 %v24, %v658
  %660 = vmatmul.mubr.f32.gmra.mrb[0].mxu0 %v659
  %v661 = vpop.f32.mrb[0].mxu0
  %v662 = vadd.f32 %v501, %v661
  %v663 = vpop.f32.mrb[0].mxu0
  %v664 = vand.u32 %v29, 4294901760
  %v665 = vsub.f32 %v29, %v664
  %666 = vmatprep.mubr.f32.mxu0 %v665
  %v667 = vand.u32 %v28, 4294901760
  %v668 = vsub.f32 %v28, %v667
  %669 = vmatmul.mubr.f32.gmra.mrb[0].mxu0 %v668
  %v670 = vpop.f32.mrb[0].mxu0
  %v671 = vadd.f32 %v508, %v670
  %v672 = vpop.f32.mrb[0].mxu0
  %v673 = vand.u32 %v33, 4294901760
  %v674 = vsub.f32 %v33, %v673
  %675 = vmatprep.mubr.f32.mxu0 %v674
  %v676 = vand.u32 %v32, 4294901760
  %v677 = vsub.f32 %v32, %v676
  %678 = vmatmul.mubr.f32.gmra.mrb[0].mxu0 %v677
  %v679 = vpop.f32.mrb[0].mxu0
  %v680 = vadd.f32 %v515, %v679
  %v681 = vpop.f32.mrb[0].mxu0
  %682 = vdwg.mxu0
  %683 = vmatprep.subr.mxu0 0.0
  %v684 = vand.u32 %v36, 4294901760
  %685 = vmatpush1.msra.mxu0 %v684
  %686 = vmatprep.subr.mxu0 0.0
  %v687 = vand.u32 %v37, 4294901760
  %688 = vmatpush1.msra.mxu0 %v687
  %689 = vmatprep.subr.mxu0 0.0
  %v690 = vand.u32 %v38, 4294901760
  %691 = vmatpush1.msra.mxu0 %v690
  %692 = vmatprep.subr.mxu0 0.0
  %v693 = vand.u32 %v39, 4294901760
  %694 = vmatpush1.msra.mxu0 %v693
  %695 = vmatprep.subr.mxu0 0.0
  %v696 = vand.u32 %v40, 4294901760
  %697 = vmatpush1.msra.mxu0 %v696
  %698 = vmatprep.subr.mxu0 0.0
  %v699 = vand.u32 %v41, 4294901760
  %700 = vmatpush1.msra.mxu0 %v699
  %701 = vmatprep.subr.mxu0 0.0
  %v702 = vand.u32 %v42, 4294901760
  %703 = vmatpush1.msra.mxu0 %v702
  %704 = vmatprep.subr.mxu0 0.0
  %v705 = vand.u32 %v43, 4294901760
  %706 = vmatpush1.msra.mxu0 %v705
  %707 = vmatprep.subr.mxu0 0.0
  %v708 = vand.u32 %v44, 4294901760
  %709 = vmatpush1.msra.mxu0 %v708
  %710 = vmatprep.subr.mxu0 0.0
  %v711 = vand.u32 %v45, 4294901760
  %712 = vmatpush1.msra.mxu0 %v711
  %713 = vmatprep.subr.mxu0 0.0
  %v714 = vand.u32 %v46, 4294901760
  %715 = vmatpush1.msra.mxu0 %v714
  %716 = vmatprep.subr.mxu0 0.0
  %v717 = vand.u32 %v47, 4294901760
  %718 = vmatpush1.msra.mxu0 %v717
  %719 = vmatprep.subr.mxu0 0.0
  %v720 = vand.u32 %v48, 4294901760
  %721 = vmatpush1.msra.mxu0 %v720
  %722 = vmatprep.subr.mxu0 0.0
  %v723 = vand.u32 %v49, 4294901760
  %724 = vmatpush1.msra.mxu0 %v723
  %725 = vmatprep.subr.mxu0 0.0
  %v726 = vand.u32 %v50, 4294901760
  %727 = vmatpush1.msra.mxu0 %v726
  %728 = vmatprep.subr.mxu0 0.0
  %v729 = vand.u32 %v51, 4294901760
  %730 = vmatpush1.msra.mxu0 %v729
  %731 = vmatprep.subr.mxu0 0.0
  %v732 = vand.u32 %v52, 4294901760
  %733 = vmatpush1.msra.mxu0 %v732
  %734 = vmatprep.subr.mxu0 0.0
  %v735 = vand.u32 %v53, 4294901760
  %736 = vmatpush1.msra.mxu0 %v735
  %737 = vmatprep.subr.mxu0 0.0
  %v738 = vand.u32 %v54, 4294901760
  %739 = vmatpush1.msra.mxu0 %v738
  %740 = vmatprep.subr.mxu0 0.0
  %v741 = vand.u32 %v55, 4294901760
  %742 = vmatpush1.msra.mxu0 %v741
  %743 = vmatprep.subr.mxu0 0.0
  %v744 = vand.u32 %v56, 4294901760
  %745 = vmatpush1.msra.mxu0 %v744
  %746 = vmatprep.subr.mxu0 0.0
  %v747 = vand.u32 %v57, 4294901760
  %748 = vmatpush1.msra.mxu0 %v747
  %749 = vmatprep.subr.mxu0 0.0
  %v750 = vand.u32 %v58, 4294901760
  %751 = vmatpush1.msra.mxu0 %v750
  %752 = vmatprep.subr.mxu0 0.0
  %v753 = vand.u32 %v59, 4294901760
  %754 = vmatpush1.msra.mxu0 %v753
  %755 = vmatprep.subr.mxu0 0.0
  %v756 = vand.u32 %v60, 4294901760
  %757 = vmatpush1.msra.mxu0 %v756
  %758 = vmatprep.subr.mxu0 0.0
  %v759 = vand.u32 %v61, 4294901760
  %760 = vmatpush1.msra.mxu0 %v759
  %761 = vmatprep.subr.mxu0 0.0
  %v762 = vand.u32 %v62, 4294901760
  %763 = vmatpush1.msra.mxu0 %v762
  %764 = vmatprep.subr.mxu0 0.0
  %v765 = vand.u32 %v63, 4294901760
  %766 = vmatpush1.msra.mxu0 %v765
  %767 = vmatprep.subr.mxu0 0.0
  %v768 = vand.u32 %v64, 4294901760
  %769 = vmatpush1.msra.mxu0 %v768
  %770 = vmatprep.subr.mxu0 0.0
  %v771 = vand.u32 %v65, 4294901760
  %772 = vmatpush1.msra.mxu0 %v771
  %773 = vmatprep.subr.mxu0 0.0
  %v774 = vand.u32 %v66, 4294901760
  %775 = vmatpush1.msra.mxu0 %v774
  %776 = vmatprep.subr.mxu0 0.0
  %v777 = vand.u32 %v67, 4294901760
  %778 = vmatpush1.msra.mxu0 %v777
  %v779 = vand.u32 %v21, 4294901760
  %v780 = vsub.f32 %v21, %v779
  %v781 = vand.u32 %v780, 4294901760
  %782 = vmatprep.mubr.f32.mxu0 %v781
  %v783 = vand.u32 %v20, 4294901760
  %v784 = vsub.f32 %v20, %v783
  %v785 = vand.u32 %v784, 4294901760
  %786 = vmatmul.mubr.f32.gmra.mrb[0].mxu0 %v785
  %v787 = vpop.f32.mrb[0].mxu0
  %v788 = vadd.f32 %v653, %v787
  %v789 = vpop.f32.mrb[0].mxu0
  %v790 = vand.u32 %v25, 4294901760
  %v791 = vsub.f32 %v25, %v790
  %v792 = vand.u32 %v791, 4294901760
  %793 = vmatprep.mubr.f32.mxu0 %v792
  %v794 = vand.u32 %v24, 4294901760
  %v795 = vsub.f32 %v24, %v794
  %v796 = vand.u32 %v795, 4294901760
  %797 = vmatmul.mubr.f32.gmra.mrb[0].mxu0 %v796
  %v798 = vpop.f32.mrb[0].mxu0
  %v799 = vadd.f32 %v662, %v798
  %v800 = vpop.f32.mrb[0].mxu0
  %v801 = vand.u32 %v29, 4294901760
  %v802 = vsub.f32 %v29, %v801
  %v803 = vand.u32 %v802, 4294901760
  %804 = vmatprep.mubr.f32.mxu0 %v803
  %v805 = vand.u32 %v28, 4294901760
  %v806 = vsub.f32 %v28, %v805
  %v807 = vand.u32 %v806, 4294901760
  %808 = vmatmul.mubr.f32.gmra.mrb[0].mxu0 %v807
  %v809 = vpop.f32.mrb[0].mxu0
  %v810 = vadd.f32 %v671, %v809
  %v811 = vpop.f32.mrb[0].mxu0
  %v812 = vand.u32 %v33, 4294901760
  %v813 = vsub.f32 %v33, %v812
  %v814 = vand.u32 %v813, 4294901760
  %815 = vmatprep.mubr.f32.mxu0 %v814
  %v816 = vand.u32 %v32, 4294901760
  %v817 = vsub.f32 %v32, %v816
  %v818 = vand.u32 %v817, 4294901760
  %819 = vmatmul.mubr.f32.gmra.mrb[0].mxu0 %v818
  %v820 = vpop.f32.mrb[0].mxu0
  %v821 = vadd.f32 %v680, %v820
  %v822 = vpop.f32.mrb[0].mxu0
  %823 = vdwg.mxu0
  %824 = vmatprep.subr.mxu0 0.0
  %v825 = vand.u32 %v36, 4294901760
  %v826 = vsub.f32 %v36, %v825
  %v827 = vand.u32 %v826, 4294901760
  %828 = vmatpush1.msra.mxu0 %v827
  %829 = vmatprep.subr.mxu0 0.0
  %v830 = vand.u32 %v37, 4294901760
  %v831 = vsub.f32 %v37, %v830
  %v832 = vand.u32 %v831, 4294901760
  %833 = vmatpush1.msra.mxu0 %v832
  %834 = vmatprep.subr.mxu0 0.0
  %v835 = vand.u32 %v38, 4294901760
  %v836 = vsub.f32 %v38, %v835
  %v837 = vand.u32 %v836, 4294901760
  %838 = vmatpush1.msra.mxu0 %v837
  %839 = vmatprep.subr.mxu0 0.0
  %v840 = vand.u32 %v39, 4294901760
  %v841 = vsub.f32 %v39, %v840
  %v842 = vand.u32 %v841, 4294901760
  %843 = vmatpush1.msra.mxu0 %v842
  %844 = vmatprep.subr.mxu0 0.0
  %v845 = vand.u32 %v40, 4294901760
  %v846 = vsub.f32 %v40, %v845
  %v847 = vand.u32 %v846, 4294901760
  %848 = vmatpush1.msra.mxu0 %v847
  %849 = vmatprep.subr.mxu0 0.0
  %v850 = vand.u32 %v41, 4294901760
  %v851 = vsub.f32 %v41, %v850
  %v852 = vand.u32 %v851, 4294901760
  %853 = vmatpush1.msra.mxu0 %v852
  %854 = vmatprep.subr.mxu0 0.0
  %v855 = vand.u32 %v42, 4294901760
  %v856 = vsub.f32 %v42, %v855
  %v857 = vand.u32 %v856, 4294901760
  %858 = vmatpush1.msra.mxu0 %v857
  %859 = vmatprep.subr.mxu0 0.0
  %v860 = vand.u32 %v43, 4294901760
  %v861 = vsub.f32 %v43, %v860
  %v862 = vand.u32 %v861, 4294901760
  %863 = vmatpush1.msra.mxu0 %v862
  %864 = vmatprep.subr.mxu0 0.0
  %v865 = vand.u32 %v44, 4294901760
  %v866 = vsub.f32 %v44, %v865
  %v867 = vand.u32 %v866, 4294901760
  %868 = vmatpush1.msra.mxu0 %v867
  %869 = vmatprep.subr.mxu0 0.0
  %v870 = vand.u32 %v45, 4294901760
  %v871 = vsub.f32 %v45, %v870
  %v872 = vand.u32 %v871, 4294901760
  %873 = vmatpush1.msra.mxu0 %v872
  %874 = vmatprep.subr.mxu0 0.0
  %v875 = vand.u32 %v46, 4294901760
  %v876 = vsub.f32 %v46, %v875
  %v877 = vand.u32 %v876, 4294901760
  %878 = vmatpush1.msra.mxu0 %v877
  %879 = vmatprep.subr.mxu0 0.0
  %v880 = vand.u32 %v47, 4294901760
  %v881 = vsub.f32 %v47, %v880
  %v882 = vand.u32 %v881, 4294901760
  %883 = vmatpush1.msra.mxu0 %v882
  %884 = vmatprep.subr.mxu0 0.0
  %v885 = vand.u32 %v48, 4294901760
  %v886 = vsub.f32 %v48, %v885
  %v887 = vand.u32 %v886, 4294901760
  %888 = vmatpush1.msra.mxu0 %v887
  %889 = vmatprep.subr.mxu0 0.0
  %v890 = vand.u32 %v49, 4294901760
  %v891 = vsub.f32 %v49, %v890
  %v892 = vand.u32 %v891, 4294901760
  %893 = vmatpush1.msra.mxu0 %v892
  %894 = vmatprep.subr.mxu0 0.0
  %v895 = vand.u32 %v50, 4294901760
  %v896 = vsub.f32 %v50, %v895
  %v897 = vand.u32 %v896, 4294901760
  %898 = vmatpush1.msra.mxu0 %v897
  %899 = vmatprep.subr.mxu0 0.0
  %v900 = vand.u32 %v51, 4294901760
  %v901 = vsub.f32 %v51, %v900
  %v902 = vand.u32 %v901, 4294901760
  %903 = vmatpush1.msra.mxu0 %v902
  %904 = vmatprep.subr.mxu0 0.0
  %v905 = vand.u32 %v52, 4294901760
  %v906 = vsub.f32 %v52, %v905
  %v907 = vand.u32 %v906, 4294901760
  %908 = vmatpush1.msra.mxu0 %v907
  %909 = vmatprep.subr.mxu0 0.0
  %v910 = vand.u32 %v53, 4294901760
  %v911 = vsub.f32 %v53, %v910
  %v912 = vand.u32 %v911, 4294901760
  %913 = vmatpush1.msra.mxu0 %v912
  %914 = vmatprep.subr.mxu0 0.0
  %v915 = vand.u32 %v54, 4294901760
  %v916 = vsub.f32 %v54, %v915
  %v917 = vand.u32 %v916, 4294901760
  %918 = vmatpush1.msra.mxu0 %v917
  %919 = vmatprep.subr.mxu0 0.0
  %v920 = vand.u32 %v55, 4294901760
  %v921 = vsub.f32 %v55, %v920
  %v922 = vand.u32 %v921, 4294901760
  %923 = vmatpush1.msra.mxu0 %v922
  %924 = vmatprep.subr.mxu0 0.0
  %v925 = vand.u32 %v56, 4294901760
  %v926 = vsub.f32 %v56, %v925
  %v927 = vand.u32 %v926, 4294901760
  %928 = vmatpush1.msra.mxu0 %v927
  %929 = vmatprep.subr.mxu0 0.0
  %v930 = vand.u32 %v57, 4294901760
  %v931 = vsub.f32 %v57, %v930
  %v932 = vand.u32 %v931, 4294901760
  %933 = vmatpush1.msra.mxu0 %v932
  %934 = vmatprep.subr.mxu0 0.0
  %v935 = vand.u32 %v58, 4294901760
  %v936 = vsub.f32 %v58, %v935
  %v937 = vand.u32 %v936, 4294901760
  %938 = vmatpush1.msra.mxu0 %v937
  %939 = vmatprep.subr.mxu0 0.0
  %v940 = vand.u32 %v59, 4294901760
  %v941 = vsub.f32 %v59, %v940
  %v942 = vand.u32 %v941, 4294901760
  %943 = vmatpush1.msra.mxu0 %v942
  %944 = vmatprep.subr.mxu0 0.0
  %v945 = vand.u32 %v60, 4294901760
  %v946 = vsub.f32 %v60, %v945
  %v947 = vand.u32 %v946, 4294901760
  %948 = vmatpush1.msra.mxu0 %v947
  %949 = vmatprep.subr.mxu0 0.0
  %v950 = vand.u32 %v61, 4294901760
  %v951 = vsub.f32 %v61, %v950
  %v952 = vand.u32 %v951, 4294901760
  %953 = vmatpush1.msra.mxu0 %v952
  %954 = vmatprep.subr.mxu0 0.0
  %v955 = vand.u32 %v62, 4294901760
  %v956 = vsub.f32 %v62, %v955
  %v957 = vand.u32 %v956, 4294901760
  %958 = vmatpush1.msra.mxu0 %v957
  %959 = vmatprep.subr.mxu0 0.0
  %v960 = vand.u32 %v63, 4294901760
  %v961 = vsub.f32 %v63, %v960
  %v962 = vand.u32 %v961, 4294901760
  %963 = vmatpush1.msra.mxu0 %v962
  %964 = vmatprep.subr.mxu0 0.0
  %v965 = vand.u32 %v64, 4294901760
  %v966 = vsub.f32 %v64, %v965
  %v967 = vand.u32 %v966, 4294901760
  %968 = vmatpush1.msra.mxu0 %v967
  %969 = vmatprep.subr.mxu0 0.0
  %v970 = vand.u32 %v65, 4294901760
  %v971 = vsub.f32 %v65, %v970
  %v972 = vand.u32 %v971, 4294901760
  %973 = vmatpush1.msra.mxu0 %v972
  %974 = vmatprep.subr.mxu0 0.0
  %v975 = vand.u32 %v66, 4294901760
  %v976 = vsub.f32 %v66, %v975
  %v977 = vand.u32 %v976, 4294901760
  %978 = vmatpush1.msra.mxu0 %v977
  %979 = vmatprep.subr.mxu0 0.0
  %v980 = vand.u32 %v67, 4294901760
  %v981 = vsub.f32 %v67, %v980
  %v982 = vand.u32 %v981, 4294901760
  %983 = vmatpush1.msra.mxu0 %v982
  %v984 = vand.u32 %v21, 4294901760
  %985 = vmatprep.mubr.f32.mxu0 %v984
  %v986 = vand.u32 %v20, 4294901760
  %987 = vmatmul.mubr.f32.gmra.mrb[0].mxu0 %v986
  %v988 = vpop.f32.mrb[0].mxu0
  %v989 = vadd.f32 %v788, %v988
  %v990 = vpop.f32.mrb[0].mxu0
  %v991 = vand.u32 %v25, 4294901760
  %992 = vmatprep.mubr.f32.mxu0 %v991
  %v993 = vand.u32 %v24, 4294901760
  %994 = vmatmul.mubr.f32.gmra.mrb[0].mxu0 %v993
  %v995 = vpop.f32.mrb[0].mxu0
  %v996 = vadd.f32 %v799, %v995
  %v997 = vpop.f32.mrb[0].mxu0
  %v998 = vand.u32 %v29, 4294901760
  %999 = vmatprep.mubr.f32.mxu0 %v998
  %v1000 = vand.u32 %v28, 4294901760
  %1001 = vmatmul.mubr.f32.gmra.mrb[0].mxu0 %v1000
  %v1002 = vpop.f32.mrb[0].mxu0
  %v1003 = vadd.f32 %v810, %v1002
  %v1004 = vpop.f32.mrb[0].mxu0
  %v1005 = vand.u32 %v33, 4294901760
  %1006 = vmatprep.mubr.f32.mxu0 %v1005
  %v1007 = vand.u32 %v32, 4294901760
  %1008 = vmatmul.mubr.f32.gmra.mrb[0].mxu0 %v1007
  %v1009 = vpop.f32.mrb[0].mxu0
  %v1010 = vadd.f32 %v821, %v1009
  %v1011 = vpop.f32.mrb[0].mxu0
  %1012 = vdwg.mxu0
  %1013 = vmatprep.subr.mxu0 0.0
  %v1014 = vand.u32 %v36, 4294901760
  %1015 = vmatpush1.msra.mxu0 %v1014
  %1016 = vmatprep.subr.mxu0 0.0
  %v1017 = vand.u32 %v37, 4294901760
  %1018 = vmatpush1.msra.mxu0 %v1017
  %1019 = vmatprep.subr.mxu0 0.0
  %v1020 = vand.u32 %v38, 4294901760
  %1021 = vmatpush1.msra.mxu0 %v1020
  %1022 = vmatprep.subr.mxu0 0.0
  %v1023 = vand.u32 %v39, 4294901760
  %1024 = vmatpush1.msra.mxu0 %v1023
  %1025 = vmatprep.subr.mxu0 0.0
  %v1026 = vand.u32 %v40, 4294901760
  %1027 = vmatpush1.msra.mxu0 %v1026
  %1028 = vmatprep.subr.mxu0 0.0
  %v1029 = vand.u32 %v41, 4294901760
  %1030 = vmatpush1.msra.mxu0 %v1029
  %1031 = vmatprep.subr.mxu0 0.0
  %v1032 = vand.u32 %v42, 4294901760
  %1033 = vmatpush1.msra.mxu0 %v1032
  %1034 = vmatprep.subr.mxu0 0.0
  %v1035 = vand.u32 %v43, 4294901760
  %1036 = vmatpush1.msra.mxu0 %v1035
  %1037 = vmatprep.subr.mxu0 0.0
  %v1038 = vand.u32 %v44, 4294901760
  %1039 = vmatpush1.msra.mxu0 %v1038
  %1040 = vmatprep.subr.mxu0 0.0
  %v1041 = vand.u32 %v45, 4294901760
  %1042 = vmatpush1.msra.mxu0 %v1041
  %1043 = vmatprep.subr.mxu0 0.0
  %v1044 = vand.u32 %v46, 4294901760
  %1045 = vmatpush1.msra.mxu0 %v1044
  %1046 = vmatprep.subr.mxu0 0.0
  %v1047 = vand.u32 %v47, 4294901760
  %1048 = vmatpush1.msra.mxu0 %v1047
  %1049 = vmatprep.subr.mxu0 0.0
  %v1050 = vand.u32 %v48, 4294901760
  %1051 = vmatpush1.msra.mxu0 %v1050
  %1052 = vmatprep.subr.mxu0 0.0
  %v1053 = vand.u32 %v49, 4294901760
  %1054 = vmatpush1.msra.mxu0 %v1053
  %1055 = vmatprep.subr.mxu0 0.0
  %v1056 = vand.u32 %v50, 4294901760
  %1057 = vmatpush1.msra.mxu0 %v1056
  %1058 = vmatprep.subr.mxu0 0.0
  %v1059 = vand.u32 %v51, 4294901760
  %1060 = vmatpush1.msra.mxu0 %v1059
  %1061 = vmatprep.subr.mxu0 0.0
  %v1062 = vand.u32 %v52, 4294901760
  %1063 = vmatpush1.msra.mxu0 %v1062
  %1064 = vmatprep.subr.mxu0 0.0
  %v1065 = vand.u32 %v53, 4294901760
  %1066 = vmatpush1.msra.mxu0 %v1065
  %1067 = vmatprep.subr.mxu0 0.0
  %v1068 = vand.u32 %v54, 4294901760
  %1069 = vmatpush1.msra.mxu0 %v1068
  %1070 = vmatprep.subr.mxu0 0.0
  %v1071 = vand.u32 %v55, 4294901760
  %1072 = vmatpush1.msra.mxu0 %v1071
  %1073 = vmatprep.subr.mxu0 0.0
  %v1074 = vand.u32 %v56, 4294901760
  %1075 = vmatpush1.msra.mxu0 %v1074
  %1076 = vmatprep.subr.mxu0 0.0
  %v1077 = vand.u32 %v57, 4294901760
  %1078 = vmatpush1.msra.mxu0 %v1077
  %1079 = vmatprep.subr.mxu0 0.0
  %v1080 = vand.u32 %v58, 4294901760
  %1081 = vmatpush1.msra.mxu0 %v1080
  %1082 = vmatprep.subr.mxu0 0.0
  %v1083 = vand.u32 %v59, 4294901760
  %1084 = vmatpush1.msra.mxu0 %v1083
  %1085 = vmatprep.subr.mxu0 0.0
  %v1086 = vand.u32 %v60, 4294901760
  %1087 = vmatpush1.msra.mxu0 %v1086
  %1088 = vmatprep.subr.mxu0 0.0
  %v1089 = vand.u32 %v61, 4294901760
  %1090 = vmatpush1.msra.mxu0 %v1089
  %1091 = vmatprep.subr.mxu0 0.0
  %v1092 = vand.u32 %v62, 4294901760
  %1093 = vmatpush1.msra.mxu0 %v1092
  %1094 = vmatprep.subr.mxu0 0.0
  %v1095 = vand.u32 %v63, 4294901760
  %1096 = vmatpush1.msra.mxu0 %v1095
  %1097 = vmatprep.subr.mxu0 0.0
  %v1098 = vand.u32 %v64, 4294901760
  %1099 = vmatpush1.msra.mxu0 %v1098
  %1100 = vmatprep.subr.mxu0 0.0
  %v1101 = vand.u32 %v65, 4294901760
  %1102 = vmatpush1.msra.mxu0 %v1101
  %1103 = vmatprep.subr.mxu0 0.0
  %v1104 = vand.u32 %v66, 4294901760
  %1105 = vmatpush1.msra.mxu0 %v1104
  %1106 = vmatprep.subr.mxu0 0.0
  %v1107 = vand.u32 %v67, 4294901760
  %1108 = vmatpush1.msra.mxu0 %v1107
  %v1109 = vand.u32 %v21, 4294901760
  %1110 = vmatprep.mubr.f32.mxu0 %v1109
  %v1111 = vand.u32 %v20, 4294901760
  %1112 = vmatmul.mubr.f32.gmra.mrb[0].mxu0 %v1111
  %v1113 = vpop.f32.mrb[0].mxu0
  %v1114 = vadd.f32 %v989, %v1113
  %v1115 = vpop.f32.mrb[0].mxu0
  %v1116 = vand.u32 %v25, 4294901760
  %1117 = vmatprep.mubr.f32.mxu0 %v1116
  %v1118 = vand.u32 %v24, 4294901760
  %1119 = vmatmul.mubr.f32.gmra.mrb[0].mxu0 %v1118
  %v1120 = vpop.f32.mrb[0].mxu0
  %v1121 = vadd.f32 %v996, %v1120
  %v1122 = vpop.f32.mrb[0].mxu0
  %v1123 = vand.u32 %v29, 4294901760
  %1124 = vmatprep.mubr.f32.mxu0 %v1123
  %v1125 = vand.u32 %v28, 4294901760
  %1126 = vmatmul.mubr.f32.gmra.mrb[0].mxu0 %v1125
  %v1127 = vpop.f32.mrb[0].mxu0
  %v1128 = vadd.f32 %v1003, %v1127
  %v1129 = vpop.f32.mrb[0].mxu0
  %v1130 = vand.u32 %v33, 4294901760
  %1131 = vmatprep.mubr.f32.mxu0 %v1130
  %v1132 = vand.u32 %v32, 4294901760
  %1133 = vmatmul.mubr.f32.gmra.mrb[0].mxu0 %v1132
  %v1134 = vpop.f32.mrb[0].mxu0
  %v1135 = vadd.f32 %v1010, %v1134
  %v1136 = vpop.f32.mrb[0].mxu0
  %1137 = vdwg.mxu0
  %1138 = vmatprep.subr.mxu0 0.0
  %v1139 = vand.u32 %v68, 4294901760
  %1140 = vmatpush1.msra.mxu0 %v1139
  %1141 = vmatprep.subr.mxu0 0.0
  %v1142 = vand.u32 %v69, 4294901760
  %1143 = vmatpush1.msra.mxu0 %v1142
  %1144 = vmatprep.subr.mxu0 0.0
  %v1145 = vand.u32 %v70, 4294901760
  %1146 = vmatpush1.msra.mxu0 %v1145
  %1147 = vmatprep.subr.mxu0 0.0
  %v1148 = vand.u32 %v71, 4294901760
  %1149 = vmatpush1.msra.mxu0 %v1148
  %1150 = vmatprep.subr.mxu0 0.0
  %v1151 = vand.u32 %v72, 4294901760
  %1152 = vmatpush1.msra.mxu0 %v1151
  %1153 = vmatprep.subr.mxu0 0.0
  %v1154 = vand.u32 %v73, 4294901760
  %1155 = vmatpush1.msra.mxu0 %v1154
  %1156 = vmatprep.subr.mxu0 0.0
  %v1157 = vand.u32 %v74, 4294901760
  %1158 = vmatpush1.msra.mxu0 %v1157
  %1159 = vmatprep.subr.mxu0 0.0
  %v1160 = vand.u32 %v75, 4294901760
  %1161 = vmatpush1.msra.mxu0 %v1160
  %1162 = vmatprep.subr.mxu0 0.0
  %v1163 = vand.u32 %v76, 4294901760
  %1164 = vmatpush1.msra.mxu0 %v1163
  %1165 = vmatprep.subr.mxu0 0.0
  %v1166 = vand.u32 %v77, 4294901760
  %1167 = vmatpush1.msra.mxu0 %v1166
  %1168 = vmatprep.subr.mxu0 0.0
  %v1169 = vand.u32 %v78, 4294901760
  %1170 = vmatpush1.msra.mxu0 %v1169
  %1171 = vmatprep.subr.mxu0 0.0
  %v1172 = vand.u32 %v79, 4294901760
  %1173 = vmatpush1.msra.mxu0 %v1172
  %1174 = vmatprep.subr.mxu0 0.0
  %v1175 = vand.u32 %v80, 4294901760
  %1176 = vmatpush1.msra.mxu0 %v1175
  %1177 = vmatprep.subr.mxu0 0.0
  %v1178 = vand.u32 %v81, 4294901760
  %1179 = vmatpush1.msra.mxu0 %v1178
  %1180 = vmatprep.subr.mxu0 0.0
  %v1181 = vand.u32 %v82, 4294901760
  %1182 = vmatpush1.msra.mxu0 %v1181
  %1183 = vmatprep.subr.mxu0 0.0
  %v1184 = vand.u32 %v83, 4294901760
  %1185 = vmatpush1.msra.mxu0 %v1184
  %1186 = vmatprep.subr.mxu0 0.0
  %v1187 = vand.u32 %v84, 4294901760
  %1188 = vmatpush1.msra.mxu0 %v1187
  %1189 = vmatprep.subr.mxu0 0.0
  %v1190 = vand.u32 %v85, 4294901760
  %1191 = vmatpush1.msra.mxu0 %v1190
  %1192 = vmatprep.subr.mxu0 0.0
  %v1193 = vand.u32 %v86, 4294901760
  %1194 = vmatpush1.msra.mxu0 %v1193
  %1195 = vmatprep.subr.mxu0 0.0
  %v1196 = vand.u32 %v87, 4294901760
  %1197 = vmatpush1.msra.mxu0 %v1196
  %1198 = vmatprep.subr.mxu0 0.0
  %v1199 = vand.u32 %v88, 4294901760
  %1200 = vmatpush1.msra.mxu0 %v1199
  %1201 = vmatprep.subr.mxu0 0.0
  %v1202 = vand.u32 %v89, 4294901760
  %1203 = vmatpush1.msra.mxu0 %v1202
  %1204 = vmatprep.subr.mxu0 0.0
  %v1205 = vand.u32 %v90, 4294901760
  %1206 = vmatpush1.msra.mxu0 %v1205
  %1207 = vmatprep.subr.mxu0 0.0
  %v1208 = vand.u32 %v91, 4294901760
  %1209 = vmatpush1.msra.mxu0 %v1208
  %1210 = vmatprep.subr.mxu0 0.0
  %v1211 = vand.u32 %v92, 4294901760
  %1212 = vmatpush1.msra.mxu0 %v1211
  %1213 = vmatprep.subr.mxu0 0.0
  %v1214 = vand.u32 %v93, 4294901760
  %1215 = vmatpush1.msra.mxu0 %v1214
  %1216 = vmatprep.subr.mxu0 0.0
  %v1217 = vand.u32 %v94, 4294901760
  %1218 = vmatpush1.msra.mxu0 %v1217
  %1219 = vmatprep.subr.mxu0 0.0
  %v1220 = vand.u32 %v95, 4294901760
  %1221 = vmatpush1.msra.mxu0 %v1220
  %1222 = vmatprep.subr.mxu0 0.0
  %v1223 = vand.u32 %v96, 4294901760
  %1224 = vmatpush1.msra.mxu0 %v1223
  %1225 = vmatprep.subr.mxu0 0.0
  %v1226 = vand.u32 %v97, 4294901760
  %1227 = vmatpush1.msra.mxu0 %v1226
  %1228 = vmatprep.subr.mxu0 0.0
  %v1229 = vand.u32 %v98, 4294901760
  %1230 = vmatpush1.msra.mxu0 %v1229
  %1231 = vmatprep.subr.mxu0 0.0
  %v1232 = vand.u32 %v99, 4294901760
  %1233 = vmatpush1.msra.mxu0 %v1232
  %v1234 = vand.u32 %v23, 4294901760
  %v1235 = vsub.f32 %v23, %v1234
  %v1236 = vand.u32 %v1235, 4294901760
  %v1237 = vsub.f32 %v1235, %v1236
  %v1238 = vand.u32 %v1237, 4294901760
  %1239 = vmatprep.mubr.f32.mxu0 %v1238
  %v1240 = vand.u32 %v22, 4294901760
  %v1241 = vsub.f32 %v22, %v1240
  %v1242 = vand.u32 %v1241, 4294901760
  %v1243 = vsub.f32 %v1241, %v1242
  %v1244 = vand.u32 %v1243, 4294901760
  %1245 = vmatmul.mubr.f32.gmra.mrb[0].mxu0 %v1244
  %v1246 = vpop.f32.mrb[0].mxu0
  %v1247 = vadd.f32 %v1114, %v1246
  %v1248 = vpop.f32.mrb[0].mxu0
  %v1249 = vand.u32 %v27, 4294901760
  %v1250 = vsub.f32 %v27, %v1249
  %v1251 = vand.u32 %v1250, 4294901760
  %v1252 = vsub.f32 %v1250, %v1251
  %v1253 = vand.u32 %v1252, 4294901760
  %1254 = vmatprep.mubr.f32.mxu0 %v1253
  %v1255 = vand.u32 %v26, 4294901760
  %v1256 = vsub.f32 %v26, %v1255
  %v1257 = vand.u32 %v1256, 4294901760
  %v1258 = vsub.f32 %v1256, %v1257
  %v1259 = vand.u32 %v1258, 4294901760
  %1260 = vmatmul.mubr.f32.gmra.mrb[0].mxu0 %v1259
  %v1261 = vpop.f32.mrb[0].mxu0
  %v1262 = vadd.f32 %v1121, %v1261
  %v1263 = vpop.f32.mrb[0].mxu0
  %v1264 = vand.u32 %v31, 4294901760
  %v1265 = vsub.f32 %v31, %v1264
  %v1266 = vand.u32 %v1265, 4294901760
  %v1267 = vsub.f32 %v1265, %v1266
  %v1268 = vand.u32 %v1267, 4294901760
  %1269 = vmatprep.mubr.f32.mxu0 %v1268
  %v1270 = vand.u32 %v30, 4294901760
  %v1271 = vsub.f32 %v30, %v1270
  %v1272 = vand.u32 %v1271, 4294901760
  %v1273 = vsub.f32 %v1271, %v1272
  %v1274 = vand.u32 %v1273, 4294901760
  %1275 = vmatmul.mubr.f32.gmra.mrb[0].mxu0 %v1274
  %v1276 = vpop.f32.mrb[0].mxu0
  %v1277 = vadd.f32 %v1128, %v1276
  %v1278 = vpop.f32.mrb[0].mxu0
  %v1279 = vand.u32 %v35, 4294901760
  %v1280 = vsub.f32 %v35, %v1279
  %v1281 = vand.u32 %v1280, 4294901760
  %v1282 = vsub.f32 %v1280, %v1281
  %v1283 = vand.u32 %v1282, 4294901760
  %1284 = vmatprep.mubr.f32.mxu0 %v1283
  %v1285 = vand.u32 %v34, 4294901760
  %v1286 = vsub.f32 %v34, %v1285
  %v1287 = vand.u32 %v1286, 4294901760
  %v1288 = vsub.f32 %v1286, %v1287
  %v1289 = vand.u32 %v1288, 4294901760
  %1290 = vmatmul.mubr.f32.gmra.mrb[0].mxu0 %v1289
  %v1291 = vpop.f32.mrb[0].mxu0
  %v1292 = vadd.f32 %v1135, %v1291
  %v1293 = vpop.f32.mrb[0].mxu0
  %1294 = vdwg.mxu0
  %1295 = vmatprep.subr.mxu0 0.0
  %v1296 = vand.u32 %v68, 4294901760
  %v1297 = vsub.f32 %v68, %v1296
  %v1298 = vand.u32 %v1297, 4294901760
  %v1299 = vsub.f32 %v1297, %v1298
  %v1300 = vand.u32 %v1299, 4294901760
  %1301 = vmatpush1.msra.mxu0 %v1300
  %1302 = vmatprep.subr.mxu0 0.0
  %v1303 = vand.u32 %v69, 4294901760
  %v1304 = vsub.f32 %v69, %v1303
  %v1305 = vand.u32 %v1304, 4294901760
  %v1306 = vsub.f32 %v1304, %v1305
  %v1307 = vand.u32 %v1306, 4294901760
  %1308 = vmatpush1.msra.mxu0 %v1307
  %1309 = vmatprep.subr.mxu0 0.0
  %v1310 = vand.u32 %v70, 4294901760
  %v1311 = vsub.f32 %v70, %v1310
  %v1312 = vand.u32 %v1311, 4294901760
  %v1313 = vsub.f32 %v1311, %v1312
  %v1314 = vand.u32 %v1313, 4294901760
  %1315 = vmatpush1.msra.mxu0 %v1314
  %1316 = vmatprep.subr.mxu0 0.0
  %v1317 = vand.u32 %v71, 4294901760
  %v1318 = vsub.f32 %v71, %v1317
  %v1319 = vand.u32 %v1318, 4294901760
  %v1320 = vsub.f32 %v1318, %v1319
  %v1321 = vand.u32 %v1320, 4294901760
  %1322 = vmatpush1.msra.mxu0 %v1321
  %1323 = vmatprep.subr.mxu0 0.0
  %v1324 = vand.u32 %v72, 4294901760
  %v1325 = vsub.f32 %v72, %v1324
  %v1326 = vand.u32 %v1325, 4294901760
  %v1327 = vsub.f32 %v1325, %v1326
  %v1328 = vand.u32 %v1327, 4294901760
  %1329 = vmatpush1.msra.mxu0 %v1328
  %1330 = vmatprep.subr.mxu0 0.0
  %v1331 = vand.u32 %v73, 4294901760
  %v1332 = vsub.f32 %v73, %v1331
  %v1333 = vand.u32 %v1332, 4294901760
  %v1334 = vsub.f32 %v1332, %v1333
  %v1335 = vand.u32 %v1334, 4294901760
  %1336 = vmatpush1.msra.mxu0 %v1335
  %1337 = vmatprep.subr.mxu0 0.0
  %v1338 = vand.u32 %v74, 4294901760
  %v1339 = vsub.f32 %v74, %v1338
  %v1340 = vand.u32 %v1339, 4294901760
  %v1341 = vsub.f32 %v1339, %v1340
  %v1342 = vand.u32 %v1341, 4294901760
  %1343 = vmatpush1.msra.mxu0 %v1342
  %1344 = vmatprep.subr.mxu0 0.0
  %v1345 = vand.u32 %v75, 4294901760
  %v1346 = vsub.f32 %v75, %v1345
  %v1347 = vand.u32 %v1346, 4294901760
  %v1348 = vsub.f32 %v1346, %v1347
  %v1349 = vand.u32 %v1348, 4294901760
  %1350 = vmatpush1.msra.mxu0 %v1349
  %1351 = vmatprep.subr.mxu0 0.0
  %v1352 = vand.u32 %v76, 4294901760
  %v1353 = vsub.f32 %v76, %v1352
  %v1354 = vand.u32 %v1353, 4294901760
  %v1355 = vsub.f32 %v1353, %v1354
  %v1356 = vand.u32 %v1355, 4294901760
  %1357 = vmatpush1.msra.mxu0 %v1356
  %1358 = vmatprep.subr.mxu0 0.0
  %v1359 = vand.u32 %v77, 4294901760
  %v1360 = vsub.f32 %v77, %v1359
  %v1361 = vand.u32 %v1360, 4294901760
  %v1362 = vsub.f32 %v1360, %v1361
  %v1363 = vand.u32 %v1362, 4294901760
  %1364 = vmatpush1.msra.mxu0 %v1363
  %1365 = vmatprep.subr.mxu0 0.0
  %v1366 = vand.u32 %v78, 4294901760
  %v1367 = vsub.f32 %v78, %v1366
  %v1368 = vand.u32 %v1367, 4294901760
  %v1369 = vsub.f32 %v1367, %v1368
  %v1370 = vand.u32 %v1369, 4294901760
  %1371 = vmatpush1.msra.mxu0 %v1370
  %1372 = vmatprep.subr.mxu0 0.0
  %v1373 = vand.u32 %v79, 4294901760
  %v1374 = vsub.f32 %v79, %v1373
  %v1375 = vand.u32 %v1374, 4294901760
  %v1376 = vsub.f32 %v1374, %v1375
  %v1377 = vand.u32 %v1376, 4294901760
  %1378 = vmatpush1.msra.mxu0 %v1377
  %1379 = vmatprep.subr.mxu0 0.0
  %v1380 = vand.u32 %v80, 4294901760
  %v1381 = vsub.f32 %v80, %v1380
  %v1382 = vand.u32 %v1381, 4294901760
  %v1383 = vsub.f32 %v1381, %v1382
  %v1384 = vand.u32 %v1383, 4294901760
  %1385 = vmatpush1.msra.mxu0 %v1384
  %1386 = vmatprep.subr.mxu0 0.0
  %v1387 = vand.u32 %v81, 4294901760
  %v1388 = vsub.f32 %v81, %v1387
  %v1389 = vand.u32 %v1388, 4294901760
  %v1390 = vsub.f32 %v1388, %v1389
  %v1391 = vand.u32 %v1390, 4294901760
  %1392 = vmatpush1.msra.mxu0 %v1391
  %1393 = vmatprep.subr.mxu0 0.0
  %v1394 = vand.u32 %v82, 4294901760
  %v1395 = vsub.f32 %v82, %v1394
  %v1396 = vand.u32 %v1395, 4294901760
  %v1397 = vsub.f32 %v1395, %v1396
  %v1398 = vand.u32 %v1397, 4294901760
  %1399 = vmatpush1.msra.mxu0 %v1398
  %1400 = vmatprep.subr.mxu0 0.0
  %v1401 = vand.u32 %v83, 4294901760
  %v1402 = vsub.f32 %v83, %v1401
  %v1403 = vand.u32 %v1402, 4294901760
  %v1404 = vsub.f32 %v1402, %v1403
  %v1405 = vand.u32 %v1404, 4294901760
  %1406 = vmatpush1.msra.mxu0 %v1405
  %1407 = vmatprep.subr.mxu0 0.0
  %v1408 = vand.u32 %v84, 4294901760
  %v1409 = vsub.f32 %v84, %v1408
  %v1410 = vand.u32 %v1409, 4294901760
  %v1411 = vsub.f32 %v1409, %v1410
  %v1412 = vand.u32 %v1411, 4294901760
  %1413 = vmatpush1.msra.mxu0 %v1412
  %1414 = vmatprep.subr.mxu0 0.0
  %v1415 = vand.u32 %v85, 4294901760
  %v1416 = vsub.f32 %v85, %v1415
  %v1417 = vand.u32 %v1416, 4294901760
  %v1418 = vsub.f32 %v1416, %v1417
  %v1419 = vand.u32 %v1418, 4294901760
  %1420 = vmatpush1.msra.mxu0 %v1419
  %1421 = vmatprep.subr.mxu0 0.0
  %v1422 = vand.u32 %v86, 4294901760
  %v1423 = vsub.f32 %v86, %v1422
  %v1424 = vand.u32 %v1423, 4294901760
  %v1425 = vsub.f32 %v1423, %v1424
  %v1426 = vand.u32 %v1425, 4294901760
  %1427 = vmatpush1.msra.mxu0 %v1426
  %1428 = vmatprep.subr.mxu0 0.0
  %v1429 = vand.u32 %v87, 4294901760
  %v1430 = vsub.f32 %v87, %v1429
  %v1431 = vand.u32 %v1430, 4294901760
  %v1432 = vsub.f32 %v1430, %v1431
  %v1433 = vand.u32 %v1432, 4294901760
  %1434 = vmatpush1.msra.mxu0 %v1433
  %1435 = vmatprep.subr.mxu0 0.0
  %v1436 = vand.u32 %v88, 4294901760
  %v1437 = vsub.f32 %v88, %v1436
  %v1438 = vand.u32 %v1437, 4294901760
  %v1439 = vsub.f32 %v1437, %v1438
  %v1440 = vand.u32 %v1439, 4294901760
  %1441 = vmatpush1.msra.mxu0 %v1440
  %1442 = vmatprep.subr.mxu0 0.0
  %v1443 = vand.u32 %v89, 4294901760
  %v1444 = vsub.f32 %v89, %v1443
  %v1445 = vand.u32 %v1444, 4294901760
  %v1446 = vsub.f32 %v1444, %v1445
  %v1447 = vand.u32 %v1446, 4294901760
  %1448 = vmatpush1.msra.mxu0 %v1447
  %1449 = vmatprep.subr.mxu0 0.0
  %v1450 = vand.u32 %v90, 4294901760
  %v1451 = vsub.f32 %v90, %v1450
  %v1452 = vand.u32 %v1451, 4294901760
  %v1453 = vsub.f32 %v1451, %v1452
  %v1454 = vand.u32 %v1453, 4294901760
  %1455 = vmatpush1.msra.mxu0 %v1454
  %1456 = vmatprep.subr.mxu0 0.0
  %v1457 = vand.u32 %v91, 4294901760
  %v1458 = vsub.f32 %v91, %v1457
  %v1459 = vand.u32 %v1458, 4294901760
  %v1460 = vsub.f32 %v1458, %v1459
  %v1461 = vand.u32 %v1460, 4294901760
  %1462 = vmatpush1.msra.mxu0 %v1461
  %1463 = vmatprep.subr.mxu0 0.0
  %v1464 = vand.u32 %v92, 4294901760
  %v1465 = vsub.f32 %v92, %v1464
  %v1466 = vand.u32 %v1465, 4294901760
  %v1467 = vsub.f32 %v1465, %v1466
  %v1468 = vand.u32 %v1467, 4294901760
  %1469 = vmatpush1.msra.mxu0 %v1468
  %1470 = vmatprep.subr.mxu0 0.0
  %v1471 = vand.u32 %v93, 4294901760
  %v1472 = vsub.f32 %v93, %v1471
  %v1473 = vand.u32 %v1472, 4294901760
  %v1474 = vsub.f32 %v1472, %v1473
  %v1475 = vand.u32 %v1474, 4294901760
  %1476 = vmatpush1.msra.mxu0 %v1475
  %1477 = vmatprep.subr.mxu0 0.0
  %v1478 = vand.u32 %v94, 4294901760
  %v1479 = vsub.f32 %v94, %v1478
  %v1480 = vand.u32 %v1479, 4294901760
  %v1481 = vsub.f32 %v1479, %v1480
  %v1482 = vand.u32 %v1481, 4294901760
  %1483 = vmatpush1.msra.mxu0 %v1482
  %1484 = vmatprep.subr.mxu0 0.0
  %v1485 = vand.u32 %v95, 4294901760
  %v1486 = vsub.f32 %v95, %v1485
  %v1487 = vand.u32 %v1486, 4294901760
  %v1488 = vsub.f32 %v1486, %v1487
  %v1489 = vand.u32 %v1488, 4294901760
  %1490 = vmatpush1.msra.mxu0 %v1489
  %1491 = vmatprep.subr.mxu0 0.0
  %v1492 = vand.u32 %v96, 4294901760
  %v1493 = vsub.f32 %v96, %v1492
  %v1494 = vand.u32 %v1493, 4294901760
  %v1495 = vsub.f32 %v1493, %v1494
  %v1496 = vand.u32 %v1495, 4294901760
  %1497 = vmatpush1.msra.mxu0 %v1496
  %1498 = vmatprep.subr.mxu0 0.0
  %v1499 = vand.u32 %v97, 4294901760
  %v1500 = vsub.f32 %v97, %v1499
  %v1501 = vand.u32 %v1500, 4294901760
  %v1502 = vsub.f32 %v1500, %v1501
  %v1503 = vand.u32 %v1502, 4294901760
  %1504 = vmatpush1.msra.mxu0 %v1503
  %1505 = vmatprep.subr.mxu0 0.0
  %v1506 = vand.u32 %v98, 4294901760
  %v1507 = vsub.f32 %v98, %v1506
  %v1508 = vand.u32 %v1507, 4294901760
  %v1509 = vsub.f32 %v1507, %v1508
  %v1510 = vand.u32 %v1509, 4294901760
  %1511 = vmatpush1.msra.mxu0 %v1510
  %1512 = vmatprep.subr.mxu0 0.0
  %v1513 = vand.u32 %v99, 4294901760
  %v1514 = vsub.f32 %v99, %v1513
  %v1515 = vand.u32 %v1514, 4294901760
  %v1516 = vsub.f32 %v1514, %v1515
  %v1517 = vand.u32 %v1516, 4294901760
  %1518 = vmatpush1.msra.mxu0 %v1517
  %v1519 = vand.u32 %v23, 4294901760
  %1520 = vmatprep.mubr.f32.mxu0 %v1519
  %v1521 = vand.u32 %v22, 4294901760
  %1522 = vmatmul.mubr.f32.gmra.mrb[0].mxu0 %v1521
  %v1523 = vpop.f32.mrb[0].mxu0
  %v1524 = vadd.f32 %v1247, %v1523
  %v1525 = vpop.f32.mrb[0].mxu0
  %v1526 = vand.u32 %v27, 4294901760
  %1527 = vmatprep.mubr.f32.mxu0 %v1526
  %v1528 = vand.u32 %v26, 4294901760
  %1529 = vmatmul.mubr.f32.gmra.mrb[0].mxu0 %v1528
  %v1530 = vpop.f32.mrb[0].mxu0
  %v1531 = vadd.f32 %v1262, %v1530
  %v1532 = vpop.f32.mrb[0].mxu0
  %v1533 = vand.u32 %v31, 4294901760
  %1534 = vmatprep.mubr.f32.mxu0 %v1533
  %v1535 = vand.u32 %v30, 4294901760
  %1536 = vmatmul.mubr.f32.gmra.mrb[0].mxu0 %v1535
  %v1537 = vpop.f32.mrb[0].mxu0
  %v1538 = vadd.f32 %v1277, %v1537
  %v1539 = vpop.f32.mrb[0].mxu0
  %v1540 = vand.u32 %v35, 4294901760
  %1541 = vmatprep.mubr.f32.mxu0 %v1540
  %v1542 = vand.u32 %v34, 4294901760
  %1543 = vmatmul.mubr.f32.gmra.mrb[0].mxu0 %v1542
  %v1544 = vpop.f32.mrb[0].mxu0
  %v1545 = vadd.f32 %v1292, %v1544
  %v1546 = vpop.f32.mrb[0].mxu0
  %1547 = vdwg.mxu0
  %1548 = vmatprep.subr.mxu0 0.0
  %v1549 = vand.u32 %v68, 4294901760
  %v1550 = vsub.f32 %v68, %v1549
  %1551 = vmatpush1.msra.mxu0 %v1550
  %1552 = vmatprep.subr.mxu0 0.0
  %v1553 = vand.u32 %v69, 4294901760
  %v1554 = vsub.f32 %v69, %v1553
  %1555 = vmatpush1.msra.mxu0 %v1554
  %1556 = vmatprep.subr.mxu0 0.0
  %v1557 = vand.u32 %v70, 4294901760
  %v1558 = vsub.f32 %v70, %v1557
  %1559 = vmatpush1.msra.mxu0 %v1558
  %1560 = vmatprep.subr.mxu0 0.0
  %v1561 = vand.u32 %v71, 4294901760
  %v1562 = vsub.f32 %v71, %v1561
  %1563 = vmatpush1.msra.mxu0 %v1562
  %1564 = vmatprep.subr.mxu0 0.0
  %v1565 = vand.u32 %v72, 4294901760
  %v1566 = vsub.f32 %v72, %v1565
  %1567 = vmatpush1.msra.mxu0 %v1566
  %1568 = vmatprep.subr.mxu0 0.0
  %v1569 = vand.u32 %v73, 4294901760
  %v1570 = vsub.f32 %v73, %v1569
  %1571 = vmatpush1.msra.mxu0 %v1570
  %1572 = vmatprep.subr.mxu0 0.0
  %v1573 = vand.u32 %v74, 4294901760
  %v1574 = vsub.f32 %v74, %v1573
  %1575 = vmatpush1.msra.mxu0 %v1574
  %1576 = vmatprep.subr.mxu0 0.0
  %v1577 = vand.u32 %v75, 4294901760
  %v1578 = vsub.f32 %v75, %v1577
  %1579 = vmatpush1.msra.mxu0 %v1578
  %1580 = vmatprep.subr.mxu0 0.0
  %v1581 = vand.u32 %v76, 4294901760
  %v1582 = vsub.f32 %v76, %v1581
  %1583 = vmatpush1.msra.mxu0 %v1582
  %1584 = vmatprep.subr.mxu0 0.0
  %v1585 = vand.u32 %v77, 4294901760
  %v1586 = vsub.f32 %v77, %v1585
  %1587 = vmatpush1.msra.mxu0 %v1586
  %1588 = vmatprep.subr.mxu0 0.0
  %v1589 = vand.u32 %v78, 4294901760
  %v1590 = vsub.f32 %v78, %v1589
  %1591 = vmatpush1.msra.mxu0 %v1590
  %1592 = vmatprep.subr.mxu0 0.0
  %v1593 = vand.u32 %v79, 4294901760
  %v1594 = vsub.f32 %v79, %v1593
  %1595 = vmatpush1.msra.mxu0 %v1594
  %1596 = vmatprep.subr.mxu0 0.0
  %v1597 = vand.u32 %v80, 4294901760
  %v1598 = vsub.f32 %v80, %v1597
  %1599 = vmatpush1.msra.mxu0 %v1598
  %1600 = vmatprep.subr.mxu0 0.0
  %v1601 = vand.u32 %v81, 4294901760
  %v1602 = vsub.f32 %v81, %v1601
  %1603 = vmatpush1.msra.mxu0 %v1602
  %1604 = vmatprep.subr.mxu0 0.0
  %v1605 = vand.u32 %v82, 4294901760
  %v1606 = vsub.f32 %v82, %v1605
  %1607 = vmatpush1.msra.mxu0 %v1606
  %1608 = vmatprep.subr.mxu0 0.0
  %v1609 = vand.u32 %v83, 4294901760
  %v1610 = vsub.f32 %v83, %v1609
  %1611 = vmatpush1.msra.mxu0 %v1610
  %1612 = vmatprep.subr.mxu0 0.0
  %v1613 = vand.u32 %v84, 4294901760
  %v1614 = vsub.f32 %v84, %v1613
  %1615 = vmatpush1.msra.mxu0 %v1614
  %1616 = vmatprep.subr.mxu0 0.0
  %v1617 = vand.u32 %v85, 4294901760
  %v1618 = vsub.f32 %v85, %v1617
  %1619 = vmatpush1.msra.mxu0 %v1618
  %1620 = vmatprep.subr.mxu0 0.0
  %v1621 = vand.u32 %v86, 4294901760
  %v1622 = vsub.f32 %v86, %v1621
  %1623 = vmatpush1.msra.mxu0 %v1622
  %1624 = vmatprep.subr.mxu0 0.0
  %v1625 = vand.u32 %v87, 4294901760
  %v1626 = vsub.f32 %v87, %v1625
  %1627 = vmatpush1.msra.mxu0 %v1626
  %1628 = vmatprep.subr.mxu0 0.0
  %v1629 = vand.u32 %v88, 4294901760
  %v1630 = vsub.f32 %v88, %v1629
  %1631 = vmatpush1.msra.mxu0 %v1630
  %1632 = vmatprep.subr.mxu0 0.0
  %v1633 = vand.u32 %v89, 4294901760
  %v1634 = vsub.f32 %v89, %v1633
  %1635 = vmatpush1.msra.mxu0 %v1634
  %1636 = vmatprep.subr.mxu0 0.0
  %v1637 = vand.u32 %v90, 4294901760
  %v1638 = vsub.f32 %v90, %v1637
  %1639 = vmatpush1.msra.mxu0 %v1638
  %1640 = vmatprep.subr.mxu0 0.0
  %v1641 = vand.u32 %v91, 4294901760
  %v1642 = vsub.f32 %v91, %v1641
  %1643 = vmatpush1.msra.mxu0 %v1642
  %1644 = vmatprep.subr.mxu0 0.0
  %v1645 = vand.u32 %v92, 4294901760
  %v1646 = vsub.f32 %v92, %v1645
  %1647 = vmatpush1.msra.mxu0 %v1646
  %1648 = vmatprep.subr.mxu0 0.0
  %v1649 = vand.u32 %v93, 4294901760
  %v1650 = vsub.f32 %v93, %v1649
  %1651 = vmatpush1.msra.mxu0 %v1650
  %1652 = vmatprep.subr.mxu0 0.0
  %v1653 = vand.u32 %v94, 4294901760
  %v1654 = vsub.f32 %v94, %v1653
  %1655 = vmatpush1.msra.mxu0 %v1654
  %1656 = vmatprep.subr.mxu0 0.0
  %v1657 = vand.u32 %v95, 4294901760
  %v1658 = vsub.f32 %v95, %v1657
  %1659 = vmatpush1.msra.mxu0 %v1658
  %1660 = vmatprep.subr.mxu0 0.0
  %v1661 = vand.u32 %v96, 4294901760
  %v1662 = vsub.f32 %v96, %v1661
  %1663 = vmatpush1.msra.mxu0 %v1662
  %1664 = vmatprep.subr.mxu0 0.0
  %v1665 = vand.u32 %v97, 4294901760
  %v1666 = vsub.f32 %v97, %v1665
  %1667 = vmatpush1.msra.mxu0 %v1666
  %1668 = vmatprep.subr.mxu0 0.0
  %v1669 = vand.u32 %v98, 4294901760
  %v1670 = vsub.f32 %v98, %v1669
  %1671 = vmatpush1.msra.mxu0 %v1670
  %1672 = vmatprep.subr.mxu0 0.0
  %v1673 = vand.u32 %v99, 4294901760
  %v1674 = vsub.f32 %v99, %v1673
  %1675 = vmatpush1.msra.mxu0 %v1674
  %v1676 = vand.u32 %v23, 4294901760
  %v1677 = vsub.f32 %v23, %v1676
  %1678 = vmatprep.mubr.f32.mxu0 %v1677
  %v1679 = vand.u32 %v22, 4294901760
  %v1680 = vsub.f32 %v22, %v1679
  %1681 = vmatmul.mubr.f32.gmra.mrb[0].mxu0 %v1680
  %v1682 = vpop.f32.mrb[0].mxu0
  %v1683 = vadd.f32 %v1524, %v1682
  %v1684 = vpop.f32.mrb[0].mxu0
  %v1685 = vand.u32 %v27, 4294901760
  %v1686 = vsub.f32 %v27, %v1685
  %1687 = vmatprep.mubr.f32.mxu0 %v1686
  %v1688 = vand.u32 %v26, 4294901760
  %v1689 = vsub.f32 %v26, %v1688
  %1690 = vmatmul.mubr.f32.gmra.mrb[0].mxu0 %v1689
  %v1691 = vpop.f32.mrb[0].mxu0
  %v1692 = vadd.f32 %v1531, %v1691
  %v1693 = vpop.f32.mrb[0].mxu0
  %v1694 = vand.u32 %v31, 4294901760
  %v1695 = vsub.f32 %v31, %v1694
  %1696 = vmatprep.mubr.f32.mxu0 %v1695
  %v1697 = vand.u32 %v30, 4294901760
  %v1698 = vsub.f32 %v30, %v1697
  %1699 = vmatmul.mubr.f32.gmra.mrb[0].mxu0 %v1698
  %v1700 = vpop.f32.mrb[0].mxu0
  %v1701 = vadd.f32 %v1538, %v1700
  %v1702 = vpop.f32.mrb[0].mxu0
  %v1703 = vand.u32 %v35, 4294901760
  %v1704 = vsub.f32 %v35, %v1703
  %1705 = vmatprep.mubr.f32.mxu0 %v1704
  %v1706 = vand.u32 %v34, 4294901760
  %v1707 = vsub.f32 %v34, %v1706
  %1708 = vmatmul.mubr.f32.gmra.mrb[0].mxu0 %v1707
  %v1709 = vpop.f32.mrb[0].mxu0
  %v1710 = vadd.f32 %v1545, %v1709
  %v1711 = vpop.f32.mrb[0].mxu0
  %1712 = vdwg.mxu0
  %1713 = vmatprep.subr.mxu0 0.0
  %v1714 = vand.u32 %v68, 4294901760
  %1715 = vmatpush1.msra.mxu0 %v1714
  %1716 = vmatprep.subr.mxu0 0.0
  %v1717 = vand.u32 %v69, 4294901760
  %1718 = vmatpush1.msra.mxu0 %v1717
  %1719 = vmatprep.subr.mxu0 0.0
  %v1720 = vand.u32 %v70, 4294901760
  %1721 = vmatpush1.msra.mxu0 %v1720
  %1722 = vmatprep.subr.mxu0 0.0
  %v1723 = vand.u32 %v71, 4294901760
  %1724 = vmatpush1.msra.mxu0 %v1723
  %1725 = vmatprep.subr.mxu0 0.0
  %v1726 = vand.u32 %v72, 4294901760
  %1727 = vmatpush1.msra.mxu0 %v1726
  %1728 = vmatprep.subr.mxu0 0.0
  %v1729 = vand.u32 %v73, 4294901760
  %1730 = vmatpush1.msra.mxu0 %v1729
  %1731 = vmatprep.subr.mxu0 0.0
  %v1732 = vand.u32 %v74, 4294901760
  %1733 = vmatpush1.msra.mxu0 %v1732
  %1734 = vmatprep.subr.mxu0 0.0
  %v1735 = vand.u32 %v75, 4294901760
  %1736 = vmatpush1.msra.mxu0 %v1735
  %1737 = vmatprep.subr.mxu0 0.0
  %v1738 = vand.u32 %v76, 4294901760
  %1739 = vmatpush1.msra.mxu0 %v1738
  %1740 = vmatprep.subr.mxu0 0.0
  %v1741 = vand.u32 %v77, 4294901760
  %1742 = vmatpush1.msra.mxu0 %v1741
  %1743 = vmatprep.subr.mxu0 0.0
  %v1744 = vand.u32 %v78, 4294901760
  %1745 = vmatpush1.msra.mxu0 %v1744
  %1746 = vmatprep.subr.mxu0 0.0
  %v1747 = vand.u32 %v79, 4294901760
  %1748 = vmatpush1.msra.mxu0 %v1747
  %1749 = vmatprep.subr.mxu0 0.0
  %v1750 = vand.u32 %v80, 4294901760
  %1751 = vmatpush1.msra.mxu0 %v1750
  %1752 = vmatprep.subr.mxu0 0.0
  %v1753 = vand.u32 %v81, 4294901760
  %1754 = vmatpush1.msra.mxu0 %v1753
  %1755 = vmatprep.subr.mxu0 0.0
  %v1756 = vand.u32 %v82, 4294901760
  %1757 = vmatpush1.msra.mxu0 %v1756
  %1758 = vmatprep.subr.mxu0 0.0
  %v1759 = vand.u32 %v83, 4294901760
  %1760 = vmatpush1.msra.mxu0 %v1759
  %1761 = vmatprep.subr.mxu0 0.0
  %v1762 = vand.u32 %v84, 4294901760
  %1763 = vmatpush1.msra.mxu0 %v1762
  %1764 = vmatprep.subr.mxu0 0.0
  %v1765 = vand.u32 %v85, 4294901760
  %1766 = vmatpush1.msra.mxu0 %v1765
  %1767 = vmatprep.subr.mxu0 0.0
  %v1768 = vand.u32 %v86, 4294901760
  %1769 = vmatpush1.msra.mxu0 %v1768
  %1770 = vmatprep.subr.mxu0 0.0
  %v1771 = vand.u32 %v87, 4294901760
  %1772 = vmatpush1.msra.mxu0 %v1771
  %1773 = vmatprep.subr.mxu0 0.0
  %v1774 = vand.u32 %v88, 4294901760
  %1775 = vmatpush1.msra.mxu0 %v1774
  %1776 = vmatprep.subr.mxu0 0.0
  %v1777 = vand.u32 %v89, 4294901760
  %1778 = vmatpush1.msra.mxu0 %v1777
  %1779 = vmatprep.subr.mxu0 0.0
  %v1780 = vand.u32 %v90, 4294901760
  %1781 = vmatpush1.msra.mxu0 %v1780
  %1782 = vmatprep.subr.mxu0 0.0
  %v1783 = vand.u32 %v91, 4294901760
  %1784 = vmatpush1.msra.mxu0 %v1783
  %1785 = vmatprep.subr.mxu0 0.0
  %v1786 = vand.u32 %v92, 4294901760
  %1787 = vmatpush1.msra.mxu0 %v1786
  %1788 = vmatprep.subr.mxu0 0.0
  %v1789 = vand.u32 %v93, 4294901760
  %1790 = vmatpush1.msra.mxu0 %v1789
  %1791 = vmatprep.subr.mxu0 0.0
  %v1792 = vand.u32 %v94, 4294901760
  %1793 = vmatpush1.msra.mxu0 %v1792
  %1794 = vmatprep.subr.mxu0 0.0
  %v1795 = vand.u32 %v95, 4294901760
  %1796 = vmatpush1.msra.mxu0 %v1795
  %1797 = vmatprep.subr.mxu0 0.0
  %v1798 = vand.u32 %v96, 4294901760
  %1799 = vmatpush1.msra.mxu0 %v1798
  %1800 = vmatprep.subr.mxu0 0.0
  %v1801 = vand.u32 %v97, 4294901760
  %1802 = vmatpush1.msra.mxu0 %v1801
  %1803 = vmatprep.subr.mxu0 0.0
  %v1804 = vand.u32 %v98, 4294901760
  %1805 = vmatpush1.msra.mxu0 %v1804
  %1806 = vmatprep.subr.mxu0 0.0
  %v1807 = vand.u32 %v99, 4294901760
  %1808 = vmatpush1.msra.mxu0 %v1807
  %v1809 = vand.u32 %v23, 4294901760
  %v1810 = vsub.f32 %v23, %v1809
  %v1811 = vand.u32 %v1810, 4294901760
  %1812 = vmatprep.mubr.f32.mxu0 %v1811
  %v1813 = vand.u32 %v22, 4294901760
  %v1814 = vsub.f32 %v22, %v1813
  %v1815 = vand.u32 %v1814, 4294901760
  %1816 = vmatmul.mubr.f32.gmra.mrb[0].mxu0 %v1815
  %v1817 = vpop.f32.mrb[0].mxu0
  %v1818 = vadd.f32 %v1683, %v1817
  %v1819 = vpop.f32.mrb[0].mxu0
  %v1820 = vand.u32 %v27, 4294901760
  %v1821 = vsub.f32 %v27, %v1820
  %v1822 = vand.u32 %v1821, 4294901760
  %1823 = vmatprep.mubr.f32.mxu0 %v1822
  %v1824 = vand.u32 %v26, 4294901760
  %v1825 = vsub.f32 %v26, %v1824
  %v1826 = vand.u32 %v1825, 4294901760
  %1827 = vmatmul.mubr.f32.gmra.mrb[0].mxu0 %v1826
  %v1828 = vpop.f32.mrb[0].mxu0
  %v1829 = vadd.f32 %v1692, %v1828
  %v1830 = vpop.f32.mrb[0].mxu0
  %v1831 = vand.u32 %v31, 4294901760
  %v1832 = vsub.f32 %v31, %v1831
  %v1833 = vand.u32 %v1832, 4294901760
  %1834 = vmatprep.mubr.f32.mxu0 %v1833
  %v1835 = vand.u32 %v30, 4294901760
  %v1836 = vsub.f32 %v30, %v1835
  %v1837 = vand.u32 %v1836, 4294901760
  %1838 = vmatmul.mubr.f32.gmra.mrb[0].mxu0 %v1837
  %v1839 = vpop.f32.mrb[0].mxu0
  %v1840 = vadd.f32 %v1701, %v1839
  %v1841 = vpop.f32.mrb[0].mxu0
  %v1842 = vand.u32 %v35, 4294901760
  %v1843 = vsub.f32 %v35, %v1842
  %v1844 = vand.u32 %v1843, 4294901760
  %1845 = vmatprep.mubr.f32.mxu0 %v1844
  %v1846 = vand.u32 %v34, 4294901760
  %v1847 = vsub.f32 %v34, %v1846
  %v1848 = vand.u32 %v1847, 4294901760
  %1849 = vmatmul.mubr.f32.gmra.mrb[0].mxu0 %v1848
  %v1850 = vpop.f32.mrb[0].mxu0
  %v1851 = vadd.f32 %v1710, %v1850
  %v1852 = vpop.f32.mrb[0].mxu0
  %1853 = vdwg.mxu0
  %1854 = vmatprep.subr.mxu0 0.0
  %v1855 = vand.u32 %v68, 4294901760
  %v1856 = vsub.f32 %v68, %v1855
  %v1857 = vand.u32 %v1856, 4294901760
  %1858 = vmatpush1.msra.mxu0 %v1857
  %1859 = vmatprep.subr.mxu0 0.0
  %v1860 = vand.u32 %v69, 4294901760
  %v1861 = vsub.f32 %v69, %v1860
  %v1862 = vand.u32 %v1861, 4294901760
  %1863 = vmatpush1.msra.mxu0 %v1862
  %1864 = vmatprep.subr.mxu0 0.0
  %v1865 = vand.u32 %v70, 4294901760
  %v1866 = vsub.f32 %v70, %v1865
  %v1867 = vand.u32 %v1866, 4294901760
  %1868 = vmatpush1.msra.mxu0 %v1867
  %1869 = vmatprep.subr.mxu0 0.0
  %v1870 = vand.u32 %v71, 4294901760
  %v1871 = vsub.f32 %v71, %v1870
  %v1872 = vand.u32 %v1871, 4294901760
  %1873 = vmatpush1.msra.mxu0 %v1872
  %1874 = vmatprep.subr.mxu0 0.0
  %v1875 = vand.u32 %v72, 4294901760
  %v1876 = vsub.f32 %v72, %v1875
  %v1877 = vand.u32 %v1876, 4294901760
  %1878 = vmatpush1.msra.mxu0 %v1877
  %1879 = vmatprep.subr.mxu0 0.0
  %v1880 = vand.u32 %v73, 4294901760
  %v1881 = vsub.f32 %v73, %v1880
  %v1882 = vand.u32 %v1881, 4294901760
  %1883 = vmatpush1.msra.mxu0 %v1882
  %1884 = vmatprep.subr.mxu0 0.0
  %v1885 = vand.u32 %v74, 4294901760
  %v1886 = vsub.f32 %v74, %v1885
  %v1887 = vand.u32 %v1886, 4294901760
  %1888 = vmatpush1.msra.mxu0 %v1887
  %1889 = vmatprep.subr.mxu0 0.0
  %v1890 = vand.u32 %v75, 4294901760
  %v1891 = vsub.f32 %v75, %v1890
  %v1892 = vand.u32 %v1891, 4294901760
  %1893 = vmatpush1.msra.mxu0 %v1892
  %1894 = vmatprep.subr.mxu0 0.0
  %v1895 = vand.u32 %v76, 4294901760
  %v1896 = vsub.f32 %v76, %v1895
  %v1897 = vand.u32 %v1896, 4294901760
  %1898 = vmatpush1.msra.mxu0 %v1897
  %1899 = vmatprep.subr.mxu0 0.0
  %v1900 = vand.u32 %v77, 4294901760
  %v1901 = vsub.f32 %v77, %v1900
  %v1902 = vand.u32 %v1901, 4294901760
  %1903 = vmatpush1.msra.mxu0 %v1902
  %1904 = vmatprep.subr.mxu0 0.0
  %v1905 = vand.u32 %v78, 4294901760
  %v1906 = vsub.f32 %v78, %v1905
  %v1907 = vand.u32 %v1906, 4294901760
  %1908 = vmatpush1.msra.mxu0 %v1907
  %1909 = vmatprep.subr.mxu0 0.0
  %v1910 = vand.u32 %v79, 4294901760
  %v1911 = vsub.f32 %v79, %v1910
  %v1912 = vand.u32 %v1911, 4294901760
  %1913 = vmatpush1.msra.mxu0 %v1912
  %1914 = vmatprep.subr.mxu0 0.0
  %v1915 = vand.u32 %v80, 4294901760
  %v1916 = vsub.f32 %v80, %v1915
  %v1917 = vand.u32 %v1916, 4294901760
  %1918 = vmatpush1.msra.mxu0 %v1917
  %1919 = vmatprep.subr.mxu0 0.0
  %v1920 = vand.u32 %v81, 4294901760
  %v1921 = vsub.f32 %v81, %v1920
  %v1922 = vand.u32 %v1921, 4294901760
  %1923 = vmatpush1.msra.mxu0 %v1922
  %1924 = vmatprep.subr.mxu0 0.0
  %v1925 = vand.u32 %v82, 4294901760
  %v1926 = vsub.f32 %v82, %v1925
  %v1927 = vand.u32 %v1926, 4294901760
  %1928 = vmatpush1.msra.mxu0 %v1927
  %1929 = vmatprep.subr.mxu0 0.0
  %v1930 = vand.u32 %v83, 4294901760
  %v1931 = vsub.f32 %v83, %v1930
  %v1932 = vand.u32 %v1931, 4294901760
  %1933 = vmatpush1.msra.mxu0 %v1932
  %1934 = vmatprep.subr.mxu0 0.0
  %v1935 = vand.u32 %v84, 4294901760
  %v1936 = vsub.f32 %v84, %v1935
  %v1937 = vand.u32 %v1936, 4294901760
  %1938 = vmatpush1.msra.mxu0 %v1937
  %1939 = vmatprep.subr.mxu0 0.0
  %v1940 = vand.u32 %v85, 4294901760
  %v1941 = vsub.f32 %v85, %v1940
  %v1942 = vand.u32 %v1941, 4294901760
  %1943 = vmatpush1.msra.mxu0 %v1942
  %1944 = vmatprep.subr.mxu0 0.0
  %v1945 = vand.u32 %v86, 4294901760
  %v1946 = vsub.f32 %v86, %v1945
  %v1947 = vand.u32 %v1946, 4294901760
  %1948 = vmatpush1.msra.mxu0 %v1947
  %1949 = vmatprep.subr.mxu0 0.0
  %v1950 = vand.u32 %v87, 4294901760
  %v1951 = vsub.f32 %v87, %v1950
  %v1952 = vand.u32 %v1951, 4294901760
  %1953 = vmatpush1.msra.mxu0 %v1952
  %1954 = vmatprep.subr.mxu0 0.0
  %v1955 = vand.u32 %v88, 4294901760
  %v1956 = vsub.f32 %v88, %v1955
  %v1957 = vand.u32 %v1956, 4294901760
  %1958 = vmatpush1.msra.mxu0 %v1957
  %1959 = vmatprep.subr.mxu0 0.0
  %v1960 = vand.u32 %v89, 4294901760
  %v1961 = vsub.f32 %v89, %v1960
  %v1962 = vand.u32 %v1961, 4294901760
  %1963 = vmatpush1.msra.mxu0 %v1962
  %1964 = vmatprep.subr.mxu0 0.0
  %v1965 = vand.u32 %v90, 4294901760
  %v1966 = vsub.f32 %v90, %v1965
  %v1967 = vand.u32 %v1966, 4294901760
  %1968 = vmatpush1.msra.mxu0 %v1967
  %1969 = vmatprep.subr.mxu0 0.0
  %v1970 = vand.u32 %v91, 4294901760
  %v1971 = vsub.f32 %v91, %v1970
  %v1972 = vand.u32 %v1971, 4294901760
  %1973 = vmatpush1.msra.mxu0 %v1972
  %1974 = vmatprep.subr.mxu0 0.0
  %v1975 = vand.u32 %v92, 4294901760
  %v1976 = vsub.f32 %v92, %v1975
  %v1977 = vand.u32 %v1976, 4294901760
  %1978 = vmatpush1.msra.mxu0 %v1977
  %1979 = vmatprep.subr.mxu0 0.0
  %v1980 = vand.u32 %v93, 4294901760
  %v1981 = vsub.f32 %v93, %v1980
  %v1982 = vand.u32 %v1981, 4294901760
  %1983 = vmatpush1.msra.mxu0 %v1982
  %1984 = vmatprep.subr.mxu0 0.0
  %v1985 = vand.u32 %v94, 4294901760
  %v1986 = vsub.f32 %v94, %v1985
  %v1987 = vand.u32 %v1986, 4294901760
  %1988 = vmatpush1.msra.mxu0 %v1987
  %1989 = vmatprep.subr.mxu0 0.0
  %v1990 = vand.u32 %v95, 4294901760
  %v1991 = vsub.f32 %v95, %v1990
  %v1992 = vand.u32 %v1991, 4294901760
  %1993 = vmatpush1.msra.mxu0 %v1992
  %1994 = vmatprep.subr.mxu0 0.0
  %v1995 = vand.u32 %v96, 4294901760
  %v1996 = vsub.f32 %v96, %v1995
  %v1997 = vand.u32 %v1996, 4294901760
  %1998 = vmatpush1.msra.mxu0 %v1997
  %1999 = vmatprep.subr.mxu0 0.0
  %v2000 = vand.u32 %v97, 4294901760
  %v2001 = vsub.f32 %v97, %v2000
  %v2002 = vand.u32 %v2001, 4294901760
  %2003 = vmatpush1.msra.mxu0 %v2002
  %2004 = vmatprep.subr.mxu0 0.0
  %v2005 = vand.u32 %v98, 4294901760
  %v2006 = vsub.f32 %v98, %v2005
  %v2007 = vand.u32 %v2006, 4294901760
  %2008 = vmatpush1.msra.mxu0 %v2007
  %2009 = vmatprep.subr.mxu0 0.0
  %v2010 = vand.u32 %v99, 4294901760
  %v2011 = vsub.f32 %v99, %v2010
  %v2012 = vand.u32 %v2011, 4294901760
  %2013 = vmatpush1.msra.mxu0 %v2012
  %v2014 = vand.u32 %v23, 4294901760
  %2015 = vmatprep.mubr.f32.mxu0 %v2014
  %v2016 = vand.u32 %v22, 4294901760
  %2017 = vmatmul.mubr.f32.gmra.mrb[0].mxu0 %v2016
  %v2018 = vpop.f32.mrb[0].mxu0
  %v2019 = vadd.f32 %v1818, %v2018
  %v2020 = vpop.f32.mrb[0].mxu0
  %v2021 = vand.u32 %v27, 4294901760
  %2022 = vmatprep.mubr.f32.mxu0 %v2021
  %v2023 = vand.u32 %v26, 4294901760
  %2024 = vmatmul.mubr.f32.gmra.mrb[0].mxu0 %v2023
  %v2025 = vpop.f32.mrb[0].mxu0
  %v2026 = vadd.f32 %v1829, %v2025
  %v2027 = vpop.f32.mrb[0].mxu0
  %v2028 = vand.u32 %v31, 4294901760
  %2029 = vmatprep.mubr.f32.mxu0 %v2028
  %v2030 = vand.u32 %v30, 4294901760
  %2031 = vmatmul.mubr.f32.gmra.mrb[0].mxu0 %v2030
  %v2032 = vpop.f32.mrb[0].mxu0
  %v2033 = vadd.f32 %v1840, %v2032
  %v2034 = vpop.f32.mrb[0].mxu0
  %v2035 = vand.u32 %v35, 4294901760
  %2036 = vmatprep.mubr.f32.mxu0 %v2035
  %v2037 = vand.u32 %v34, 4294901760
  %2038 = vmatmul.mubr.f32.gmra.mrb[0].mxu0 %v2037
  %v2039 = vpop.f32.mrb[0].mxu0
  %v2040 = vadd.f32 %v1851, %v2039
  %v2041 = vpop.f32.mrb[0].mxu0
  %2042 = vdwg.mxu0
  %2043 = vmatprep.subr.mxu0 0.0
  %v2044 = vand.u32 %v68, 4294901760
  %2045 = vmatpush1.msra.mxu0 %v2044
  %2046 = vmatprep.subr.mxu0 0.0
  %v2047 = vand.u32 %v69, 4294901760
  %2048 = vmatpush1.msra.mxu0 %v2047
  %2049 = vmatprep.subr.mxu0 0.0
  %v2050 = vand.u32 %v70, 4294901760
  %2051 = vmatpush1.msra.mxu0 %v2050
  %2052 = vmatprep.subr.mxu0 0.0
  %v2053 = vand.u32 %v71, 4294901760
  %2054 = vmatpush1.msra.mxu0 %v2053
  %2055 = vmatprep.subr.mxu0 0.0
  %v2056 = vand.u32 %v72, 4294901760
  %2057 = vmatpush1.msra.mxu0 %v2056
  %2058 = vmatprep.subr.mxu0 0.0
  %v2059 = vand.u32 %v73, 4294901760
  %2060 = vmatpush1.msra.mxu0 %v2059
  %2061 = vmatprep.subr.mxu0 0.0
  %v2062 = vand.u32 %v74, 4294901760
  %2063 = vmatpush1.msra.mxu0 %v2062
  %2064 = vmatprep.subr.mxu0 0.0
  %v2065 = vand.u32 %v75, 4294901760
  %2066 = vmatpush1.msra.mxu0 %v2065
  %2067 = vmatprep.subr.mxu0 0.0
  %v2068 = vand.u32 %v76, 4294901760
  %2069 = vmatpush1.msra.mxu0 %v2068
  %2070 = vmatprep.subr.mxu0 0.0
  %v2071 = vand.u32 %v77, 4294901760
  %2072 = vmatpush1.msra.mxu0 %v2071
  %2073 = vmatprep.subr.mxu0 0.0
  %v2074 = vand.u32 %v78, 4294901760
  %2075 = vmatpush1.msra.mxu0 %v2074
  %2076 = vmatprep.subr.mxu0 0.0
  %v2077 = vand.u32 %v79, 4294901760
  %2078 = vmatpush1.msra.mxu0 %v2077
  %2079 = vmatprep.subr.mxu0 0.0
  %v2080 = vand.u32 %v80, 4294901760
  %2081 = vmatpush1.msra.mxu0 %v2080
  %2082 = vmatprep.subr.mxu0 0.0
  %v2083 = vand.u32 %v81, 4294901760
  %2084 = vmatpush1.msra.mxu0 %v2083
  %2085 = vmatprep.subr.mxu0 0.0
  %v2086 = vand.u32 %v82, 4294901760
  %2087 = vmatpush1.msra.mxu0 %v2086
  %2088 = vmatprep.subr.mxu0 0.0
  %v2089 = vand.u32 %v83, 4294901760
  %2090 = vmatpush1.msra.mxu0 %v2089
  %2091 = vmatprep.subr.mxu0 0.0
  %v2092 = vand.u32 %v84, 4294901760
  %2093 = vmatpush1.msra.mxu0 %v2092
  %2094 = vmatprep.subr.mxu0 0.0
  %v2095 = vand.u32 %v85, 4294901760
  %2096 = vmatpush1.msra.mxu0 %v2095
  %2097 = vmatprep.subr.mxu0 0.0
  %v2098 = vand.u32 %v86, 4294901760
  %2099 = vmatpush1.msra.mxu0 %v2098
  %2100 = vmatprep.subr.mxu0 0.0
  %v2101 = vand.u32 %v87, 4294901760
  %2102 = vmatpush1.msra.mxu0 %v2101
  %2103 = vmatprep.subr.mxu0 0.0
  %v2104 = vand.u32 %v88, 4294901760
  %2105 = vmatpush1.msra.mxu0 %v2104
  %2106 = vmatprep.subr.mxu0 0.0
  %v2107 = vand.u32 %v89, 4294901760
  %2108 = vmatpush1.msra.mxu0 %v2107
  %2109 = vmatprep.subr.mxu0 0.0
  %v2110 = vand.u32 %v90, 4294901760
  %2111 = vmatpush1.msra.mxu0 %v2110
  %2112 = vmatprep.subr.mxu0 0.0
  %v2113 = vand.u32 %v91, 4294901760
  %2114 = vmatpush1.msra.mxu0 %v2113
  %2115 = vmatprep.subr.mxu0 0.0
  %v2116 = vand.u32 %v92, 4294901760
  %2117 = vmatpush1.msra.mxu0 %v2116
  %2118 = vmatprep.subr.mxu0 0.0
  %v2119 = vand.u32 %v93, 4294901760
  %2120 = vmatpush1.msra.mxu0 %v2119
  %2121 = vmatprep.subr.mxu0 0.0
  %v2122 = vand.u32 %v94, 4294901760
  %2123 = vmatpush1.msra.mxu0 %v2122
  %2124 = vmatprep.subr.mxu0 0.0
  %v2125 = vand.u32 %v95, 4294901760
  %2126 = vmatpush1.msra.mxu0 %v2125
  %2127 = vmatprep.subr.mxu0 0.0
  %v2128 = vand.u32 %v96, 4294901760
  %2129 = vmatpush1.msra.mxu0 %v2128
  %2130 = vmatprep.subr.mxu0 0.0
  %v2131 = vand.u32 %v97, 4294901760
  %2132 = vmatpush1.msra.mxu0 %v2131
  %2133 = vmatprep.subr.mxu0 0.0
  %v2134 = vand.u32 %v98, 4294901760
  %2135 = vmatpush1.msra.mxu0 %v2134
  %2136 = vmatprep.subr.mxu0 0.0
  %v2137 = vand.u32 %v99, 4294901760
  %2138 = vmatpush1.msra.mxu0 %v2137
  %v2139 = vand.u32 %v23, 4294901760
  %2140 = vmatprep.mubr.f32.mxu0 %v2139
  %v2141 = vand.u32 %v22, 4294901760
  %2142 = vmatmul.mubr.f32.gmra.mrb[0].mxu0 %v2141
  %v2143 = vpop.f32.mrb[0].mxu0
  %v2144 = vadd.f32 %v2019, %v2143
  %v2145 = vpop.f32.mrb[0].mxu0
  %v2146 = vand.u32 %v27, 4294901760
  %2147 = vmatprep.mubr.f32.mxu0 %v2146
  %v2148 = vand.u32 %v26, 4294901760
  %2149 = vmatmul.mubr.f32.gmra.mrb[0].mxu0 %v2148
  %v2150 = vpop.f32.mrb[0].mxu0
  %v2151 = vadd.f32 %v2026, %v2150
  %v2152 = vpop.f32.mrb[0].mxu0
  %v2153 = vand.u32 %v31, 4294901760
  %2154 = vmatprep.mubr.f32.mxu0 %v2153
  %v2155 = vand.u32 %v30, 4294901760
  %2156 = vmatmul.mubr.f32.gmra.mrb[0].mxu0 %v2155
  %v2157 = vpop.f32.mrb[0].mxu0
  %v2158 = vadd.f32 %v2033, %v2157
  %v2159 = vpop.f32.mrb[0].mxu0
  %v2160 = vand.u32 %v35, 4294901760
  %2161 = vmatprep.mubr.f32.mxu0 %v2160
  %v2162 = vand.u32 %v34, 4294901760
  %2163 = vmatmul.mubr.f32.gmra.mrb[0].mxu0 %v2162
  %v2164 = vpop.f32.mrb[0].mxu0
  %v2165 = vadd.f32 %v2040, %v2164
  %v2166 = vpop.f32.mrb[0].mxu0
  %2167 = vdwg.mxu0
  %v2168 = vmul.f32 %v20, %v20
  %v2169 = vmul.f32 %v21, %v21
  %v2170 = vmul.f32 %v22, %v22
  %v2171 = vmul.f32 %v23, %v23
  %v2172 = vmul.f32 %v24, %v24
  %v2173 = vmul.f32 %v25, %v25
  %v2174 = vmul.f32 %v26, %v26
  %v2175 = vmul.f32 %v27, %v27
  %v2176 = vmul.f32 %v28, %v28
  %v2177 = vmul.f32 %v29, %v29
  %v2178 = vmul.f32 %v30, %v30
  %v2179 = vmul.f32 %v31, %v31
  %v2180 = vmul.f32 %v32, %v32
  %v2181 = vmul.f32 %v33, %v33
  %v2182 = vmul.f32 %v34, %v34
  %v2183 = vmul.f32 %v35, %v35
  %2184 = vmatprep.subr.mxu0 0.0
  %v2185 = vand.u32 %v36, 4294901760
  %2186 = vmatpush1.msra.mxu0 %v2185
  %2187 = vmatprep.subr.mxu0 0.0
  %v2188 = vand.u32 %v37, 4294901760
  %2189 = vmatpush1.msra.mxu0 %v2188
  %2190 = vmatprep.subr.mxu0 0.0
  %v2191 = vand.u32 %v38, 4294901760
  %2192 = vmatpush1.msra.mxu0 %v2191
  %2193 = vmatprep.subr.mxu0 0.0
  %v2194 = vand.u32 %v39, 4294901760
  %2195 = vmatpush1.msra.mxu0 %v2194
  %2196 = vmatprep.subr.mxu0 0.0
  %v2197 = vand.u32 %v40, 4294901760
  %2198 = vmatpush1.msra.mxu0 %v2197
  %2199 = vmatprep.subr.mxu0 0.0
  %v2200 = vand.u32 %v41, 4294901760
  %2201 = vmatpush1.msra.mxu0 %v2200
  %2202 = vmatprep.subr.mxu0 0.0
  %v2203 = vand.u32 %v42, 4294901760
  %2204 = vmatpush1.msra.mxu0 %v2203
  %2205 = vmatprep.subr.mxu0 0.0
  %v2206 = vand.u32 %v43, 4294901760
  %2207 = vmatpush1.msra.mxu0 %v2206
  %2208 = vmatprep.subr.mxu0 0.0
  %v2209 = vand.u32 %v44, 4294901760
  %2210 = vmatpush1.msra.mxu0 %v2209
  %2211 = vmatprep.subr.mxu0 0.0
  %v2212 = vand.u32 %v45, 4294901760
  %2213 = vmatpush1.msra.mxu0 %v2212
  %2214 = vmatprep.subr.mxu0 0.0
  %v2215 = vand.u32 %v46, 4294901760
  %2216 = vmatpush1.msra.mxu0 %v2215
  %2217 = vmatprep.subr.mxu0 0.0
  %v2218 = vand.u32 %v47, 4294901760
  %2219 = vmatpush1.msra.mxu0 %v2218
  %2220 = vmatprep.subr.mxu0 0.0
  %v2221 = vand.u32 %v48, 4294901760
  %2222 = vmatpush1.msra.mxu0 %v2221
  %2223 = vmatprep.subr.mxu0 0.0
  %v2224 = vand.u32 %v49, 4294901760
  %2225 = vmatpush1.msra.mxu0 %v2224
  %2226 = vmatprep.subr.mxu0 0.0
  %v2227 = vand.u32 %v50, 4294901760
  %2228 = vmatpush1.msra.mxu0 %v2227
  %2229 = vmatprep.subr.mxu0 0.0
  %v2230 = vand.u32 %v51, 4294901760
  %2231 = vmatpush1.msra.mxu0 %v2230
  %2232 = vmatprep.subr.mxu0 0.0
  %v2233 = vand.u32 %v52, 4294901760
  %2234 = vmatpush1.msra.mxu0 %v2233
  %2235 = vmatprep.subr.mxu0 0.0
  %v2236 = vand.u32 %v53, 4294901760
  %2237 = vmatpush1.msra.mxu0 %v2236
  %2238 = vmatprep.subr.mxu0 0.0
  %v2239 = vand.u32 %v54, 4294901760
  %2240 = vmatpush1.msra.mxu0 %v2239
  %2241 = vmatprep.subr.mxu0 0.0
  %v2242 = vand.u32 %v55, 4294901760
  %2243 = vmatpush1.msra.mxu0 %v2242
  %2244 = vmatprep.subr.mxu0 0.0
  %v2245 = vand.u32 %v56, 4294901760
  %2246 = vmatpush1.msra.mxu0 %v2245
  %2247 = vmatprep.subr.mxu0 0.0
  %v2248 = vand.u32 %v57, 4294901760
  %2249 = vmatpush1.msra.mxu0 %v2248
  %2250 = vmatprep.subr.mxu0 0.0
  %v2251 = vand.u32 %v58, 4294901760
  %2252 = vmatpush1.msra.mxu0 %v2251
  %2253 = vmatprep.subr.mxu0 0.0
  %v2254 = vand.u32 %v59, 4294901760
  %2255 = vmatpush1.msra.mxu0 %v2254
  %2256 = vmatprep.subr.mxu0 0.0
  %v2257 = vand.u32 %v60, 4294901760
  %2258 = vmatpush1.msra.mxu0 %v2257
  %2259 = vmatprep.subr.mxu0 0.0
  %v2260 = vand.u32 %v61, 4294901760
  %2261 = vmatpush1.msra.mxu0 %v2260
  %2262 = vmatprep.subr.mxu0 0.0
  %v2263 = vand.u32 %v62, 4294901760
  %2264 = vmatpush1.msra.mxu0 %v2263
  %2265 = vmatprep.subr.mxu0 0.0
  %v2266 = vand.u32 %v63, 4294901760
  %2267 = vmatpush1.msra.mxu0 %v2266
  %2268 = vmatprep.subr.mxu0 0.0
  %v2269 = vand.u32 %v64, 4294901760
  %2270 = vmatpush1.msra.mxu0 %v2269
  %2271 = vmatprep.subr.mxu0 0.0
  %v2272 = vand.u32 %v65, 4294901760
  %2273 = vmatpush1.msra.mxu0 %v2272
  %2274 = vmatprep.subr.mxu0 0.0
  %v2275 = vand.u32 %v66, 4294901760
  %2276 = vmatpush1.msra.mxu0 %v2275
  %2277 = vmatprep.subr.mxu0 0.0
  %v2278 = vand.u32 %v67, 4294901760
  %2279 = vmatpush1.msra.mxu0 %v2278
  %v2280 = vand.u32 %v2169, 4294901760
  %v2281 = vsub.f32 %v2169, %v2280
  %v2282 = vand.u32 %v2281, 4294901760
  %v2283 = vsub.f32 %v2281, %v2282
  %v2284 = vand.u32 %v2283, 4294901760
  %2285 = vmatprep.mubr.f32.mxu0 %v2284
  %v2286 = vand.u32 %v2168, 4294901760
  %v2287 = vsub.f32 %v2168, %v2286
  %v2288 = vand.u32 %v2287, 4294901760
  %v2289 = vsub.f32 %v2287, %v2288
  %v2290 = vand.u32 %v2289, 4294901760
  %2291 = vmatmul.mubr.f32.gmra.mrb[0].mxu0 %v2290
  %v2292 = vpop.f32.mrb[0].mxu0
  %v2293 = vadd.f32 0.0, %v2292
  %v2294 = vpop.f32.mrb[0].mxu0
  %v2295 = vand.u32 %v2173, 4294901760
  %v2296 = vsub.f32 %v2173, %v2295
  %v2297 = vand.u32 %v2296, 4294901760
  %v2298 = vsub.f32 %v2296, %v2297
  %v2299 = vand.u32 %v2298, 4294901760
  %2300 = vmatprep.mubr.f32.mxu0 %v2299
  %v2301 = vand.u32 %v2172, 4294901760
  %v2302 = vsub.f32 %v2172, %v2301
  %v2303 = vand.u32 %v2302, 4294901760
  %v2304 = vsub.f32 %v2302, %v2303
  %v2305 = vand.u32 %v2304, 4294901760
  %2306 = vmatmul.mubr.f32.gmra.mrb[0].mxu0 %v2305
  %v2307 = vpop.f32.mrb[0].mxu0
  %v2308 = vadd.f32 0.0, %v2307
  %v2309 = vpop.f32.mrb[0].mxu0
  %v2310 = vand.u32 %v2177, 4294901760
  %v2311 = vsub.f32 %v2177, %v2310
  %v2312 = vand.u32 %v2311, 4294901760
  %v2313 = vsub.f32 %v2311, %v2312
  %v2314 = vand.u32 %v2313, 4294901760
  %2315 = vmatprep.mubr.f32.mxu0 %v2314
  %v2316 = vand.u32 %v2176, 4294901760
  %v2317 = vsub.f32 %v2176, %v2316
  %v2318 = vand.u32 %v2317, 4294901760
  %v2319 = vsub.f32 %v2317, %v2318
  %v2320 = vand.u32 %v2319, 4294901760
  %2321 = vmatmul.mubr.f32.gmra.mrb[0].mxu0 %v2320
  %v2322 = vpop.f32.mrb[0].mxu0
  %v2323 = vadd.f32 0.0, %v2322
  %v2324 = vpop.f32.mrb[0].mxu0
  %v2325 = vand.u32 %v2181, 4294901760
  %v2326 = vsub.f32 %v2181, %v2325
  %v2327 = vand.u32 %v2326, 4294901760
  %v2328 = vsub.f32 %v2326, %v2327
  %v2329 = vand.u32 %v2328, 4294901760
  %2330 = vmatprep.mubr.f32.mxu0 %v2329
  %v2331 = vand.u32 %v2180, 4294901760
  %v2332 = vsub.f32 %v2180, %v2331
  %v2333 = vand.u32 %v2332, 4294901760
  %v2334 = vsub.f32 %v2332, %v2333
  %v2335 = vand.u32 %v2334, 4294901760
  %2336 = vmatmul.mubr.f32.gmra.mrb[0].mxu0 %v2335
  %v2337 = vpop.f32.mrb[0].mxu0
  %v2338 = vadd.f32 0.0, %v2337
  %v2339 = vpop.f32.mrb[0].mxu0
  %2340 = vdwg.mxu0
  %2341 = vmatprep.subr.mxu0 0.0
  %v2342 = vand.u32 %v36, 4294901760
  %v2343 = vsub.f32 %v36, %v2342
  %v2344 = vand.u32 %v2343, 4294901760
  %v2345 = vsub.f32 %v2343, %v2344
  %v2346 = vand.u32 %v2345, 4294901760
  %2347 = vmatpush1.msra.mxu0 %v2346
  %2348 = vmatprep.subr.mxu0 0.0
  %v2349 = vand.u32 %v37, 4294901760
  %v2350 = vsub.f32 %v37, %v2349
  %v2351 = vand.u32 %v2350, 4294901760
  %v2352 = vsub.f32 %v2350, %v2351
  %v2353 = vand.u32 %v2352, 4294901760
  %2354 = vmatpush1.msra.mxu0 %v2353
  %2355 = vmatprep.subr.mxu0 0.0
  %v2356 = vand.u32 %v38, 4294901760
  %v2357 = vsub.f32 %v38, %v2356
  %v2358 = vand.u32 %v2357, 4294901760
  %v2359 = vsub.f32 %v2357, %v2358
  %v2360 = vand.u32 %v2359, 4294901760
  %2361 = vmatpush1.msra.mxu0 %v2360
  %2362 = vmatprep.subr.mxu0 0.0
  %v2363 = vand.u32 %v39, 4294901760
  %v2364 = vsub.f32 %v39, %v2363
  %v2365 = vand.u32 %v2364, 4294901760
  %v2366 = vsub.f32 %v2364, %v2365
  %v2367 = vand.u32 %v2366, 4294901760
  %2368 = vmatpush1.msra.mxu0 %v2367
  %2369 = vmatprep.subr.mxu0 0.0
  %v2370 = vand.u32 %v40, 4294901760
  %v2371 = vsub.f32 %v40, %v2370
  %v2372 = vand.u32 %v2371, 4294901760
  %v2373 = vsub.f32 %v2371, %v2372
  %v2374 = vand.u32 %v2373, 4294901760
  %2375 = vmatpush1.msra.mxu0 %v2374
  %2376 = vmatprep.subr.mxu0 0.0
  %v2377 = vand.u32 %v41, 4294901760
  %v2378 = vsub.f32 %v41, %v2377
  %v2379 = vand.u32 %v2378, 4294901760
  %v2380 = vsub.f32 %v2378, %v2379
  %v2381 = vand.u32 %v2380, 4294901760
  %2382 = vmatpush1.msra.mxu0 %v2381
  %2383 = vmatprep.subr.mxu0 0.0
  %v2384 = vand.u32 %v42, 4294901760
  %v2385 = vsub.f32 %v42, %v2384
  %v2386 = vand.u32 %v2385, 4294901760
  %v2387 = vsub.f32 %v2385, %v2386
  %v2388 = vand.u32 %v2387, 4294901760
  %2389 = vmatpush1.msra.mxu0 %v2388
  %2390 = vmatprep.subr.mxu0 0.0
  %v2391 = vand.u32 %v43, 4294901760
  %v2392 = vsub.f32 %v43, %v2391
  %v2393 = vand.u32 %v2392, 4294901760
  %v2394 = vsub.f32 %v2392, %v2393
  %v2395 = vand.u32 %v2394, 4294901760
  %2396 = vmatpush1.msra.mxu0 %v2395
  %2397 = vmatprep.subr.mxu0 0.0
  %v2398 = vand.u32 %v44, 4294901760
  %v2399 = vsub.f32 %v44, %v2398
  %v2400 = vand.u32 %v2399, 4294901760
  %v2401 = vsub.f32 %v2399, %v2400
  %v2402 = vand.u32 %v2401, 4294901760
  %2403 = vmatpush1.msra.mxu0 %v2402
  %2404 = vmatprep.subr.mxu0 0.0
  %v2405 = vand.u32 %v45, 4294901760
  %v2406 = vsub.f32 %v45, %v2405
  %v2407 = vand.u32 %v2406, 4294901760
  %v2408 = vsub.f32 %v2406, %v2407
  %v2409 = vand.u32 %v2408, 4294901760
  %2410 = vmatpush1.msra.mxu0 %v2409
  %2411 = vmatprep.subr.mxu0 0.0
  %v2412 = vand.u32 %v46, 4294901760
  %v2413 = vsub.f32 %v46, %v2412
  %v2414 = vand.u32 %v2413, 4294901760
  %v2415 = vsub.f32 %v2413, %v2414
  %v2416 = vand.u32 %v2415, 4294901760
  %2417 = vmatpush1.msra.mxu0 %v2416
  %2418 = vmatprep.subr.mxu0 0.0
  %v2419 = vand.u32 %v47, 4294901760
  %v2420 = vsub.f32 %v47, %v2419
  %v2421 = vand.u32 %v2420, 4294901760
  %v2422 = vsub.f32 %v2420, %v2421
  %v2423 = vand.u32 %v2422, 4294901760
  %2424 = vmatpush1.msra.mxu0 %v2423
  %2425 = vmatprep.subr.mxu0 0.0
  %v2426 = vand.u32 %v48, 4294901760
  %v2427 = vsub.f32 %v48, %v2426
  %v2428 = vand.u32 %v2427, 4294901760
  %v2429 = vsub.f32 %v2427, %v2428
  %v2430 = vand.u32 %v2429, 4294901760
  %2431 = vmatpush1.msra.mxu0 %v2430
  %2432 = vmatprep.subr.mxu0 0.0
  %v2433 = vand.u32 %v49, 4294901760
  %v2434 = vsub.f32 %v49, %v2433
  %v2435 = vand.u32 %v2434, 4294901760
  %v2436 = vsub.f32 %v2434, %v2435
  %v2437 = vand.u32 %v2436, 4294901760
  %2438 = vmatpush1.msra.mxu0 %v2437
  %2439 = vmatprep.subr.mxu0 0.0
  %v2440 = vand.u32 %v50, 4294901760
  %v2441 = vsub.f32 %v50, %v2440
  %v2442 = vand.u32 %v2441, 4294901760
  %v2443 = vsub.f32 %v2441, %v2442
  %v2444 = vand.u32 %v2443, 4294901760
  %2445 = vmatpush1.msra.mxu0 %v2444
  %2446 = vmatprep.subr.mxu0 0.0
  %v2447 = vand.u32 %v51, 4294901760
  %v2448 = vsub.f32 %v51, %v2447
  %v2449 = vand.u32 %v2448, 4294901760
  %v2450 = vsub.f32 %v2448, %v2449
  %v2451 = vand.u32 %v2450, 4294901760
  %2452 = vmatpush1.msra.mxu0 %v2451
  %2453 = vmatprep.subr.mxu0 0.0
  %v2454 = vand.u32 %v52, 4294901760
  %v2455 = vsub.f32 %v52, %v2454
  %v2456 = vand.u32 %v2455, 4294901760
  %v2457 = vsub.f32 %v2455, %v2456
  %v2458 = vand.u32 %v2457, 4294901760
  %2459 = vmatpush1.msra.mxu0 %v2458
  %2460 = vmatprep.subr.mxu0 0.0
  %v2461 = vand.u32 %v53, 4294901760
  %v2462 = vsub.f32 %v53, %v2461
  %v2463 = vand.u32 %v2462, 4294901760
  %v2464 = vsub.f32 %v2462, %v2463
  %v2465 = vand.u32 %v2464, 4294901760
  %2466 = vmatpush1.msra.mxu0 %v2465
  %2467 = vmatprep.subr.mxu0 0.0
  %v2468 = vand.u32 %v54, 4294901760
  %v2469 = vsub.f32 %v54, %v2468
  %v2470 = vand.u32 %v2469, 4294901760
  %v2471 = vsub.f32 %v2469, %v2470
  %v2472 = vand.u32 %v2471, 4294901760
  %2473 = vmatpush1.msra.mxu0 %v2472
  %2474 = vmatprep.subr.mxu0 0.0
  %v2475 = vand.u32 %v55, 4294901760
  %v2476 = vsub.f32 %v55, %v2475
  %v2477 = vand.u32 %v2476, 4294901760
  %v2478 = vsub.f32 %v2476, %v2477
  %v2479 = vand.u32 %v2478, 4294901760
  %2480 = vmatpush1.msra.mxu0 %v2479
  %2481 = vmatprep.subr.mxu0 0.0
  %v2482 = vand.u32 %v56, 4294901760
  %v2483 = vsub.f32 %v56, %v2482
  %v2484 = vand.u32 %v2483, 4294901760
  %v2485 = vsub.f32 %v2483, %v2484
  %v2486 = vand.u32 %v2485, 4294901760
  %2487 = vmatpush1.msra.mxu0 %v2486
  %2488 = vmatprep.subr.mxu0 0.0
  %v2489 = vand.u32 %v57, 4294901760
  %v2490 = vsub.f32 %v57, %v2489
  %v2491 = vand.u32 %v2490, 4294901760
  %v2492 = vsub.f32 %v2490, %v2491
  %v2493 = vand.u32 %v2492, 4294901760
  %2494 = vmatpush1.msra.mxu0 %v2493
  %2495 = vmatprep.subr.mxu0 0.0
  %v2496 = vand.u32 %v58, 4294901760
  %v2497 = vsub.f32 %v58, %v2496
  %v2498 = vand.u32 %v2497, 4294901760
  %v2499 = vsub.f32 %v2497, %v2498
  %v2500 = vand.u32 %v2499, 4294901760
  %2501 = vmatpush1.msra.mxu0 %v2500
  %2502 = vmatprep.subr.mxu0 0.0
  %v2503 = vand.u32 %v59, 4294901760
  %v2504 = vsub.f32 %v59, %v2503
  %v2505 = vand.u32 %v2504, 4294901760
  %v2506 = vsub.f32 %v2504, %v2505
  %v2507 = vand.u32 %v2506, 4294901760
  %2508 = vmatpush1.msra.mxu0 %v2507
  %2509 = vmatprep.subr.mxu0 0.0
  %v2510 = vand.u32 %v60, 4294901760
  %v2511 = vsub.f32 %v60, %v2510
  %v2512 = vand.u32 %v2511, 4294901760
  %v2513 = vsub.f32 %v2511, %v2512
  %v2514 = vand.u32 %v2513, 4294901760
  %2515 = vmatpush1.msra.mxu0 %v2514
  %2516 = vmatprep.subr.mxu0 0.0
  %v2517 = vand.u32 %v61, 4294901760
  %v2518 = vsub.f32 %v61, %v2517
  %v2519 = vand.u32 %v2518, 4294901760
  %v2520 = vsub.f32 %v2518, %v2519
  %v2521 = vand.u32 %v2520, 4294901760
  %2522 = vmatpush1.msra.mxu0 %v2521
  %2523 = vmatprep.subr.mxu0 0.0
  %v2524 = vand.u32 %v62, 4294901760
  %v2525 = vsub.f32 %v62, %v2524
  %v2526 = vand.u32 %v2525, 4294901760
  %v2527 = vsub.f32 %v2525, %v2526
  %v2528 = vand.u32 %v2527, 4294901760
  %2529 = vmatpush1.msra.mxu0 %v2528
  %2530 = vmatprep.subr.mxu0 0.0
  %v2531 = vand.u32 %v63, 4294901760
  %v2532 = vsub.f32 %v63, %v2531
  %v2533 = vand.u32 %v2532, 4294901760
  %v2534 = vsub.f32 %v2532, %v2533
  %v2535 = vand.u32 %v2534, 4294901760
  %2536 = vmatpush1.msra.mxu0 %v2535
  %2537 = vmatprep.subr.mxu0 0.0
  %v2538 = vand.u32 %v64, 4294901760
  %v2539 = vsub.f32 %v64, %v2538
  %v2540 = vand.u32 %v2539, 4294901760
  %v2541 = vsub.f32 %v2539, %v2540
  %v2542 = vand.u32 %v2541, 4294901760
  %2543 = vmatpush1.msra.mxu0 %v2542
  %2544 = vmatprep.subr.mxu0 0.0
  %v2545 = vand.u32 %v65, 4294901760
  %v2546 = vsub.f32 %v65, %v2545
  %v2547 = vand.u32 %v2546, 4294901760
  %v2548 = vsub.f32 %v2546, %v2547
  %v2549 = vand.u32 %v2548, 4294901760
  %2550 = vmatpush1.msra.mxu0 %v2549
  %2551 = vmatprep.subr.mxu0 0.0
  %v2552 = vand.u32 %v66, 4294901760
  %v2553 = vsub.f32 %v66, %v2552
  %v2554 = vand.u32 %v2553, 4294901760
  %v2555 = vsub.f32 %v2553, %v2554
  %v2556 = vand.u32 %v2555, 4294901760
  %2557 = vmatpush1.msra.mxu0 %v2556
  %2558 = vmatprep.subr.mxu0 0.0
  %v2559 = vand.u32 %v67, 4294901760
  %v2560 = vsub.f32 %v67, %v2559
  %v2561 = vand.u32 %v2560, 4294901760
  %v2562 = vsub.f32 %v2560, %v2561
  %v2563 = vand.u32 %v2562, 4294901760
  %2564 = vmatpush1.msra.mxu0 %v2563
  %v2565 = vand.u32 %v2169, 4294901760
  %2566 = vmatprep.mubr.f32.mxu0 %v2565
  %v2567 = vand.u32 %v2168, 4294901760
  %2568 = vmatmul.mubr.f32.gmra.mrb[0].mxu0 %v2567
  %v2569 = vpop.f32.mrb[0].mxu0
  %v2570 = vadd.f32 %v2293, %v2569
  %v2571 = vpop.f32.mrb[0].mxu0
  %v2572 = vand.u32 %v2173, 4294901760
  %2573 = vmatprep.mubr.f32.mxu0 %v2572
  %v2574 = vand.u32 %v2172, 4294901760
  %2575 = vmatmul.mubr.f32.gmra.mrb[0].mxu0 %v2574
  %v2576 = vpop.f32.mrb[0].mxu0
  %v2577 = vadd.f32 %v2308, %v2576
  %v2578 = vpop.f32.mrb[0].mxu0
  %v2579 = vand.u32 %v2177, 4294901760
  %2580 = vmatprep.mubr.f32.mxu0 %v2579
  %v2581 = vand.u32 %v2176, 4294901760
  %2582 = vmatmul.mubr.f32.gmra.mrb[0].mxu0 %v2581
  %v2583 = vpop.f32.mrb[0].mxu0
  %v2584 = vadd.f32 %v2323, %v2583
  %v2585 = vpop.f32.mrb[0].mxu0
  %v2586 = vand.u32 %v2181, 4294901760
  %2587 = vmatprep.mubr.f32.mxu0 %v2586
  %v2588 = vand.u32 %v2180, 4294901760
  %2589 = vmatmul.mubr.f32.gmra.mrb[0].mxu0 %v2588
  %v2590 = vpop.f32.mrb[0].mxu0
  %v2591 = vadd.f32 %v2338, %v2590
  %v2592 = vpop.f32.mrb[0].mxu0
  %2593 = vdwg.mxu0
  %2594 = vmatprep.subr.mxu0 0.0
  %v2595 = vand.u32 %v36, 4294901760
  %v2596 = vsub.f32 %v36, %v2595
  %2597 = vmatpush1.msra.mxu0 %v2596
  %2598 = vmatprep.subr.mxu0 0.0
  %v2599 = vand.u32 %v37, 4294901760
  %v2600 = vsub.f32 %v37, %v2599
  %2601 = vmatpush1.msra.mxu0 %v2600
  %2602 = vmatprep.subr.mxu0 0.0
  %v2603 = vand.u32 %v38, 4294901760
  %v2604 = vsub.f32 %v38, %v2603
  %2605 = vmatpush1.msra.mxu0 %v2604
  %2606 = vmatprep.subr.mxu0 0.0
  %v2607 = vand.u32 %v39, 4294901760
  %v2608 = vsub.f32 %v39, %v2607
  %2609 = vmatpush1.msra.mxu0 %v2608
  %2610 = vmatprep.subr.mxu0 0.0
  %v2611 = vand.u32 %v40, 4294901760
  %v2612 = vsub.f32 %v40, %v2611
  %2613 = vmatpush1.msra.mxu0 %v2612
  %2614 = vmatprep.subr.mxu0 0.0
  %v2615 = vand.u32 %v41, 4294901760
  %v2616 = vsub.f32 %v41, %v2615
  %2617 = vmatpush1.msra.mxu0 %v2616
  %2618 = vmatprep.subr.mxu0 0.0
  %v2619 = vand.u32 %v42, 4294901760
  %v2620 = vsub.f32 %v42, %v2619
  %2621 = vmatpush1.msra.mxu0 %v2620
  %2622 = vmatprep.subr.mxu0 0.0
  %v2623 = vand.u32 %v43, 4294901760
  %v2624 = vsub.f32 %v43, %v2623
  %2625 = vmatpush1.msra.mxu0 %v2624
  %2626 = vmatprep.subr.mxu0 0.0
  %v2627 = vand.u32 %v44, 4294901760
  %v2628 = vsub.f32 %v44, %v2627
  %2629 = vmatpush1.msra.mxu0 %v2628
  %2630 = vmatprep.subr.mxu0 0.0
  %v2631 = vand.u32 %v45, 4294901760
  %v2632 = vsub.f32 %v45, %v2631
  %2633 = vmatpush1.msra.mxu0 %v2632
  %2634 = vmatprep.subr.mxu0 0.0
  %v2635 = vand.u32 %v46, 4294901760
  %v2636 = vsub.f32 %v46, %v2635
  %2637 = vmatpush1.msra.mxu0 %v2636
  %2638 = vmatprep.subr.mxu0 0.0
  %v2639 = vand.u32 %v47, 4294901760
  %v2640 = vsub.f32 %v47, %v2639
  %2641 = vmatpush1.msra.mxu0 %v2640
  %2642 = vmatprep.subr.mxu0 0.0
  %v2643 = vand.u32 %v48, 4294901760
  %v2644 = vsub.f32 %v48, %v2643
  %2645 = vmatpush1.msra.mxu0 %v2644
  %2646 = vmatprep.subr.mxu0 0.0
  %v2647 = vand.u32 %v49, 4294901760
  %v2648 = vsub.f32 %v49, %v2647
  %2649 = vmatpush1.msra.mxu0 %v2648
  %2650 = vmatprep.subr.mxu0 0.0
  %v2651 = vand.u32 %v50, 4294901760
  %v2652 = vsub.f32 %v50, %v2651
  %2653 = vmatpush1.msra.mxu0 %v2652
  %2654 = vmatprep.subr.mxu0 0.0
  %v2655 = vand.u32 %v51, 4294901760
  %v2656 = vsub.f32 %v51, %v2655
  %2657 = vmatpush1.msra.mxu0 %v2656
  %2658 = vmatprep.subr.mxu0 0.0
  %v2659 = vand.u32 %v52, 4294901760
  %v2660 = vsub.f32 %v52, %v2659
  %2661 = vmatpush1.msra.mxu0 %v2660
  %2662 = vmatprep.subr.mxu0 0.0
  %v2663 = vand.u32 %v53, 4294901760
  %v2664 = vsub.f32 %v53, %v2663
  %2665 = vmatpush1.msra.mxu0 %v2664
  %2666 = vmatprep.subr.mxu0 0.0
  %v2667 = vand.u32 %v54, 4294901760
  %v2668 = vsub.f32 %v54, %v2667
  %2669 = vmatpush1.msra.mxu0 %v2668
  %2670 = vmatprep.subr.mxu0 0.0
  %v2671 = vand.u32 %v55, 4294901760
  %v2672 = vsub.f32 %v55, %v2671
  %2673 = vmatpush1.msra.mxu0 %v2672
  %2674 = vmatprep.subr.mxu0 0.0
  %v2675 = vand.u32 %v56, 4294901760
  %v2676 = vsub.f32 %v56, %v2675
  %2677 = vmatpush1.msra.mxu0 %v2676
  %2678 = vmatprep.subr.mxu0 0.0
  %v2679 = vand.u32 %v57, 4294901760
  %v2680 = vsub.f32 %v57, %v2679
  %2681 = vmatpush1.msra.mxu0 %v2680
  %2682 = vmatprep.subr.mxu0 0.0
  %v2683 = vand.u32 %v58, 4294901760
  %v2684 = vsub.f32 %v58, %v2683
  %2685 = vmatpush1.msra.mxu0 %v2684
  %2686 = vmatprep.subr.mxu0 0.0
  %v2687 = vand.u32 %v59, 4294901760
  %v2688 = vsub.f32 %v59, %v2687
  %2689 = vmatpush1.msra.mxu0 %v2688
  %2690 = vmatprep.subr.mxu0 0.0
  %v2691 = vand.u32 %v60, 4294901760
  %v2692 = vsub.f32 %v60, %v2691
  %2693 = vmatpush1.msra.mxu0 %v2692
  %2694 = vmatprep.subr.mxu0 0.0
  %v2695 = vand.u32 %v61, 4294901760
  %v2696 = vsub.f32 %v61, %v2695
  %2697 = vmatpush1.msra.mxu0 %v2696
  %2698 = vmatprep.subr.mxu0 0.0
  %v2699 = vand.u32 %v62, 4294901760
  %v2700 = vsub.f32 %v62, %v2699
  %2701 = vmatpush1.msra.mxu0 %v2700
  %2702 = vmatprep.subr.mxu0 0.0
  %v2703 = vand.u32 %v63, 4294901760
  %v2704 = vsub.f32 %v63, %v2703
  %2705 = vmatpush1.msra.mxu0 %v2704
  %2706 = vmatprep.subr.mxu0 0.0
  %v2707 = vand.u32 %v64, 4294901760
  %v2708 = vsub.f32 %v64, %v2707
  %2709 = vmatpush1.msra.mxu0 %v2708
  %2710 = vmatprep.subr.mxu0 0.0
  %v2711 = vand.u32 %v65, 4294901760
  %v2712 = vsub.f32 %v65, %v2711
  %2713 = vmatpush1.msra.mxu0 %v2712
  %2714 = vmatprep.subr.mxu0 0.0
  %v2715 = vand.u32 %v66, 4294901760
  %v2716 = vsub.f32 %v66, %v2715
  %2717 = vmatpush1.msra.mxu0 %v2716
  %2718 = vmatprep.subr.mxu0 0.0
  %v2719 = vand.u32 %v67, 4294901760
  %v2720 = vsub.f32 %v67, %v2719
  %2721 = vmatpush1.msra.mxu0 %v2720
  %v2722 = vand.u32 %v2169, 4294901760
  %v2723 = vsub.f32 %v2169, %v2722
  %2724 = vmatprep.mubr.f32.mxu0 %v2723
  %v2725 = vand.u32 %v2168, 4294901760
  %v2726 = vsub.f32 %v2168, %v2725
  %2727 = vmatmul.mubr.f32.gmra.mrb[0].mxu0 %v2726
  %v2728 = vpop.f32.mrb[0].mxu0
  %v2729 = vadd.f32 %v2570, %v2728
  %v2730 = vpop.f32.mrb[0].mxu0
  %v2731 = vand.u32 %v2173, 4294901760
  %v2732 = vsub.f32 %v2173, %v2731
  %2733 = vmatprep.mubr.f32.mxu0 %v2732
  %v2734 = vand.u32 %v2172, 4294901760
  %v2735 = vsub.f32 %v2172, %v2734
  %2736 = vmatmul.mubr.f32.gmra.mrb[0].mxu0 %v2735
  %v2737 = vpop.f32.mrb[0].mxu0
  %v2738 = vadd.f32 %v2577, %v2737
  %v2739 = vpop.f32.mrb[0].mxu0
  %v2740 = vand.u32 %v2177, 4294901760
  %v2741 = vsub.f32 %v2177, %v2740
  %2742 = vmatprep.mubr.f32.mxu0 %v2741
  %v2743 = vand.u32 %v2176, 4294901760
  %v2744 = vsub.f32 %v2176, %v2743
  %2745 = vmatmul.mubr.f32.gmra.mrb[0].mxu0 %v2744
  %v2746 = vpop.f32.mrb[0].mxu0
  %v2747 = vadd.f32 %v2584, %v2746
  %v2748 = vpop.f32.mrb[0].mxu0
  %v2749 = vand.u32 %v2181, 4294901760
  %v2750 = vsub.f32 %v2181, %v2749
  %2751 = vmatprep.mubr.f32.mxu0 %v2750
  %v2752 = vand.u32 %v2180, 4294901760
  %v2753 = vsub.f32 %v2180, %v2752
  %2754 = vmatmul.mubr.f32.gmra.mrb[0].mxu0 %v2753
  %v2755 = vpop.f32.mrb[0].mxu0
  %v2756 = vadd.f32 %v2591, %v2755
  %v2757 = vpop.f32.mrb[0].mxu0
  %2758 = vdwg.mxu0
  %2759 = vmatprep.subr.mxu0 0.0
  %v2760 = vand.u32 %v36, 4294901760
  %2761 = vmatpush1.msra.mxu0 %v2760
  %2762 = vmatprep.subr.mxu0 0.0
  %v2763 = vand.u32 %v37, 4294901760
  %2764 = vmatpush1.msra.mxu0 %v2763
  %2765 = vmatprep.subr.mxu0 0.0
  %v2766 = vand.u32 %v38, 4294901760
  %2767 = vmatpush1.msra.mxu0 %v2766
  %2768 = vmatprep.subr.mxu0 0.0
  %v2769 = vand.u32 %v39, 4294901760
  %2770 = vmatpush1.msra.mxu0 %v2769
  %2771 = vmatprep.subr.mxu0 0.0
  %v2772 = vand.u32 %v40, 4294901760
  %2773 = vmatpush1.msra.mxu0 %v2772
  %2774 = vmatprep.subr.mxu0 0.0
  %v2775 = vand.u32 %v41, 4294901760
  %2776 = vmatpush1.msra.mxu0 %v2775
  %2777 = vmatprep.subr.mxu0 0.0
  %v2778 = vand.u32 %v42, 4294901760
  %2779 = vmatpush1.msra.mxu0 %v2778
  %2780 = vmatprep.subr.mxu0 0.0
  %v2781 = vand.u32 %v43, 4294901760
  %2782 = vmatpush1.msra.mxu0 %v2781
  %2783 = vmatprep.subr.mxu0 0.0
  %v2784 = vand.u32 %v44, 4294901760
  %2785 = vmatpush1.msra.mxu0 %v2784
  %2786 = vmatprep.subr.mxu0 0.0
  %v2787 = vand.u32 %v45, 4294901760
  %2788 = vmatpush1.msra.mxu0 %v2787
  %2789 = vmatprep.subr.mxu0 0.0
  %v2790 = vand.u32 %v46, 4294901760
  %2791 = vmatpush1.msra.mxu0 %v2790
  %2792 = vmatprep.subr.mxu0 0.0
  %v2793 = vand.u32 %v47, 4294901760
  %2794 = vmatpush1.msra.mxu0 %v2793
  %2795 = vmatprep.subr.mxu0 0.0
  %v2796 = vand.u32 %v48, 4294901760
  %2797 = vmatpush1.msra.mxu0 %v2796
  %2798 = vmatprep.subr.mxu0 0.0
  %v2799 = vand.u32 %v49, 4294901760
  %2800 = vmatpush1.msra.mxu0 %v2799
  %2801 = vmatprep.subr.mxu0 0.0
  %v2802 = vand.u32 %v50, 4294901760
  %2803 = vmatpush1.msra.mxu0 %v2802
  %2804 = vmatprep.subr.mxu0 0.0
  %v2805 = vand.u32 %v51, 4294901760
  %2806 = vmatpush1.msra.mxu0 %v2805
  %2807 = vmatprep.subr.mxu0 0.0
  %v2808 = vand.u32 %v52, 4294901760
  %2809 = vmatpush1.msra.mxu0 %v2808
  %2810 = vmatprep.subr.mxu0 0.0
  %v2811 = vand.u32 %v53, 4294901760
  %2812 = vmatpush1.msra.mxu0 %v2811
  %2813 = vmatprep.subr.mxu0 0.0
  %v2814 = vand.u32 %v54, 4294901760
  %2815 = vmatpush1.msra.mxu0 %v2814
  %2816 = vmatprep.subr.mxu0 0.0
  %v2817 = vand.u32 %v55, 4294901760
  %2818 = vmatpush1.msra.mxu0 %v2817
  %2819 = vmatprep.subr.mxu0 0.0
  %v2820 = vand.u32 %v56, 4294901760
  %2821 = vmatpush1.msra.mxu0 %v2820
  %2822 = vmatprep.subr.mxu0 0.0
  %v2823 = vand.u32 %v57, 4294901760
  %2824 = vmatpush1.msra.mxu0 %v2823
  %2825 = vmatprep.subr.mxu0 0.0
  %v2826 = vand.u32 %v58, 4294901760
  %2827 = vmatpush1.msra.mxu0 %v2826
  %2828 = vmatprep.subr.mxu0 0.0
  %v2829 = vand.u32 %v59, 4294901760
  %2830 = vmatpush1.msra.mxu0 %v2829
  %2831 = vmatprep.subr.mxu0 0.0
  %v2832 = vand.u32 %v60, 4294901760
  %2833 = vmatpush1.msra.mxu0 %v2832
  %2834 = vmatprep.subr.mxu0 0.0
  %v2835 = vand.u32 %v61, 4294901760
  %2836 = vmatpush1.msra.mxu0 %v2835
  %2837 = vmatprep.subr.mxu0 0.0
  %v2838 = vand.u32 %v62, 4294901760
  %2839 = vmatpush1.msra.mxu0 %v2838
  %2840 = vmatprep.subr.mxu0 0.0
  %v2841 = vand.u32 %v63, 4294901760
  %2842 = vmatpush1.msra.mxu0 %v2841
  %2843 = vmatprep.subr.mxu0 0.0
  %v2844 = vand.u32 %v64, 4294901760
  %2845 = vmatpush1.msra.mxu0 %v2844
  %2846 = vmatprep.subr.mxu0 0.0
  %v2847 = vand.u32 %v65, 4294901760
  %2848 = vmatpush1.msra.mxu0 %v2847
  %2849 = vmatprep.subr.mxu0 0.0
  %v2850 = vand.u32 %v66, 4294901760
  %2851 = vmatpush1.msra.mxu0 %v2850
  %2852 = vmatprep.subr.mxu0 0.0
  %v2853 = vand.u32 %v67, 4294901760
  %2854 = vmatpush1.msra.mxu0 %v2853
  %v2855 = vand.u32 %v2169, 4294901760
  %v2856 = vsub.f32 %v2169, %v2855
  %v2857 = vand.u32 %v2856, 4294901760
  %2858 = vmatprep.mubr.f32.mxu0 %v2857
  %v2859 = vand.u32 %v2168, 4294901760
  %v2860 = vsub.f32 %v2168, %v2859
  %v2861 = vand.u32 %v2860, 4294901760
  %2862 = vmatmul.mubr.f32.gmra.mrb[0].mxu0 %v2861
  %v2863 = vpop.f32.mrb[0].mxu0
  %v2864 = vadd.f32 %v2729, %v2863
  %v2865 = vpop.f32.mrb[0].mxu0
  %v2866 = vand.u32 %v2173, 4294901760
  %v2867 = vsub.f32 %v2173, %v2866
  %v2868 = vand.u32 %v2867, 4294901760
  %2869 = vmatprep.mubr.f32.mxu0 %v2868
  %v2870 = vand.u32 %v2172, 4294901760
  %v2871 = vsub.f32 %v2172, %v2870
  %v2872 = vand.u32 %v2871, 4294901760
  %2873 = vmatmul.mubr.f32.gmra.mrb[0].mxu0 %v2872
  %v2874 = vpop.f32.mrb[0].mxu0
  %v2875 = vadd.f32 %v2738, %v2874
  %v2876 = vpop.f32.mrb[0].mxu0
  %v2877 = vand.u32 %v2177, 4294901760
  %v2878 = vsub.f32 %v2177, %v2877
  %v2879 = vand.u32 %v2878, 4294901760
  %2880 = vmatprep.mubr.f32.mxu0 %v2879
  %v2881 = vand.u32 %v2176, 4294901760
  %v2882 = vsub.f32 %v2176, %v2881
  %v2883 = vand.u32 %v2882, 4294901760
  %2884 = vmatmul.mubr.f32.gmra.mrb[0].mxu0 %v2883
  %v2885 = vpop.f32.mrb[0].mxu0
  %v2886 = vadd.f32 %v2747, %v2885
  %v2887 = vpop.f32.mrb[0].mxu0
  %v2888 = vand.u32 %v2181, 4294901760
  %v2889 = vsub.f32 %v2181, %v2888
  %v2890 = vand.u32 %v2889, 4294901760
  %2891 = vmatprep.mubr.f32.mxu0 %v2890
  %v2892 = vand.u32 %v2180, 4294901760
  %v2893 = vsub.f32 %v2180, %v2892
  %v2894 = vand.u32 %v2893, 4294901760
  %2895 = vmatmul.mubr.f32.gmra.mrb[0].mxu0 %v2894
  %v2896 = vpop.f32.mrb[0].mxu0
  %v2897 = vadd.f32 %v2756, %v2896
  %v2898 = vpop.f32.mrb[0].mxu0
  %2899 = vdwg.mxu0
  %2900 = vmatprep.subr.mxu0 0.0
  %v2901 = vand.u32 %v36, 4294901760
  %v2902 = vsub.f32 %v36, %v2901
  %v2903 = vand.u32 %v2902, 4294901760
  %2904 = vmatpush1.msra.mxu0 %v2903
  %2905 = vmatprep.subr.mxu0 0.0
  %v2906 = vand.u32 %v37, 4294901760
  %v2907 = vsub.f32 %v37, %v2906
  %v2908 = vand.u32 %v2907, 4294901760
  %2909 = vmatpush1.msra.mxu0 %v2908
  %2910 = vmatprep.subr.mxu0 0.0
  %v2911 = vand.u32 %v38, 4294901760
  %v2912 = vsub.f32 %v38, %v2911
  %v2913 = vand.u32 %v2912, 4294901760
  %2914 = vmatpush1.msra.mxu0 %v2913
  %2915 = vmatprep.subr.mxu0 0.0
  %v2916 = vand.u32 %v39, 4294901760
  %v2917 = vsub.f32 %v39, %v2916
  %v2918 = vand.u32 %v2917, 4294901760
  %2919 = vmatpush1.msra.mxu0 %v2918
  %2920 = vmatprep.subr.mxu0 0.0
  %v2921 = vand.u32 %v40, 4294901760
  %v2922 = vsub.f32 %v40, %v2921
  %v2923 = vand.u32 %v2922, 4294901760
  %2924 = vmatpush1.msra.mxu0 %v2923
  %2925 = vmatprep.subr.mxu0 0.0
  %v2926 = vand.u32 %v41, 4294901760
  %v2927 = vsub.f32 %v41, %v2926
  %v2928 = vand.u32 %v2927, 4294901760
  %2929 = vmatpush1.msra.mxu0 %v2928
  %2930 = vmatprep.subr.mxu0 0.0
  %v2931 = vand.u32 %v42, 4294901760
  %v2932 = vsub.f32 %v42, %v2931
  %v2933 = vand.u32 %v2932, 4294901760
  %2934 = vmatpush1.msra.mxu0 %v2933
  %2935 = vmatprep.subr.mxu0 0.0
  %v2936 = vand.u32 %v43, 4294901760
  %v2937 = vsub.f32 %v43, %v2936
  %v2938 = vand.u32 %v2937, 4294901760
  %2939 = vmatpush1.msra.mxu0 %v2938
  %2940 = vmatprep.subr.mxu0 0.0
  %v2941 = vand.u32 %v44, 4294901760
  %v2942 = vsub.f32 %v44, %v2941
  %v2943 = vand.u32 %v2942, 4294901760
  %2944 = vmatpush1.msra.mxu0 %v2943
  %2945 = vmatprep.subr.mxu0 0.0
  %v2946 = vand.u32 %v45, 4294901760
  %v2947 = vsub.f32 %v45, %v2946
  %v2948 = vand.u32 %v2947, 4294901760
  %2949 = vmatpush1.msra.mxu0 %v2948
  %2950 = vmatprep.subr.mxu0 0.0
  %v2951 = vand.u32 %v46, 4294901760
  %v2952 = vsub.f32 %v46, %v2951
  %v2953 = vand.u32 %v2952, 4294901760
  %2954 = vmatpush1.msra.mxu0 %v2953
  %2955 = vmatprep.subr.mxu0 0.0
  %v2956 = vand.u32 %v47, 4294901760
  %v2957 = vsub.f32 %v47, %v2956
  %v2958 = vand.u32 %v2957, 4294901760
  %2959 = vmatpush1.msra.mxu0 %v2958
  %2960 = vmatprep.subr.mxu0 0.0
  %v2961 = vand.u32 %v48, 4294901760
  %v2962 = vsub.f32 %v48, %v2961
  %v2963 = vand.u32 %v2962, 4294901760
  %2964 = vmatpush1.msra.mxu0 %v2963
  %2965 = vmatprep.subr.mxu0 0.0
  %v2966 = vand.u32 %v49, 4294901760
  %v2967 = vsub.f32 %v49, %v2966
  %v2968 = vand.u32 %v2967, 4294901760
  %2969 = vmatpush1.msra.mxu0 %v2968
  %2970 = vmatprep.subr.mxu0 0.0
  %v2971 = vand.u32 %v50, 4294901760
  %v2972 = vsub.f32 %v50, %v2971
  %v2973 = vand.u32 %v2972, 4294901760
  %2974 = vmatpush1.msra.mxu0 %v2973
  %2975 = vmatprep.subr.mxu0 0.0
  %v2976 = vand.u32 %v51, 4294901760
  %v2977 = vsub.f32 %v51, %v2976
  %v2978 = vand.u32 %v2977, 4294901760
  %2979 = vmatpush1.msra.mxu0 %v2978
  %2980 = vmatprep.subr.mxu0 0.0
  %v2981 = vand.u32 %v52, 4294901760
  %v2982 = vsub.f32 %v52, %v2981
  %v2983 = vand.u32 %v2982, 4294901760
  %2984 = vmatpush1.msra.mxu0 %v2983
  %2985 = vmatprep.subr.mxu0 0.0
  %v2986 = vand.u32 %v53, 4294901760
  %v2987 = vsub.f32 %v53, %v2986
  %v2988 = vand.u32 %v2987, 4294901760
  %2989 = vmatpush1.msra.mxu0 %v2988
  %2990 = vmatprep.subr.mxu0 0.0
  %v2991 = vand.u32 %v54, 4294901760
  %v2992 = vsub.f32 %v54, %v2991
  %v2993 = vand.u32 %v2992, 4294901760
  %2994 = vmatpush1.msra.mxu0 %v2993
  %2995 = vmatprep.subr.mxu0 0.0
  %v2996 = vand.u32 %v55, 4294901760
  %v2997 = vsub.f32 %v55, %v2996
  %v2998 = vand.u32 %v2997, 4294901760
  %2999 = vmatpush1.msra.mxu0 %v2998
  %3000 = vmatprep.subr.mxu0 0.0
  %v3001 = vand.u32 %v56, 4294901760
  %v3002 = vsub.f32 %v56, %v3001
  %v3003 = vand.u32 %v3002, 4294901760
  %3004 = vmatpush1.msra.mxu0 %v3003
  %3005 = vmatprep.subr.mxu0 0.0
  %v3006 = vand.u32 %v57, 4294901760
  %v3007 = vsub.f32 %v57, %v3006
  %v3008 = vand.u32 %v3007, 4294901760
  %3009 = vmatpush1.msra.mxu0 %v3008
  %3010 = vmatprep.subr.mxu0 0.0
  %v3011 = vand.u32 %v58, 4294901760
  %v3012 = vsub.f32 %v58, %v3011
  %v3013 = vand.u32 %v3012, 4294901760
  %3014 = vmatpush1.msra.mxu0 %v3013
  %3015 = vmatprep.subr.mxu0 0.0
  %v3016 = vand.u32 %v59, 4294901760
  %v3017 = vsub.f32 %v59, %v3016
  %v3018 = vand.u32 %v3017, 4294901760
  %3019 = vmatpush1.msra.mxu0 %v3018
  %3020 = vmatprep.subr.mxu0 0.0
  %v3021 = vand.u32 %v60, 4294901760
  %v3022 = vsub.f32 %v60, %v3021
  %v3023 = vand.u32 %v3022, 4294901760
  %3024 = vmatpush1.msra.mxu0 %v3023
  %3025 = vmatprep.subr.mxu0 0.0
  %v3026 = vand.u32 %v61, 4294901760
  %v3027 = vsub.f32 %v61, %v3026
  %v3028 = vand.u32 %v3027, 4294901760
  %3029 = vmatpush1.msra.mxu0 %v3028
  %3030 = vmatprep.subr.mxu0 0.0
  %v3031 = vand.u32 %v62, 4294901760
  %v3032 = vsub.f32 %v62, %v3031
  %v3033 = vand.u32 %v3032, 4294901760
  %3034 = vmatpush1.msra.mxu0 %v3033
  %3035 = vmatprep.subr.mxu0 0.0
  %v3036 = vand.u32 %v63, 4294901760
  %v3037 = vsub.f32 %v63, %v3036
  %v3038 = vand.u32 %v3037, 4294901760
  %3039 = vmatpush1.msra.mxu0 %v3038
  %3040 = vmatprep.subr.mxu0 0.0
  %v3041 = vand.u32 %v64, 4294901760
  %v3042 = vsub.f32 %v64, %v3041
  %v3043 = vand.u32 %v3042, 4294901760
  %3044 = vmatpush1.msra.mxu0 %v3043
  %3045 = vmatprep.subr.mxu0 0.0
  %v3046 = vand.u32 %v65, 4294901760
  %v3047 = vsub.f32 %v65, %v3046
  %v3048 = vand.u32 %v3047, 4294901760
  %3049 = vmatpush1.msra.mxu0 %v3048
  %3050 = vmatprep.subr.mxu0 0.0
  %v3051 = vand.u32 %v66, 4294901760
  %v3052 = vsub.f32 %v66, %v3051
  %v3053 = vand.u32 %v3052, 4294901760
  %3054 = vmatpush1.msra.mxu0 %v3053
  %3055 = vmatprep.subr.mxu0 0.0
  %v3056 = vand.u32 %v67, 4294901760
  %v3057 = vsub.f32 %v67, %v3056
  %v3058 = vand.u32 %v3057, 4294901760
  %3059 = vmatpush1.msra.mxu0 %v3058
  %v3060 = vand.u32 %v2169, 4294901760
  %3061 = vmatprep.mubr.f32.mxu0 %v3060
  %v3062 = vand.u32 %v2168, 4294901760
  %3063 = vmatmul.mubr.f32.gmra.mrb[0].mxu0 %v3062
  %v3064 = vpop.f32.mrb[0].mxu0
  %v3065 = vadd.f32 %v2864, %v3064
  %v3066 = vpop.f32.mrb[0].mxu0
  %v3067 = vand.u32 %v2173, 4294901760
  %3068 = vmatprep.mubr.f32.mxu0 %v3067
  %v3069 = vand.u32 %v2172, 4294901760
  %3070 = vmatmul.mubr.f32.gmra.mrb[0].mxu0 %v3069
  %v3071 = vpop.f32.mrb[0].mxu0
  %v3072 = vadd.f32 %v2875, %v3071
  %v3073 = vpop.f32.mrb[0].mxu0
  %v3074 = vand.u32 %v2177, 4294901760
  %3075 = vmatprep.mubr.f32.mxu0 %v3074
  %v3076 = vand.u32 %v2176, 4294901760
  %3077 = vmatmul.mubr.f32.gmra.mrb[0].mxu0 %v3076
  %v3078 = vpop.f32.mrb[0].mxu0
  %v3079 = vadd.f32 %v2886, %v3078
  %v3080 = vpop.f32.mrb[0].mxu0
  %v3081 = vand.u32 %v2181, 4294901760
  %3082 = vmatprep.mubr.f32.mxu0 %v3081
  %v3083 = vand.u32 %v2180, 4294901760
  %3084 = vmatmul.mubr.f32.gmra.mrb[0].mxu0 %v3083
  %v3085 = vpop.f32.mrb[0].mxu0
  %v3086 = vadd.f32 %v2897, %v3085
  %v3087 = vpop.f32.mrb[0].mxu0
  %3088 = vdwg.mxu0
  %3089 = vmatprep.subr.mxu0 0.0
  %v3090 = vand.u32 %v36, 4294901760
  %3091 = vmatpush1.msra.mxu0 %v3090
  %3092 = vmatprep.subr.mxu0 0.0
  %v3093 = vand.u32 %v37, 4294901760
  %3094 = vmatpush1.msra.mxu0 %v3093
  %3095 = vmatprep.subr.mxu0 0.0
  %v3096 = vand.u32 %v38, 4294901760
  %3097 = vmatpush1.msra.mxu0 %v3096
  %3098 = vmatprep.subr.mxu0 0.0
  %v3099 = vand.u32 %v39, 4294901760
  %3100 = vmatpush1.msra.mxu0 %v3099
  %3101 = vmatprep.subr.mxu0 0.0
  %v3102 = vand.u32 %v40, 4294901760
  %3103 = vmatpush1.msra.mxu0 %v3102
  %3104 = vmatprep.subr.mxu0 0.0
  %v3105 = vand.u32 %v41, 4294901760
  %3106 = vmatpush1.msra.mxu0 %v3105
  %3107 = vmatprep.subr.mxu0 0.0
  %v3108 = vand.u32 %v42, 4294901760
  %3109 = vmatpush1.msra.mxu0 %v3108
  %3110 = vmatprep.subr.mxu0 0.0
  %v3111 = vand.u32 %v43, 4294901760
  %3112 = vmatpush1.msra.mxu0 %v3111
  %3113 = vmatprep.subr.mxu0 0.0
  %v3114 = vand.u32 %v44, 4294901760
  %3115 = vmatpush1.msra.mxu0 %v3114
  %3116 = vmatprep.subr.mxu0 0.0
  %v3117 = vand.u32 %v45, 4294901760
  %3118 = vmatpush1.msra.mxu0 %v3117
  %3119 = vmatprep.subr.mxu0 0.0
  %v3120 = vand.u32 %v46, 4294901760
  %3121 = vmatpush1.msra.mxu0 %v3120
  %3122 = vmatprep.subr.mxu0 0.0
  %v3123 = vand.u32 %v47, 4294901760
  %3124 = vmatpush1.msra.mxu0 %v3123
  %3125 = vmatprep.subr.mxu0 0.0
  %v3126 = vand.u32 %v48, 4294901760
  %3127 = vmatpush1.msra.mxu0 %v3126
  %3128 = vmatprep.subr.mxu0 0.0
  %v3129 = vand.u32 %v49, 4294901760
  %3130 = vmatpush1.msra.mxu0 %v3129
  %3131 = vmatprep.subr.mxu0 0.0
  %v3132 = vand.u32 %v50, 4294901760
  %3133 = vmatpush1.msra.mxu0 %v3132
  %3134 = vmatprep.subr.mxu0 0.0
  %v3135 = vand.u32 %v51, 4294901760
  %3136 = vmatpush1.msra.mxu0 %v3135
  %3137 = vmatprep.subr.mxu0 0.0
  %v3138 = vand.u32 %v52, 4294901760
  %3139 = vmatpush1.msra.mxu0 %v3138
  %3140 = vmatprep.subr.mxu0 0.0
  %v3141 = vand.u32 %v53, 4294901760
  %3142 = vmatpush1.msra.mxu0 %v3141
  %3143 = vmatprep.subr.mxu0 0.0
  %v3144 = vand.u32 %v54, 4294901760
  %3145 = vmatpush1.msra.mxu0 %v3144
  %3146 = vmatprep.subr.mxu0 0.0
  %v3147 = vand.u32 %v55, 4294901760
  %3148 = vmatpush1.msra.mxu0 %v3147
  %3149 = vmatprep.subr.mxu0 0.0
  %v3150 = vand.u32 %v56, 4294901760
  %3151 = vmatpush1.msra.mxu0 %v3150
  %3152 = vmatprep.subr.mxu0 0.0
  %v3153 = vand.u32 %v57, 4294901760
  %3154 = vmatpush1.msra.mxu0 %v3153
  %3155 = vmatprep.subr.mxu0 0.0
  %v3156 = vand.u32 %v58, 4294901760
  %3157 = vmatpush1.msra.mxu0 %v3156
  %3158 = vmatprep.subr.mxu0 0.0
  %v3159 = vand.u32 %v59, 4294901760
  %3160 = vmatpush1.msra.mxu0 %v3159
  %3161 = vmatprep.subr.mxu0 0.0
  %v3162 = vand.u32 %v60, 4294901760
  %3163 = vmatpush1.msra.mxu0 %v3162
  %3164 = vmatprep.subr.mxu0 0.0
  %v3165 = vand.u32 %v61, 4294901760
  %3166 = vmatpush1.msra.mxu0 %v3165
  %3167 = vmatprep.subr.mxu0 0.0
  %v3168 = vand.u32 %v62, 4294901760
  %3169 = vmatpush1.msra.mxu0 %v3168
  %3170 = vmatprep.subr.mxu0 0.0
  %v3171 = vand.u32 %v63, 4294901760
  %3172 = vmatpush1.msra.mxu0 %v3171
  %3173 = vmatprep.subr.mxu0 0.0
  %v3174 = vand.u32 %v64, 4294901760
  %3175 = vmatpush1.msra.mxu0 %v3174
  %3176 = vmatprep.subr.mxu0 0.0
  %v3177 = vand.u32 %v65, 4294901760
  %3178 = vmatpush1.msra.mxu0 %v3177
  %3179 = vmatprep.subr.mxu0 0.0
  %v3180 = vand.u32 %v66, 4294901760
  %3181 = vmatpush1.msra.mxu0 %v3180
  %3182 = vmatprep.subr.mxu0 0.0
  %v3183 = vand.u32 %v67, 4294901760
  %3184 = vmatpush1.msra.mxu0 %v3183
  %v3185 = vand.u32 %v2169, 4294901760
  %3186 = vmatprep.mubr.f32.mxu0 %v3185
  %v3187 = vand.u32 %v2168, 4294901760
  %3188 = vmatmul.mubr.f32.gmra.mrb[0].mxu0 %v3187
  %v3189 = vpop.f32.mrb[0].mxu0
  %v3190 = vadd.f32 %v3065, %v3189
  %v3191 = vpop.f32.mrb[0].mxu0
  %v3192 = vand.u32 %v2173, 4294901760
  %3193 = vmatprep.mubr.f32.mxu0 %v3192
  %v3194 = vand.u32 %v2172, 4294901760
  %3195 = vmatmul.mubr.f32.gmra.mrb[0].mxu0 %v3194
  %v3196 = vpop.f32.mrb[0].mxu0
  %v3197 = vadd.f32 %v3072, %v3196
  %v3198 = vpop.f32.mrb[0].mxu0
  %v3199 = vand.u32 %v2177, 4294901760
  %3200 = vmatprep.mubr.f32.mxu0 %v3199
  %v3201 = vand.u32 %v2176, 4294901760
  %3202 = vmatmul.mubr.f32.gmra.mrb[0].mxu0 %v3201
  %v3203 = vpop.f32.mrb[0].mxu0
  %v3204 = vadd.f32 %v3079, %v3203
  %v3205 = vpop.f32.mrb[0].mxu0
  %v3206 = vand.u32 %v2181, 4294901760
  %3207 = vmatprep.mubr.f32.mxu0 %v3206
  %v3208 = vand.u32 %v2180, 4294901760
  %3209 = vmatmul.mubr.f32.gmra.mrb[0].mxu0 %v3208
  %v3210 = vpop.f32.mrb[0].mxu0
  %v3211 = vadd.f32 %v3086, %v3210
  %v3212 = vpop.f32.mrb[0].mxu0
  %3213 = vdwg.mxu0
  %3214 = vmatprep.subr.mxu0 0.0
  %v3215 = vand.u32 %v68, 4294901760
  %3216 = vmatpush1.msra.mxu0 %v3215
  %3217 = vmatprep.subr.mxu0 0.0
  %v3218 = vand.u32 %v69, 4294901760
  %3219 = vmatpush1.msra.mxu0 %v3218
  %3220 = vmatprep.subr.mxu0 0.0
  %v3221 = vand.u32 %v70, 4294901760
  %3222 = vmatpush1.msra.mxu0 %v3221
  %3223 = vmatprep.subr.mxu0 0.0
  %v3224 = vand.u32 %v71, 4294901760
  %3225 = vmatpush1.msra.mxu0 %v3224
  %3226 = vmatprep.subr.mxu0 0.0
  %v3227 = vand.u32 %v72, 4294901760
  %3228 = vmatpush1.msra.mxu0 %v3227
  %3229 = vmatprep.subr.mxu0 0.0
  %v3230 = vand.u32 %v73, 4294901760
  %3231 = vmatpush1.msra.mxu0 %v3230
  %3232 = vmatprep.subr.mxu0 0.0
  %v3233 = vand.u32 %v74, 4294901760
  %3234 = vmatpush1.msra.mxu0 %v3233
  %3235 = vmatprep.subr.mxu0 0.0
  %v3236 = vand.u32 %v75, 4294901760
  %3237 = vmatpush1.msra.mxu0 %v3236
  %3238 = vmatprep.subr.mxu0 0.0
  %v3239 = vand.u32 %v76, 4294901760
  %3240 = vmatpush1.msra.mxu0 %v3239
  %3241 = vmatprep.subr.mxu0 0.0
  %v3242 = vand.u32 %v77, 4294901760
  %3243 = vmatpush1.msra.mxu0 %v3242
  %3244 = vmatprep.subr.mxu0 0.0
  %v3245 = vand.u32 %v78, 4294901760
  %3246 = vmatpush1.msra.mxu0 %v3245
  %3247 = vmatprep.subr.mxu0 0.0
  %v3248 = vand.u32 %v79, 4294901760
  %3249 = vmatpush1.msra.mxu0 %v3248
  %3250 = vmatprep.subr.mxu0 0.0
  %v3251 = vand.u32 %v80, 4294901760
  %3252 = vmatpush1.msra.mxu0 %v3251
  %3253 = vmatprep.subr.mxu0 0.0
  %v3254 = vand.u32 %v81, 4294901760
  %3255 = vmatpush1.msra.mxu0 %v3254
  %3256 = vmatprep.subr.mxu0 0.0
  %v3257 = vand.u32 %v82, 4294901760
  %3258 = vmatpush1.msra.mxu0 %v3257
  %3259 = vmatprep.subr.mxu0 0.0
  %v3260 = vand.u32 %v83, 4294901760
  %3261 = vmatpush1.msra.mxu0 %v3260
  %3262 = vmatprep.subr.mxu0 0.0
  %v3263 = vand.u32 %v84, 4294901760
  %3264 = vmatpush1.msra.mxu0 %v3263
  %3265 = vmatprep.subr.mxu0 0.0
  %v3266 = vand.u32 %v85, 4294901760
  %3267 = vmatpush1.msra.mxu0 %v3266
  %3268 = vmatprep.subr.mxu0 0.0
  %v3269 = vand.u32 %v86, 4294901760
  %3270 = vmatpush1.msra.mxu0 %v3269
  %3271 = vmatprep.subr.mxu0 0.0
  %v3272 = vand.u32 %v87, 4294901760
  %3273 = vmatpush1.msra.mxu0 %v3272
  %3274 = vmatprep.subr.mxu0 0.0
  %v3275 = vand.u32 %v88, 4294901760
  %3276 = vmatpush1.msra.mxu0 %v3275
  %3277 = vmatprep.subr.mxu0 0.0
  %v3278 = vand.u32 %v89, 4294901760
  %3279 = vmatpush1.msra.mxu0 %v3278
  %3280 = vmatprep.subr.mxu0 0.0
  %v3281 = vand.u32 %v90, 4294901760
  %3282 = vmatpush1.msra.mxu0 %v3281
  %3283 = vmatprep.subr.mxu0 0.0
  %v3284 = vand.u32 %v91, 4294901760
  %3285 = vmatpush1.msra.mxu0 %v3284
  %3286 = vmatprep.subr.mxu0 0.0
  %v3287 = vand.u32 %v92, 4294901760
  %3288 = vmatpush1.msra.mxu0 %v3287
  %3289 = vmatprep.subr.mxu0 0.0
  %v3290 = vand.u32 %v93, 4294901760
  %3291 = vmatpush1.msra.mxu0 %v3290
  %3292 = vmatprep.subr.mxu0 0.0
  %v3293 = vand.u32 %v94, 4294901760
  %3294 = vmatpush1.msra.mxu0 %v3293
  %3295 = vmatprep.subr.mxu0 0.0
  %v3296 = vand.u32 %v95, 4294901760
  %3297 = vmatpush1.msra.mxu0 %v3296
  %3298 = vmatprep.subr.mxu0 0.0
  %v3299 = vand.u32 %v96, 4294901760
  %3300 = vmatpush1.msra.mxu0 %v3299
  %3301 = vmatprep.subr.mxu0 0.0
  %v3302 = vand.u32 %v97, 4294901760
  %3303 = vmatpush1.msra.mxu0 %v3302
  %3304 = vmatprep.subr.mxu0 0.0
  %v3305 = vand.u32 %v98, 4294901760
  %3306 = vmatpush1.msra.mxu0 %v3305
  %3307 = vmatprep.subr.mxu0 0.0
  %v3308 = vand.u32 %v99, 4294901760
  %3309 = vmatpush1.msra.mxu0 %v3308
  %v3310 = vand.u32 %v2171, 4294901760
  %v3311 = vsub.f32 %v2171, %v3310
  %v3312 = vand.u32 %v3311, 4294901760
  %v3313 = vsub.f32 %v3311, %v3312
  %v3314 = vand.u32 %v3313, 4294901760
  %3315 = vmatprep.mubr.f32.mxu0 %v3314
  %v3316 = vand.u32 %v2170, 4294901760
  %v3317 = vsub.f32 %v2170, %v3316
  %v3318 = vand.u32 %v3317, 4294901760
  %v3319 = vsub.f32 %v3317, %v3318
  %v3320 = vand.u32 %v3319, 4294901760
  %3321 = vmatmul.mubr.f32.gmra.mrb[0].mxu0 %v3320
  %v3322 = vpop.f32.mrb[0].mxu0
  %v3323 = vadd.f32 %v3190, %v3322
  %v3324 = vpop.f32.mrb[0].mxu0
  %v3325 = vand.u32 %v2175, 4294901760
  %v3326 = vsub.f32 %v2175, %v3325
  %v3327 = vand.u32 %v3326, 4294901760
  %v3328 = vsub.f32 %v3326, %v3327
  %v3329 = vand.u32 %v3328, 4294901760
  %3330 = vmatprep.mubr.f32.mxu0 %v3329
  %v3331 = vand.u32 %v2174, 4294901760
  %v3332 = vsub.f32 %v2174, %v3331
  %v3333 = vand.u32 %v3332, 4294901760
  %v3334 = vsub.f32 %v3332, %v3333
  %v3335 = vand.u32 %v3334, 4294901760
  %3336 = vmatmul.mubr.f32.gmra.mrb[0].mxu0 %v3335
  %v3337 = vpop.f32.mrb[0].mxu0
  %v3338 = vadd.f32 %v3197, %v3337
  %v3339 = vpop.f32.mrb[0].mxu0
  %v3340 = vand.u32 %v2179, 4294901760
  %v3341 = vsub.f32 %v2179, %v3340
  %v3342 = vand.u32 %v3341, 4294901760
  %v3343 = vsub.f32 %v3341, %v3342
  %v3344 = vand.u32 %v3343, 4294901760
  %3345 = vmatprep.mubr.f32.mxu0 %v3344
  %v3346 = vand.u32 %v2178, 4294901760
  %v3347 = vsub.f32 %v2178, %v3346
  %v3348 = vand.u32 %v3347, 4294901760
  %v3349 = vsub.f32 %v3347, %v3348
  %v3350 = vand.u32 %v3349, 4294901760
  %3351 = vmatmul.mubr.f32.gmra.mrb[0].mxu0 %v3350
  %v3352 = vpop.f32.mrb[0].mxu0
  %v3353 = vadd.f32 %v3204, %v3352
  %v3354 = vpop.f32.mrb[0].mxu0
  %v3355 = vand.u32 %v2183, 4294901760
  %v3356 = vsub.f32 %v2183, %v3355
  %v3357 = vand.u32 %v3356, 4294901760
  %v3358 = vsub.f32 %v3356, %v3357
  %v3359 = vand.u32 %v3358, 4294901760
  %3360 = vmatprep.mubr.f32.mxu0 %v3359
  %v3361 = vand.u32 %v2182, 4294901760
  %v3362 = vsub.f32 %v2182, %v3361
  %v3363 = vand.u32 %v3362, 4294901760
  %v3364 = vsub.f32 %v3362, %v3363
  %v3365 = vand.u32 %v3364, 4294901760
  %3366 = vmatmul.mubr.f32.gmra.mrb[0].mxu0 %v3365
  %v3367 = vpop.f32.mrb[0].mxu0
  %v3368 = vadd.f32 %v3211, %v3367
  %v3369 = vpop.f32.mrb[0].mxu0
  %3370 = vdwg.mxu0
  %3371 = vmatprep.subr.mxu0 0.0
  %v3372 = vand.u32 %v68, 4294901760
  %v3373 = vsub.f32 %v68, %v3372
  %v3374 = vand.u32 %v3373, 4294901760
  %v3375 = vsub.f32 %v3373, %v3374
  %v3376 = vand.u32 %v3375, 4294901760
  %3377 = vmatpush1.msra.mxu0 %v3376
  %3378 = vmatprep.subr.mxu0 0.0
  %v3379 = vand.u32 %v69, 4294901760
  %v3380 = vsub.f32 %v69, %v3379
  %v3381 = vand.u32 %v3380, 4294901760
  %v3382 = vsub.f32 %v3380, %v3381
  %v3383 = vand.u32 %v3382, 4294901760
  %3384 = vmatpush1.msra.mxu0 %v3383
  %3385 = vmatprep.subr.mxu0 0.0
  %v3386 = vand.u32 %v70, 4294901760
  %v3387 = vsub.f32 %v70, %v3386
  %v3388 = vand.u32 %v3387, 4294901760
  %v3389 = vsub.f32 %v3387, %v3388
  %v3390 = vand.u32 %v3389, 4294901760
  %3391 = vmatpush1.msra.mxu0 %v3390
  %3392 = vmatprep.subr.mxu0 0.0
  %v3393 = vand.u32 %v71, 4294901760
  %v3394 = vsub.f32 %v71, %v3393
  %v3395 = vand.u32 %v3394, 4294901760
  %v3396 = vsub.f32 %v3394, %v3395
  %v3397 = vand.u32 %v3396, 4294901760
  %3398 = vmatpush1.msra.mxu0 %v3397
  %3399 = vmatprep.subr.mxu0 0.0
  %v3400 = vand.u32 %v72, 4294901760
  %v3401 = vsub.f32 %v72, %v3400
  %v3402 = vand.u32 %v3401, 4294901760
  %v3403 = vsub.f32 %v3401, %v3402
  %v3404 = vand.u32 %v3403, 4294901760
  %3405 = vmatpush1.msra.mxu0 %v3404
  %3406 = vmatprep.subr.mxu0 0.0
  %v3407 = vand.u32 %v73, 4294901760
  %v3408 = vsub.f32 %v73, %v3407
  %v3409 = vand.u32 %v3408, 4294901760
  %v3410 = vsub.f32 %v3408, %v3409
  %v3411 = vand.u32 %v3410, 4294901760
  %3412 = vmatpush1.msra.mxu0 %v3411
  %3413 = vmatprep.subr.mxu0 0.0
  %v3414 = vand.u32 %v74, 4294901760
  %v3415 = vsub.f32 %v74, %v3414
  %v3416 = vand.u32 %v3415, 4294901760
  %v3417 = vsub.f32 %v3415, %v3416
  %v3418 = vand.u32 %v3417, 4294901760
  %3419 = vmatpush1.msra.mxu0 %v3418
  %3420 = vmatprep.subr.mxu0 0.0
  %v3421 = vand.u32 %v75, 4294901760
  %v3422 = vsub.f32 %v75, %v3421
  %v3423 = vand.u32 %v3422, 4294901760
  %v3424 = vsub.f32 %v3422, %v3423
  %v3425 = vand.u32 %v3424, 4294901760
  %3426 = vmatpush1.msra.mxu0 %v3425
  %3427 = vmatprep.subr.mxu0 0.0
  %v3428 = vand.u32 %v76, 4294901760
  %v3429 = vsub.f32 %v76, %v3428
  %v3430 = vand.u32 %v3429, 4294901760
  %v3431 = vsub.f32 %v3429, %v3430
  %v3432 = vand.u32 %v3431, 4294901760
  %3433 = vmatpush1.msra.mxu0 %v3432
  %3434 = vmatprep.subr.mxu0 0.0
  %v3435 = vand.u32 %v77, 4294901760
  %v3436 = vsub.f32 %v77, %v3435
  %v3437 = vand.u32 %v3436, 4294901760
  %v3438 = vsub.f32 %v3436, %v3437
  %v3439 = vand.u32 %v3438, 4294901760
  %3440 = vmatpush1.msra.mxu0 %v3439
  %3441 = vmatprep.subr.mxu0 0.0
  %v3442 = vand.u32 %v78, 4294901760
  %v3443 = vsub.f32 %v78, %v3442
  %v3444 = vand.u32 %v3443, 4294901760
  %v3445 = vsub.f32 %v3443, %v3444
  %v3446 = vand.u32 %v3445, 4294901760
  %3447 = vmatpush1.msra.mxu0 %v3446
  %3448 = vmatprep.subr.mxu0 0.0
  %v3449 = vand.u32 %v79, 4294901760
  %v3450 = vsub.f32 %v79, %v3449
  %v3451 = vand.u32 %v3450, 4294901760
  %v3452 = vsub.f32 %v3450, %v3451
  %v3453 = vand.u32 %v3452, 4294901760
  %3454 = vmatpush1.msra.mxu0 %v3453
  %3455 = vmatprep.subr.mxu0 0.0
  %v3456 = vand.u32 %v80, 4294901760
  %v3457 = vsub.f32 %v80, %v3456
  %v3458 = vand.u32 %v3457, 4294901760
  %v3459 = vsub.f32 %v3457, %v3458
  %v3460 = vand.u32 %v3459, 4294901760
  %3461 = vmatpush1.msra.mxu0 %v3460
  %3462 = vmatprep.subr.mxu0 0.0
  %v3463 = vand.u32 %v81, 4294901760
  %v3464 = vsub.f32 %v81, %v3463
  %v3465 = vand.u32 %v3464, 4294901760
  %v3466 = vsub.f32 %v3464, %v3465
  %v3467 = vand.u32 %v3466, 4294901760
  %3468 = vmatpush1.msra.mxu0 %v3467
  %3469 = vmatprep.subr.mxu0 0.0
  %v3470 = vand.u32 %v82, 4294901760
  %v3471 = vsub.f32 %v82, %v3470
  %v3472 = vand.u32 %v3471, 4294901760
  %v3473 = vsub.f32 %v3471, %v3472
  %v3474 = vand.u32 %v3473, 4294901760
  %3475 = vmatpush1.msra.mxu0 %v3474
  %3476 = vmatprep.subr.mxu0 0.0
  %v3477 = vand.u32 %v83, 4294901760
  %v3478 = vsub.f32 %v83, %v3477
  %v3479 = vand.u32 %v3478, 4294901760
  %v3480 = vsub.f32 %v3478, %v3479
  %v3481 = vand.u32 %v3480, 4294901760
  %3482 = vmatpush1.msra.mxu0 %v3481
  %3483 = vmatprep.subr.mxu0 0.0
  %v3484 = vand.u32 %v84, 4294901760
  %v3485 = vsub.f32 %v84, %v3484
  %v3486 = vand.u32 %v3485, 4294901760
  %v3487 = vsub.f32 %v3485, %v3486
  %v3488 = vand.u32 %v3487, 4294901760
  %3489 = vmatpush1.msra.mxu0 %v3488
  %3490 = vmatprep.subr.mxu0 0.0
  %v3491 = vand.u32 %v85, 4294901760
  %v3492 = vsub.f32 %v85, %v3491
  %v3493 = vand.u32 %v3492, 4294901760
  %v3494 = vsub.f32 %v3492, %v3493
  %v3495 = vand.u32 %v3494, 4294901760
  %3496 = vmatpush1.msra.mxu0 %v3495
  %3497 = vmatprep.subr.mxu0 0.0
  %v3498 = vand.u32 %v86, 4294901760
  %v3499 = vsub.f32 %v86, %v3498
  %v3500 = vand.u32 %v3499, 4294901760
  %v3501 = vsub.f32 %v3499, %v3500
  %v3502 = vand.u32 %v3501, 4294901760
  %3503 = vmatpush1.msra.mxu0 %v3502
  %3504 = vmatprep.subr.mxu0 0.0
  %v3505 = vand.u32 %v87, 4294901760
  %v3506 = vsub.f32 %v87, %v3505
  %v3507 = vand.u32 %v3506, 4294901760
  %v3508 = vsub.f32 %v3506, %v3507
  %v3509 = vand.u32 %v3508, 4294901760
  %3510 = vmatpush1.msra.mxu0 %v3509
  %3511 = vmatprep.subr.mxu0 0.0
  %v3512 = vand.u32 %v88, 4294901760
  %v3513 = vsub.f32 %v88, %v3512
  %v3514 = vand.u32 %v3513, 4294901760
  %v3515 = vsub.f32 %v3513, %v3514
  %v3516 = vand.u32 %v3515, 4294901760
  %3517 = vmatpush1.msra.mxu0 %v3516
  %3518 = vmatprep.subr.mxu0 0.0
  %v3519 = vand.u32 %v89, 4294901760
  %v3520 = vsub.f32 %v89, %v3519
  %v3521 = vand.u32 %v3520, 4294901760
  %v3522 = vsub.f32 %v3520, %v3521
  %v3523 = vand.u32 %v3522, 4294901760
  %3524 = vmatpush1.msra.mxu0 %v3523
  %3525 = vmatprep.subr.mxu0 0.0
  %v3526 = vand.u32 %v90, 4294901760
  %v3527 = vsub.f32 %v90, %v3526
  %v3528 = vand.u32 %v3527, 4294901760
  %v3529 = vsub.f32 %v3527, %v3528
  %v3530 = vand.u32 %v3529, 4294901760
  %3531 = vmatpush1.msra.mxu0 %v3530
  %3532 = vmatprep.subr.mxu0 0.0
  %v3533 = vand.u32 %v91, 4294901760
  %v3534 = vsub.f32 %v91, %v3533
  %v3535 = vand.u32 %v3534, 4294901760
  %v3536 = vsub.f32 %v3534, %v3535
  %v3537 = vand.u32 %v3536, 4294901760
  %3538 = vmatpush1.msra.mxu0 %v3537
  %3539 = vmatprep.subr.mxu0 0.0
  %v3540 = vand.u32 %v92, 4294901760
  %v3541 = vsub.f32 %v92, %v3540
  %v3542 = vand.u32 %v3541, 4294901760
  %v3543 = vsub.f32 %v3541, %v3542
  %v3544 = vand.u32 %v3543, 4294901760
  %3545 = vmatpush1.msra.mxu0 %v3544
  %3546 = vmatprep.subr.mxu0 0.0
  %v3547 = vand.u32 %v93, 4294901760
  %v3548 = vsub.f32 %v93, %v3547
  %v3549 = vand.u32 %v3548, 4294901760
  %v3550 = vsub.f32 %v3548, %v3549
  %v3551 = vand.u32 %v3550, 4294901760
  %3552 = vmatpush1.msra.mxu0 %v3551
  %3553 = vmatprep.subr.mxu0 0.0
  %v3554 = vand.u32 %v94, 4294901760
  %v3555 = vsub.f32 %v94, %v3554
  %v3556 = vand.u32 %v3555, 4294901760
  %v3557 = vsub.f32 %v3555, %v3556
  %v3558 = vand.u32 %v3557, 4294901760
  %3559 = vmatpush1.msra.mxu0 %v3558
  %3560 = vmatprep.subr.mxu0 0.0
  %v3561 = vand.u32 %v95, 4294901760
  %v3562 = vsub.f32 %v95, %v3561
  %v3563 = vand.u32 %v3562, 4294901760
  %v3564 = vsub.f32 %v3562, %v3563
  %v3565 = vand.u32 %v3564, 4294901760
  %3566 = vmatpush1.msra.mxu0 %v3565
  %3567 = vmatprep.subr.mxu0 0.0
  %v3568 = vand.u32 %v96, 4294901760
  %v3569 = vsub.f32 %v96, %v3568
  %v3570 = vand.u32 %v3569, 4294901760
  %v3571 = vsub.f32 %v3569, %v3570
  %v3572 = vand.u32 %v3571, 4294901760
  %3573 = vmatpush1.msra.mxu0 %v3572
  %3574 = vmatprep.subr.mxu0 0.0
  %v3575 = vand.u32 %v97, 4294901760
  %v3576 = vsub.f32 %v97, %v3575
  %v3577 = vand.u32 %v3576, 4294901760
  %v3578 = vsub.f32 %v3576, %v3577
  %v3579 = vand.u32 %v3578, 4294901760
  %3580 = vmatpush1.msra.mxu0 %v3579
  %3581 = vmatprep.subr.mxu0 0.0
  %v3582 = vand.u32 %v98, 4294901760
  %v3583 = vsub.f32 %v98, %v3582
  %v3584 = vand.u32 %v3583, 4294901760
  %v3585 = vsub.f32 %v3583, %v3584
  %v3586 = vand.u32 %v3585, 4294901760
  %3587 = vmatpush1.msra.mxu0 %v3586
  %3588 = vmatprep.subr.mxu0 0.0
  %v3589 = vand.u32 %v99, 4294901760
  %v3590 = vsub.f32 %v99, %v3589
  %v3591 = vand.u32 %v3590, 4294901760
  %v3592 = vsub.f32 %v3590, %v3591
  %v3593 = vand.u32 %v3592, 4294901760
  %3594 = vmatpush1.msra.mxu0 %v3593
  %v3595 = vand.u32 %v2171, 4294901760
  %3596 = vmatprep.mubr.f32.mxu0 %v3595
  %v3597 = vand.u32 %v2170, 4294901760
  %3598 = vmatmul.mubr.f32.gmra.mrb[0].mxu0 %v3597
  %v3599 = vpop.f32.mrb[0].mxu0
  %v3600 = vadd.f32 %v3323, %v3599
  %v3601 = vpop.f32.mrb[0].mxu0
  %v3602 = vand.u32 %v2175, 4294901760
  %3603 = vmatprep.mubr.f32.mxu0 %v3602
  %v3604 = vand.u32 %v2174, 4294901760
  %3605 = vmatmul.mubr.f32.gmra.mrb[0].mxu0 %v3604
  %v3606 = vpop.f32.mrb[0].mxu0
  %v3607 = vadd.f32 %v3338, %v3606
  %v3608 = vpop.f32.mrb[0].mxu0
  %v3609 = vand.u32 %v2179, 4294901760
  %3610 = vmatprep.mubr.f32.mxu0 %v3609
  %v3611 = vand.u32 %v2178, 4294901760
  %3612 = vmatmul.mubr.f32.gmra.mrb[0].mxu0 %v3611
  %v3613 = vpop.f32.mrb[0].mxu0
  %v3614 = vadd.f32 %v3353, %v3613
  %v3615 = vpop.f32.mrb[0].mxu0
  %v3616 = vand.u32 %v2183, 4294901760
  %3617 = vmatprep.mubr.f32.mxu0 %v3616
  %v3618 = vand.u32 %v2182, 4294901760
  %3619 = vmatmul.mubr.f32.gmra.mrb[0].mxu0 %v3618
  %v3620 = vpop.f32.mrb[0].mxu0
  %v3621 = vadd.f32 %v3368, %v3620
  %v3622 = vpop.f32.mrb[0].mxu0
  %3623 = vdwg.mxu0
  %3624 = vmatprep.subr.mxu0 0.0
  %v3625 = vand.u32 %v68, 4294901760
  %v3626 = vsub.f32 %v68, %v3625
  %3627 = vmatpush1.msra.mxu0 %v3626
  %3628 = vmatprep.subr.mxu0 0.0
  %v3629 = vand.u32 %v69, 4294901760
  %v3630 = vsub.f32 %v69, %v3629
  %3631 = vmatpush1.msra.mxu0 %v3630
  %3632 = vmatprep.subr.mxu0 0.0
  %v3633 = vand.u32 %v70, 4294901760
  %v3634 = vsub.f32 %v70, %v3633
  %3635 = vmatpush1.msra.mxu0 %v3634
  %3636 = vmatprep.subr.mxu0 0.0
  %v3637 = vand.u32 %v71, 4294901760
  %v3638 = vsub.f32 %v71, %v3637
  %3639 = vmatpush1.msra.mxu0 %v3638
  %3640 = vmatprep.subr.mxu0 0.0
  %v3641 = vand.u32 %v72, 4294901760
  %v3642 = vsub.f32 %v72, %v3641
  %3643 = vmatpush1.msra.mxu0 %v3642
  %3644 = vmatprep.subr.mxu0 0.0
  %v3645 = vand.u32 %v73, 4294901760
  %v3646 = vsub.f32 %v73, %v3645
  %3647 = vmatpush1.msra.mxu0 %v3646
  %3648 = vmatprep.subr.mxu0 0.0
  %v3649 = vand.u32 %v74, 4294901760
  %v3650 = vsub.f32 %v74, %v3649
  %3651 = vmatpush1.msra.mxu0 %v3650
  %3652 = vmatprep.subr.mxu0 0.0
  %v3653 = vand.u32 %v75, 4294901760
  %v3654 = vsub.f32 %v75, %v3653
  %3655 = vmatpush1.msra.mxu0 %v3654
  %3656 = vmatprep.subr.mxu0 0.0
  %v3657 = vand.u32 %v76, 4294901760
  %v3658 = vsub.f32 %v76, %v3657
  %3659 = vmatpush1.msra.mxu0 %v3658
  %3660 = vmatprep.subr.mxu0 0.0
  %v3661 = vand.u32 %v77, 4294901760
  %v3662 = vsub.f32 %v77, %v3661
  %3663 = vmatpush1.msra.mxu0 %v3662
  %3664 = vmatprep.subr.mxu0 0.0
  %v3665 = vand.u32 %v78, 4294901760
  %v3666 = vsub.f32 %v78, %v3665
  %3667 = vmatpush1.msra.mxu0 %v3666
  %3668 = vmatprep.subr.mxu0 0.0
  %v3669 = vand.u32 %v79, 4294901760
  %v3670 = vsub.f32 %v79, %v3669
  %3671 = vmatpush1.msra.mxu0 %v3670
  %3672 = vmatprep.subr.mxu0 0.0
  %v3673 = vand.u32 %v80, 4294901760
  %v3674 = vsub.f32 %v80, %v3673
  %3675 = vmatpush1.msra.mxu0 %v3674
  %3676 = vmatprep.subr.mxu0 0.0
  %v3677 = vand.u32 %v81, 4294901760
  %v3678 = vsub.f32 %v81, %v3677
  %3679 = vmatpush1.msra.mxu0 %v3678
  %3680 = vmatprep.subr.mxu0 0.0
  %v3681 = vand.u32 %v82, 4294901760
  %v3682 = vsub.f32 %v82, %v3681
  %3683 = vmatpush1.msra.mxu0 %v3682
  %3684 = vmatprep.subr.mxu0 0.0
  %v3685 = vand.u32 %v83, 4294901760
  %v3686 = vsub.f32 %v83, %v3685
  %3687 = vmatpush1.msra.mxu0 %v3686
  %3688 = vmatprep.subr.mxu0 0.0
  %v3689 = vand.u32 %v84, 4294901760
  %v3690 = vsub.f32 %v84, %v3689
  %3691 = vmatpush1.msra.mxu0 %v3690
  %3692 = vmatprep.subr.mxu0 0.0
  %v3693 = vand.u32 %v85, 4294901760
  %v3694 = vsub.f32 %v85, %v3693
  %3695 = vmatpush1.msra.mxu0 %v3694
  %3696 = vmatprep.subr.mxu0 0.0
  %v3697 = vand.u32 %v86, 4294901760
  %v3698 = vsub.f32 %v86, %v3697
  %3699 = vmatpush1.msra.mxu0 %v3698
  %3700 = vmatprep.subr.mxu0 0.0
  %v3701 = vand.u32 %v87, 4294901760
  %v3702 = vsub.f32 %v87, %v3701
  %3703 = vmatpush1.msra.mxu0 %v3702
  %3704 = vmatprep.subr.mxu0 0.0
  %v3705 = vand.u32 %v88, 4294901760
  %v3706 = vsub.f32 %v88, %v3705
  %3707 = vmatpush1.msra.mxu0 %v3706
  %3708 = vmatprep.subr.mxu0 0.0
  %v3709 = vand.u32 %v89, 4294901760
  %v3710 = vsub.f32 %v89, %v3709
  %3711 = vmatpush1.msra.mxu0 %v3710
  %3712 = vmatprep.subr.mxu0 0.0
  %v3713 = vand.u32 %v90, 4294901760
  %v3714 = vsub.f32 %v90, %v3713
  %3715 = vmatpush1.msra.mxu0 %v3714
  %3716 = vmatprep.subr.mxu0 0.0
  %v3717 = vand.u32 %v91, 4294901760
  %v3718 = vsub.f32 %v91, %v3717
  %3719 = vmatpush1.msra.mxu0 %v3718
  %3720 = vmatprep.subr.mxu0 0.0
  %v3721 = vand.u32 %v92, 4294901760
  %v3722 = vsub.f32 %v92, %v3721
  %3723 = vmatpush1.msra.mxu0 %v3722
  %3724 = vmatprep.subr.mxu0 0.0
  %v3725 = vand.u32 %v93, 4294901760
  %v3726 = vsub.f32 %v93, %v3725
  %3727 = vmatpush1.msra.mxu0 %v3726
  %3728 = vmatprep.subr.mxu0 0.0
  %v3729 = vand.u32 %v94, 4294901760
  %v3730 = vsub.f32 %v94, %v3729
  %3731 = vmatpush1.msra.mxu0 %v3730
  %3732 = vmatprep.subr.mxu0 0.0
  %v3733 = vand.u32 %v95, 4294901760
  %v3734 = vsub.f32 %v95, %v3733
  %3735 = vmatpush1.msra.mxu0 %v3734
  %3736 = vmatprep.subr.mxu0 0.0
  %v3737 = vand.u32 %v96, 4294901760
  %v3738 = vsub.f32 %v96, %v3737
  %3739 = vmatpush1.msra.mxu0 %v3738
  %3740 = vmatprep.subr.mxu0 0.0
  %v3741 = vand.u32 %v97, 4294901760
  %v3742 = vsub.f32 %v97, %v3741
  %3743 = vmatpush1.msra.mxu0 %v3742
  %3744 = vmatprep.subr.mxu0 0.0
  %v3745 = vand.u32 %v98, 4294901760
  %v3746 = vsub.f32 %v98, %v3745
  %3747 = vmatpush1.msra.mxu0 %v3746
  %3748 = vmatprep.subr.mxu0 0.0
  %v3749 = vand.u32 %v99, 4294901760
  %v3750 = vsub.f32 %v99, %v3749
  %3751 = vmatpush1.msra.mxu0 %v3750
  %v3752 = vand.u32 %v2171, 4294901760
  %v3753 = vsub.f32 %v2171, %v3752
  %3754 = vmatprep.mubr.f32.mxu0 %v3753
  %v3755 = vand.u32 %v2170, 4294901760
  %v3756 = vsub.f32 %v2170, %v3755
  %3757 = vmatmul.mubr.f32.gmra.mrb[0].mxu0 %v3756
  %v3758 = vpop.f32.mrb[0].mxu0
  %v3759 = vadd.f32 %v3600, %v3758
  %v3760 = vpop.f32.mrb[0].mxu0
  %v3761 = vand.u32 %v2175, 4294901760
  %v3762 = vsub.f32 %v2175, %v3761
  %3763 = vmatprep.mubr.f32.mxu0 %v3762
  %v3764 = vand.u32 %v2174, 4294901760
  %v3765 = vsub.f32 %v2174, %v3764
  %3766 = vmatmul.mubr.f32.gmra.mrb[0].mxu0 %v3765
  %v3767 = vpop.f32.mrb[0].mxu0
  %v3768 = vadd.f32 %v3607, %v3767
  %v3769 = vpop.f32.mrb[0].mxu0
  %v3770 = vand.u32 %v2179, 4294901760
  %v3771 = vsub.f32 %v2179, %v3770
  %3772 = vmatprep.mubr.f32.mxu0 %v3771
  %v3773 = vand.u32 %v2178, 4294901760
  %v3774 = vsub.f32 %v2178, %v3773
  %3775 = vmatmul.mubr.f32.gmra.mrb[0].mxu0 %v3774
  %v3776 = vpop.f32.mrb[0].mxu0
  %v3777 = vadd.f32 %v3614, %v3776
  %v3778 = vpop.f32.mrb[0].mxu0
  %v3779 = vand.u32 %v2183, 4294901760
  %v3780 = vsub.f32 %v2183, %v3779
  %3781 = vmatprep.mubr.f32.mxu0 %v3780
  %v3782 = vand.u32 %v2182, 4294901760
  %v3783 = vsub.f32 %v2182, %v3782
  %3784 = vmatmul.mubr.f32.gmra.mrb[0].mxu0 %v3783
  %v3785 = vpop.f32.mrb[0].mxu0
  %v3786 = vadd.f32 %v3621, %v3785
  %v3787 = vpop.f32.mrb[0].mxu0
  %3788 = vdwg.mxu0
  %3789 = vmatprep.subr.mxu0 0.0
  %v3790 = vand.u32 %v68, 4294901760
  %3791 = vmatpush1.msra.mxu0 %v3790
  %3792 = vmatprep.subr.mxu0 0.0
  %v3793 = vand.u32 %v69, 4294901760
  %3794 = vmatpush1.msra.mxu0 %v3793
  %3795 = vmatprep.subr.mxu0 0.0
  %v3796 = vand.u32 %v70, 4294901760
  %3797 = vmatpush1.msra.mxu0 %v3796
  %3798 = vmatprep.subr.mxu0 0.0
  %v3799 = vand.u32 %v71, 4294901760
  %3800 = vmatpush1.msra.mxu0 %v3799
  %3801 = vmatprep.subr.mxu0 0.0
  %v3802 = vand.u32 %v72, 4294901760
  %3803 = vmatpush1.msra.mxu0 %v3802
  %3804 = vmatprep.subr.mxu0 0.0
  %v3805 = vand.u32 %v73, 4294901760
  %3806 = vmatpush1.msra.mxu0 %v3805
  %3807 = vmatprep.subr.mxu0 0.0
  %v3808 = vand.u32 %v74, 4294901760
  %3809 = vmatpush1.msra.mxu0 %v3808
  %3810 = vmatprep.subr.mxu0 0.0
  %v3811 = vand.u32 %v75, 4294901760
  %3812 = vmatpush1.msra.mxu0 %v3811
  %3813 = vmatprep.subr.mxu0 0.0
  %v3814 = vand.u32 %v76, 4294901760
  %3815 = vmatpush1.msra.mxu0 %v3814
  %3816 = vmatprep.subr.mxu0 0.0
  %v3817 = vand.u32 %v77, 4294901760
  %3818 = vmatpush1.msra.mxu0 %v3817
  %3819 = vmatprep.subr.mxu0 0.0
  %v3820 = vand.u32 %v78, 4294901760
  %3821 = vmatpush1.msra.mxu0 %v3820
  %3822 = vmatprep.subr.mxu0 0.0
  %v3823 = vand.u32 %v79, 4294901760
  %3824 = vmatpush1.msra.mxu0 %v3823
  %3825 = vmatprep.subr.mxu0 0.0
  %v3826 = vand.u32 %v80, 4294901760
  %3827 = vmatpush1.msra.mxu0 %v3826
  %3828 = vmatprep.subr.mxu0 0.0
  %v3829 = vand.u32 %v81, 4294901760
  %3830 = vmatpush1.msra.mxu0 %v3829
  %3831 = vmatprep.subr.mxu0 0.0
  %v3832 = vand.u32 %v82, 4294901760
  %3833 = vmatpush1.msra.mxu0 %v3832
  %3834 = vmatprep.subr.mxu0 0.0
  %v3835 = vand.u32 %v83, 4294901760
  %3836 = vmatpush1.msra.mxu0 %v3835
  %3837 = vmatprep.subr.mxu0 0.0
  %v3838 = vand.u32 %v84, 4294901760
  %3839 = vmatpush1.msra.mxu0 %v3838
  %3840 = vmatprep.subr.mxu0 0.0
  %v3841 = vand.u32 %v85, 4294901760
  %3842 = vmatpush1.msra.mxu0 %v3841
  %3843 = vmatprep.subr.mxu0 0.0
  %v3844 = vand.u32 %v86, 4294901760
  %3845 = vmatpush1.msra.mxu0 %v3844
  %3846 = vmatprep.subr.mxu0 0.0
  %v3847 = vand.u32 %v87, 4294901760
  %3848 = vmatpush1.msra.mxu0 %v3847
  %3849 = vmatprep.subr.mxu0 0.0
  %v3850 = vand.u32 %v88, 4294901760
  %3851 = vmatpush1.msra.mxu0 %v3850
  %3852 = vmatprep.subr.mxu0 0.0
  %v3853 = vand.u32 %v89, 4294901760
  %3854 = vmatpush1.msra.mxu0 %v3853
  %3855 = vmatprep.subr.mxu0 0.0
  %v3856 = vand.u32 %v90, 4294901760
  %3857 = vmatpush1.msra.mxu0 %v3856
  %3858 = vmatprep.subr.mxu0 0.0
  %v3859 = vand.u32 %v91, 4294901760
  %3860 = vmatpush1.msra.mxu0 %v3859
  %3861 = vmatprep.subr.mxu0 0.0
  %v3862 = vand.u32 %v92, 4294901760
  %3863 = vmatpush1.msra.mxu0 %v3862
  %3864 = vmatprep.subr.mxu0 0.0
  %v3865 = vand.u32 %v93, 4294901760
  %3866 = vmatpush1.msra.mxu0 %v3865
  %3867 = vmatprep.subr.mxu0 0.0
  %v3868 = vand.u32 %v94, 4294901760
  %3869 = vmatpush1.msra.mxu0 %v3868
  %3870 = vmatprep.subr.mxu0 0.0
  %v3871 = vand.u32 %v95, 4294901760
  %3872 = vmatpush1.msra.mxu0 %v3871
  %3873 = vmatprep.subr.mxu0 0.0
  %v3874 = vand.u32 %v96, 4294901760
  %3875 = vmatpush1.msra.mxu0 %v3874
  %3876 = vmatprep.subr.mxu0 0.0
  %v3877 = vand.u32 %v97, 4294901760
  %3878 = vmatpush1.msra.mxu0 %v3877
  %3879 = vmatprep.subr.mxu0 0.0
  %v3880 = vand.u32 %v98, 4294901760
  %3881 = vmatpush1.msra.mxu0 %v3880
  %3882 = vmatprep.subr.mxu0 0.0
  %v3883 = vand.u32 %v99, 4294901760
  %3884 = vmatpush1.msra.mxu0 %v3883
  %v3885 = vand.u32 %v2171, 4294901760
  %v3886 = vsub.f32 %v2171, %v3885
  %v3887 = vand.u32 %v3886, 4294901760
  %3888 = vmatprep.mubr.f32.mxu0 %v3887
  %v3889 = vand.u32 %v2170, 4294901760
  %v3890 = vsub.f32 %v2170, %v3889
  %v3891 = vand.u32 %v3890, 4294901760
  %3892 = vmatmul.mubr.f32.gmra.mrb[0].mxu0 %v3891
  %v3893 = vpop.f32.mrb[0].mxu0
  %v3894 = vadd.f32 %v3759, %v3893
  %v3895 = vpop.f32.mrb[0].mxu0
  %v3896 = vand.u32 %v2175, 4294901760
  %v3897 = vsub.f32 %v2175, %v3896
  %v3898 = vand.u32 %v3897, 4294901760
  %3899 = vmatprep.mubr.f32.mxu0 %v3898
  %v3900 = vand.u32 %v2174, 4294901760
  %v3901 = vsub.f32 %v2174, %v3900
  %v3902 = vand.u32 %v3901, 4294901760
  %3903 = vmatmul.mubr.f32.gmra.mrb[0].mxu0 %v3902
  %v3904 = vpop.f32.mrb[0].mxu0
  %v3905 = vadd.f32 %v3768, %v3904
  %v3906 = vpop.f32.mrb[0].mxu0
  %v3907 = vand.u32 %v2179, 4294901760
  %v3908 = vsub.f32 %v2179, %v3907
  %v3909 = vand.u32 %v3908, 4294901760
  %3910 = vmatprep.mubr.f32.mxu0 %v3909
  %v3911 = vand.u32 %v2178, 4294901760
  %v3912 = vsub.f32 %v2178, %v3911
  %v3913 = vand.u32 %v3912, 4294901760
  %3914 = vmatmul.mubr.f32.gmra.mrb[0].mxu0 %v3913
  %v3915 = vpop.f32.mrb[0].mxu0
  %v3916 = vadd.f32 %v3777, %v3915
  %v3917 = vpop.f32.mrb[0].mxu0
  %v3918 = vand.u32 %v2183, 4294901760
  %v3919 = vsub.f32 %v2183, %v3918
  %v3920 = vand.u32 %v3919, 4294901760
  %3921 = vmatprep.mubr.f32.mxu0 %v3920
  %v3922 = vand.u32 %v2182, 4294901760
  %v3923 = vsub.f32 %v2182, %v3922
  %v3924 = vand.u32 %v3923, 4294901760
  %3925 = vmatmul.mubr.f32.gmra.mrb[0].mxu0 %v3924
  %v3926 = vpop.f32.mrb[0].mxu0
  %v3927 = vadd.f32 %v3786, %v3926
  %v3928 = vpop.f32.mrb[0].mxu0
  %3929 = vdwg.mxu0
  %3930 = vmatprep.subr.mxu0 0.0
  %v3931 = vand.u32 %v68, 4294901760
  %v3932 = vsub.f32 %v68, %v3931
  %v3933 = vand.u32 %v3932, 4294901760
  %3934 = vmatpush1.msra.mxu0 %v3933
  %3935 = vmatprep.subr.mxu0 0.0
  %v3936 = vand.u32 %v69, 4294901760
  %v3937 = vsub.f32 %v69, %v3936
  %v3938 = vand.u32 %v3937, 4294901760
  %3939 = vmatpush1.msra.mxu0 %v3938
  %3940 = vmatprep.subr.mxu0 0.0
  %v3941 = vand.u32 %v70, 4294901760
  %v3942 = vsub.f32 %v70, %v3941
  %v3943 = vand.u32 %v3942, 4294901760
  %3944 = vmatpush1.msra.mxu0 %v3943
  %3945 = vmatprep.subr.mxu0 0.0
  %v3946 = vand.u32 %v71, 4294901760
  %v3947 = vsub.f32 %v71, %v3946
  %v3948 = vand.u32 %v3947, 4294901760
  %3949 = vmatpush1.msra.mxu0 %v3948
  %3950 = vmatprep.subr.mxu0 0.0
  %v3951 = vand.u32 %v72, 4294901760
  %v3952 = vsub.f32 %v72, %v3951
  %v3953 = vand.u32 %v3952, 4294901760
  %3954 = vmatpush1.msra.mxu0 %v3953
  %3955 = vmatprep.subr.mxu0 0.0
  %v3956 = vand.u32 %v73, 4294901760
  %v3957 = vsub.f32 %v73, %v3956
  %v3958 = vand.u32 %v3957, 4294901760
  %3959 = vmatpush1.msra.mxu0 %v3958
  %3960 = vmatprep.subr.mxu0 0.0
  %v3961 = vand.u32 %v74, 4294901760
  %v3962 = vsub.f32 %v74, %v3961
  %v3963 = vand.u32 %v3962, 4294901760
  %3964 = vmatpush1.msra.mxu0 %v3963
  %3965 = vmatprep.subr.mxu0 0.0
  %v3966 = vand.u32 %v75, 4294901760
  %v3967 = vsub.f32 %v75, %v3966
  %v3968 = vand.u32 %v3967, 4294901760
  %3969 = vmatpush1.msra.mxu0 %v3968
  %3970 = vmatprep.subr.mxu0 0.0
  %v3971 = vand.u32 %v76, 4294901760
  %v3972 = vsub.f32 %v76, %v3971
  %v3973 = vand.u32 %v3972, 4294901760
  %3974 = vmatpush1.msra.mxu0 %v3973
  %3975 = vmatprep.subr.mxu0 0.0
  %v3976 = vand.u32 %v77, 4294901760
  %v3977 = vsub.f32 %v77, %v3976
  %v3978 = vand.u32 %v3977, 4294901760
  %3979 = vmatpush1.msra.mxu0 %v3978
  %3980 = vmatprep.subr.mxu0 0.0
  %v3981 = vand.u32 %v78, 4294901760
  %v3982 = vsub.f32 %v78, %v3981
  %v3983 = vand.u32 %v3982, 4294901760
  %3984 = vmatpush1.msra.mxu0 %v3983
  %3985 = vmatprep.subr.mxu0 0.0
  %v3986 = vand.u32 %v79, 4294901760
  %v3987 = vsub.f32 %v79, %v3986
  %v3988 = vand.u32 %v3987, 4294901760
  %3989 = vmatpush1.msra.mxu0 %v3988
  %3990 = vmatprep.subr.mxu0 0.0
  %v3991 = vand.u32 %v80, 4294901760
  %v3992 = vsub.f32 %v80, %v3991
  %v3993 = vand.u32 %v3992, 4294901760
  %3994 = vmatpush1.msra.mxu0 %v3993
  %3995 = vmatprep.subr.mxu0 0.0
  %v3996 = vand.u32 %v81, 4294901760
  %v3997 = vsub.f32 %v81, %v3996
  %v3998 = vand.u32 %v3997, 4294901760
  %3999 = vmatpush1.msra.mxu0 %v3998
  %4000 = vmatprep.subr.mxu0 0.0
  %v4001 = vand.u32 %v82, 4294901760
  %v4002 = vsub.f32 %v82, %v4001
  %v4003 = vand.u32 %v4002, 4294901760
  %4004 = vmatpush1.msra.mxu0 %v4003
  %4005 = vmatprep.subr.mxu0 0.0
  %v4006 = vand.u32 %v83, 4294901760
  %v4007 = vsub.f32 %v83, %v4006
  %v4008 = vand.u32 %v4007, 4294901760
  %4009 = vmatpush1.msra.mxu0 %v4008
  %4010 = vmatprep.subr.mxu0 0.0
  %v4011 = vand.u32 %v84, 4294901760
  %v4012 = vsub.f32 %v84, %v4011
  %v4013 = vand.u32 %v4012, 4294901760
  %4014 = vmatpush1.msra.mxu0 %v4013
  %4015 = vmatprep.subr.mxu0 0.0
  %v4016 = vand.u32 %v85, 4294901760
  %v4017 = vsub.f32 %v85, %v4016
  %v4018 = vand.u32 %v4017, 4294901760
  %4019 = vmatpush1.msra.mxu0 %v4018
  %4020 = vmatprep.subr.mxu0 0.0
  %v4021 = vand.u32 %v86, 4294901760
  %v4022 = vsub.f32 %v86, %v4021
  %v4023 = vand.u32 %v4022, 4294901760
  %4024 = vmatpush1.msra.mxu0 %v4023
  %4025 = vmatprep.subr.mxu0 0.0
  %v4026 = vand.u32 %v87, 4294901760
  %v4027 = vsub.f32 %v87, %v4026
  %v4028 = vand.u32 %v4027, 4294901760
  %4029 = vmatpush1.msra.mxu0 %v4028
  %4030 = vmatprep.subr.mxu0 0.0
  %v4031 = vand.u32 %v88, 4294901760
  %v4032 = vsub.f32 %v88, %v4031
  %v4033 = vand.u32 %v4032, 4294901760
  %4034 = vmatpush1.msra.mxu0 %v4033
  %4035 = vmatprep.subr.mxu0 0.0
  %v4036 = vand.u32 %v89, 4294901760
  %v4037 = vsub.f32 %v89, %v4036
  %v4038 = vand.u32 %v4037, 4294901760
  %4039 = vmatpush1.msra.mxu0 %v4038
  %4040 = vmatprep.subr.mxu0 0.0
  %v4041 = vand.u32 %v90, 4294901760
  %v4042 = vsub.f32 %v90, %v4041
  %v4043 = vand.u32 %v4042, 4294901760
  %4044 = vmatpush1.msra.mxu0 %v4043
  %4045 = vmatprep.subr.mxu0 0.0
  %v4046 = vand.u32 %v91, 4294901760
  %v4047 = vsub.f32 %v91, %v4046
  %v4048 = vand.u32 %v4047, 4294901760
  %4049 = vmatpush1.msra.mxu0 %v4048
  %4050 = vmatprep.subr.mxu0 0.0
  %v4051 = vand.u32 %v92, 4294901760
  %v4052 = vsub.f32 %v92, %v4051
  %v4053 = vand.u32 %v4052, 4294901760
  %4054 = vmatpush1.msra.mxu0 %v4053
  %4055 = vmatprep.subr.mxu0 0.0
  %v4056 = vand.u32 %v93, 4294901760
  %v4057 = vsub.f32 %v93, %v4056
  %v4058 = vand.u32 %v4057, 4294901760
  %4059 = vmatpush1.msra.mxu0 %v4058
  %4060 = vmatprep.subr.mxu0 0.0
  %v4061 = vand.u32 %v94, 4294901760
  %v4062 = vsub.f32 %v94, %v4061
  %v4063 = vand.u32 %v4062, 4294901760
  %4064 = vmatpush1.msra.mxu0 %v4063
  %4065 = vmatprep.subr.mxu0 0.0
  %v4066 = vand.u32 %v95, 4294901760
  %v4067 = vsub.f32 %v95, %v4066
  %v4068 = vand.u32 %v4067, 4294901760
  %4069 = vmatpush1.msra.mxu0 %v4068
  %4070 = vmatprep.subr.mxu0 0.0
  %v4071 = vand.u32 %v96, 4294901760
  %v4072 = vsub.f32 %v96, %v4071
  %v4073 = vand.u32 %v4072, 4294901760
  %4074 = vmatpush1.msra.mxu0 %v4073
  %4075 = vmatprep.subr.mxu0 0.0
  %v4076 = vand.u32 %v97, 4294901760
  %v4077 = vsub.f32 %v97, %v4076
  %v4078 = vand.u32 %v4077, 4294901760
  %4079 = vmatpush1.msra.mxu0 %v4078
  %4080 = vmatprep.subr.mxu0 0.0
  %v4081 = vand.u32 %v98, 4294901760
  %v4082 = vsub.f32 %v98, %v4081
  %v4083 = vand.u32 %v4082, 4294901760
  %4084 = vmatpush1.msra.mxu0 %v4083
  %4085 = vmatprep.subr.mxu0 0.0
  %v4086 = vand.u32 %v99, 4294901760
  %v4087 = vsub.f32 %v99, %v4086
  %v4088 = vand.u32 %v4087, 4294901760
  %4089 = vmatpush1.msra.mxu0 %v4088
  %v4090 = vand.u32 %v2171, 4294901760
  %4091 = vmatprep.mubr.f32.mxu0 %v4090
  %v4092 = vand.u32 %v2170, 4294901760
  %4093 = vmatmul.mubr.f32.gmra.mrb[0].mxu0 %v4092
  %v4094 = vpop.f32.mrb[0].mxu0
  %v4095 = vadd.f32 %v3894, %v4094
  %v4096 = vpop.f32.mrb[0].mxu0
  %v4097 = vand.u32 %v2175, 4294901760
  %4098 = vmatprep.mubr.f32.mxu0 %v4097
  %v4099 = vand.u32 %v2174, 4294901760
  %4100 = vmatmul.mubr.f32.gmra.mrb[0].mxu0 %v4099
  %v4101 = vpop.f32.mrb[0].mxu0
  %v4102 = vadd.f32 %v3905, %v4101
  %v4103 = vpop.f32.mrb[0].mxu0
  %v4104 = vand.u32 %v2179, 4294901760
  %4105 = vmatprep.mubr.f32.mxu0 %v4104
  %v4106 = vand.u32 %v2178, 4294901760
  %4107 = vmatmul.mubr.f32.gmra.mrb[0].mxu0 %v4106
  %v4108 = vpop.f32.mrb[0].mxu0
  %v4109 = vadd.f32 %v3916, %v4108
  %v4110 = vpop.f32.mrb[0].mxu0
  %v4111 = vand.u32 %v2183, 4294901760
  %4112 = vmatprep.mubr.f32.mxu0 %v4111
  %v4113 = vand.u32 %v2182, 4294901760
  %4114 = vmatmul.mubr.f32.gmra.mrb[0].mxu0 %v4113
  %v4115 = vpop.f32.mrb[0].mxu0
  %v4116 = vadd.f32 %v3927, %v4115
  %v4117 = vpop.f32.mrb[0].mxu0
  %4118 = vdwg.mxu0
  %4119 = vmatprep.subr.mxu0 0.0
  %v4120 = vand.u32 %v68, 4294901760
  %4121 = vmatpush1.msra.mxu0 %v4120
  %4122 = vmatprep.subr.mxu0 0.0
  %v4123 = vand.u32 %v69, 4294901760
  %4124 = vmatpush1.msra.mxu0 %v4123
  %4125 = vmatprep.subr.mxu0 0.0
  %v4126 = vand.u32 %v70, 4294901760
  %4127 = vmatpush1.msra.mxu0 %v4126
  %4128 = vmatprep.subr.mxu0 0.0
  %v4129 = vand.u32 %v71, 4294901760
  %4130 = vmatpush1.msra.mxu0 %v4129
  %4131 = vmatprep.subr.mxu0 0.0
  %v4132 = vand.u32 %v72, 4294901760
  %4133 = vmatpush1.msra.mxu0 %v4132
  %4134 = vmatprep.subr.mxu0 0.0
  %v4135 = vand.u32 %v73, 4294901760
  %4136 = vmatpush1.msra.mxu0 %v4135
  %4137 = vmatprep.subr.mxu0 0.0
  %v4138 = vand.u32 %v74, 4294901760
  %4139 = vmatpush1.msra.mxu0 %v4138
  %4140 = vmatprep.subr.mxu0 0.0
  %v4141 = vand.u32 %v75, 4294901760
  %4142 = vmatpush1.msra.mxu0 %v4141
  %4143 = vmatprep.subr.mxu0 0.0
  %v4144 = vand.u32 %v76, 4294901760
  %4145 = vmatpush1.msra.mxu0 %v4144
  %4146 = vmatprep.subr.mxu0 0.0
  %v4147 = vand.u32 %v77, 4294901760
  %4148 = vmatpush1.msra.mxu0 %v4147
  %4149 = vmatprep.subr.mxu0 0.0
  %v4150 = vand.u32 %v78, 4294901760
  %4151 = vmatpush1.msra.mxu0 %v4150
  %4152 = vmatprep.subr.mxu0 0.0
  %v4153 = vand.u32 %v79, 4294901760
  %4154 = vmatpush1.msra.mxu0 %v4153
  %4155 = vmatprep.subr.mxu0 0.0
  %v4156 = vand.u32 %v80, 4294901760
  %4157 = vmatpush1.msra.mxu0 %v4156
  %4158 = vmatprep.subr.mxu0 0.0
  %v4159 = vand.u32 %v81, 4294901760
  %4160 = vmatpush1.msra.mxu0 %v4159
  %4161 = vmatprep.subr.mxu0 0.0
  %v4162 = vand.u32 %v82, 4294901760
  %4163 = vmatpush1.msra.mxu0 %v4162
  %4164 = vmatprep.subr.mxu0 0.0
  %v4165 = vand.u32 %v83, 4294901760
  %4166 = vmatpush1.msra.mxu0 %v4165
  %4167 = vmatprep.subr.mxu0 0.0
  %v4168 = vand.u32 %v84, 4294901760
  %4169 = vmatpush1.msra.mxu0 %v4168
  %4170 = vmatprep.subr.mxu0 0.0
  %v4171 = vand.u32 %v85, 4294901760
  %4172 = vmatpush1.msra.mxu0 %v4171
  %4173 = vmatprep.subr.mxu0 0.0
  %v4174 = vand.u32 %v86, 4294901760
  %4175 = vmatpush1.msra.mxu0 %v4174
  %4176 = vmatprep.subr.mxu0 0.0
  %v4177 = vand.u32 %v87, 4294901760
  %4178 = vmatpush1.msra.mxu0 %v4177
  %4179 = vmatprep.subr.mxu0 0.0
  %v4180 = vand.u32 %v88, 4294901760
  %4181 = vmatpush1.msra.mxu0 %v4180
  %4182 = vmatprep.subr.mxu0 0.0
  %v4183 = vand.u32 %v89, 4294901760
  %4184 = vmatpush1.msra.mxu0 %v4183
  %4185 = vmatprep.subr.mxu0 0.0
  %v4186 = vand.u32 %v90, 4294901760
  %4187 = vmatpush1.msra.mxu0 %v4186
  %4188 = vmatprep.subr.mxu0 0.0
  %v4189 = vand.u32 %v91, 4294901760
  %4190 = vmatpush1.msra.mxu0 %v4189
  %4191 = vmatprep.subr.mxu0 0.0
  %v4192 = vand.u32 %v92, 4294901760
  %4193 = vmatpush1.msra.mxu0 %v4192
  %4194 = vmatprep.subr.mxu0 0.0
  %v4195 = vand.u32 %v93, 4294901760
  %4196 = vmatpush1.msra.mxu0 %v4195
  %4197 = vmatprep.subr.mxu0 0.0
  %v4198 = vand.u32 %v94, 4294901760
  %4199 = vmatpush1.msra.mxu0 %v4198
  %4200 = vmatprep.subr.mxu0 0.0
  %v4201 = vand.u32 %v95, 4294901760
  %4202 = vmatpush1.msra.mxu0 %v4201
  %4203 = vmatprep.subr.mxu0 0.0
  %v4204 = vand.u32 %v96, 4294901760
  %4205 = vmatpush1.msra.mxu0 %v4204
  %4206 = vmatprep.subr.mxu0 0.0
  %v4207 = vand.u32 %v97, 4294901760
  %4208 = vmatpush1.msra.mxu0 %v4207
  %4209 = vmatprep.subr.mxu0 0.0
  %v4210 = vand.u32 %v98, 4294901760
  %4211 = vmatpush1.msra.mxu0 %v4210
  %4212 = vmatprep.subr.mxu0 0.0
  %v4213 = vand.u32 %v99, 4294901760
  %4214 = vmatpush1.msra.mxu0 %v4213
  %v4215 = vand.u32 %v2171, 4294901760
  %4216 = vmatprep.mubr.f32.mxu0 %v4215
  %v4217 = vand.u32 %v2170, 4294901760
  %4218 = vmatmul.mubr.f32.gmra.mrb[0].mxu0 %v4217
  %v4219 = vpop.f32.mrb[0].mxu0
  %v4220 = vadd.f32 %v4095, %v4219
  %v4221 = vpop.f32.mrb[0].mxu0
  %v4222 = vand.u32 %v2175, 4294901760
  %4223 = vmatprep.mubr.f32.mxu0 %v4222
  %v4224 = vand.u32 %v2174, 4294901760
  %4225 = vmatmul.mubr.f32.gmra.mrb[0].mxu0 %v4224
  %v4226 = vpop.f32.mrb[0].mxu0
  %v4227 = vadd.f32 %v4102, %v4226
  %v4228 = vpop.f32.mrb[0].mxu0
  %v4229 = vand.u32 %v2179, 4294901760
  %4230 = vmatprep.mubr.f32.mxu0 %v4229
  %v4231 = vand.u32 %v2178, 4294901760
  %4232 = vmatmul.mubr.f32.gmra.mrb[0].mxu0 %v4231
  %v4233 = vpop.f32.mrb[0].mxu0
  %v4234 = vadd.f32 %v4109, %v4233
  %v4235 = vpop.f32.mrb[0].mxu0
  %v4236 = vand.u32 %v2183, 4294901760
  %4237 = vmatprep.mubr.f32.mxu0 %v4236
  %v4238 = vand.u32 %v2182, 4294901760
  %4239 = vmatmul.mubr.f32.gmra.mrb[0].mxu0 %v4238
  %v4240 = vpop.f32.mrb[0].mxu0
  %v4241 = vadd.f32 %v4116, %v4240
  %v4242 = vpop.f32.mrb[0].mxu0
  %4243 = vdwg.mxu0
  %v4244 = vmul.f32 %v2144, 0.03125
  %v4245 = vmul.f32 %v2151, 0.03125
  %v4246 = vmul.f32 %v2158, 0.03125
  %v4247 = vmul.f32 %v2165, 0.03125
  %v4248 = vmul.f32 %v4220, 0.03125
  %v4249 = vmul.f32 %v4227, 0.03125
  %v4250 = vmul.f32 %v4234, 0.03125
  %v4251 = vmul.f32 %v4241, 0.03125
  %v4252 = vmul.f32 %v4244, %v4244
  %v4253 = vmul.f32 %v4245, %v4245
  %v4254 = vmul.f32 %v4246, %v4246
  %v4255 = vmul.f32 %v4247, %v4247
  %v4256 = vsub.f32 %v4248, %v4252
  %v4257 = vsub.f32 %v4249, %v4253
  %v4258 = vsub.f32 %v4250, %v4254
  %v4259 = vsub.f32 %v4251, %v4255
  %v4260 = vmax.f32 %v4256, 0.0
  %v4261 = vmax.f32 %v4257, 0.0
  %v4262 = vmax.f32 %v4258, 0.0
  %v4263 = vmax.f32 %v4259, 0.0
  %v4264 = vadd.f32 %v4260, 1e-05
  %v4265 = vadd.f32 %v4261, 1e-05
  %v4266 = vadd.f32 %v4262, 1e-05
  %v4267 = vadd.f32 %v4263, 1e-05
  %v4268 = vrsqrt.pop %v4264
  %v4269 = vrsqrt.pop %v4265
  %v4270 = vrsqrt.pop %v4266
  %v4271 = vrsqrt.pop %v4267
  %vm4272 = vcmask 130048
  %v4274 = vsel %vm4272, %v4268, 0
  %v4277 = vsel %vm4272, %v4269, 0
  %v4280 = vsel %vm4272, %v4270, 0
  %v4283 = vsel %vm4272, %v4271, 0
  %v4285 = vand.u32 %v101, 4294901760
  %4286 = vmatprep.subr.mxu0 %v4285
  %v4287 = vand.u32 %v100, 4294901760
  %4288 = vmatpush1.msra.mxu0 %v4287
  %v4289 = vand.u32 %v105, 4294901760
  %4290 = vmatprep.subr.mxu0 %v4289
  %v4291 = vand.u32 %v104, 4294901760
  %4292 = vmatpush1.msra.mxu0 %v4291
  %4293 = vmatprep.subr.mxu0 0.0
  %4294 = vmatpush1.msra.mxu0 0.0
  %4295 = vmatprep.subr.mxu0 0.0
  %4296 = vmatpush1.msra.mxu0 0.0
  %4297 = vmatprep.subr.mxu0 0.0
  %4298 = vmatpush1.msra.mxu0 0.0
  %4299 = vmatprep.subr.mxu0 0.0
  %4300 = vmatpush1.msra.mxu0 0.0
  %4301 = vmatprep.subr.mxu0 0.0
  %4302 = vmatpush1.msra.mxu0 0.0
  %4303 = vmatprep.subr.mxu0 0.0
  %4304 = vmatpush1.msra.mxu0 0.0
  %4305 = vmatprep.subr.mxu0 0.0
  %4306 = vmatpush1.msra.mxu0 0.0
  %4307 = vmatprep.subr.mxu0 0.0
  %4308 = vmatpush1.msra.mxu0 0.0
  %4309 = vmatprep.subr.mxu0 0.0
  %4310 = vmatpush1.msra.mxu0 0.0
  %4311 = vmatprep.subr.mxu0 0.0
  %4312 = vmatpush1.msra.mxu0 0.0
  %4313 = vmatprep.subr.mxu0 0.0
  %4314 = vmatpush1.msra.mxu0 0.0
  %4315 = vmatprep.subr.mxu0 0.0
  %4316 = vmatpush1.msra.mxu0 0.0
  %4317 = vmatprep.subr.mxu0 0.0
  %4318 = vmatpush1.msra.mxu0 0.0
  %4319 = vmatprep.subr.mxu0 0.0
  %4320 = vmatpush1.msra.mxu0 0.0
  %4321 = vmatprep.subr.mxu0 0.0
  %4322 = vmatpush1.msra.mxu0 0.0
  %4323 = vmatprep.subr.mxu0 0.0
  %4324 = vmatpush1.msra.mxu0 0.0
  %4325 = vmatprep.subr.mxu0 0.0
  %4326 = vmatpush1.msra.mxu0 0.0
  %4327 = vmatprep.subr.mxu0 0.0
  %4328 = vmatpush1.msra.mxu0 0.0
  %4329 = vmatprep.subr.mxu0 0.0
  %4330 = vmatpush1.msra.mxu0 0.0
  %4331 = vmatprep.subr.mxu0 0.0
  %4332 = vmatpush1.msra.mxu0 0.0
  %4333 = vmatprep.subr.mxu0 0.0
  %4334 = vmatpush1.msra.mxu0 0.0
  %4335 = vmatprep.subr.mxu0 0.0
  %4336 = vmatpush1.msra.mxu0 0.0
  %4337 = vmatprep.subr.mxu0 0.0
  %4338 = vmatpush1.msra.mxu0 0.0
  %4339 = vmatprep.subr.mxu0 0.0
  %4340 = vmatpush1.msra.mxu0 0.0
  %4341 = vmatprep.subr.mxu0 0.0
  %4342 = vmatpush1.msra.mxu0 0.0
  %4343 = vmatprep.subr.mxu0 0.0
  %4344 = vmatpush1.msra.mxu0 0.0
  %4345 = vmatprep.subr.mxu0 0.0
  %4346 = vmatpush1.msra.mxu0 0.0
  %4347 = vmatprep.subr.mxu0 0.0
  %4348 = vmatpush1.msra.mxu0 0.0
  %4349 = vmatprep.subr.mxu0 0.0
  %4350 = vmatpush1.msra.mxu0 0.0
  %4351 = vmatprep.subr.mxu0 0.0
  %4352 = vmatpush1.msra.mxu0 0.0
  %4353 = vmatprep.mubr.f32.mxu0 0.0
  %v4354 = vand.u32 %v4274, 4294901760
  %v4355 = vsub.f32 %v4274, %v4354
  %v4356 = vand.u32 %v4355, 4294901760
  %v4357 = vsub.f32 %v4355, %v4356
  %v4358 = vand.u32 %v4357, 4294901760
  %4359 = vmatmul.mubr.f32.gmra.mrb[0].mxu0 %v4358
  %v4360 = vpop.f32.mrb[0].mxu0
  %v4361 = vadd.f32 0.0, %v4360
  %v4362 = vpop.f32.mrb[0].mxu0
  %v4363 = vadd.f32 0.0, %v4362
  %4364 = vmatprep.mubr.f32.mxu0 0.0
  %v4365 = vand.u32 %v4277, 4294901760
  %v4366 = vsub.f32 %v4277, %v4365
  %v4367 = vand.u32 %v4366, 4294901760
  %v4368 = vsub.f32 %v4366, %v4367
  %v4369 = vand.u32 %v4368, 4294901760
  %4370 = vmatmul.mubr.f32.gmra.mrb[0].mxu0 %v4369
  %v4371 = vpop.f32.mrb[0].mxu0
  %v4372 = vadd.f32 0.0, %v4371
  %v4373 = vpop.f32.mrb[0].mxu0
  %v4374 = vadd.f32 0.0, %v4373
  %4375 = vmatprep.mubr.f32.mxu0 0.0
  %v4376 = vand.u32 %v4280, 4294901760
  %v4377 = vsub.f32 %v4280, %v4376
  %v4378 = vand.u32 %v4377, 4294901760
  %v4379 = vsub.f32 %v4377, %v4378
  %v4380 = vand.u32 %v4379, 4294901760
  %4381 = vmatmul.mubr.f32.gmra.mrb[0].mxu0 %v4380
  %v4382 = vpop.f32.mrb[0].mxu0
  %v4383 = vadd.f32 0.0, %v4382
  %v4384 = vpop.f32.mrb[0].mxu0
  %v4385 = vadd.f32 0.0, %v4384
  %4386 = vmatprep.mubr.f32.mxu0 0.0
  %v4387 = vand.u32 %v4283, 4294901760
  %v4388 = vsub.f32 %v4283, %v4387
  %v4389 = vand.u32 %v4388, 4294901760
  %v4390 = vsub.f32 %v4388, %v4389
  %v4391 = vand.u32 %v4390, 4294901760
  %4392 = vmatmul.mubr.f32.gmra.mrb[0].mxu0 %v4391
  %v4393 = vpop.f32.mrb[0].mxu0
  %v4394 = vadd.f32 0.0, %v4393
  %v4395 = vpop.f32.mrb[0].mxu0
  %v4396 = vadd.f32 0.0, %v4395
  %4397 = vdwg.mxu0
  %v4398 = vand.u32 %v101, 4294901760
  %v4399 = vsub.f32 %v101, %v4398
  %v4400 = vand.u32 %v4399, 4294901760
  %v4401 = vsub.f32 %v4399, %v4400
  %v4402 = vand.u32 %v4401, 4294901760
  %4403 = vmatprep.subr.mxu0 %v4402
  %v4404 = vand.u32 %v100, 4294901760
  %v4405 = vsub.f32 %v100, %v4404
  %v4406 = vand.u32 %v4405, 4294901760
  %v4407 = vsub.f32 %v4405, %v4406
  %v4408 = vand.u32 %v4407, 4294901760
  %4409 = vmatpush1.msra.mxu0 %v4408
  %v4410 = vand.u32 %v105, 4294901760
  %v4411 = vsub.f32 %v105, %v4410
  %v4412 = vand.u32 %v4411, 4294901760
  %v4413 = vsub.f32 %v4411, %v4412
  %v4414 = vand.u32 %v4413, 4294901760
  %4415 = vmatprep.subr.mxu0 %v4414
  %v4416 = vand.u32 %v104, 4294901760
  %v4417 = vsub.f32 %v104, %v4416
  %v4418 = vand.u32 %v4417, 4294901760
  %v4419 = vsub.f32 %v4417, %v4418
  %v4420 = vand.u32 %v4419, 4294901760
  %4421 = vmatpush1.msra.mxu0 %v4420
  %4422 = vmatprep.subr.mxu0 0.0
  %4423 = vmatpush1.msra.mxu0 0.0
  %4424 = vmatprep.subr.mxu0 0.0
  %4425 = vmatpush1.msra.mxu0 0.0
  %4426 = vmatprep.subr.mxu0 0.0
  %4427 = vmatpush1.msra.mxu0 0.0
  %4428 = vmatprep.subr.mxu0 0.0
  %4429 = vmatpush1.msra.mxu0 0.0
  %4430 = vmatprep.subr.mxu0 0.0
  %4431 = vmatpush1.msra.mxu0 0.0
  %4432 = vmatprep.subr.mxu0 0.0
  %4433 = vmatpush1.msra.mxu0 0.0
  %4434 = vmatprep.subr.mxu0 0.0
  %4435 = vmatpush1.msra.mxu0 0.0
  %4436 = vmatprep.subr.mxu0 0.0
  %4437 = vmatpush1.msra.mxu0 0.0
  %4438 = vmatprep.subr.mxu0 0.0
  %4439 = vmatpush1.msra.mxu0 0.0
  %4440 = vmatprep.subr.mxu0 0.0
  %4441 = vmatpush1.msra.mxu0 0.0
  %4442 = vmatprep.subr.mxu0 0.0
  %4443 = vmatpush1.msra.mxu0 0.0
  %4444 = vmatprep.subr.mxu0 0.0
  %4445 = vmatpush1.msra.mxu0 0.0
  %4446 = vmatprep.subr.mxu0 0.0
  %4447 = vmatpush1.msra.mxu0 0.0
  %4448 = vmatprep.subr.mxu0 0.0
  %4449 = vmatpush1.msra.mxu0 0.0
  %4450 = vmatprep.subr.mxu0 0.0
  %4451 = vmatpush1.msra.mxu0 0.0
  %4452 = vmatprep.subr.mxu0 0.0
  %4453 = vmatpush1.msra.mxu0 0.0
  %4454 = vmatprep.subr.mxu0 0.0
  %4455 = vmatpush1.msra.mxu0 0.0
  %4456 = vmatprep.subr.mxu0 0.0
  %4457 = vmatpush1.msra.mxu0 0.0
  %4458 = vmatprep.subr.mxu0 0.0
  %4459 = vmatpush1.msra.mxu0 0.0
  %4460 = vmatprep.subr.mxu0 0.0
  %4461 = vmatpush1.msra.mxu0 0.0
  %4462 = vmatprep.subr.mxu0 0.0
  %4463 = vmatpush1.msra.mxu0 0.0
  %4464 = vmatprep.subr.mxu0 0.0
  %4465 = vmatpush1.msra.mxu0 0.0
  %4466 = vmatprep.subr.mxu0 0.0
  %4467 = vmatpush1.msra.mxu0 0.0
  %4468 = vmatprep.subr.mxu0 0.0
  %4469 = vmatpush1.msra.mxu0 0.0
  %4470 = vmatprep.subr.mxu0 0.0
  %4471 = vmatpush1.msra.mxu0 0.0
  %4472 = vmatprep.subr.mxu0 0.0
  %4473 = vmatpush1.msra.mxu0 0.0
  %4474 = vmatprep.subr.mxu0 0.0
  %4475 = vmatpush1.msra.mxu0 0.0
  %4476 = vmatprep.subr.mxu0 0.0
  %4477 = vmatpush1.msra.mxu0 0.0
  %4478 = vmatprep.subr.mxu0 0.0
  %4479 = vmatpush1.msra.mxu0 0.0
  %4480 = vmatprep.subr.mxu0 0.0
  %4481 = vmatpush1.msra.mxu0 0.0
  %4482 = vmatprep.mubr.f32.mxu0 0.0
  %v4483 = vand.u32 %v4274, 4294901760
  %4484 = vmatmul.mubr.f32.gmra.mrb[0].mxu0 %v4483
  %v4485 = vpop.f32.mrb[0].mxu0
  %v4486 = vadd.f32 %v4361, %v4485
  %v4487 = vpop.f32.mrb[0].mxu0
  %v4488 = vadd.f32 %v4363, %v4487
  %4489 = vmatprep.mubr.f32.mxu0 0.0
  %v4490 = vand.u32 %v4277, 4294901760
  %4491 = vmatmul.mubr.f32.gmra.mrb[0].mxu0 %v4490
  %v4492 = vpop.f32.mrb[0].mxu0
  %v4493 = vadd.f32 %v4372, %v4492
  %v4494 = vpop.f32.mrb[0].mxu0
  %v4495 = vadd.f32 %v4374, %v4494
  %4496 = vmatprep.mubr.f32.mxu0 0.0
  %v4497 = vand.u32 %v4280, 4294901760
  %4498 = vmatmul.mubr.f32.gmra.mrb[0].mxu0 %v4497
  %v4499 = vpop.f32.mrb[0].mxu0
  %v4500 = vadd.f32 %v4383, %v4499
  %v4501 = vpop.f32.mrb[0].mxu0
  %v4502 = vadd.f32 %v4385, %v4501
  %4503 = vmatprep.mubr.f32.mxu0 0.0
  %v4504 = vand.u32 %v4283, 4294901760
  %4505 = vmatmul.mubr.f32.gmra.mrb[0].mxu0 %v4504
  %v4506 = vpop.f32.mrb[0].mxu0
  %v4507 = vadd.f32 %v4394, %v4506
  %v4508 = vpop.f32.mrb[0].mxu0
  %v4509 = vadd.f32 %v4396, %v4508
  %4510 = vdwg.mxu0
  %v4511 = vand.u32 %v101, 4294901760
  %v4512 = vsub.f32 %v101, %v4511
  %4513 = vmatprep.subr.mxu0 %v4512
  %v4514 = vand.u32 %v100, 4294901760
  %v4515 = vsub.f32 %v100, %v4514
  %4516 = vmatpush1.msra.mxu0 %v4515
  %v4517 = vand.u32 %v105, 4294901760
  %v4518 = vsub.f32 %v105, %v4517
  %4519 = vmatprep.subr.mxu0 %v4518
  %v4520 = vand.u32 %v104, 4294901760
  %v4521 = vsub.f32 %v104, %v4520
  %4522 = vmatpush1.msra.mxu0 %v4521
  %4523 = vmatprep.subr.mxu0 0.0
  %4524 = vmatpush1.msra.mxu0 0.0
  %4525 = vmatprep.subr.mxu0 0.0
  %4526 = vmatpush1.msra.mxu0 0.0
  %4527 = vmatprep.subr.mxu0 0.0
  %4528 = vmatpush1.msra.mxu0 0.0
  %4529 = vmatprep.subr.mxu0 0.0
  %4530 = vmatpush1.msra.mxu0 0.0
  %4531 = vmatprep.subr.mxu0 0.0
  %4532 = vmatpush1.msra.mxu0 0.0
  %4533 = vmatprep.subr.mxu0 0.0
  %4534 = vmatpush1.msra.mxu0 0.0
  %4535 = vmatprep.subr.mxu0 0.0
  %4536 = vmatpush1.msra.mxu0 0.0
  %4537 = vmatprep.subr.mxu0 0.0
  %4538 = vmatpush1.msra.mxu0 0.0
  %4539 = vmatprep.subr.mxu0 0.0
  %4540 = vmatpush1.msra.mxu0 0.0
  %4541 = vmatprep.subr.mxu0 0.0
  %4542 = vmatpush1.msra.mxu0 0.0
  %4543 = vmatprep.subr.mxu0 0.0
  %4544 = vmatpush1.msra.mxu0 0.0
  %4545 = vmatprep.subr.mxu0 0.0
  %4546 = vmatpush1.msra.mxu0 0.0
  %4547 = vmatprep.subr.mxu0 0.0
  %4548 = vmatpush1.msra.mxu0 0.0
  %4549 = vmatprep.subr.mxu0 0.0
  %4550 = vmatpush1.msra.mxu0 0.0
  %4551 = vmatprep.subr.mxu0 0.0
  %4552 = vmatpush1.msra.mxu0 0.0
  %4553 = vmatprep.subr.mxu0 0.0
  %4554 = vmatpush1.msra.mxu0 0.0
  %4555 = vmatprep.subr.mxu0 0.0
  %4556 = vmatpush1.msra.mxu0 0.0
  %4557 = vmatprep.subr.mxu0 0.0
  %4558 = vmatpush1.msra.mxu0 0.0
  %4559 = vmatprep.subr.mxu0 0.0
  %4560 = vmatpush1.msra.mxu0 0.0
  %4561 = vmatprep.subr.mxu0 0.0
  %4562 = vmatpush1.msra.mxu0 0.0
  %4563 = vmatprep.subr.mxu0 0.0
  %4564 = vmatpush1.msra.mxu0 0.0
  %4565 = vmatprep.subr.mxu0 0.0
  %4566 = vmatpush1.msra.mxu0 0.0
  %4567 = vmatprep.subr.mxu0 0.0
  %4568 = vmatpush1.msra.mxu0 0.0
  %4569 = vmatprep.subr.mxu0 0.0
  %4570 = vmatpush1.msra.mxu0 0.0
  %4571 = vmatprep.subr.mxu0 0.0
  %4572 = vmatpush1.msra.mxu0 0.0
  %4573 = vmatprep.subr.mxu0 0.0
  %4574 = vmatpush1.msra.mxu0 0.0
  %4575 = vmatprep.subr.mxu0 0.0
  %4576 = vmatpush1.msra.mxu0 0.0
  %4577 = vmatprep.subr.mxu0 0.0
  %4578 = vmatpush1.msra.mxu0 0.0
  %4579 = vmatprep.subr.mxu0 0.0
  %4580 = vmatpush1.msra.mxu0 0.0
  %4581 = vmatprep.subr.mxu0 0.0
  %4582 = vmatpush1.msra.mxu0 0.0
  %4583 = vmatprep.mubr.f32.mxu0 0.0
  %v4584 = vand.u32 %v4274, 4294901760
  %v4585 = vsub.f32 %v4274, %v4584
  %4586 = vmatmul.mubr.f32.gmra.mrb[0].mxu0 %v4585
  %v4587 = vpop.f32.mrb[0].mxu0
  %v4588 = vadd.f32 %v4486, %v4587
  %v4589 = vpop.f32.mrb[0].mxu0
  %v4590 = vadd.f32 %v4488, %v4589
  %4591 = vmatprep.mubr.f32.mxu0 0.0
  %v4592 = vand.u32 %v4277, 4294901760
  %v4593 = vsub.f32 %v4277, %v4592
  %4594 = vmatmul.mubr.f32.gmra.mrb[0].mxu0 %v4593
  %v4595 = vpop.f32.mrb[0].mxu0
  %v4596 = vadd.f32 %v4493, %v4595
  %v4597 = vpop.f32.mrb[0].mxu0
  %v4598 = vadd.f32 %v4495, %v4597
  %4599 = vmatprep.mubr.f32.mxu0 0.0
  %v4600 = vand.u32 %v4280, 4294901760
  %v4601 = vsub.f32 %v4280, %v4600
  %4602 = vmatmul.mubr.f32.gmra.mrb[0].mxu0 %v4601
  %v4603 = vpop.f32.mrb[0].mxu0
  %v4604 = vadd.f32 %v4500, %v4603
  %v4605 = vpop.f32.mrb[0].mxu0
  %v4606 = vadd.f32 %v4502, %v4605
  %4607 = vmatprep.mubr.f32.mxu0 0.0
  %v4608 = vand.u32 %v4283, 4294901760
  %v4609 = vsub.f32 %v4283, %v4608
  %4610 = vmatmul.mubr.f32.gmra.mrb[0].mxu0 %v4609
  %v4611 = vpop.f32.mrb[0].mxu0
  %v4612 = vadd.f32 %v4507, %v4611
  %v4613 = vpop.f32.mrb[0].mxu0
  %v4614 = vadd.f32 %v4509, %v4613
  %4615 = vdwg.mxu0
  %v4616 = vand.u32 %v101, 4294901760
  %4617 = vmatprep.subr.mxu0 %v4616
  %v4618 = vand.u32 %v100, 4294901760
  %4619 = vmatpush1.msra.mxu0 %v4618
  %v4620 = vand.u32 %v105, 4294901760
  %4621 = vmatprep.subr.mxu0 %v4620
  %v4622 = vand.u32 %v104, 4294901760
  %4623 = vmatpush1.msra.mxu0 %v4622
  %4624 = vmatprep.subr.mxu0 0.0
  %4625 = vmatpush1.msra.mxu0 0.0
  %4626 = vmatprep.subr.mxu0 0.0
  %4627 = vmatpush1.msra.mxu0 0.0
  %4628 = vmatprep.subr.mxu0 0.0
  %4629 = vmatpush1.msra.mxu0 0.0
  %4630 = vmatprep.subr.mxu0 0.0
  %4631 = vmatpush1.msra.mxu0 0.0
  %4632 = vmatprep.subr.mxu0 0.0
  %4633 = vmatpush1.msra.mxu0 0.0
  %4634 = vmatprep.subr.mxu0 0.0
  %4635 = vmatpush1.msra.mxu0 0.0
  %4636 = vmatprep.subr.mxu0 0.0
  %4637 = vmatpush1.msra.mxu0 0.0
  %4638 = vmatprep.subr.mxu0 0.0
  %4639 = vmatpush1.msra.mxu0 0.0
  %4640 = vmatprep.subr.mxu0 0.0
  %4641 = vmatpush1.msra.mxu0 0.0
  %4642 = vmatprep.subr.mxu0 0.0
  %4643 = vmatpush1.msra.mxu0 0.0
  %4644 = vmatprep.subr.mxu0 0.0
  %4645 = vmatpush1.msra.mxu0 0.0
  %4646 = vmatprep.subr.mxu0 0.0
  %4647 = vmatpush1.msra.mxu0 0.0
  %4648 = vmatprep.subr.mxu0 0.0
  %4649 = vmatpush1.msra.mxu0 0.0
  %4650 = vmatprep.subr.mxu0 0.0
  %4651 = vmatpush1.msra.mxu0 0.0
  %4652 = vmatprep.subr.mxu0 0.0
  %4653 = vmatpush1.msra.mxu0 0.0
  %4654 = vmatprep.subr.mxu0 0.0
  %4655 = vmatpush1.msra.mxu0 0.0
  %4656 = vmatprep.subr.mxu0 0.0
  %4657 = vmatpush1.msra.mxu0 0.0
  %4658 = vmatprep.subr.mxu0 0.0
  %4659 = vmatpush1.msra.mxu0 0.0
  %4660 = vmatprep.subr.mxu0 0.0
  %4661 = vmatpush1.msra.mxu0 0.0
  %4662 = vmatprep.subr.mxu0 0.0
  %4663 = vmatpush1.msra.mxu0 0.0
  %4664 = vmatprep.subr.mxu0 0.0
  %4665 = vmatpush1.msra.mxu0 0.0
  %4666 = vmatprep.subr.mxu0 0.0
  %4667 = vmatpush1.msra.mxu0 0.0
  %4668 = vmatprep.subr.mxu0 0.0
  %4669 = vmatpush1.msra.mxu0 0.0
  %4670 = vmatprep.subr.mxu0 0.0
  %4671 = vmatpush1.msra.mxu0 0.0
  %4672 = vmatprep.subr.mxu0 0.0
  %4673 = vmatpush1.msra.mxu0 0.0
  %4674 = vmatprep.subr.mxu0 0.0
  %4675 = vmatpush1.msra.mxu0 0.0
  %4676 = vmatprep.subr.mxu0 0.0
  %4677 = vmatpush1.msra.mxu0 0.0
  %4678 = vmatprep.subr.mxu0 0.0
  %4679 = vmatpush1.msra.mxu0 0.0
  %4680 = vmatprep.subr.mxu0 0.0
  %4681 = vmatpush1.msra.mxu0 0.0
  %4682 = vmatprep.subr.mxu0 0.0
  %4683 = vmatpush1.msra.mxu0 0.0
  %4684 = vmatprep.mubr.f32.mxu0 0.0
  %v4685 = vand.u32 %v4274, 4294901760
  %v4686 = vsub.f32 %v4274, %v4685
  %v4687 = vand.u32 %v4686, 4294901760
  %4688 = vmatmul.mubr.f32.gmra.mrb[0].mxu0 %v4687
  %v4689 = vpop.f32.mrb[0].mxu0
  %v4690 = vadd.f32 %v4588, %v4689
  %v4691 = vpop.f32.mrb[0].mxu0
  %v4692 = vadd.f32 %v4590, %v4691
  %4693 = vmatprep.mubr.f32.mxu0 0.0
  %v4694 = vand.u32 %v4277, 4294901760
  %v4695 = vsub.f32 %v4277, %v4694
  %v4696 = vand.u32 %v4695, 4294901760
  %4697 = vmatmul.mubr.f32.gmra.mrb[0].mxu0 %v4696
  %v4698 = vpop.f32.mrb[0].mxu0
  %v4699 = vadd.f32 %v4596, %v4698
  %v4700 = vpop.f32.mrb[0].mxu0
  %v4701 = vadd.f32 %v4598, %v4700
  %4702 = vmatprep.mubr.f32.mxu0 0.0
  %v4703 = vand.u32 %v4280, 4294901760
  %v4704 = vsub.f32 %v4280, %v4703
  %v4705 = vand.u32 %v4704, 4294901760
  %4706 = vmatmul.mubr.f32.gmra.mrb[0].mxu0 %v4705
  %v4707 = vpop.f32.mrb[0].mxu0
  %v4708 = vadd.f32 %v4604, %v4707
  %v4709 = vpop.f32.mrb[0].mxu0
  %v4710 = vadd.f32 %v4606, %v4709
  %4711 = vmatprep.mubr.f32.mxu0 0.0
  %v4712 = vand.u32 %v4283, 4294901760
  %v4713 = vsub.f32 %v4283, %v4712
  %v4714 = vand.u32 %v4713, 4294901760
  %4715 = vmatmul.mubr.f32.gmra.mrb[0].mxu0 %v4714
  %v4716 = vpop.f32.mrb[0].mxu0
  %v4717 = vadd.f32 %v4612, %v4716
  %v4718 = vpop.f32.mrb[0].mxu0
  %v4719 = vadd.f32 %v4614, %v4718
  %4720 = vdwg.mxu0
  %v4721 = vand.u32 %v101, 4294901760
  %v4722 = vsub.f32 %v101, %v4721
  %v4723 = vand.u32 %v4722, 4294901760
  %4724 = vmatprep.subr.mxu0 %v4723
  %v4725 = vand.u32 %v100, 4294901760
  %v4726 = vsub.f32 %v100, %v4725
  %v4727 = vand.u32 %v4726, 4294901760
  %4728 = vmatpush1.msra.mxu0 %v4727
  %v4729 = vand.u32 %v105, 4294901760
  %v4730 = vsub.f32 %v105, %v4729
  %v4731 = vand.u32 %v4730, 4294901760
  %4732 = vmatprep.subr.mxu0 %v4731
  %v4733 = vand.u32 %v104, 4294901760
  %v4734 = vsub.f32 %v104, %v4733
  %v4735 = vand.u32 %v4734, 4294901760
  %4736 = vmatpush1.msra.mxu0 %v4735
  %4737 = vmatprep.subr.mxu0 0.0
  %4738 = vmatpush1.msra.mxu0 0.0
  %4739 = vmatprep.subr.mxu0 0.0
  %4740 = vmatpush1.msra.mxu0 0.0
  %4741 = vmatprep.subr.mxu0 0.0
  %4742 = vmatpush1.msra.mxu0 0.0
  %4743 = vmatprep.subr.mxu0 0.0
  %4744 = vmatpush1.msra.mxu0 0.0
  %4745 = vmatprep.subr.mxu0 0.0
  %4746 = vmatpush1.msra.mxu0 0.0
  %4747 = vmatprep.subr.mxu0 0.0
  %4748 = vmatpush1.msra.mxu0 0.0
  %4749 = vmatprep.subr.mxu0 0.0
  %4750 = vmatpush1.msra.mxu0 0.0
  %4751 = vmatprep.subr.mxu0 0.0
  %4752 = vmatpush1.msra.mxu0 0.0
  %4753 = vmatprep.subr.mxu0 0.0
  %4754 = vmatpush1.msra.mxu0 0.0
  %4755 = vmatprep.subr.mxu0 0.0
  %4756 = vmatpush1.msra.mxu0 0.0
  %4757 = vmatprep.subr.mxu0 0.0
  %4758 = vmatpush1.msra.mxu0 0.0
  %4759 = vmatprep.subr.mxu0 0.0
  %4760 = vmatpush1.msra.mxu0 0.0
  %4761 = vmatprep.subr.mxu0 0.0
  %4762 = vmatpush1.msra.mxu0 0.0
  %4763 = vmatprep.subr.mxu0 0.0
  %4764 = vmatpush1.msra.mxu0 0.0
  %4765 = vmatprep.subr.mxu0 0.0
  %4766 = vmatpush1.msra.mxu0 0.0
  %4767 = vmatprep.subr.mxu0 0.0
  %4768 = vmatpush1.msra.mxu0 0.0
  %4769 = vmatprep.subr.mxu0 0.0
  %4770 = vmatpush1.msra.mxu0 0.0
  %4771 = vmatprep.subr.mxu0 0.0
  %4772 = vmatpush1.msra.mxu0 0.0
  %4773 = vmatprep.subr.mxu0 0.0
  %4774 = vmatpush1.msra.mxu0 0.0
  %4775 = vmatprep.subr.mxu0 0.0
  %4776 = vmatpush1.msra.mxu0 0.0
  %4777 = vmatprep.subr.mxu0 0.0
  %4778 = vmatpush1.msra.mxu0 0.0
  %4779 = vmatprep.subr.mxu0 0.0
  %4780 = vmatpush1.msra.mxu0 0.0
  %4781 = vmatprep.subr.mxu0 0.0
  %4782 = vmatpush1.msra.mxu0 0.0
  %4783 = vmatprep.subr.mxu0 0.0
  %4784 = vmatpush1.msra.mxu0 0.0
  %4785 = vmatprep.subr.mxu0 0.0
  %4786 = vmatpush1.msra.mxu0 0.0
  %4787 = vmatprep.subr.mxu0 0.0
  %4788 = vmatpush1.msra.mxu0 0.0
  %4789 = vmatprep.subr.mxu0 0.0
  %4790 = vmatpush1.msra.mxu0 0.0
  %4791 = vmatprep.subr.mxu0 0.0
  %4792 = vmatpush1.msra.mxu0 0.0
  %4793 = vmatprep.subr.mxu0 0.0
  %4794 = vmatpush1.msra.mxu0 0.0
  %4795 = vmatprep.subr.mxu0 0.0
  %4796 = vmatpush1.msra.mxu0 0.0
  %4797 = vmatprep.mubr.f32.mxu0 0.0
  %v4798 = vand.u32 %v4274, 4294901760
  %4799 = vmatmul.mubr.f32.gmra.mrb[0].mxu0 %v4798
  %v4800 = vpop.f32.mrb[0].mxu0
  %v4801 = vadd.f32 %v4690, %v4800
  %v4802 = vpop.f32.mrb[0].mxu0
  %v4803 = vadd.f32 %v4692, %v4802
  %4804 = vmatprep.mubr.f32.mxu0 0.0
  %v4805 = vand.u32 %v4277, 4294901760
  %4806 = vmatmul.mubr.f32.gmra.mrb[0].mxu0 %v4805
  %v4807 = vpop.f32.mrb[0].mxu0
  %v4808 = vadd.f32 %v4699, %v4807
  %v4809 = vpop.f32.mrb[0].mxu0
  %v4810 = vadd.f32 %v4701, %v4809
  %4811 = vmatprep.mubr.f32.mxu0 0.0
  %v4812 = vand.u32 %v4280, 4294901760
  %4813 = vmatmul.mubr.f32.gmra.mrb[0].mxu0 %v4812
  %v4814 = vpop.f32.mrb[0].mxu0
  %v4815 = vadd.f32 %v4708, %v4814
  %v4816 = vpop.f32.mrb[0].mxu0
  %v4817 = vadd.f32 %v4710, %v4816
  %4818 = vmatprep.mubr.f32.mxu0 0.0
  %v4819 = vand.u32 %v4283, 4294901760
  %4820 = vmatmul.mubr.f32.gmra.mrb[0].mxu0 %v4819
  %v4821 = vpop.f32.mrb[0].mxu0
  %v4822 = vadd.f32 %v4717, %v4821
  %v4823 = vpop.f32.mrb[0].mxu0
  %v4824 = vadd.f32 %v4719, %v4823
  %4825 = vdwg.mxu0
  %v4826 = vand.u32 %v101, 4294901760
  %4827 = vmatprep.subr.mxu0 %v4826
  %v4828 = vand.u32 %v100, 4294901760
  %4829 = vmatpush1.msra.mxu0 %v4828
  %v4830 = vand.u32 %v105, 4294901760
  %4831 = vmatprep.subr.mxu0 %v4830
  %v4832 = vand.u32 %v104, 4294901760
  %4833 = vmatpush1.msra.mxu0 %v4832
  %4834 = vmatprep.subr.mxu0 0.0
  %4835 = vmatpush1.msra.mxu0 0.0
  %4836 = vmatprep.subr.mxu0 0.0
  %4837 = vmatpush1.msra.mxu0 0.0
  %4838 = vmatprep.subr.mxu0 0.0
  %4839 = vmatpush1.msra.mxu0 0.0
  %4840 = vmatprep.subr.mxu0 0.0
  %4841 = vmatpush1.msra.mxu0 0.0
  %4842 = vmatprep.subr.mxu0 0.0
  %4843 = vmatpush1.msra.mxu0 0.0
  %4844 = vmatprep.subr.mxu0 0.0
  %4845 = vmatpush1.msra.mxu0 0.0
  %4846 = vmatprep.subr.mxu0 0.0
  %4847 = vmatpush1.msra.mxu0 0.0
  %4848 = vmatprep.subr.mxu0 0.0
  %4849 = vmatpush1.msra.mxu0 0.0
  %4850 = vmatprep.subr.mxu0 0.0
  %4851 = vmatpush1.msra.mxu0 0.0
  %4852 = vmatprep.subr.mxu0 0.0
  %4853 = vmatpush1.msra.mxu0 0.0
  %4854 = vmatprep.subr.mxu0 0.0
  %4855 = vmatpush1.msra.mxu0 0.0
  %4856 = vmatprep.subr.mxu0 0.0
  %4857 = vmatpush1.msra.mxu0 0.0
  %4858 = vmatprep.subr.mxu0 0.0
  %4859 = vmatpush1.msra.mxu0 0.0
  %4860 = vmatprep.subr.mxu0 0.0
  %4861 = vmatpush1.msra.mxu0 0.0
  %4862 = vmatprep.subr.mxu0 0.0
  %4863 = vmatpush1.msra.mxu0 0.0
  %4864 = vmatprep.subr.mxu0 0.0
  %4865 = vmatpush1.msra.mxu0 0.0
  %4866 = vmatprep.subr.mxu0 0.0
  %4867 = vmatpush1.msra.mxu0 0.0
  %4868 = vmatprep.subr.mxu0 0.0
  %4869 = vmatpush1.msra.mxu0 0.0
  %4870 = vmatprep.subr.mxu0 0.0
  %4871 = vmatpush1.msra.mxu0 0.0
  %4872 = vmatprep.subr.mxu0 0.0
  %4873 = vmatpush1.msra.mxu0 0.0
  %4874 = vmatprep.subr.mxu0 0.0
  %4875 = vmatpush1.msra.mxu0 0.0
  %4876 = vmatprep.subr.mxu0 0.0
  %4877 = vmatpush1.msra.mxu0 0.0
  %4878 = vmatprep.subr.mxu0 0.0
  %4879 = vmatpush1.msra.mxu0 0.0
  %4880 = vmatprep.subr.mxu0 0.0
  %4881 = vmatpush1.msra.mxu0 0.0
  %4882 = vmatprep.subr.mxu0 0.0
  %4883 = vmatpush1.msra.mxu0 0.0
  %4884 = vmatprep.subr.mxu0 0.0
  %4885 = vmatpush1.msra.mxu0 0.0
  %4886 = vmatprep.subr.mxu0 0.0
  %4887 = vmatpush1.msra.mxu0 0.0
  %4888 = vmatprep.subr.mxu0 0.0
  %4889 = vmatpush1.msra.mxu0 0.0
  %4890 = vmatprep.subr.mxu0 0.0
  %4891 = vmatpush1.msra.mxu0 0.0
  %4892 = vmatprep.subr.mxu0 0.0
  %4893 = vmatpush1.msra.mxu0 0.0
  %4894 = vmatprep.mubr.f32.mxu0 0.0
  %v4895 = vand.u32 %v4274, 4294901760
  %4896 = vmatmul.mubr.f32.gmra.mrb[0].mxu0 %v4895
  %v4897 = vpop.f32.mrb[0].mxu0
  %v4898 = vadd.f32 %v4801, %v4897
  %v4899 = vpop.f32.mrb[0].mxu0
  %v4900 = vadd.f32 %v4803, %v4899
  %4901 = vmatprep.mubr.f32.mxu0 0.0
  %v4902 = vand.u32 %v4277, 4294901760
  %4903 = vmatmul.mubr.f32.gmra.mrb[0].mxu0 %v4902
  %v4904 = vpop.f32.mrb[0].mxu0
  %v4905 = vadd.f32 %v4808, %v4904
  %v4906 = vpop.f32.mrb[0].mxu0
  %v4907 = vadd.f32 %v4810, %v4906
  %4908 = vmatprep.mubr.f32.mxu0 0.0
  %v4909 = vand.u32 %v4280, 4294901760
  %4910 = vmatmul.mubr.f32.gmra.mrb[0].mxu0 %v4909
  %v4911 = vpop.f32.mrb[0].mxu0
  %v4912 = vadd.f32 %v4815, %v4911
  %v4913 = vpop.f32.mrb[0].mxu0
  %v4914 = vadd.f32 %v4817, %v4913
  %4915 = vmatprep.mubr.f32.mxu0 0.0
  %v4916 = vand.u32 %v4283, 4294901760
  %4917 = vmatmul.mubr.f32.gmra.mrb[0].mxu0 %v4916
  %v4918 = vpop.f32.mrb[0].mxu0
  %v4919 = vadd.f32 %v4822, %v4918
  %v4920 = vpop.f32.mrb[0].mxu0
  %v4921 = vadd.f32 %v4824, %v4920
  %4922 = vdwg.mxu0
  %v4923 = vand.u32 %v103, 4294901760
  %4924 = vmatprep.subr.mxu0 %v4923
  %v4925 = vand.u32 %v102, 4294901760
  %4926 = vmatpush1.msra.mxu0 %v4925
  %v4927 = vand.u32 %v107, 4294901760
  %4928 = vmatprep.subr.mxu0 %v4927
  %v4929 = vand.u32 %v106, 4294901760
  %4930 = vmatpush1.msra.mxu0 %v4929
  %4931 = vmatprep.subr.mxu0 0.0
  %4932 = vmatpush1.msra.mxu0 0.0
  %4933 = vmatprep.subr.mxu0 0.0
  %4934 = vmatpush1.msra.mxu0 0.0
  %4935 = vmatprep.subr.mxu0 0.0
  %4936 = vmatpush1.msra.mxu0 0.0
  %4937 = vmatprep.subr.mxu0 0.0
  %4938 = vmatpush1.msra.mxu0 0.0
  %4939 = vmatprep.subr.mxu0 0.0
  %4940 = vmatpush1.msra.mxu0 0.0
  %4941 = vmatprep.subr.mxu0 0.0
  %4942 = vmatpush1.msra.mxu0 0.0
  %4943 = vmatprep.subr.mxu0 0.0
  %4944 = vmatpush1.msra.mxu0 0.0
  %4945 = vmatprep.subr.mxu0 0.0
  %4946 = vmatpush1.msra.mxu0 0.0
  %4947 = vmatprep.subr.mxu0 0.0
  %4948 = vmatpush1.msra.mxu0 0.0
  %4949 = vmatprep.subr.mxu0 0.0
  %4950 = vmatpush1.msra.mxu0 0.0
  %4951 = vmatprep.subr.mxu0 0.0
  %4952 = vmatpush1.msra.mxu0 0.0
  %4953 = vmatprep.subr.mxu0 0.0
  %4954 = vmatpush1.msra.mxu0 0.0
  %4955 = vmatprep.subr.mxu0 0.0
  %4956 = vmatpush1.msra.mxu0 0.0
  %4957 = vmatprep.subr.mxu0 0.0
  %4958 = vmatpush1.msra.mxu0 0.0
  %4959 = vmatprep.subr.mxu0 0.0
  %4960 = vmatpush1.msra.mxu0 0.0
  %4961 = vmatprep.subr.mxu0 0.0
  %4962 = vmatpush1.msra.mxu0 0.0
  %4963 = vmatprep.subr.mxu0 0.0
  %4964 = vmatpush1.msra.mxu0 0.0
  %4965 = vmatprep.subr.mxu0 0.0
  %4966 = vmatpush1.msra.mxu0 0.0
  %4967 = vmatprep.subr.mxu0 0.0
  %4968 = vmatpush1.msra.mxu0 0.0
  %4969 = vmatprep.subr.mxu0 0.0
  %4970 = vmatpush1.msra.mxu0 0.0
  %4971 = vmatprep.subr.mxu0 0.0
  %4972 = vmatpush1.msra.mxu0 0.0
  %4973 = vmatprep.subr.mxu0 0.0
  %4974 = vmatpush1.msra.mxu0 0.0
  %4975 = vmatprep.subr.mxu0 0.0
  %4976 = vmatpush1.msra.mxu0 0.0
  %4977 = vmatprep.subr.mxu0 0.0
  %4978 = vmatpush1.msra.mxu0 0.0
  %4979 = vmatprep.subr.mxu0 0.0
  %4980 = vmatpush1.msra.mxu0 0.0
  %4981 = vmatprep.subr.mxu0 0.0
  %4982 = vmatpush1.msra.mxu0 0.0
  %4983 = vmatprep.subr.mxu0 0.0
  %4984 = vmatpush1.msra.mxu0 0.0
  %4985 = vmatprep.subr.mxu0 0.0
  %4986 = vmatpush1.msra.mxu0 0.0
  %4987 = vmatprep.subr.mxu0 0.0
  %4988 = vmatpush1.msra.mxu0 0.0
  %4989 = vmatprep.subr.mxu0 0.0
  %4990 = vmatpush1.msra.mxu0 0.0
  %4991 = vmatprep.mubr.f32.mxu0 0.0
  %v4992 = vand.u32 %v4274, 4294901760
  %v4993 = vsub.f32 %v4274, %v4992
  %v4994 = vand.u32 %v4993, 4294901760
  %v4995 = vsub.f32 %v4993, %v4994
  %v4996 = vand.u32 %v4995, 4294901760
  %4997 = vmatmul.mubr.f32.gmra.mrb[0].mxu0 %v4996
  %v4998 = vpop.f32.mrb[0].mxu0
  %v4999 = vadd.f32 0.0, %v4998
  %v5000 = vpop.f32.mrb[0].mxu0
  %v5001 = vadd.f32 0.0, %v5000
  %5002 = vmatprep.mubr.f32.mxu0 0.0
  %v5003 = vand.u32 %v4277, 4294901760
  %v5004 = vsub.f32 %v4277, %v5003
  %v5005 = vand.u32 %v5004, 4294901760
  %v5006 = vsub.f32 %v5004, %v5005
  %v5007 = vand.u32 %v5006, 4294901760
  %5008 = vmatmul.mubr.f32.gmra.mrb[0].mxu0 %v5007
  %v5009 = vpop.f32.mrb[0].mxu0
  %v5010 = vadd.f32 0.0, %v5009
  %v5011 = vpop.f32.mrb[0].mxu0
  %v5012 = vadd.f32 0.0, %v5011
  %5013 = vmatprep.mubr.f32.mxu0 0.0
  %v5014 = vand.u32 %v4280, 4294901760
  %v5015 = vsub.f32 %v4280, %v5014
  %v5016 = vand.u32 %v5015, 4294901760
  %v5017 = vsub.f32 %v5015, %v5016
  %v5018 = vand.u32 %v5017, 4294901760
  %5019 = vmatmul.mubr.f32.gmra.mrb[0].mxu0 %v5018
  %v5020 = vpop.f32.mrb[0].mxu0
  %v5021 = vadd.f32 0.0, %v5020
  %v5022 = vpop.f32.mrb[0].mxu0
  %v5023 = vadd.f32 0.0, %v5022
  %5024 = vmatprep.mubr.f32.mxu0 0.0
  %v5025 = vand.u32 %v4283, 4294901760
  %v5026 = vsub.f32 %v4283, %v5025
  %v5027 = vand.u32 %v5026, 4294901760
  %v5028 = vsub.f32 %v5026, %v5027
  %v5029 = vand.u32 %v5028, 4294901760
  %5030 = vmatmul.mubr.f32.gmra.mrb[0].mxu0 %v5029
  %v5031 = vpop.f32.mrb[0].mxu0
  %v5032 = vadd.f32 0.0, %v5031
  %v5033 = vpop.f32.mrb[0].mxu0
  %v5034 = vadd.f32 0.0, %v5033
  %5035 = vdwg.mxu0
  %v5036 = vand.u32 %v103, 4294901760
  %v5037 = vsub.f32 %v103, %v5036
  %v5038 = vand.u32 %v5037, 4294901760
  %v5039 = vsub.f32 %v5037, %v5038
  %v5040 = vand.u32 %v5039, 4294901760
  %5041 = vmatprep.subr.mxu0 %v5040
  %v5042 = vand.u32 %v102, 4294901760
  %v5043 = vsub.f32 %v102, %v5042
  %v5044 = vand.u32 %v5043, 4294901760
  %v5045 = vsub.f32 %v5043, %v5044
  %v5046 = vand.u32 %v5045, 4294901760
  %5047 = vmatpush1.msra.mxu0 %v5046
  %v5048 = vand.u32 %v107, 4294901760
  %v5049 = vsub.f32 %v107, %v5048
  %v5050 = vand.u32 %v5049, 4294901760
  %v5051 = vsub.f32 %v5049, %v5050
  %v5052 = vand.u32 %v5051, 4294901760
  %5053 = vmatprep.subr.mxu0 %v5052
  %v5054 = vand.u32 %v106, 4294901760
  %v5055 = vsub.f32 %v106, %v5054
  %v5056 = vand.u32 %v5055, 4294901760
  %v5057 = vsub.f32 %v5055, %v5056
  %v5058 = vand.u32 %v5057, 4294901760
  %5059 = vmatpush1.msra.mxu0 %v5058
  %5060 = vmatprep.subr.mxu0 0.0
  %5061 = vmatpush1.msra.mxu0 0.0
  %5062 = vmatprep.subr.mxu0 0.0
  %5063 = vmatpush1.msra.mxu0 0.0
  %5064 = vmatprep.subr.mxu0 0.0
  %5065 = vmatpush1.msra.mxu0 0.0
  %5066 = vmatprep.subr.mxu0 0.0
  %5067 = vmatpush1.msra.mxu0 0.0
  %5068 = vmatprep.subr.mxu0 0.0
  %5069 = vmatpush1.msra.mxu0 0.0
  %5070 = vmatprep.subr.mxu0 0.0
  %5071 = vmatpush1.msra.mxu0 0.0
  %5072 = vmatprep.subr.mxu0 0.0
  %5073 = vmatpush1.msra.mxu0 0.0
  %5074 = vmatprep.subr.mxu0 0.0
  %5075 = vmatpush1.msra.mxu0 0.0
  %5076 = vmatprep.subr.mxu0 0.0
  %5077 = vmatpush1.msra.mxu0 0.0
  %5078 = vmatprep.subr.mxu0 0.0
  %5079 = vmatpush1.msra.mxu0 0.0
  %5080 = vmatprep.subr.mxu0 0.0
  %5081 = vmatpush1.msra.mxu0 0.0
  %5082 = vmatprep.subr.mxu0 0.0
  %5083 = vmatpush1.msra.mxu0 0.0
  %5084 = vmatprep.subr.mxu0 0.0
  %5085 = vmatpush1.msra.mxu0 0.0
  %5086 = vmatprep.subr.mxu0 0.0
  %5087 = vmatpush1.msra.mxu0 0.0
  %5088 = vmatprep.subr.mxu0 0.0
  %5089 = vmatpush1.msra.mxu0 0.0
  %5090 = vmatprep.subr.mxu0 0.0
  %5091 = vmatpush1.msra.mxu0 0.0
  %5092 = vmatprep.subr.mxu0 0.0
  %5093 = vmatpush1.msra.mxu0 0.0
  %5094 = vmatprep.subr.mxu0 0.0
  %5095 = vmatpush1.msra.mxu0 0.0
  %5096 = vmatprep.subr.mxu0 0.0
  %5097 = vmatpush1.msra.mxu0 0.0
  %5098 = vmatprep.subr.mxu0 0.0
  %5099 = vmatpush1.msra.mxu0 0.0
  %5100 = vmatprep.subr.mxu0 0.0
  %5101 = vmatpush1.msra.mxu0 0.0
  %5102 = vmatprep.subr.mxu0 0.0
  %5103 = vmatpush1.msra.mxu0 0.0
  %5104 = vmatprep.subr.mxu0 0.0
  %5105 = vmatpush1.msra.mxu0 0.0
  %5106 = vmatprep.subr.mxu0 0.0
  %5107 = vmatpush1.msra.mxu0 0.0
  %5108 = vmatprep.subr.mxu0 0.0
  %5109 = vmatpush1.msra.mxu0 0.0
  %5110 = vmatprep.subr.mxu0 0.0
  %5111 = vmatpush1.msra.mxu0 0.0
  %5112 = vmatprep.subr.mxu0 0.0
  %5113 = vmatpush1.msra.mxu0 0.0
  %5114 = vmatprep.subr.mxu0 0.0
  %5115 = vmatpush1.msra.mxu0 0.0
  %5116 = vmatprep.subr.mxu0 0.0
  %5117 = vmatpush1.msra.mxu0 0.0
  %5118 = vmatprep.subr.mxu0 0.0
  %5119 = vmatpush1.msra.mxu0 0.0
  %5120 = vmatprep.mubr.f32.mxu0 0.0
  %v5121 = vand.u32 %v4274, 4294901760
  %5122 = vmatmul.mubr.f32.gmra.mrb[0].mxu0 %v5121
  %v5123 = vpop.f32.mrb[0].mxu0
  %v5124 = vadd.f32 %v4999, %v5123
  %v5125 = vpop.f32.mrb[0].mxu0
  %v5126 = vadd.f32 %v5001, %v5125
  %5127 = vmatprep.mubr.f32.mxu0 0.0
  %v5128 = vand.u32 %v4277, 4294901760
  %5129 = vmatmul.mubr.f32.gmra.mrb[0].mxu0 %v5128
  %v5130 = vpop.f32.mrb[0].mxu0
  %v5131 = vadd.f32 %v5010, %v5130
  %v5132 = vpop.f32.mrb[0].mxu0
  %v5133 = vadd.f32 %v5012, %v5132
  %5134 = vmatprep.mubr.f32.mxu0 0.0
  %v5135 = vand.u32 %v4280, 4294901760
  %5136 = vmatmul.mubr.f32.gmra.mrb[0].mxu0 %v5135
  %v5137 = vpop.f32.mrb[0].mxu0
  %v5138 = vadd.f32 %v5021, %v5137
  %v5139 = vpop.f32.mrb[0].mxu0
  %v5140 = vadd.f32 %v5023, %v5139
  %5141 = vmatprep.mubr.f32.mxu0 0.0
  %v5142 = vand.u32 %v4283, 4294901760
  %5143 = vmatmul.mubr.f32.gmra.mrb[0].mxu0 %v5142
  %v5144 = vpop.f32.mrb[0].mxu0
  %v5145 = vadd.f32 %v5032, %v5144
  %v5146 = vpop.f32.mrb[0].mxu0
  %v5147 = vadd.f32 %v5034, %v5146
  %5148 = vdwg.mxu0
  %v5149 = vand.u32 %v103, 4294901760
  %v5150 = vsub.f32 %v103, %v5149
  %5151 = vmatprep.subr.mxu0 %v5150
  %v5152 = vand.u32 %v102, 4294901760
  %v5153 = vsub.f32 %v102, %v5152
  %5154 = vmatpush1.msra.mxu0 %v5153
  %v5155 = vand.u32 %v107, 4294901760
  %v5156 = vsub.f32 %v107, %v5155
  %5157 = vmatprep.subr.mxu0 %v5156
  %v5158 = vand.u32 %v106, 4294901760
  %v5159 = vsub.f32 %v106, %v5158
  %5160 = vmatpush1.msra.mxu0 %v5159
  %5161 = vmatprep.subr.mxu0 0.0
  %5162 = vmatpush1.msra.mxu0 0.0
  %5163 = vmatprep.subr.mxu0 0.0
  %5164 = vmatpush1.msra.mxu0 0.0
  %5165 = vmatprep.subr.mxu0 0.0
  %5166 = vmatpush1.msra.mxu0 0.0
  %5167 = vmatprep.subr.mxu0 0.0
  %5168 = vmatpush1.msra.mxu0 0.0
  %5169 = vmatprep.subr.mxu0 0.0
  %5170 = vmatpush1.msra.mxu0 0.0
  %5171 = vmatprep.subr.mxu0 0.0
  %5172 = vmatpush1.msra.mxu0 0.0
  %5173 = vmatprep.subr.mxu0 0.0
  %5174 = vmatpush1.msra.mxu0 0.0
  %5175 = vmatprep.subr.mxu0 0.0
  %5176 = vmatpush1.msra.mxu0 0.0
  %5177 = vmatprep.subr.mxu0 0.0
  %5178 = vmatpush1.msra.mxu0 0.0
  %5179 = vmatprep.subr.mxu0 0.0
  %5180 = vmatpush1.msra.mxu0 0.0
  %5181 = vmatprep.subr.mxu0 0.0
  %5182 = vmatpush1.msra.mxu0 0.0
  %5183 = vmatprep.subr.mxu0 0.0
  %5184 = vmatpush1.msra.mxu0 0.0
  %5185 = vmatprep.subr.mxu0 0.0
  %5186 = vmatpush1.msra.mxu0 0.0
  %5187 = vmatprep.subr.mxu0 0.0
  %5188 = vmatpush1.msra.mxu0 0.0
  %5189 = vmatprep.subr.mxu0 0.0
  %5190 = vmatpush1.msra.mxu0 0.0
  %5191 = vmatprep.subr.mxu0 0.0
  %5192 = vmatpush1.msra.mxu0 0.0
  %5193 = vmatprep.subr.mxu0 0.0
  %5194 = vmatpush1.msra.mxu0 0.0
  %5195 = vmatprep.subr.mxu0 0.0
  %5196 = vmatpush1.msra.mxu0 0.0
  %5197 = vmatprep.subr.mxu0 0.0
  %5198 = vmatpush1.msra.mxu0 0.0
  %5199 = vmatprep.subr.mxu0 0.0
  %5200 = vmatpush1.msra.mxu0 0.0
  %5201 = vmatprep.subr.mxu0 0.0
  %5202 = vmatpush1.msra.mxu0 0.0
  %5203 = vmatprep.subr.mxu0 0.0
  %5204 = vmatpush1.msra.mxu0 0.0
  %5205 = vmatprep.subr.mxu0 0.0
  %5206 = vmatpush1.msra.mxu0 0.0
  %5207 = vmatprep.subr.mxu0 0.0
  %5208 = vmatpush1.msra.mxu0 0.0
  %5209 = vmatprep.subr.mxu0 0.0
  %5210 = vmatpush1.msra.mxu0 0.0
  %5211 = vmatprep.subr.mxu0 0.0
  %5212 = vmatpush1.msra.mxu0 0.0
  %5213 = vmatprep.subr.mxu0 0.0
  %5214 = vmatpush1.msra.mxu0 0.0
  %5215 = vmatprep.subr.mxu0 0.0
  %5216 = vmatpush1.msra.mxu0 0.0
  %5217 = vmatprep.subr.mxu0 0.0
  %5218 = vmatpush1.msra.mxu0 0.0
  %5219 = vmatprep.subr.mxu0 0.0
  %5220 = vmatpush1.msra.mxu0 0.0
  %5221 = vmatprep.mubr.f32.mxu0 0.0
  %v5222 = vand.u32 %v4274, 4294901760
  %v5223 = vsub.f32 %v4274, %v5222
  %5224 = vmatmul.mubr.f32.gmra.mrb[0].mxu0 %v5223
  %v5225 = vpop.f32.mrb[0].mxu0
  %v5226 = vadd.f32 %v5124, %v5225
  %v5227 = vpop.f32.mrb[0].mxu0
  %v5228 = vadd.f32 %v5126, %v5227
  %5229 = vmatprep.mubr.f32.mxu0 0.0
  %v5230 = vand.u32 %v4277, 4294901760
  %v5231 = vsub.f32 %v4277, %v5230
  %5232 = vmatmul.mubr.f32.gmra.mrb[0].mxu0 %v5231
  %v5233 = vpop.f32.mrb[0].mxu0
  %v5234 = vadd.f32 %v5131, %v5233
  %v5235 = vpop.f32.mrb[0].mxu0
  %v5236 = vadd.f32 %v5133, %v5235
  %5237 = vmatprep.mubr.f32.mxu0 0.0
  %v5238 = vand.u32 %v4280, 4294901760
  %v5239 = vsub.f32 %v4280, %v5238
  %5240 = vmatmul.mubr.f32.gmra.mrb[0].mxu0 %v5239
  %v5241 = vpop.f32.mrb[0].mxu0
  %v5242 = vadd.f32 %v5138, %v5241
  %v5243 = vpop.f32.mrb[0].mxu0
  %v5244 = vadd.f32 %v5140, %v5243
  %5245 = vmatprep.mubr.f32.mxu0 0.0
  %v5246 = vand.u32 %v4283, 4294901760
  %v5247 = vsub.f32 %v4283, %v5246
  %5248 = vmatmul.mubr.f32.gmra.mrb[0].mxu0 %v5247
  %v5249 = vpop.f32.mrb[0].mxu0
  %v5250 = vadd.f32 %v5145, %v5249
  %v5251 = vpop.f32.mrb[0].mxu0
  %v5252 = vadd.f32 %v5147, %v5251
  %5253 = vdwg.mxu0
  %v5254 = vand.u32 %v103, 4294901760
  %5255 = vmatprep.subr.mxu0 %v5254
  %v5256 = vand.u32 %v102, 4294901760
  %5257 = vmatpush1.msra.mxu0 %v5256
  %v5258 = vand.u32 %v107, 4294901760
  %5259 = vmatprep.subr.mxu0 %v5258
  %v5260 = vand.u32 %v106, 4294901760
  %5261 = vmatpush1.msra.mxu0 %v5260
  %5262 = vmatprep.subr.mxu0 0.0
  %5263 = vmatpush1.msra.mxu0 0.0
  %5264 = vmatprep.subr.mxu0 0.0
  %5265 = vmatpush1.msra.mxu0 0.0
  %5266 = vmatprep.subr.mxu0 0.0
  %5267 = vmatpush1.msra.mxu0 0.0
  %5268 = vmatprep.subr.mxu0 0.0
  %5269 = vmatpush1.msra.mxu0 0.0
  %5270 = vmatprep.subr.mxu0 0.0
  %5271 = vmatpush1.msra.mxu0 0.0
  %5272 = vmatprep.subr.mxu0 0.0
  %5273 = vmatpush1.msra.mxu0 0.0
  %5274 = vmatprep.subr.mxu0 0.0
  %5275 = vmatpush1.msra.mxu0 0.0
  %5276 = vmatprep.subr.mxu0 0.0
  %5277 = vmatpush1.msra.mxu0 0.0
  %5278 = vmatprep.subr.mxu0 0.0
  %5279 = vmatpush1.msra.mxu0 0.0
  %5280 = vmatprep.subr.mxu0 0.0
  %5281 = vmatpush1.msra.mxu0 0.0
  %5282 = vmatprep.subr.mxu0 0.0
  %5283 = vmatpush1.msra.mxu0 0.0
  %5284 = vmatprep.subr.mxu0 0.0
  %5285 = vmatpush1.msra.mxu0 0.0
  %5286 = vmatprep.subr.mxu0 0.0
  %5287 = vmatpush1.msra.mxu0 0.0
  %5288 = vmatprep.subr.mxu0 0.0
  %5289 = vmatpush1.msra.mxu0 0.0
  %5290 = vmatprep.subr.mxu0 0.0
  %5291 = vmatpush1.msra.mxu0 0.0
  %5292 = vmatprep.subr.mxu0 0.0
  %5293 = vmatpush1.msra.mxu0 0.0
  %5294 = vmatprep.subr.mxu0 0.0
  %5295 = vmatpush1.msra.mxu0 0.0
  %5296 = vmatprep.subr.mxu0 0.0
  %5297 = vmatpush1.msra.mxu0 0.0
  %5298 = vmatprep.subr.mxu0 0.0
  %5299 = vmatpush1.msra.mxu0 0.0
  %5300 = vmatprep.subr.mxu0 0.0
  %5301 = vmatpush1.msra.mxu0 0.0
  %5302 = vmatprep.subr.mxu0 0.0
  %5303 = vmatpush1.msra.mxu0 0.0
  %5304 = vmatprep.subr.mxu0 0.0
  %5305 = vmatpush1.msra.mxu0 0.0
  %5306 = vmatprep.subr.mxu0 0.0
  %5307 = vmatpush1.msra.mxu0 0.0
  %5308 = vmatprep.subr.mxu0 0.0
  %5309 = vmatpush1.msra.mxu0 0.0
  %5310 = vmatprep.subr.mxu0 0.0
  %5311 = vmatpush1.msra.mxu0 0.0
  %5312 = vmatprep.subr.mxu0 0.0
  %5313 = vmatpush1.msra.mxu0 0.0
  %5314 = vmatprep.subr.mxu0 0.0
  %5315 = vmatpush1.msra.mxu0 0.0
  %5316 = vmatprep.subr.mxu0 0.0
  %5317 = vmatpush1.msra.mxu0 0.0
  %5318 = vmatprep.subr.mxu0 0.0
  %5319 = vmatpush1.msra.mxu0 0.0
  %5320 = vmatprep.subr.mxu0 0.0
  %5321 = vmatpush1.msra.mxu0 0.0
  %5322 = vmatprep.mubr.f32.mxu0 0.0
  %v5323 = vand.u32 %v4274, 4294901760
  %v5324 = vsub.f32 %v4274, %v5323
  %v5325 = vand.u32 %v5324, 4294901760
  %5326 = vmatmul.mubr.f32.gmra.mrb[0].mxu0 %v5325
  %v5327 = vpop.f32.mrb[0].mxu0
  %v5328 = vadd.f32 %v5226, %v5327
  %v5329 = vpop.f32.mrb[0].mxu0
  %v5330 = vadd.f32 %v5228, %v5329
  %5331 = vmatprep.mubr.f32.mxu0 0.0
  %v5332 = vand.u32 %v4277, 4294901760
  %v5333 = vsub.f32 %v4277, %v5332
  %v5334 = vand.u32 %v5333, 4294901760
  %5335 = vmatmul.mubr.f32.gmra.mrb[0].mxu0 %v5334
  %v5336 = vpop.f32.mrb[0].mxu0
  %v5337 = vadd.f32 %v5234, %v5336
  %v5338 = vpop.f32.mrb[0].mxu0
  %v5339 = vadd.f32 %v5236, %v5338
  %5340 = vmatprep.mubr.f32.mxu0 0.0
  %v5341 = vand.u32 %v4280, 4294901760
  %v5342 = vsub.f32 %v4280, %v5341
  %v5343 = vand.u32 %v5342, 4294901760
  %5344 = vmatmul.mubr.f32.gmra.mrb[0].mxu0 %v5343
  %v5345 = vpop.f32.mrb[0].mxu0
  %v5346 = vadd.f32 %v5242, %v5345
  %v5347 = vpop.f32.mrb[0].mxu0
  %v5348 = vadd.f32 %v5244, %v5347
  %5349 = vmatprep.mubr.f32.mxu0 0.0
  %v5350 = vand.u32 %v4283, 4294901760
  %v5351 = vsub.f32 %v4283, %v5350
  %v5352 = vand.u32 %v5351, 4294901760
  %5353 = vmatmul.mubr.f32.gmra.mrb[0].mxu0 %v5352
  %v5354 = vpop.f32.mrb[0].mxu0
  %v5355 = vadd.f32 %v5250, %v5354
  %v5356 = vpop.f32.mrb[0].mxu0
  %v5357 = vadd.f32 %v5252, %v5356
  %5358 = vdwg.mxu0
  %v5359 = vand.u32 %v103, 4294901760
  %v5360 = vsub.f32 %v103, %v5359
  %v5361 = vand.u32 %v5360, 4294901760
  %5362 = vmatprep.subr.mxu0 %v5361
  %v5363 = vand.u32 %v102, 4294901760
  %v5364 = vsub.f32 %v102, %v5363
  %v5365 = vand.u32 %v5364, 4294901760
  %5366 = vmatpush1.msra.mxu0 %v5365
  %v5367 = vand.u32 %v107, 4294901760
  %v5368 = vsub.f32 %v107, %v5367
  %v5369 = vand.u32 %v5368, 4294901760
  %5370 = vmatprep.subr.mxu0 %v5369
  %v5371 = vand.u32 %v106, 4294901760
  %v5372 = vsub.f32 %v106, %v5371
  %v5373 = vand.u32 %v5372, 4294901760
  %5374 = vmatpush1.msra.mxu0 %v5373
  %5375 = vmatprep.subr.mxu0 0.0
  %5376 = vmatpush1.msra.mxu0 0.0
  %5377 = vmatprep.subr.mxu0 0.0
  %5378 = vmatpush1.msra.mxu0 0.0
  %5379 = vmatprep.subr.mxu0 0.0
  %5380 = vmatpush1.msra.mxu0 0.0
  %5381 = vmatprep.subr.mxu0 0.0
  %5382 = vmatpush1.msra.mxu0 0.0
  %5383 = vmatprep.subr.mxu0 0.0
  %5384 = vmatpush1.msra.mxu0 0.0
  %5385 = vmatprep.subr.mxu0 0.0
  %5386 = vmatpush1.msra.mxu0 0.0
  %5387 = vmatprep.subr.mxu0 0.0
  %5388 = vmatpush1.msra.mxu0 0.0
  %5389 = vmatprep.subr.mxu0 0.0
  %5390 = vmatpush1.msra.mxu0 0.0
  %5391 = vmatprep.subr.mxu0 0.0
  %5392 = vmatpush1.msra.mxu0 0.0
  %5393 = vmatprep.subr.mxu0 0.0
  %5394 = vmatpush1.msra.mxu0 0.0
  %5395 = vmatprep.subr.mxu0 0.0
  %5396 = vmatpush1.msra.mxu0 0.0
  %5397 = vmatprep.subr.mxu0 0.0
  %5398 = vmatpush1.msra.mxu0 0.0
  %5399 = vmatprep.subr.mxu0 0.0
  %5400 = vmatpush1.msra.mxu0 0.0
  %5401 = vmatprep.subr.mxu0 0.0
  %5402 = vmatpush1.msra.mxu0 0.0
  %5403 = vmatprep.subr.mxu0 0.0
  %5404 = vmatpush1.msra.mxu0 0.0
  %5405 = vmatprep.subr.mxu0 0.0
  %5406 = vmatpush1.msra.mxu0 0.0
  %5407 = vmatprep.subr.mxu0 0.0
  %5408 = vmatpush1.msra.mxu0 0.0
  %5409 = vmatprep.subr.mxu0 0.0
  %5410 = vmatpush1.msra.mxu0 0.0
  %5411 = vmatprep.subr.mxu0 0.0
  %5412 = vmatpush1.msra.mxu0 0.0
  %5413 = vmatprep.subr.mxu0 0.0
  %5414 = vmatpush1.msra.mxu0 0.0
  %5415 = vmatprep.subr.mxu0 0.0
  %5416 = vmatpush1.msra.mxu0 0.0
  %5417 = vmatprep.subr.mxu0 0.0
  %5418 = vmatpush1.msra.mxu0 0.0
  %5419 = vmatprep.subr.mxu0 0.0
  %5420 = vmatpush1.msra.mxu0 0.0
  %5421 = vmatprep.subr.mxu0 0.0
  %5422 = vmatpush1.msra.mxu0 0.0
  %5423 = vmatprep.subr.mxu0 0.0
  %5424 = vmatpush1.msra.mxu0 0.0
  %5425 = vmatprep.subr.mxu0 0.0
  %5426 = vmatpush1.msra.mxu0 0.0
  %5427 = vmatprep.subr.mxu0 0.0
  %5428 = vmatpush1.msra.mxu0 0.0
  %5429 = vmatprep.subr.mxu0 0.0
  %5430 = vmatpush1.msra.mxu0 0.0
  %5431 = vmatprep.subr.mxu0 0.0
  %5432 = vmatpush1.msra.mxu0 0.0
  %5433 = vmatprep.subr.mxu0 0.0
  %5434 = vmatpush1.msra.mxu0 0.0
  %5435 = vmatprep.mubr.f32.mxu0 0.0
  %v5436 = vand.u32 %v4274, 4294901760
  %5437 = vmatmul.mubr.f32.gmra.mrb[0].mxu0 %v5436
  %v5438 = vpop.f32.mrb[0].mxu0
  %v5439 = vadd.f32 %v5328, %v5438
  %v5440 = vpop.f32.mrb[0].mxu0
  %v5441 = vadd.f32 %v5330, %v5440
  %5442 = vmatprep.mubr.f32.mxu0 0.0
  %v5443 = vand.u32 %v4277, 4294901760
  %5444 = vmatmul.mubr.f32.gmra.mrb[0].mxu0 %v5443
  %v5445 = vpop.f32.mrb[0].mxu0
  %v5446 = vadd.f32 %v5337, %v5445
  %v5447 = vpop.f32.mrb[0].mxu0
  %v5448 = vadd.f32 %v5339, %v5447
  %5449 = vmatprep.mubr.f32.mxu0 0.0
  %v5450 = vand.u32 %v4280, 4294901760
  %5451 = vmatmul.mubr.f32.gmra.mrb[0].mxu0 %v5450
  %v5452 = vpop.f32.mrb[0].mxu0
  %v5453 = vadd.f32 %v5346, %v5452
  %v5454 = vpop.f32.mrb[0].mxu0
  %v5455 = vadd.f32 %v5348, %v5454
  %5456 = vmatprep.mubr.f32.mxu0 0.0
  %v5457 = vand.u32 %v4283, 4294901760
  %5458 = vmatmul.mubr.f32.gmra.mrb[0].mxu0 %v5457
  %v5459 = vpop.f32.mrb[0].mxu0
  %v5460 = vadd.f32 %v5355, %v5459
  %v5461 = vpop.f32.mrb[0].mxu0
  %v5462 = vadd.f32 %v5357, %v5461
  %5463 = vdwg.mxu0
  %v5464 = vand.u32 %v103, 4294901760
  %5465 = vmatprep.subr.mxu0 %v5464
  %v5466 = vand.u32 %v102, 4294901760
  %5467 = vmatpush1.msra.mxu0 %v5466
  %v5468 = vand.u32 %v107, 4294901760
  %5469 = vmatprep.subr.mxu0 %v5468
  %v5470 = vand.u32 %v106, 4294901760
  %5471 = vmatpush1.msra.mxu0 %v5470
  %5472 = vmatprep.subr.mxu0 0.0
  %5473 = vmatpush1.msra.mxu0 0.0
  %5474 = vmatprep.subr.mxu0 0.0
  %5475 = vmatpush1.msra.mxu0 0.0
  %5476 = vmatprep.subr.mxu0 0.0
  %5477 = vmatpush1.msra.mxu0 0.0
  %5478 = vmatprep.subr.mxu0 0.0
  %5479 = vmatpush1.msra.mxu0 0.0
  %5480 = vmatprep.subr.mxu0 0.0
  %5481 = vmatpush1.msra.mxu0 0.0
  %5482 = vmatprep.subr.mxu0 0.0
  %5483 = vmatpush1.msra.mxu0 0.0
  %5484 = vmatprep.subr.mxu0 0.0
  %5485 = vmatpush1.msra.mxu0 0.0
  %5486 = vmatprep.subr.mxu0 0.0
  %5487 = vmatpush1.msra.mxu0 0.0
  %5488 = vmatprep.subr.mxu0 0.0
  %5489 = vmatpush1.msra.mxu0 0.0
  %5490 = vmatprep.subr.mxu0 0.0
  %5491 = vmatpush1.msra.mxu0 0.0
  %5492 = vmatprep.subr.mxu0 0.0
  %5493 = vmatpush1.msra.mxu0 0.0
  %5494 = vmatprep.subr.mxu0 0.0
  %5495 = vmatpush1.msra.mxu0 0.0
  %5496 = vmatprep.subr.mxu0 0.0
  %5497 = vmatpush1.msra.mxu0 0.0
  %5498 = vmatprep.subr.mxu0 0.0
  %5499 = vmatpush1.msra.mxu0 0.0
  %5500 = vmatprep.subr.mxu0 0.0
  %5501 = vmatpush1.msra.mxu0 0.0
  %5502 = vmatprep.subr.mxu0 0.0
  %5503 = vmatpush1.msra.mxu0 0.0
  %5504 = vmatprep.subr.mxu0 0.0
  %5505 = vmatpush1.msra.mxu0 0.0
  %5506 = vmatprep.subr.mxu0 0.0
  %5507 = vmatpush1.msra.mxu0 0.0
  %5508 = vmatprep.subr.mxu0 0.0
  %5509 = vmatpush1.msra.mxu0 0.0
  %5510 = vmatprep.subr.mxu0 0.0
  %5511 = vmatpush1.msra.mxu0 0.0
  %5512 = vmatprep.subr.mxu0 0.0
  %5513 = vmatpush1.msra.mxu0 0.0
  %5514 = vmatprep.subr.mxu0 0.0
  %5515 = vmatpush1.msra.mxu0 0.0
  %5516 = vmatprep.subr.mxu0 0.0
  %5517 = vmatpush1.msra.mxu0 0.0
  %5518 = vmatprep.subr.mxu0 0.0
  %5519 = vmatpush1.msra.mxu0 0.0
  %5520 = vmatprep.subr.mxu0 0.0
  %5521 = vmatpush1.msra.mxu0 0.0
  %5522 = vmatprep.subr.mxu0 0.0
  %5523 = vmatpush1.msra.mxu0 0.0
  %5524 = vmatprep.subr.mxu0 0.0
  %5525 = vmatpush1.msra.mxu0 0.0
  %5526 = vmatprep.subr.mxu0 0.0
  %5527 = vmatpush1.msra.mxu0 0.0
  %5528 = vmatprep.subr.mxu0 0.0
  %5529 = vmatpush1.msra.mxu0 0.0
  %5530 = vmatprep.subr.mxu0 0.0
  %5531 = vmatpush1.msra.mxu0 0.0
  %5532 = vmatprep.mubr.f32.mxu0 0.0
  %v5533 = vand.u32 %v4274, 4294901760
  %5534 = vmatmul.mubr.f32.gmra.mrb[0].mxu0 %v5533
  %v5535 = vpop.f32.mrb[0].mxu0
  %v5536 = vadd.f32 %v5439, %v5535
  %v5537 = vpop.f32.mrb[0].mxu0
  %v5538 = vadd.f32 %v5441, %v5537
  %5539 = vmatprep.mubr.f32.mxu0 0.0
  %v5540 = vand.u32 %v4277, 4294901760
  %5541 = vmatmul.mubr.f32.gmra.mrb[0].mxu0 %v5540
  %v5542 = vpop.f32.mrb[0].mxu0
  %v5543 = vadd.f32 %v5446, %v5542
  %v5544 = vpop.f32.mrb[0].mxu0
  %v5545 = vadd.f32 %v5448, %v5544
  %5546 = vmatprep.mubr.f32.mxu0 0.0
  %v5547 = vand.u32 %v4280, 4294901760
  %5548 = vmatmul.mubr.f32.gmra.mrb[0].mxu0 %v5547
  %v5549 = vpop.f32.mrb[0].mxu0
  %v5550 = vadd.f32 %v5453, %v5549
  %v5551 = vpop.f32.mrb[0].mxu0
  %v5552 = vadd.f32 %v5455, %v5551
  %5553 = vmatprep.mubr.f32.mxu0 0.0
  %v5554 = vand.u32 %v4283, 4294901760
  %5555 = vmatmul.mubr.f32.gmra.mrb[0].mxu0 %v5554
  %v5556 = vpop.f32.mrb[0].mxu0
  %v5557 = vadd.f32 %v5460, %v5556
  %v5558 = vpop.f32.mrb[0].mxu0
  %v5559 = vadd.f32 %v5462, %v5558
  %5560 = vdwg.mxu0
  %v5561 = vmul.f32 %v4244, %v4268
  %v5562 = vmul.f32 %v4245, %v4269
  %v5563 = vmul.f32 %v4246, %v4270
  %v5564 = vmul.f32 %v4247, %v4271
  %v5566 = vsel %vm4272, %v5561, 0
  %v5569 = vsel %vm4272, %v5562, 0
  %v5572 = vsel %vm4272, %v5563, 0
  %v5575 = vsel %vm4272, %v5564, 0
  %v5577 = vand.u32 %v101, 4294901760
  %5578 = vmatprep.subr.mxu0 %v5577
  %v5579 = vand.u32 %v100, 4294901760
  %5580 = vmatpush1.msra.mxu0 %v5579
  %v5581 = vand.u32 %v105, 4294901760
  %5582 = vmatprep.subr.mxu0 %v5581
  %v5583 = vand.u32 %v104, 4294901760
  %5584 = vmatpush1.msra.mxu0 %v5583
  %5585 = vmatprep.subr.mxu0 0.0
  %5586 = vmatpush1.msra.mxu0 0.0
  %5587 = vmatprep.subr.mxu0 0.0
  %5588 = vmatpush1.msra.mxu0 0.0
  %5589 = vmatprep.subr.mxu0 0.0
  %5590 = vmatpush1.msra.mxu0 0.0
  %5591 = vmatprep.subr.mxu0 0.0
  %5592 = vmatpush1.msra.mxu0 0.0
  %5593 = vmatprep.subr.mxu0 0.0
  %5594 = vmatpush1.msra.mxu0 0.0
  %5595 = vmatprep.subr.mxu0 0.0
  %5596 = vmatpush1.msra.mxu0 0.0
  %5597 = vmatprep.subr.mxu0 0.0
  %5598 = vmatpush1.msra.mxu0 0.0
  %5599 = vmatprep.subr.mxu0 0.0
  %5600 = vmatpush1.msra.mxu0 0.0
  %5601 = vmatprep.subr.mxu0 0.0
  %5602 = vmatpush1.msra.mxu0 0.0
  %5603 = vmatprep.subr.mxu0 0.0
  %5604 = vmatpush1.msra.mxu0 0.0
  %5605 = vmatprep.subr.mxu0 0.0
  %5606 = vmatpush1.msra.mxu0 0.0
  %5607 = vmatprep.subr.mxu0 0.0
  %5608 = vmatpush1.msra.mxu0 0.0
  %5609 = vmatprep.subr.mxu0 0.0
  %5610 = vmatpush1.msra.mxu0 0.0
  %5611 = vmatprep.subr.mxu0 0.0
  %5612 = vmatpush1.msra.mxu0 0.0
  %5613 = vmatprep.subr.mxu0 0.0
  %5614 = vmatpush1.msra.mxu0 0.0
  %5615 = vmatprep.subr.mxu0 0.0
  %5616 = vmatpush1.msra.mxu0 0.0
  %5617 = vmatprep.subr.mxu0 0.0
  %5618 = vmatpush1.msra.mxu0 0.0
  %5619 = vmatprep.subr.mxu0 0.0
  %5620 = vmatpush1.msra.mxu0 0.0
  %5621 = vmatprep.subr.mxu0 0.0
  %5622 = vmatpush1.msra.mxu0 0.0
  %5623 = vmatprep.subr.mxu0 0.0
  %5624 = vmatpush1.msra.mxu0 0.0
  %5625 = vmatprep.subr.mxu0 0.0
  %5626 = vmatpush1.msra.mxu0 0.0
  %5627 = vmatprep.subr.mxu0 0.0
  %5628 = vmatpush1.msra.mxu0 0.0
  %5629 = vmatprep.subr.mxu0 0.0
  %5630 = vmatpush1.msra.mxu0 0.0
  %5631 = vmatprep.subr.mxu0 0.0
  %5632 = vmatpush1.msra.mxu0 0.0
  %5633 = vmatprep.subr.mxu0 0.0
  %5634 = vmatpush1.msra.mxu0 0.0
  %5635 = vmatprep.subr.mxu0 0.0
  %5636 = vmatpush1.msra.mxu0 0.0
  %5637 = vmatprep.subr.mxu0 0.0
  %5638 = vmatpush1.msra.mxu0 0.0
  %5639 = vmatprep.subr.mxu0 0.0
  %5640 = vmatpush1.msra.mxu0 0.0
  %5641 = vmatprep.subr.mxu0 0.0
  %5642 = vmatpush1.msra.mxu0 0.0
  %5643 = vmatprep.subr.mxu0 0.0
  %5644 = vmatpush1.msra.mxu0 0.0
  %5645 = vmatprep.mubr.f32.mxu0 0.0
  %v5646 = vand.u32 %v5566, 4294901760
  %v5647 = vsub.f32 %v5566, %v5646
  %v5648 = vand.u32 %v5647, 4294901760
  %v5649 = vsub.f32 %v5647, %v5648
  %v5650 = vand.u32 %v5649, 4294901760
  %5651 = vmatmul.mubr.f32.gmra.mrb[0].mxu0 %v5650
  %v5652 = vpop.f32.mrb[0].mxu0
  %v5653 = vadd.f32 0.0, %v5652
  %v5654 = vpop.f32.mrb[0].mxu0
  %v5655 = vadd.f32 0.0, %v5654
  %5656 = vmatprep.mubr.f32.mxu0 0.0
  %v5657 = vand.u32 %v5569, 4294901760
  %v5658 = vsub.f32 %v5569, %v5657
  %v5659 = vand.u32 %v5658, 4294901760
  %v5660 = vsub.f32 %v5658, %v5659
  %v5661 = vand.u32 %v5660, 4294901760
  %5662 = vmatmul.mubr.f32.gmra.mrb[0].mxu0 %v5661
  %v5663 = vpop.f32.mrb[0].mxu0
  %v5664 = vadd.f32 0.0, %v5663
  %v5665 = vpop.f32.mrb[0].mxu0
  %v5666 = vadd.f32 0.0, %v5665
  %5667 = vmatprep.mubr.f32.mxu0 0.0
  %v5668 = vand.u32 %v5572, 4294901760
  %v5669 = vsub.f32 %v5572, %v5668
  %v5670 = vand.u32 %v5669, 4294901760
  %v5671 = vsub.f32 %v5669, %v5670
  %v5672 = vand.u32 %v5671, 4294901760
  %5673 = vmatmul.mubr.f32.gmra.mrb[0].mxu0 %v5672
  %v5674 = vpop.f32.mrb[0].mxu0
  %v5675 = vadd.f32 0.0, %v5674
  %v5676 = vpop.f32.mrb[0].mxu0
  %v5677 = vadd.f32 0.0, %v5676
  %5678 = vmatprep.mubr.f32.mxu0 0.0
  %v5679 = vand.u32 %v5575, 4294901760
  %v5680 = vsub.f32 %v5575, %v5679
  %v5681 = vand.u32 %v5680, 4294901760
  %v5682 = vsub.f32 %v5680, %v5681
  %v5683 = vand.u32 %v5682, 4294901760
  %5684 = vmatmul.mubr.f32.gmra.mrb[0].mxu0 %v5683
  %v5685 = vpop.f32.mrb[0].mxu0
  %v5686 = vadd.f32 0.0, %v5685
  %v5687 = vpop.f32.mrb[0].mxu0
  %v5688 = vadd.f32 0.0, %v5687
  %5689 = vdwg.mxu0
  %v5690 = vand.u32 %v101, 4294901760
  %v5691 = vsub.f32 %v101, %v5690
  %v5692 = vand.u32 %v5691, 4294901760
  %v5693 = vsub.f32 %v5691, %v5692
  %v5694 = vand.u32 %v5693, 4294901760
  %5695 = vmatprep.subr.mxu0 %v5694
  %v5696 = vand.u32 %v100, 4294901760
  %v5697 = vsub.f32 %v100, %v5696
  %v5698 = vand.u32 %v5697, 4294901760
  %v5699 = vsub.f32 %v5697, %v5698
  %v5700 = vand.u32 %v5699, 4294901760
  %5701 = vmatpush1.msra.mxu0 %v5700
  %v5702 = vand.u32 %v105, 4294901760
  %v5703 = vsub.f32 %v105, %v5702
  %v5704 = vand.u32 %v5703, 4294901760
  %v5705 = vsub.f32 %v5703, %v5704
  %v5706 = vand.u32 %v5705, 4294901760
  %5707 = vmatprep.subr.mxu0 %v5706
  %v5708 = vand.u32 %v104, 4294901760
  %v5709 = vsub.f32 %v104, %v5708
  %v5710 = vand.u32 %v5709, 4294901760
  %v5711 = vsub.f32 %v5709, %v5710
  %v5712 = vand.u32 %v5711, 4294901760
  %5713 = vmatpush1.msra.mxu0 %v5712
  %5714 = vmatprep.subr.mxu0 0.0
  %5715 = vmatpush1.msra.mxu0 0.0
  %5716 = vmatprep.subr.mxu0 0.0
  %5717 = vmatpush1.msra.mxu0 0.0
  %5718 = vmatprep.subr.mxu0 0.0
  %5719 = vmatpush1.msra.mxu0 0.0
  %5720 = vmatprep.subr.mxu0 0.0
  %5721 = vmatpush1.msra.mxu0 0.0
  %5722 = vmatprep.subr.mxu0 0.0
  %5723 = vmatpush1.msra.mxu0 0.0
  %5724 = vmatprep.subr.mxu0 0.0
  %5725 = vmatpush1.msra.mxu0 0.0
  %5726 = vmatprep.subr.mxu0 0.0
  %5727 = vmatpush1.msra.mxu0 0.0
  %5728 = vmatprep.subr.mxu0 0.0
  %5729 = vmatpush1.msra.mxu0 0.0
  %5730 = vmatprep.subr.mxu0 0.0
  %5731 = vmatpush1.msra.mxu0 0.0
  %5732 = vmatprep.subr.mxu0 0.0
  %5733 = vmatpush1.msra.mxu0 0.0
  %5734 = vmatprep.subr.mxu0 0.0
  %5735 = vmatpush1.msra.mxu0 0.0
  %5736 = vmatprep.subr.mxu0 0.0
  %5737 = vmatpush1.msra.mxu0 0.0
  %5738 = vmatprep.subr.mxu0 0.0
  %5739 = vmatpush1.msra.mxu0 0.0
  %5740 = vmatprep.subr.mxu0 0.0
  %5741 = vmatpush1.msra.mxu0 0.0
  %5742 = vmatprep.subr.mxu0 0.0
  %5743 = vmatpush1.msra.mxu0 0.0
  %5744 = vmatprep.subr.mxu0 0.0
  %5745 = vmatpush1.msra.mxu0 0.0
  %5746 = vmatprep.subr.mxu0 0.0
  %5747 = vmatpush1.msra.mxu0 0.0
  %5748 = vmatprep.subr.mxu0 0.0
  %5749 = vmatpush1.msra.mxu0 0.0
  %5750 = vmatprep.subr.mxu0 0.0
  %5751 = vmatpush1.msra.mxu0 0.0
  %5752 = vmatprep.subr.mxu0 0.0
  %5753 = vmatpush1.msra.mxu0 0.0
  %5754 = vmatprep.subr.mxu0 0.0
  %5755 = vmatpush1.msra.mxu0 0.0
  %5756 = vmatprep.subr.mxu0 0.0
  %5757 = vmatpush1.msra.mxu0 0.0
  %5758 = vmatprep.subr.mxu0 0.0
  %5759 = vmatpush1.msra.mxu0 0.0
  %5760 = vmatprep.subr.mxu0 0.0
  %5761 = vmatpush1.msra.mxu0 0.0
  %5762 = vmatprep.subr.mxu0 0.0
  %5763 = vmatpush1.msra.mxu0 0.0
  %5764 = vmatprep.subr.mxu0 0.0
  %5765 = vmatpush1.msra.mxu0 0.0
  %5766 = vmatprep.subr.mxu0 0.0
  %5767 = vmatpush1.msra.mxu0 0.0
  %5768 = vmatprep.subr.mxu0 0.0
  %5769 = vmatpush1.msra.mxu0 0.0
  %5770 = vmatprep.subr.mxu0 0.0
  %5771 = vmatpush1.msra.mxu0 0.0
  %5772 = vmatprep.subr.mxu0 0.0
  %5773 = vmatpush1.msra.mxu0 0.0
  %5774 = vmatprep.mubr.f32.mxu0 0.0
  %v5775 = vand.u32 %v5566, 4294901760
  %5776 = vmatmul.mubr.f32.gmra.mrb[0].mxu0 %v5775
  %v5777 = vpop.f32.mrb[0].mxu0
  %v5778 = vadd.f32 %v5653, %v5777
  %v5779 = vpop.f32.mrb[0].mxu0
  %v5780 = vadd.f32 %v5655, %v5779
  %5781 = vmatprep.mubr.f32.mxu0 0.0
  %v5782 = vand.u32 %v5569, 4294901760
  %5783 = vmatmul.mubr.f32.gmra.mrb[0].mxu0 %v5782
  %v5784 = vpop.f32.mrb[0].mxu0
  %v5785 = vadd.f32 %v5664, %v5784
  %v5786 = vpop.f32.mrb[0].mxu0
  %v5787 = vadd.f32 %v5666, %v5786
  %5788 = vmatprep.mubr.f32.mxu0 0.0
  %v5789 = vand.u32 %v5572, 4294901760
  %5790 = vmatmul.mubr.f32.gmra.mrb[0].mxu0 %v5789
  %v5791 = vpop.f32.mrb[0].mxu0
  %v5792 = vadd.f32 %v5675, %v5791
  %v5793 = vpop.f32.mrb[0].mxu0
  %v5794 = vadd.f32 %v5677, %v5793
  %5795 = vmatprep.mubr.f32.mxu0 0.0
  %v5796 = vand.u32 %v5575, 4294901760
  %5797 = vmatmul.mubr.f32.gmra.mrb[0].mxu0 %v5796
  %v5798 = vpop.f32.mrb[0].mxu0
  %v5799 = vadd.f32 %v5686, %v5798
  %v5800 = vpop.f32.mrb[0].mxu0
  %v5801 = vadd.f32 %v5688, %v5800
  %5802 = vdwg.mxu0
  %v5803 = vand.u32 %v101, 4294901760
  %v5804 = vsub.f32 %v101, %v5803
  %5805 = vmatprep.subr.mxu0 %v5804
  %v5806 = vand.u32 %v100, 4294901760
  %v5807 = vsub.f32 %v100, %v5806
  %5808 = vmatpush1.msra.mxu0 %v5807
  %v5809 = vand.u32 %v105, 4294901760
  %v5810 = vsub.f32 %v105, %v5809
  %5811 = vmatprep.subr.mxu0 %v5810
  %v5812 = vand.u32 %v104, 4294901760
  %v5813 = vsub.f32 %v104, %v5812
  %5814 = vmatpush1.msra.mxu0 %v5813
  %5815 = vmatprep.subr.mxu0 0.0
  %5816 = vmatpush1.msra.mxu0 0.0
  %5817 = vmatprep.subr.mxu0 0.0
  %5818 = vmatpush1.msra.mxu0 0.0
  %5819 = vmatprep.subr.mxu0 0.0
  %5820 = vmatpush1.msra.mxu0 0.0
  %5821 = vmatprep.subr.mxu0 0.0
  %5822 = vmatpush1.msra.mxu0 0.0
  %5823 = vmatprep.subr.mxu0 0.0
  %5824 = vmatpush1.msra.mxu0 0.0
  %5825 = vmatprep.subr.mxu0 0.0
  %5826 = vmatpush1.msra.mxu0 0.0
  %5827 = vmatprep.subr.mxu0 0.0
  %5828 = vmatpush1.msra.mxu0 0.0
  %5829 = vmatprep.subr.mxu0 0.0
  %5830 = vmatpush1.msra.mxu0 0.0
  %5831 = vmatprep.subr.mxu0 0.0
  %5832 = vmatpush1.msra.mxu0 0.0
  %5833 = vmatprep.subr.mxu0 0.0
  %5834 = vmatpush1.msra.mxu0 0.0
  %5835 = vmatprep.subr.mxu0 0.0
  %5836 = vmatpush1.msra.mxu0 0.0
  %5837 = vmatprep.subr.mxu0 0.0
  %5838 = vmatpush1.msra.mxu0 0.0
  %5839 = vmatprep.subr.mxu0 0.0
  %5840 = vmatpush1.msra.mxu0 0.0
  %5841 = vmatprep.subr.mxu0 0.0
  %5842 = vmatpush1.msra.mxu0 0.0
  %5843 = vmatprep.subr.mxu0 0.0
  %5844 = vmatpush1.msra.mxu0 0.0
  %5845 = vmatprep.subr.mxu0 0.0
  %5846 = vmatpush1.msra.mxu0 0.0
  %5847 = vmatprep.subr.mxu0 0.0
  %5848 = vmatpush1.msra.mxu0 0.0
  %5849 = vmatprep.subr.mxu0 0.0
  %5850 = vmatpush1.msra.mxu0 0.0
  %5851 = vmatprep.subr.mxu0 0.0
  %5852 = vmatpush1.msra.mxu0 0.0
  %5853 = vmatprep.subr.mxu0 0.0
  %5854 = vmatpush1.msra.mxu0 0.0
  %5855 = vmatprep.subr.mxu0 0.0
  %5856 = vmatpush1.msra.mxu0 0.0
  %5857 = vmatprep.subr.mxu0 0.0
  %5858 = vmatpush1.msra.mxu0 0.0
  %5859 = vmatprep.subr.mxu0 0.0
  %5860 = vmatpush1.msra.mxu0 0.0
  %5861 = vmatprep.subr.mxu0 0.0
  %5862 = vmatpush1.msra.mxu0 0.0
  %5863 = vmatprep.subr.mxu0 0.0
  %5864 = vmatpush1.msra.mxu0 0.0
  %5865 = vmatprep.subr.mxu0 0.0
  %5866 = vmatpush1.msra.mxu0 0.0
  %5867 = vmatprep.subr.mxu0 0.0
  %5868 = vmatpush1.msra.mxu0 0.0
  %5869 = vmatprep.subr.mxu0 0.0
  %5870 = vmatpush1.msra.mxu0 0.0
  %5871 = vmatprep.subr.mxu0 0.0
  %5872 = vmatpush1.msra.mxu0 0.0
  %5873 = vmatprep.subr.mxu0 0.0
  %5874 = vmatpush1.msra.mxu0 0.0
  %5875 = vmatprep.mubr.f32.mxu0 0.0
  %v5876 = vand.u32 %v5566, 4294901760
  %v5877 = vsub.f32 %v5566, %v5876
  %5878 = vmatmul.mubr.f32.gmra.mrb[0].mxu0 %v5877
  %v5879 = vpop.f32.mrb[0].mxu0
  %v5880 = vadd.f32 %v5778, %v5879
  %v5881 = vpop.f32.mrb[0].mxu0
  %v5882 = vadd.f32 %v5780, %v5881
  %5883 = vmatprep.mubr.f32.mxu0 0.0
  %v5884 = vand.u32 %v5569, 4294901760
  %v5885 = vsub.f32 %v5569, %v5884
  %5886 = vmatmul.mubr.f32.gmra.mrb[0].mxu0 %v5885
  %v5887 = vpop.f32.mrb[0].mxu0
  %v5888 = vadd.f32 %v5785, %v5887
  %v5889 = vpop.f32.mrb[0].mxu0
  %v5890 = vadd.f32 %v5787, %v5889
  %5891 = vmatprep.mubr.f32.mxu0 0.0
  %v5892 = vand.u32 %v5572, 4294901760
  %v5893 = vsub.f32 %v5572, %v5892
  %5894 = vmatmul.mubr.f32.gmra.mrb[0].mxu0 %v5893
  %v5895 = vpop.f32.mrb[0].mxu0
  %v5896 = vadd.f32 %v5792, %v5895
  %v5897 = vpop.f32.mrb[0].mxu0
  %v5898 = vadd.f32 %v5794, %v5897
  %5899 = vmatprep.mubr.f32.mxu0 0.0
  %v5900 = vand.u32 %v5575, 4294901760
  %v5901 = vsub.f32 %v5575, %v5900
  %5902 = vmatmul.mubr.f32.gmra.mrb[0].mxu0 %v5901
  %v5903 = vpop.f32.mrb[0].mxu0
  %v5904 = vadd.f32 %v5799, %v5903
  %v5905 = vpop.f32.mrb[0].mxu0
  %v5906 = vadd.f32 %v5801, %v5905
  %5907 = vdwg.mxu0
  %v5908 = vand.u32 %v101, 4294901760
  %5909 = vmatprep.subr.mxu0 %v5908
  %v5910 = vand.u32 %v100, 4294901760
  %5911 = vmatpush1.msra.mxu0 %v5910
  %v5912 = vand.u32 %v105, 4294901760
  %5913 = vmatprep.subr.mxu0 %v5912
  %v5914 = vand.u32 %v104, 4294901760
  %5915 = vmatpush1.msra.mxu0 %v5914
  %5916 = vmatprep.subr.mxu0 0.0
  %5917 = vmatpush1.msra.mxu0 0.0
  %5918 = vmatprep.subr.mxu0 0.0
  %5919 = vmatpush1.msra.mxu0 0.0
  %5920 = vmatprep.subr.mxu0 0.0
  %5921 = vmatpush1.msra.mxu0 0.0
  %5922 = vmatprep.subr.mxu0 0.0
  %5923 = vmatpush1.msra.mxu0 0.0
  %5924 = vmatprep.subr.mxu0 0.0
  %5925 = vmatpush1.msra.mxu0 0.0
  %5926 = vmatprep.subr.mxu0 0.0
  %5927 = vmatpush1.msra.mxu0 0.0
  %5928 = vmatprep.subr.mxu0 0.0
  %5929 = vmatpush1.msra.mxu0 0.0
  %5930 = vmatprep.subr.mxu0 0.0
  %5931 = vmatpush1.msra.mxu0 0.0
  %5932 = vmatprep.subr.mxu0 0.0
  %5933 = vmatpush1.msra.mxu0 0.0
  %5934 = vmatprep.subr.mxu0 0.0
  %5935 = vmatpush1.msra.mxu0 0.0
  %5936 = vmatprep.subr.mxu0 0.0
  %5937 = vmatpush1.msra.mxu0 0.0
  %5938 = vmatprep.subr.mxu0 0.0
  %5939 = vmatpush1.msra.mxu0 0.0
  %5940 = vmatprep.subr.mxu0 0.0
  %5941 = vmatpush1.msra.mxu0 0.0
  %5942 = vmatprep.subr.mxu0 0.0
  %5943 = vmatpush1.msra.mxu0 0.0
  %5944 = vmatprep.subr.mxu0 0.0
  %5945 = vmatpush1.msra.mxu0 0.0
  %5946 = vmatprep.subr.mxu0 0.0
  %5947 = vmatpush1.msra.mxu0 0.0
  %5948 = vmatprep.subr.mxu0 0.0
  %5949 = vmatpush1.msra.mxu0 0.0
  %5950 = vmatprep.subr.mxu0 0.0
  %5951 = vmatpush1.msra.mxu0 0.0
  %5952 = vmatprep.subr.mxu0 0.0
  %5953 = vmatpush1.msra.mxu0 0.0
  %5954 = vmatprep.subr.mxu0 0.0
  %5955 = vmatpush1.msra.mxu0 0.0
  %5956 = vmatprep.subr.mxu0 0.0
  %5957 = vmatpush1.msra.mxu0 0.0
  %5958 = vmatprep.subr.mxu0 0.0
  %5959 = vmatpush1.msra.mxu0 0.0
  %5960 = vmatprep.subr.mxu0 0.0
  %5961 = vmatpush1.msra.mxu0 0.0
  %5962 = vmatprep.subr.mxu0 0.0
  %5963 = vmatpush1.msra.mxu0 0.0
  %5964 = vmatprep.subr.mxu0 0.0
  %5965 = vmatpush1.msra.mxu0 0.0
  %5966 = vmatprep.subr.mxu0 0.0
  %5967 = vmatpush1.msra.mxu0 0.0
  %5968 = vmatprep.subr.mxu0 0.0
  %5969 = vmatpush1.msra.mxu0 0.0
  %5970 = vmatprep.subr.mxu0 0.0
  %5971 = vmatpush1.msra.mxu0 0.0
  %5972 = vmatprep.subr.mxu0 0.0
  %5973 = vmatpush1.msra.mxu0 0.0
  %5974 = vmatprep.subr.mxu0 0.0
  %5975 = vmatpush1.msra.mxu0 0.0
  %5976 = vmatprep.mubr.f32.mxu0 0.0
  %v5977 = vand.u32 %v5566, 4294901760
  %v5978 = vsub.f32 %v5566, %v5977
  %v5979 = vand.u32 %v5978, 4294901760
  %5980 = vmatmul.mubr.f32.gmra.mrb[0].mxu0 %v5979
  %v5981 = vpop.f32.mrb[0].mxu0
  %v5982 = vadd.f32 %v5880, %v5981
  %v5983 = vpop.f32.mrb[0].mxu0
  %v5984 = vadd.f32 %v5882, %v5983
  %5985 = vmatprep.mubr.f32.mxu0 0.0
  %v5986 = vand.u32 %v5569, 4294901760
  %v5987 = vsub.f32 %v5569, %v5986
  %v5988 = vand.u32 %v5987, 4294901760
  %5989 = vmatmul.mubr.f32.gmra.mrb[0].mxu0 %v5988
  %v5990 = vpop.f32.mrb[0].mxu0
  %v5991 = vadd.f32 %v5888, %v5990
  %v5992 = vpop.f32.mrb[0].mxu0
  %v5993 = vadd.f32 %v5890, %v5992
  %5994 = vmatprep.mubr.f32.mxu0 0.0
  %v5995 = vand.u32 %v5572, 4294901760
  %v5996 = vsub.f32 %v5572, %v5995
  %v5997 = vand.u32 %v5996, 4294901760
  %5998 = vmatmul.mubr.f32.gmra.mrb[0].mxu0 %v5997
  %v5999 = vpop.f32.mrb[0].mxu0
  %v6000 = vadd.f32 %v5896, %v5999
  %v6001 = vpop.f32.mrb[0].mxu0
  %v6002 = vadd.f32 %v5898, %v6001
  %6003 = vmatprep.mubr.f32.mxu0 0.0
  %v6004 = vand.u32 %v5575, 4294901760
  %v6005 = vsub.f32 %v5575, %v6004
  %v6006 = vand.u32 %v6005, 4294901760
  %6007 = vmatmul.mubr.f32.gmra.mrb[0].mxu0 %v6006
  %v6008 = vpop.f32.mrb[0].mxu0
  %v6009 = vadd.f32 %v5904, %v6008
  %v6010 = vpop.f32.mrb[0].mxu0
  %v6011 = vadd.f32 %v5906, %v6010
  %6012 = vdwg.mxu0
  %v6013 = vand.u32 %v101, 4294901760
  %v6014 = vsub.f32 %v101, %v6013
  %v6015 = vand.u32 %v6014, 4294901760
  %6016 = vmatprep.subr.mxu0 %v6015
  %v6017 = vand.u32 %v100, 4294901760
  %v6018 = vsub.f32 %v100, %v6017
  %v6019 = vand.u32 %v6018, 4294901760
  %6020 = vmatpush1.msra.mxu0 %v6019
  %v6021 = vand.u32 %v105, 4294901760
  %v6022 = vsub.f32 %v105, %v6021
  %v6023 = vand.u32 %v6022, 4294901760
  %6024 = vmatprep.subr.mxu0 %v6023
  %v6025 = vand.u32 %v104, 4294901760
  %v6026 = vsub.f32 %v104, %v6025
  %v6027 = vand.u32 %v6026, 4294901760
  %6028 = vmatpush1.msra.mxu0 %v6027
  %6029 = vmatprep.subr.mxu0 0.0
  %6030 = vmatpush1.msra.mxu0 0.0
  %6031 = vmatprep.subr.mxu0 0.0
  %6032 = vmatpush1.msra.mxu0 0.0
  %6033 = vmatprep.subr.mxu0 0.0
  %6034 = vmatpush1.msra.mxu0 0.0
  %6035 = vmatprep.subr.mxu0 0.0
  %6036 = vmatpush1.msra.mxu0 0.0
  %6037 = vmatprep.subr.mxu0 0.0
  %6038 = vmatpush1.msra.mxu0 0.0
  %6039 = vmatprep.subr.mxu0 0.0
  %6040 = vmatpush1.msra.mxu0 0.0
  %6041 = vmatprep.subr.mxu0 0.0
  %6042 = vmatpush1.msra.mxu0 0.0
  %6043 = vmatprep.subr.mxu0 0.0
  %6044 = vmatpush1.msra.mxu0 0.0
  %6045 = vmatprep.subr.mxu0 0.0
  %6046 = vmatpush1.msra.mxu0 0.0
  %6047 = vmatprep.subr.mxu0 0.0
  %6048 = vmatpush1.msra.mxu0 0.0
  %6049 = vmatprep.subr.mxu0 0.0
  %6050 = vmatpush1.msra.mxu0 0.0
  %6051 = vmatprep.subr.mxu0 0.0
  %6052 = vmatpush1.msra.mxu0 0.0
  %6053 = vmatprep.subr.mxu0 0.0
  %6054 = vmatpush1.msra.mxu0 0.0
  %6055 = vmatprep.subr.mxu0 0.0
  %6056 = vmatpush1.msra.mxu0 0.0
  %6057 = vmatprep.subr.mxu0 0.0
  %6058 = vmatpush1.msra.mxu0 0.0
  %6059 = vmatprep.subr.mxu0 0.0
  %6060 = vmatpush1.msra.mxu0 0.0
  %6061 = vmatprep.subr.mxu0 0.0
  %6062 = vmatpush1.msra.mxu0 0.0
  %6063 = vmatprep.subr.mxu0 0.0
  %6064 = vmatpush1.msra.mxu0 0.0
  %6065 = vmatprep.subr.mxu0 0.0
  %6066 = vmatpush1.msra.mxu0 0.0
  %6067 = vmatprep.subr.mxu0 0.0
  %6068 = vmatpush1.msra.mxu0 0.0
  %6069 = vmatprep.subr.mxu0 0.0
  %6070 = vmatpush1.msra.mxu0 0.0
  %6071 = vmatprep.subr.mxu0 0.0
  %6072 = vmatpush1.msra.mxu0 0.0
  %6073 = vmatprep.subr.mxu0 0.0
  %6074 = vmatpush1.msra.mxu0 0.0
  %6075 = vmatprep.subr.mxu0 0.0
  %6076 = vmatpush1.msra.mxu0 0.0
  %6077 = vmatprep.subr.mxu0 0.0
  %6078 = vmatpush1.msra.mxu0 0.0
  %6079 = vmatprep.subr.mxu0 0.0
  %6080 = vmatpush1.msra.mxu0 0.0
  %6081 = vmatprep.subr.mxu0 0.0
  %6082 = vmatpush1.msra.mxu0 0.0
  %6083 = vmatprep.subr.mxu0 0.0
  %6084 = vmatpush1.msra.mxu0 0.0
  %6085 = vmatprep.subr.mxu0 0.0
  %6086 = vmatpush1.msra.mxu0 0.0
  %6087 = vmatprep.subr.mxu0 0.0
  %6088 = vmatpush1.msra.mxu0 0.0
  %6089 = vmatprep.mubr.f32.mxu0 0.0
  %v6090 = vand.u32 %v5566, 4294901760
  %6091 = vmatmul.mubr.f32.gmra.mrb[0].mxu0 %v6090
  %v6092 = vpop.f32.mrb[0].mxu0
  %v6093 = vadd.f32 %v5982, %v6092
  %v6094 = vpop.f32.mrb[0].mxu0
  %v6095 = vadd.f32 %v5984, %v6094
  %6096 = vmatprep.mubr.f32.mxu0 0.0
  %v6097 = vand.u32 %v5569, 4294901760
  %6098 = vmatmul.mubr.f32.gmra.mrb[0].mxu0 %v6097
  %v6099 = vpop.f32.mrb[0].mxu0
  %v6100 = vadd.f32 %v5991, %v6099
  %v6101 = vpop.f32.mrb[0].mxu0
  %v6102 = vadd.f32 %v5993, %v6101
  %6103 = vmatprep.mubr.f32.mxu0 0.0
  %v6104 = vand.u32 %v5572, 4294901760
  %6105 = vmatmul.mubr.f32.gmra.mrb[0].mxu0 %v6104
  %v6106 = vpop.f32.mrb[0].mxu0
  %v6107 = vadd.f32 %v6000, %v6106
  %v6108 = vpop.f32.mrb[0].mxu0
  %v6109 = vadd.f32 %v6002, %v6108
  %6110 = vmatprep.mubr.f32.mxu0 0.0
  %v6111 = vand.u32 %v5575, 4294901760
  %6112 = vmatmul.mubr.f32.gmra.mrb[0].mxu0 %v6111
  %v6113 = vpop.f32.mrb[0].mxu0
  %v6114 = vadd.f32 %v6009, %v6113
  %v6115 = vpop.f32.mrb[0].mxu0
  %v6116 = vadd.f32 %v6011, %v6115
  %6117 = vdwg.mxu0
  %v6118 = vand.u32 %v101, 4294901760
  %6119 = vmatprep.subr.mxu0 %v6118
  %v6120 = vand.u32 %v100, 4294901760
  %6121 = vmatpush1.msra.mxu0 %v6120
  %v6122 = vand.u32 %v105, 4294901760
  %6123 = vmatprep.subr.mxu0 %v6122
  %v6124 = vand.u32 %v104, 4294901760
  %6125 = vmatpush1.msra.mxu0 %v6124
  %6126 = vmatprep.subr.mxu0 0.0
  %6127 = vmatpush1.msra.mxu0 0.0
  %6128 = vmatprep.subr.mxu0 0.0
  %6129 = vmatpush1.msra.mxu0 0.0
  %6130 = vmatprep.subr.mxu0 0.0
  %6131 = vmatpush1.msra.mxu0 0.0
  %6132 = vmatprep.subr.mxu0 0.0
  %6133 = vmatpush1.msra.mxu0 0.0
  %6134 = vmatprep.subr.mxu0 0.0
  %6135 = vmatpush1.msra.mxu0 0.0
  %6136 = vmatprep.subr.mxu0 0.0
  %6137 = vmatpush1.msra.mxu0 0.0
  %6138 = vmatprep.subr.mxu0 0.0
  %6139 = vmatpush1.msra.mxu0 0.0
  %6140 = vmatprep.subr.mxu0 0.0
  %6141 = vmatpush1.msra.mxu0 0.0
  %6142 = vmatprep.subr.mxu0 0.0
  %6143 = vmatpush1.msra.mxu0 0.0
  %6144 = vmatprep.subr.mxu0 0.0
  %6145 = vmatpush1.msra.mxu0 0.0
  %6146 = vmatprep.subr.mxu0 0.0
  %6147 = vmatpush1.msra.mxu0 0.0
  %6148 = vmatprep.subr.mxu0 0.0
  %6149 = vmatpush1.msra.mxu0 0.0
  %6150 = vmatprep.subr.mxu0 0.0
  %6151 = vmatpush1.msra.mxu0 0.0
  %6152 = vmatprep.subr.mxu0 0.0
  %6153 = vmatpush1.msra.mxu0 0.0
  %6154 = vmatprep.subr.mxu0 0.0
  %6155 = vmatpush1.msra.mxu0 0.0
  %6156 = vmatprep.subr.mxu0 0.0
  %6157 = vmatpush1.msra.mxu0 0.0
  %6158 = vmatprep.subr.mxu0 0.0
  %6159 = vmatpush1.msra.mxu0 0.0
  %6160 = vmatprep.subr.mxu0 0.0
  %6161 = vmatpush1.msra.mxu0 0.0
  %6162 = vmatprep.subr.mxu0 0.0
  %6163 = vmatpush1.msra.mxu0 0.0
  %6164 = vmatprep.subr.mxu0 0.0
  %6165 = vmatpush1.msra.mxu0 0.0
  %6166 = vmatprep.subr.mxu0 0.0
  %6167 = vmatpush1.msra.mxu0 0.0
  %6168 = vmatprep.subr.mxu0 0.0
  %6169 = vmatpush1.msra.mxu0 0.0
  %6170 = vmatprep.subr.mxu0 0.0
  %6171 = vmatpush1.msra.mxu0 0.0
  %6172 = vmatprep.subr.mxu0 0.0
  %6173 = vmatpush1.msra.mxu0 0.0
  %6174 = vmatprep.subr.mxu0 0.0
  %6175 = vmatpush1.msra.mxu0 0.0
  %6176 = vmatprep.subr.mxu0 0.0
  %6177 = vmatpush1.msra.mxu0 0.0
  %6178 = vmatprep.subr.mxu0 0.0
  %6179 = vmatpush1.msra.mxu0 0.0
  %6180 = vmatprep.subr.mxu0 0.0
  %6181 = vmatpush1.msra.mxu0 0.0
  %6182 = vmatprep.subr.mxu0 0.0
  %6183 = vmatpush1.msra.mxu0 0.0
  %6184 = vmatprep.subr.mxu0 0.0
  %6185 = vmatpush1.msra.mxu0 0.0
  %6186 = vmatprep.mubr.f32.mxu0 0.0
  %v6187 = vand.u32 %v5566, 4294901760
  %6188 = vmatmul.mubr.f32.gmra.mrb[0].mxu0 %v6187
  %v6189 = vpop.f32.mrb[0].mxu0
  %v6190 = vadd.f32 %v6093, %v6189
  %v6191 = vpop.f32.mrb[0].mxu0
  %v6192 = vadd.f32 %v6095, %v6191
  %6193 = vmatprep.mubr.f32.mxu0 0.0
  %v6194 = vand.u32 %v5569, 4294901760
  %6195 = vmatmul.mubr.f32.gmra.mrb[0].mxu0 %v6194
  %v6196 = vpop.f32.mrb[0].mxu0
  %v6197 = vadd.f32 %v6100, %v6196
  %v6198 = vpop.f32.mrb[0].mxu0
  %v6199 = vadd.f32 %v6102, %v6198
  %6200 = vmatprep.mubr.f32.mxu0 0.0
  %v6201 = vand.u32 %v5572, 4294901760
  %6202 = vmatmul.mubr.f32.gmra.mrb[0].mxu0 %v6201
  %v6203 = vpop.f32.mrb[0].mxu0
  %v6204 = vadd.f32 %v6107, %v6203
  %v6205 = vpop.f32.mrb[0].mxu0
  %v6206 = vadd.f32 %v6109, %v6205
  %6207 = vmatprep.mubr.f32.mxu0 0.0
  %v6208 = vand.u32 %v5575, 4294901760
  %6209 = vmatmul.mubr.f32.gmra.mrb[0].mxu0 %v6208
  %v6210 = vpop.f32.mrb[0].mxu0
  %v6211 = vadd.f32 %v6114, %v6210
  %v6212 = vpop.f32.mrb[0].mxu0
  %v6213 = vadd.f32 %v6116, %v6212
  %6214 = vdwg.mxu0
  %v6215 = vand.u32 %v103, 4294901760
  %6216 = vmatprep.subr.mxu0 %v6215
  %v6217 = vand.u32 %v102, 4294901760
  %6218 = vmatpush1.msra.mxu0 %v6217
  %v6219 = vand.u32 %v107, 4294901760
  %6220 = vmatprep.subr.mxu0 %v6219
  %v6221 = vand.u32 %v106, 4294901760
  %6222 = vmatpush1.msra.mxu0 %v6221
  %6223 = vmatprep.subr.mxu0 0.0
  %6224 = vmatpush1.msra.mxu0 0.0
  %6225 = vmatprep.subr.mxu0 0.0
  %6226 = vmatpush1.msra.mxu0 0.0
  %6227 = vmatprep.subr.mxu0 0.0
  %6228 = vmatpush1.msra.mxu0 0.0
  %6229 = vmatprep.subr.mxu0 0.0
  %6230 = vmatpush1.msra.mxu0 0.0
  %6231 = vmatprep.subr.mxu0 0.0
  %6232 = vmatpush1.msra.mxu0 0.0
  %6233 = vmatprep.subr.mxu0 0.0
  %6234 = vmatpush1.msra.mxu0 0.0
  %6235 = vmatprep.subr.mxu0 0.0
  %6236 = vmatpush1.msra.mxu0 0.0
  %6237 = vmatprep.subr.mxu0 0.0
  %6238 = vmatpush1.msra.mxu0 0.0
  %6239 = vmatprep.subr.mxu0 0.0
  %6240 = vmatpush1.msra.mxu0 0.0
  %6241 = vmatprep.subr.mxu0 0.0
  %6242 = vmatpush1.msra.mxu0 0.0
  %6243 = vmatprep.subr.mxu0 0.0
  %6244 = vmatpush1.msra.mxu0 0.0
  %6245 = vmatprep.subr.mxu0 0.0
  %6246 = vmatpush1.msra.mxu0 0.0
  %6247 = vmatprep.subr.mxu0 0.0
  %6248 = vmatpush1.msra.mxu0 0.0
  %6249 = vmatprep.subr.mxu0 0.0
  %6250 = vmatpush1.msra.mxu0 0.0
  %6251 = vmatprep.subr.mxu0 0.0
  %6252 = vmatpush1.msra.mxu0 0.0
  %6253 = vmatprep.subr.mxu0 0.0
  %6254 = vmatpush1.msra.mxu0 0.0
  %6255 = vmatprep.subr.mxu0 0.0
  %6256 = vmatpush1.msra.mxu0 0.0
  %6257 = vmatprep.subr.mxu0 0.0
  %6258 = vmatpush1.msra.mxu0 0.0
  %6259 = vmatprep.subr.mxu0 0.0
  %6260 = vmatpush1.msra.mxu0 0.0
  %6261 = vmatprep.subr.mxu0 0.0
  %6262 = vmatpush1.msra.mxu0 0.0
  %6263 = vmatprep.subr.mxu0 0.0
  %6264 = vmatpush1.msra.mxu0 0.0
  %6265 = vmatprep.subr.mxu0 0.0
  %6266 = vmatpush1.msra.mxu0 0.0
  %6267 = vmatprep.subr.mxu0 0.0
  %6268 = vmatpush1.msra.mxu0 0.0
  %6269 = vmatprep.subr.mxu0 0.0
  %6270 = vmatpush1.msra.mxu0 0.0
  %6271 = vmatprep.subr.mxu0 0.0
  %6272 = vmatpush1.msra.mxu0 0.0
  %6273 = vmatprep.subr.mxu0 0.0
  %6274 = vmatpush1.msra.mxu0 0.0
  %6275 = vmatprep.subr.mxu0 0.0
  %6276 = vmatpush1.msra.mxu0 0.0
  %6277 = vmatprep.subr.mxu0 0.0
  %6278 = vmatpush1.msra.mxu0 0.0
  %6279 = vmatprep.subr.mxu0 0.0
  %6280 = vmatpush1.msra.mxu0 0.0
  %6281 = vmatprep.subr.mxu0 0.0
  %6282 = vmatpush1.msra.mxu0 0.0
  %6283 = vmatprep.mubr.f32.mxu0 0.0
  %v6284 = vand.u32 %v5566, 4294901760
  %v6285 = vsub.f32 %v5566, %v6284
  %v6286 = vand.u32 %v6285, 4294901760
  %v6287 = vsub.f32 %v6285, %v6286
  %v6288 = vand.u32 %v6287, 4294901760
  %6289 = vmatmul.mubr.f32.gmra.mrb[0].mxu0 %v6288
  %v6290 = vpop.f32.mrb[0].mxu0
  %v6291 = vadd.f32 0.0, %v6290
  %v6292 = vpop.f32.mrb[0].mxu0
  %v6293 = vadd.f32 0.0, %v6292
  %6294 = vmatprep.mubr.f32.mxu0 0.0
  %v6295 = vand.u32 %v5569, 4294901760
  %v6296 = vsub.f32 %v5569, %v6295
  %v6297 = vand.u32 %v6296, 4294901760
  %v6298 = vsub.f32 %v6296, %v6297
  %v6299 = vand.u32 %v6298, 4294901760
  %6300 = vmatmul.mubr.f32.gmra.mrb[0].mxu0 %v6299
  %v6301 = vpop.f32.mrb[0].mxu0
  %v6302 = vadd.f32 0.0, %v6301
  %v6303 = vpop.f32.mrb[0].mxu0
  %v6304 = vadd.f32 0.0, %v6303
  %6305 = vmatprep.mubr.f32.mxu0 0.0
  %v6306 = vand.u32 %v5572, 4294901760
  %v6307 = vsub.f32 %v5572, %v6306
  %v6308 = vand.u32 %v6307, 4294901760
  %v6309 = vsub.f32 %v6307, %v6308
  %v6310 = vand.u32 %v6309, 4294901760
  %6311 = vmatmul.mubr.f32.gmra.mrb[0].mxu0 %v6310
  %v6312 = vpop.f32.mrb[0].mxu0
  %v6313 = vadd.f32 0.0, %v6312
  %v6314 = vpop.f32.mrb[0].mxu0
  %v6315 = vadd.f32 0.0, %v6314
  %6316 = vmatprep.mubr.f32.mxu0 0.0
  %v6317 = vand.u32 %v5575, 4294901760
  %v6318 = vsub.f32 %v5575, %v6317
  %v6319 = vand.u32 %v6318, 4294901760
  %v6320 = vsub.f32 %v6318, %v6319
  %v6321 = vand.u32 %v6320, 4294901760
  %6322 = vmatmul.mubr.f32.gmra.mrb[0].mxu0 %v6321
  %v6323 = vpop.f32.mrb[0].mxu0
  %v6324 = vadd.f32 0.0, %v6323
  %v6325 = vpop.f32.mrb[0].mxu0
  %v6326 = vadd.f32 0.0, %v6325
  %6327 = vdwg.mxu0
  %v6328 = vand.u32 %v103, 4294901760
  %v6329 = vsub.f32 %v103, %v6328
  %v6330 = vand.u32 %v6329, 4294901760
  %v6331 = vsub.f32 %v6329, %v6330
  %v6332 = vand.u32 %v6331, 4294901760
  %6333 = vmatprep.subr.mxu0 %v6332
  %v6334 = vand.u32 %v102, 4294901760
  %v6335 = vsub.f32 %v102, %v6334
  %v6336 = vand.u32 %v6335, 4294901760
  %v6337 = vsub.f32 %v6335, %v6336
  %v6338 = vand.u32 %v6337, 4294901760
  %6339 = vmatpush1.msra.mxu0 %v6338
  %v6340 = vand.u32 %v107, 4294901760
  %v6341 = vsub.f32 %v107, %v6340
  %v6342 = vand.u32 %v6341, 4294901760
  %v6343 = vsub.f32 %v6341, %v6342
  %v6344 = vand.u32 %v6343, 4294901760
  %6345 = vmatprep.subr.mxu0 %v6344
  %v6346 = vand.u32 %v106, 4294901760
  %v6347 = vsub.f32 %v106, %v6346
  %v6348 = vand.u32 %v6347, 4294901760
  %v6349 = vsub.f32 %v6347, %v6348
  %v6350 = vand.u32 %v6349, 4294901760
  %6351 = vmatpush1.msra.mxu0 %v6350
  %6352 = vmatprep.subr.mxu0 0.0
  %6353 = vmatpush1.msra.mxu0 0.0
  %6354 = vmatprep.subr.mxu0 0.0
  %6355 = vmatpush1.msra.mxu0 0.0
  %6356 = vmatprep.subr.mxu0 0.0
  %6357 = vmatpush1.msra.mxu0 0.0
  %6358 = vmatprep.subr.mxu0 0.0
  %6359 = vmatpush1.msra.mxu0 0.0
  %6360 = vmatprep.subr.mxu0 0.0
  %6361 = vmatpush1.msra.mxu0 0.0
  %6362 = vmatprep.subr.mxu0 0.0
  %6363 = vmatpush1.msra.mxu0 0.0
  %6364 = vmatprep.subr.mxu0 0.0
  %6365 = vmatpush1.msra.mxu0 0.0
  %6366 = vmatprep.subr.mxu0 0.0
  %6367 = vmatpush1.msra.mxu0 0.0
  %6368 = vmatprep.subr.mxu0 0.0
  %6369 = vmatpush1.msra.mxu0 0.0
  %6370 = vmatprep.subr.mxu0 0.0
  %6371 = vmatpush1.msra.mxu0 0.0
  %6372 = vmatprep.subr.mxu0 0.0
  %6373 = vmatpush1.msra.mxu0 0.0
  %6374 = vmatprep.subr.mxu0 0.0
  %6375 = vmatpush1.msra.mxu0 0.0
  %6376 = vmatprep.subr.mxu0 0.0
  %6377 = vmatpush1.msra.mxu0 0.0
  %6378 = vmatprep.subr.mxu0 0.0
  %6379 = vmatpush1.msra.mxu0 0.0
  %6380 = vmatprep.subr.mxu0 0.0
  %6381 = vmatpush1.msra.mxu0 0.0
  %6382 = vmatprep.subr.mxu0 0.0
  %6383 = vmatpush1.msra.mxu0 0.0
  %6384 = vmatprep.subr.mxu0 0.0
  %6385 = vmatpush1.msra.mxu0 0.0
  %6386 = vmatprep.subr.mxu0 0.0
  %6387 = vmatpush1.msra.mxu0 0.0
  %6388 = vmatprep.subr.mxu0 0.0
  %6389 = vmatpush1.msra.mxu0 0.0
  %6390 = vmatprep.subr.mxu0 0.0
  %6391 = vmatpush1.msra.mxu0 0.0
  %6392 = vmatprep.subr.mxu0 0.0
  %6393 = vmatpush1.msra.mxu0 0.0
  %6394 = vmatprep.subr.mxu0 0.0
  %6395 = vmatpush1.msra.mxu0 0.0
  %6396 = vmatprep.subr.mxu0 0.0
  %6397 = vmatpush1.msra.mxu0 0.0
  %6398 = vmatprep.subr.mxu0 0.0
  %6399 = vmatpush1.msra.mxu0 0.0
  %6400 = vmatprep.subr.mxu0 0.0
  %6401 = vmatpush1.msra.mxu0 0.0
  %6402 = vmatprep.subr.mxu0 0.0
  %6403 = vmatpush1.msra.mxu0 0.0
  %6404 = vmatprep.subr.mxu0 0.0
  %6405 = vmatpush1.msra.mxu0 0.0
  %6406 = vmatprep.subr.mxu0 0.0
  %6407 = vmatpush1.msra.mxu0 0.0
  %6408 = vmatprep.subr.mxu0 0.0
  %6409 = vmatpush1.msra.mxu0 0.0
  %6410 = vmatprep.subr.mxu0 0.0
  %6411 = vmatpush1.msra.mxu0 0.0
  %6412 = vmatprep.mubr.f32.mxu0 0.0
  %v6413 = vand.u32 %v5566, 4294901760
  %6414 = vmatmul.mubr.f32.gmra.mrb[0].mxu0 %v6413
  %v6415 = vpop.f32.mrb[0].mxu0
  %v6416 = vadd.f32 %v6291, %v6415
  %v6417 = vpop.f32.mrb[0].mxu0
  %v6418 = vadd.f32 %v6293, %v6417
  %6419 = vmatprep.mubr.f32.mxu0 0.0
  %v6420 = vand.u32 %v5569, 4294901760
  %6421 = vmatmul.mubr.f32.gmra.mrb[0].mxu0 %v6420
  %v6422 = vpop.f32.mrb[0].mxu0
  %v6423 = vadd.f32 %v6302, %v6422
  %v6424 = vpop.f32.mrb[0].mxu0
  %v6425 = vadd.f32 %v6304, %v6424
  %6426 = vmatprep.mubr.f32.mxu0 0.0
  %v6427 = vand.u32 %v5572, 4294901760
  %6428 = vmatmul.mubr.f32.gmra.mrb[0].mxu0 %v6427
  %v6429 = vpop.f32.mrb[0].mxu0
  %v6430 = vadd.f32 %v6313, %v6429
  %v6431 = vpop.f32.mrb[0].mxu0
  %v6432 = vadd.f32 %v6315, %v6431
  %6433 = vmatprep.mubr.f32.mxu0 0.0
  %v6434 = vand.u32 %v5575, 4294901760
  %6435 = vmatmul.mubr.f32.gmra.mrb[0].mxu0 %v6434
  %v6436 = vpop.f32.mrb[0].mxu0
  %v6437 = vadd.f32 %v6324, %v6436
  %v6438 = vpop.f32.mrb[0].mxu0
  %v6439 = vadd.f32 %v6326, %v6438
  %6440 = vdwg.mxu0
  %v6441 = vand.u32 %v103, 4294901760
  %v6442 = vsub.f32 %v103, %v6441
  %6443 = vmatprep.subr.mxu0 %v6442
  %v6444 = vand.u32 %v102, 4294901760
  %v6445 = vsub.f32 %v102, %v6444
  %6446 = vmatpush1.msra.mxu0 %v6445
  %v6447 = vand.u32 %v107, 4294901760
  %v6448 = vsub.f32 %v107, %v6447
  %6449 = vmatprep.subr.mxu0 %v6448
  %v6450 = vand.u32 %v106, 4294901760
  %v6451 = vsub.f32 %v106, %v6450
  %6452 = vmatpush1.msra.mxu0 %v6451
  %6453 = vmatprep.subr.mxu0 0.0
  %6454 = vmatpush1.msra.mxu0 0.0
  %6455 = vmatprep.subr.mxu0 0.0
  %6456 = vmatpush1.msra.mxu0 0.0
  %6457 = vmatprep.subr.mxu0 0.0
  %6458 = vmatpush1.msra.mxu0 0.0
  %6459 = vmatprep.subr.mxu0 0.0
  %6460 = vmatpush1.msra.mxu0 0.0
  %6461 = vmatprep.subr.mxu0 0.0
  %6462 = vmatpush1.msra.mxu0 0.0
  %6463 = vmatprep.subr.mxu0 0.0
  %6464 = vmatpush1.msra.mxu0 0.0
  %6465 = vmatprep.subr.mxu0 0.0
  %6466 = vmatpush1.msra.mxu0 0.0
  %6467 = vmatprep.subr.mxu0 0.0
  %6468 = vmatpush1.msra.mxu0 0.0
  %6469 = vmatprep.subr.mxu0 0.0
  %6470 = vmatpush1.msra.mxu0 0.0
  %6471 = vmatprep.subr.mxu0 0.0
  %6472 = vmatpush1.msra.mxu0 0.0
  %6473 = vmatprep.subr.mxu0 0.0
  %6474 = vmatpush1.msra.mxu0 0.0
  %6475 = vmatprep.subr.mxu0 0.0
  %6476 = vmatpush1.msra.mxu0 0.0
  %6477 = vmatprep.subr.mxu0 0.0
  %6478 = vmatpush1.msra.mxu0 0.0
  %6479 = vmatprep.subr.mxu0 0.0
  %6480 = vmatpush1.msra.mxu0 0.0
  %6481 = vmatprep.subr.mxu0 0.0
  %6482 = vmatpush1.msra.mxu0 0.0
  %6483 = vmatprep.subr.mxu0 0.0
  %6484 = vmatpush1.msra.mxu0 0.0
  %6485 = vmatprep.subr.mxu0 0.0
  %6486 = vmatpush1.msra.mxu0 0.0
  %6487 = vmatprep.subr.mxu0 0.0
  %6488 = vmatpush1.msra.mxu0 0.0
  %6489 = vmatprep.subr.mxu0 0.0
  %6490 = vmatpush1.msra.mxu0 0.0
  %6491 = vmatprep.subr.mxu0 0.0
  %6492 = vmatpush1.msra.mxu0 0.0
  %6493 = vmatprep.subr.mxu0 0.0
  %6494 = vmatpush1.msra.mxu0 0.0
  %6495 = vmatprep.subr.mxu0 0.0
  %6496 = vmatpush1.msra.mxu0 0.0
  %6497 = vmatprep.subr.mxu0 0.0
  %6498 = vmatpush1.msra.mxu0 0.0
  %6499 = vmatprep.subr.mxu0 0.0
  %6500 = vmatpush1.msra.mxu0 0.0
  %6501 = vmatprep.subr.mxu0 0.0
  %6502 = vmatpush1.msra.mxu0 0.0
  %6503 = vmatprep.subr.mxu0 0.0
  %6504 = vmatpush1.msra.mxu0 0.0
  %6505 = vmatprep.subr.mxu0 0.0
  %6506 = vmatpush1.msra.mxu0 0.0
  %6507 = vmatprep.subr.mxu0 0.0
  %6508 = vmatpush1.msra.mxu0 0.0
  %6509 = vmatprep.subr.mxu0 0.0
  %6510 = vmatpush1.msra.mxu0 0.0
  %6511 = vmatprep.subr.mxu0 0.0
  %6512 = vmatpush1.msra.mxu0 0.0
  %6513 = vmatprep.mubr.f32.mxu0 0.0
  %v6514 = vand.u32 %v5566, 4294901760
  %v6515 = vsub.f32 %v5566, %v6514
  %6516 = vmatmul.mubr.f32.gmra.mrb[0].mxu0 %v6515
  %v6517 = vpop.f32.mrb[0].mxu0
  %v6518 = vadd.f32 %v6416, %v6517
  %v6519 = vpop.f32.mrb[0].mxu0
  %v6520 = vadd.f32 %v6418, %v6519
  %6521 = vmatprep.mubr.f32.mxu0 0.0
  %v6522 = vand.u32 %v5569, 4294901760
  %v6523 = vsub.f32 %v5569, %v6522
  %6524 = vmatmul.mubr.f32.gmra.mrb[0].mxu0 %v6523
  %v6525 = vpop.f32.mrb[0].mxu0
  %v6526 = vadd.f32 %v6423, %v6525
  %v6527 = vpop.f32.mrb[0].mxu0
  %v6528 = vadd.f32 %v6425, %v6527
  %6529 = vmatprep.mubr.f32.mxu0 0.0
  %v6530 = vand.u32 %v5572, 4294901760
  %v6531 = vsub.f32 %v5572, %v6530
  %6532 = vmatmul.mubr.f32.gmra.mrb[0].mxu0 %v6531
  %v6533 = vpop.f32.mrb[0].mxu0
  %v6534 = vadd.f32 %v6430, %v6533
  %v6535 = vpop.f32.mrb[0].mxu0
  %v6536 = vadd.f32 %v6432, %v6535
  %6537 = vmatprep.mubr.f32.mxu0 0.0
  %v6538 = vand.u32 %v5575, 4294901760
  %v6539 = vsub.f32 %v5575, %v6538
  %6540 = vmatmul.mubr.f32.gmra.mrb[0].mxu0 %v6539
  %v6541 = vpop.f32.mrb[0].mxu0
  %v6542 = vadd.f32 %v6437, %v6541
  %v6543 = vpop.f32.mrb[0].mxu0
  %v6544 = vadd.f32 %v6439, %v6543
  %6545 = vdwg.mxu0
  %v6546 = vand.u32 %v103, 4294901760
  %6547 = vmatprep.subr.mxu0 %v6546
  %v6548 = vand.u32 %v102, 4294901760
  %6549 = vmatpush1.msra.mxu0 %v6548
  %v6550 = vand.u32 %v107, 4294901760
  %6551 = vmatprep.subr.mxu0 %v6550
  %v6552 = vand.u32 %v106, 4294901760
  %6553 = vmatpush1.msra.mxu0 %v6552
  %6554 = vmatprep.subr.mxu0 0.0
  %6555 = vmatpush1.msra.mxu0 0.0
  %6556 = vmatprep.subr.mxu0 0.0
  %6557 = vmatpush1.msra.mxu0 0.0
  %6558 = vmatprep.subr.mxu0 0.0
  %6559 = vmatpush1.msra.mxu0 0.0
  %6560 = vmatprep.subr.mxu0 0.0
  %6561 = vmatpush1.msra.mxu0 0.0
  %6562 = vmatprep.subr.mxu0 0.0
  %6563 = vmatpush1.msra.mxu0 0.0
  %6564 = vmatprep.subr.mxu0 0.0
  %6565 = vmatpush1.msra.mxu0 0.0
  %6566 = vmatprep.subr.mxu0 0.0
  %6567 = vmatpush1.msra.mxu0 0.0
  %6568 = vmatprep.subr.mxu0 0.0
  %6569 = vmatpush1.msra.mxu0 0.0
  %6570 = vmatprep.subr.mxu0 0.0
  %6571 = vmatpush1.msra.mxu0 0.0
  %6572 = vmatprep.subr.mxu0 0.0
  %6573 = vmatpush1.msra.mxu0 0.0
  %6574 = vmatprep.subr.mxu0 0.0
  %6575 = vmatpush1.msra.mxu0 0.0
  %6576 = vmatprep.subr.mxu0 0.0
  %6577 = vmatpush1.msra.mxu0 0.0
  %6578 = vmatprep.subr.mxu0 0.0
  %6579 = vmatpush1.msra.mxu0 0.0
  %6580 = vmatprep.subr.mxu0 0.0
  %6581 = vmatpush1.msra.mxu0 0.0
  %6582 = vmatprep.subr.mxu0 0.0
  %6583 = vmatpush1.msra.mxu0 0.0
  %6584 = vmatprep.subr.mxu0 0.0
  %6585 = vmatpush1.msra.mxu0 0.0
  %6586 = vmatprep.subr.mxu0 0.0
  %6587 = vmatpush1.msra.mxu0 0.0
  %6588 = vmatprep.subr.mxu0 0.0
  %6589 = vmatpush1.msra.mxu0 0.0
  %6590 = vmatprep.subr.mxu0 0.0
  %6591 = vmatpush1.msra.mxu0 0.0
  %6592 = vmatprep.subr.mxu0 0.0
  %6593 = vmatpush1.msra.mxu0 0.0
  %6594 = vmatprep.subr.mxu0 0.0
  %6595 = vmatpush1.msra.mxu0 0.0
  %6596 = vmatprep.subr.mxu0 0.0
  %6597 = vmatpush1.msra.mxu0 0.0
  %6598 = vmatprep.subr.mxu0 0.0
  %6599 = vmatpush1.msra.mxu0 0.0
  %6600 = vmatprep.subr.mxu0 0.0
  %6601 = vmatpush1.msra.mxu0 0.0
  %6602 = vmatprep.subr.mxu0 0.0
  %6603 = vmatpush1.msra.mxu0 0.0
  %6604 = vmatprep.subr.mxu0 0.0
  %6605 = vmatpush1.msra.mxu0 0.0
  %6606 = vmatprep.subr.mxu0 0.0
  %6607 = vmatpush1.msra.mxu0 0.0
  %6608 = vmatprep.subr.mxu0 0.0
  %6609 = vmatpush1.msra.mxu0 0.0
  %6610 = vmatprep.subr.mxu0 0.0
  %6611 = vmatpush1.msra.mxu0 0.0
  %6612 = vmatprep.subr.mxu0 0.0
  %6613 = vmatpush1.msra.mxu0 0.0
  %6614 = vmatprep.mubr.f32.mxu0 0.0
  %v6615 = vand.u32 %v5566, 4294901760
  %v6616 = vsub.f32 %v5566, %v6615
  %v6617 = vand.u32 %v6616, 4294901760
  %6618 = vmatmul.mubr.f32.gmra.mrb[0].mxu0 %v6617
  %v6619 = vpop.f32.mrb[0].mxu0
  %v6620 = vadd.f32 %v6518, %v6619
  %v6621 = vpop.f32.mrb[0].mxu0
  %v6622 = vadd.f32 %v6520, %v6621
  %6623 = vmatprep.mubr.f32.mxu0 0.0
  %v6624 = vand.u32 %v5569, 4294901760
  %v6625 = vsub.f32 %v5569, %v6624
  %v6626 = vand.u32 %v6625, 4294901760
  %6627 = vmatmul.mubr.f32.gmra.mrb[0].mxu0 %v6626
  %v6628 = vpop.f32.mrb[0].mxu0
  %v6629 = vadd.f32 %v6526, %v6628
  %v6630 = vpop.f32.mrb[0].mxu0
  %v6631 = vadd.f32 %v6528, %v6630
  %6632 = vmatprep.mubr.f32.mxu0 0.0
  %v6633 = vand.u32 %v5572, 4294901760
  %v6634 = vsub.f32 %v5572, %v6633
  %v6635 = vand.u32 %v6634, 4294901760
  %6636 = vmatmul.mubr.f32.gmra.mrb[0].mxu0 %v6635
  %v6637 = vpop.f32.mrb[0].mxu0
  %v6638 = vadd.f32 %v6534, %v6637
  %v6639 = vpop.f32.mrb[0].mxu0
  %v6640 = vadd.f32 %v6536, %v6639
  %6641 = vmatprep.mubr.f32.mxu0 0.0
  %v6642 = vand.u32 %v5575, 4294901760
  %v6643 = vsub.f32 %v5575, %v6642
  %v6644 = vand.u32 %v6643, 4294901760
  %6645 = vmatmul.mubr.f32.gmra.mrb[0].mxu0 %v6644
  %v6646 = vpop.f32.mrb[0].mxu0
  %v6647 = vadd.f32 %v6542, %v6646
  %v6648 = vpop.f32.mrb[0].mxu0
  %v6649 = vadd.f32 %v6544, %v6648
  %6650 = vdwg.mxu0
  %v6651 = vand.u32 %v103, 4294901760
  %v6652 = vsub.f32 %v103, %v6651
  %v6653 = vand.u32 %v6652, 4294901760
  %6654 = vmatprep.subr.mxu0 %v6653
  %v6655 = vand.u32 %v102, 4294901760
  %v6656 = vsub.f32 %v102, %v6655
  %v6657 = vand.u32 %v6656, 4294901760
  %6658 = vmatpush1.msra.mxu0 %v6657
  %v6659 = vand.u32 %v107, 4294901760
  %v6660 = vsub.f32 %v107, %v6659
  %v6661 = vand.u32 %v6660, 4294901760
  %6662 = vmatprep.subr.mxu0 %v6661
  %v6663 = vand.u32 %v106, 4294901760
  %v6664 = vsub.f32 %v106, %v6663
  %v6665 = vand.u32 %v6664, 4294901760
  %6666 = vmatpush1.msra.mxu0 %v6665
  %6667 = vmatprep.subr.mxu0 0.0
  %6668 = vmatpush1.msra.mxu0 0.0
  %6669 = vmatprep.subr.mxu0 0.0
  %6670 = vmatpush1.msra.mxu0 0.0
  %6671 = vmatprep.subr.mxu0 0.0
  %6672 = vmatpush1.msra.mxu0 0.0
  %6673 = vmatprep.subr.mxu0 0.0
  %6674 = vmatpush1.msra.mxu0 0.0
  %6675 = vmatprep.subr.mxu0 0.0
  %6676 = vmatpush1.msra.mxu0 0.0
  %6677 = vmatprep.subr.mxu0 0.0
  %6678 = vmatpush1.msra.mxu0 0.0
  %6679 = vmatprep.subr.mxu0 0.0
  %6680 = vmatpush1.msra.mxu0 0.0
  %6681 = vmatprep.subr.mxu0 0.0
  %6682 = vmatpush1.msra.mxu0 0.0
  %6683 = vmatprep.subr.mxu0 0.0
  %6684 = vmatpush1.msra.mxu0 0.0
  %6685 = vmatprep.subr.mxu0 0.0
  %6686 = vmatpush1.msra.mxu0 0.0
  %6687 = vmatprep.subr.mxu0 0.0
  %6688 = vmatpush1.msra.mxu0 0.0
  %6689 = vmatprep.subr.mxu0 0.0
  %6690 = vmatpush1.msra.mxu0 0.0
  %6691 = vmatprep.subr.mxu0 0.0
  %6692 = vmatpush1.msra.mxu0 0.0
  %6693 = vmatprep.subr.mxu0 0.0
  %6694 = vmatpush1.msra.mxu0 0.0
  %6695 = vmatprep.subr.mxu0 0.0
  %6696 = vmatpush1.msra.mxu0 0.0
  %6697 = vmatprep.subr.mxu0 0.0
  %6698 = vmatpush1.msra.mxu0 0.0
  %6699 = vmatprep.subr.mxu0 0.0
  %6700 = vmatpush1.msra.mxu0 0.0
  %6701 = vmatprep.subr.mxu0 0.0
  %6702 = vmatpush1.msra.mxu0 0.0
  %6703 = vmatprep.subr.mxu0 0.0
  %6704 = vmatpush1.msra.mxu0 0.0
  %6705 = vmatprep.subr.mxu0 0.0
  %6706 = vmatpush1.msra.mxu0 0.0
  %6707 = vmatprep.subr.mxu0 0.0
  %6708 = vmatpush1.msra.mxu0 0.0
  %6709 = vmatprep.subr.mxu0 0.0
  %6710 = vmatpush1.msra.mxu0 0.0
  %6711 = vmatprep.subr.mxu0 0.0
  %6712 = vmatpush1.msra.mxu0 0.0
  %6713 = vmatprep.subr.mxu0 0.0
  %6714 = vmatpush1.msra.mxu0 0.0
  %6715 = vmatprep.subr.mxu0 0.0
  %6716 = vmatpush1.msra.mxu0 0.0
  %6717 = vmatprep.subr.mxu0 0.0
  %6718 = vmatpush1.msra.mxu0 0.0
  %6719 = vmatprep.subr.mxu0 0.0
  %6720 = vmatpush1.msra.mxu0 0.0
  %6721 = vmatprep.subr.mxu0 0.0
  %6722 = vmatpush1.msra.mxu0 0.0
  %6723 = vmatprep.subr.mxu0 0.0
  %6724 = vmatpush1.msra.mxu0 0.0
  %6725 = vmatprep.subr.mxu0 0.0
  %6726 = vmatpush1.msra.mxu0 0.0
  %6727 = vmatprep.mubr.f32.mxu0 0.0
  %v6728 = vand.u32 %v5566, 4294901760
  %6729 = vmatmul.mubr.f32.gmra.mrb[0].mxu0 %v6728
  %v6730 = vpop.f32.mrb[0].mxu0
  %v6731 = vadd.f32 %v6620, %v6730
  %v6732 = vpop.f32.mrb[0].mxu0
  %v6733 = vadd.f32 %v6622, %v6732
  %6734 = vmatprep.mubr.f32.mxu0 0.0
  %v6735 = vand.u32 %v5569, 4294901760
  %6736 = vmatmul.mubr.f32.gmra.mrb[0].mxu0 %v6735
  %v6737 = vpop.f32.mrb[0].mxu0
  %v6738 = vadd.f32 %v6629, %v6737
  %v6739 = vpop.f32.mrb[0].mxu0
  %v6740 = vadd.f32 %v6631, %v6739
  %6741 = vmatprep.mubr.f32.mxu0 0.0
  %v6742 = vand.u32 %v5572, 4294901760
  %6743 = vmatmul.mubr.f32.gmra.mrb[0].mxu0 %v6742
  %v6744 = vpop.f32.mrb[0].mxu0
  %v6745 = vadd.f32 %v6638, %v6744
  %v6746 = vpop.f32.mrb[0].mxu0
  %v6747 = vadd.f32 %v6640, %v6746
  %6748 = vmatprep.mubr.f32.mxu0 0.0
  %v6749 = vand.u32 %v5575, 4294901760
  %6750 = vmatmul.mubr.f32.gmra.mrb[0].mxu0 %v6749
  %v6751 = vpop.f32.mrb[0].mxu0
  %v6752 = vadd.f32 %v6647, %v6751
  %v6753 = vpop.f32.mrb[0].mxu0
  %v6754 = vadd.f32 %v6649, %v6753
  %6755 = vdwg.mxu0
  %v6756 = vand.u32 %v103, 4294901760
  %6757 = vmatprep.subr.mxu0 %v6756
  %v6758 = vand.u32 %v102, 4294901760
  %6759 = vmatpush1.msra.mxu0 %v6758
  %v6760 = vand.u32 %v107, 4294901760
  %6761 = vmatprep.subr.mxu0 %v6760
  %v6762 = vand.u32 %v106, 4294901760
  %6763 = vmatpush1.msra.mxu0 %v6762
  %6764 = vmatprep.subr.mxu0 0.0
  %6765 = vmatpush1.msra.mxu0 0.0
  %6766 = vmatprep.subr.mxu0 0.0
  %6767 = vmatpush1.msra.mxu0 0.0
  %6768 = vmatprep.subr.mxu0 0.0
  %6769 = vmatpush1.msra.mxu0 0.0
  %6770 = vmatprep.subr.mxu0 0.0
  %6771 = vmatpush1.msra.mxu0 0.0
  %6772 = vmatprep.subr.mxu0 0.0
  %6773 = vmatpush1.msra.mxu0 0.0
  %6774 = vmatprep.subr.mxu0 0.0
  %6775 = vmatpush1.msra.mxu0 0.0
  %6776 = vmatprep.subr.mxu0 0.0
  %6777 = vmatpush1.msra.mxu0 0.0
  %6778 = vmatprep.subr.mxu0 0.0
  %6779 = vmatpush1.msra.mxu0 0.0
  %6780 = vmatprep.subr.mxu0 0.0
  %6781 = vmatpush1.msra.mxu0 0.0
  %6782 = vmatprep.subr.mxu0 0.0
  %6783 = vmatpush1.msra.mxu0 0.0
  %6784 = vmatprep.subr.mxu0 0.0
  %6785 = vmatpush1.msra.mxu0 0.0
  %6786 = vmatprep.subr.mxu0 0.0
  %6787 = vmatpush1.msra.mxu0 0.0
  %6788 = vmatprep.subr.mxu0 0.0
  %6789 = vmatpush1.msra.mxu0 0.0
  %6790 = vmatprep.subr.mxu0 0.0
  %6791 = vmatpush1.msra.mxu0 0.0
  %6792 = vmatprep.subr.mxu0 0.0
  %6793 = vmatpush1.msra.mxu0 0.0
  %6794 = vmatprep.subr.mxu0 0.0
  %6795 = vmatpush1.msra.mxu0 0.0
  %6796 = vmatprep.subr.mxu0 0.0
  %6797 = vmatpush1.msra.mxu0 0.0
  %6798 = vmatprep.subr.mxu0 0.0
  %6799 = vmatpush1.msra.mxu0 0.0
  %6800 = vmatprep.subr.mxu0 0.0
  %6801 = vmatpush1.msra.mxu0 0.0
  %6802 = vmatprep.subr.mxu0 0.0
  %6803 = vmatpush1.msra.mxu0 0.0
  %6804 = vmatprep.subr.mxu0 0.0
  %6805 = vmatpush1.msra.mxu0 0.0
  %6806 = vmatprep.subr.mxu0 0.0
  %6807 = vmatpush1.msra.mxu0 0.0
  %6808 = vmatprep.subr.mxu0 0.0
  %6809 = vmatpush1.msra.mxu0 0.0
  %6810 = vmatprep.subr.mxu0 0.0
  %6811 = vmatpush1.msra.mxu0 0.0
  %6812 = vmatprep.subr.mxu0 0.0
  %6813 = vmatpush1.msra.mxu0 0.0
  %6814 = vmatprep.subr.mxu0 0.0
  %6815 = vmatpush1.msra.mxu0 0.0
  %6816 = vmatprep.subr.mxu0 0.0
  %6817 = vmatpush1.msra.mxu0 0.0
  %6818 = vmatprep.subr.mxu0 0.0
  %6819 = vmatpush1.msra.mxu0 0.0
  %6820 = vmatprep.subr.mxu0 0.0
  %6821 = vmatpush1.msra.mxu0 0.0
  %6822 = vmatprep.subr.mxu0 0.0
  %6823 = vmatpush1.msra.mxu0 0.0
  %6824 = vmatprep.mubr.f32.mxu0 0.0
  %v6825 = vand.u32 %v5566, 4294901760
  %6826 = vmatmul.mubr.f32.gmra.mrb[0].mxu0 %v6825
  %v6827 = vpop.f32.mrb[0].mxu0
  %v6828 = vadd.f32 %v6731, %v6827
  %v6829 = vpop.f32.mrb[0].mxu0
  %v6830 = vadd.f32 %v6733, %v6829
  %6831 = vmatprep.mubr.f32.mxu0 0.0
  %v6832 = vand.u32 %v5569, 4294901760
  %6833 = vmatmul.mubr.f32.gmra.mrb[0].mxu0 %v6832
  %v6834 = vpop.f32.mrb[0].mxu0
  %v6835 = vadd.f32 %v6738, %v6834
  %v6836 = vpop.f32.mrb[0].mxu0
  %v6837 = vadd.f32 %v6740, %v6836
  %6838 = vmatprep.mubr.f32.mxu0 0.0
  %v6839 = vand.u32 %v5572, 4294901760
  %6840 = vmatmul.mubr.f32.gmra.mrb[0].mxu0 %v6839
  %v6841 = vpop.f32.mrb[0].mxu0
  %v6842 = vadd.f32 %v6745, %v6841
  %v6843 = vpop.f32.mrb[0].mxu0
  %v6844 = vadd.f32 %v6747, %v6843
  %6845 = vmatprep.mubr.f32.mxu0 0.0
  %v6846 = vand.u32 %v5575, 4294901760
  %6847 = vmatmul.mubr.f32.gmra.mrb[0].mxu0 %v6846
  %v6848 = vpop.f32.mrb[0].mxu0
  %v6849 = vadd.f32 %v6752, %v6848
  %v6850 = vpop.f32.mrb[0].mxu0
  %v6851 = vadd.f32 %v6754, %v6850
  %6852 = vdwg.mxu0
  %v6853 = vld [vmem:[%s1] sm:$0xf]
  %v6854 = vld [vmem:[%s2] sm:$0xf]
  %v6855 = vmul.f32 %v20, %v4898
  %v6856 = vmul.f32 %v21, %v4900
  %v6857 = vmul.f32 %v22, %v5536
  %v6858 = vmul.f32 %v23, %v5538
  %v6859 = vmul.f32 %v24, %v4905
  %v6860 = vmul.f32 %v25, %v4907
  %v6861 = vmul.f32 %v26, %v5543
  %v6862 = vmul.f32 %v27, %v5545
  %v6863 = vmul.f32 %v28, %v4912
  %v6864 = vmul.f32 %v29, %v4914
  %v6865 = vmul.f32 %v30, %v5550
  %v6866 = vmul.f32 %v31, %v5552
  %v6867 = vmul.f32 %v32, %v4919
  %v6868 = vmul.f32 %v33, %v4921
  %v6869 = vmul.f32 %v34, %v5557
  %v6870 = vmul.f32 %v35, %v5559
  %v6871 = vsub.f32 %v6855, %v6190
  %v6872 = vsub.f32 %v6856, %v6192
  %v6873 = vsub.f32 %v6857, %v6828
  %v6874 = vsub.f32 %v6858, %v6830
  %v6875 = vsub.f32 %v6859, %v6197
  %v6876 = vsub.f32 %v6860, %v6199
  %v6877 = vsub.f32 %v6861, %v6835
  %v6878 = vsub.f32 %v6862, %v6837
  %v6879 = vsub.f32 %v6863, %v6204
  %v6880 = vsub.f32 %v6864, %v6206
  %v6881 = vsub.f32 %v6865, %v6842
  %v6882 = vsub.f32 %v6866, %v6844
  %v6883 = vsub.f32 %v6867, %v6211
  %v6884 = vsub.f32 %v6868, %v6213
  %v6885 = vsub.f32 %v6869, %v6849
  %v6886 = vsub.f32 %v6870, %v6851
  %v6888 = vlaneseq
  %v6889 = vshrl.u32 %v6888, 7
  %v6890 = vsub.s32 0, %v6889
  %v6891 = vrot.slane %v6853, %v6890
  %v6892 = vlaneseq
  %v6893 = vshrl.u32 %v6892, 7
  %v6894 = vsub.s32 1, %v6893
  %v6895 = vrot.slane %v6853, %v6894
  %v6896 = vlaneseq
  %v6897 = vshrl.u32 %v6896, 7
  %v6898 = vsub.s32 2, %v6897
  %v6899 = vrot.slane %v6853, %v6898
  %v6900 = vlaneseq
  %v6901 = vshrl.u32 %v6900, 7
  %v6902 = vsub.s32 3, %v6901
  %v6903 = vrot.slane %v6853, %v6902
  %v6908 = vmul.f32 %v6871, %v6891
  %v6909 = vmul.f32 %v6872, %v6895
  %v6910 = vmul.f32 %v6873, %v6899
  %v6911 = vmul.f32 %v6874, %v6903
  %v6912 = vmul.f32 %v6875, %v6891
  %v6913 = vmul.f32 %v6876, %v6895
  %v6914 = vmul.f32 %v6877, %v6899
  %v6915 = vmul.f32 %v6878, %v6903
  %v6916 = vmul.f32 %v6879, %v6891
  %v6917 = vmul.f32 %v6880, %v6895
  %v6918 = vmul.f32 %v6881, %v6899
  %v6919 = vmul.f32 %v6882, %v6903
  %v6920 = vmul.f32 %v6883, %v6891
  %v6921 = vmul.f32 %v6884, %v6895
  %v6922 = vmul.f32 %v6885, %v6899
  %v6923 = vmul.f32 %v6886, %v6903
  %v6925 = vlaneseq
  %v6926 = vshrl.u32 %v6925, 7
  %v6927 = vsub.s32 0, %v6926
  %v6928 = vrot.slane %v6854, %v6927
  %v6929 = vlaneseq
  %v6930 = vshrl.u32 %v6929, 7
  %v6931 = vsub.s32 1, %v6930
  %v6932 = vrot.slane %v6854, %v6931
  %v6933 = vlaneseq
  %v6934 = vshrl.u32 %v6933, 7
  %v6935 = vsub.s32 2, %v6934
  %v6936 = vrot.slane %v6854, %v6935
  %v6937 = vlaneseq
  %v6938 = vshrl.u32 %v6937, 7
  %v6939 = vsub.s32 3, %v6938
  %v6940 = vrot.slane %v6854, %v6939
  %v6945 = vadd.f32 %v6908, %v6928
  %v6946 = vadd.f32 %v6909, %v6932
  %v6947 = vadd.f32 %v6910, %v6936
  %v6948 = vadd.f32 %v6911, %v6940
  %v6949 = vadd.f32 %v6912, %v6928
  %v6950 = vadd.f32 %v6913, %v6932
  %v6951 = vadd.f32 %v6914, %v6936
  %v6952 = vadd.f32 %v6915, %v6940
  %v6953 = vadd.f32 %v6916, %v6928
  %v6954 = vadd.f32 %v6917, %v6932
  %v6955 = vadd.f32 %v6918, %v6936
  %v6956 = vadd.f32 %v6919, %v6940
  %v6957 = vadd.f32 %v6920, %v6928
  %v6958 = vadd.f32 %v6921, %v6932
  %v6959 = vadd.f32 %v6922, %v6936
  %v6960 = vadd.f32 %v6923, %v6940
  %6961 = vst [vmem:[%s5] sm:$0xff] %v6945
  %6962 = vst [vmem:[%s5 + $0x8] sm:$0xff] %v6946
  %6963 = vst [vmem:[%s5 + $0x10] sm:$0xff] %v6947
  %6964 = vst [vmem:[%s5 + $0x18] sm:$0xff] %v6948
  %6965 = vst [vmem:[%s5 + $0x20] sm:$0xff] %v6949
  %6966 = vst [vmem:[%s5 + $0x28] sm:$0xff] %v6950
  %6967 = vst [vmem:[%s5 + $0x30] sm:$0xff] %v6951
  %6968 = vst [vmem:[%s5 + $0x38] sm:$0xff] %v6952
  %6969 = vst [vmem:[%s5 + $0x40] sm:$0xff] %v6953
  %6970 = vst [vmem:[%s5 + $0x48] sm:$0xff] %v6954
  %6971 = vst [vmem:[%s5 + $0x50] sm:$0xff] %v6955
  %6972 = vst [vmem:[%s5 + $0x58] sm:$0xff] %v6956
  %6973 = vst [vmem:[%s5 + $0x60] sm:$0xff] %v6957
  %6974 = vst [vmem:[%s5 + $0x68] sm:$0xff] %v6958
  %6975 = vst [vmem:[%s5 + $0x70] sm:$0xff] %v6959
  %6976 = vst [vmem:[%s5 + $0x78] sm:$0xff] %v6960
  // Predicated region
  $region22: #{withbias_layernorm.1} parent=0 // pred_check
    _
  $region23: #{withbias_layernorm.1} parent=0 // pred_check_branch
    %6978 = sbr.rel (0) target = $region25
  $region24: #{withbias_layernorm.1} parent=0 // pred_region
    _
  $region25: #{withbias_layernorm.1} parent=0 // pred_fallthru
    _
  // Predicated region
  $region26: #{withbias_layernorm.1} parent=0 // pred_check
    _
  $region27: #{withbias_layernorm.1} parent=0 // pred_check_branch
    %6980 = sbr.rel (0) target = $region29
  $region28: #{withbias_layernorm.1} parent=0 // pred_region
    _
  $region29: #{withbias_layernorm.1} parent=0 // pred_fallthru
    _

</llo_original>
